<compile_context>
chip_gen: v6e
topology: v6e:2x2x1
jax: 0.10.0
libtpu: 0.0.40
codegen_flags: <defaults>
</compile_context>

<pallas_src>
import jax
import jax.numpy as jnp
from jax import lax
from jax.experimental import pallas as pl
from jax.experimental.pallas import tpu as pltpu

DT = 0.05
N_NEWTON = 5   # fixed Newton-Raphson iteration count (warm start)
N_RICH = 2     # Richardson iterations for the matrix-free diagonal-block solve
# TODO(synk): ChunkNewtonRaphson uses an rtol/atol convergence loop; fixed
# iteration counts are used here (valid while dt*||Wst|| << 1; re-validate if
# block_size or the weight scaling changes).


def _solver_kernel(y0_ref, f_ref, wst_ref, wf_ref, b_ref, out_ref,
                   carry_ref, y_ref, r_ref, s2_ref):
    """One grid step = one StepGenerator chunk of `block_size` new time steps
    for one batch tile."""
    c = pl.program_id(1)   # chunk index (sequential, carries the lookback state)

    # result[0] = y0 : seed the lookback carry on the first chunk of this tile.
    @pl.when(c == 0)
    def _():
        carry_ref[...] = y0_ref[...].astype(jnp.float32)

    C, BT, F = f_ref.shape
    S = y0_ref.shape[-1]

    y_prev = carry_ref[...]                            # (BT, S) solution at step k1-1
    # Single bf16 copy of Wst used for every MXU op (residual + Richardson);
    # accumulation is always f32 via preferred_element_type.
    wst_bf = wst_ref[...].astype(jnp.bfloat16)         # (S, S)

    # Hoisted force contribution (independent of y): one matmul per chunk.
    fb = f_ref[...].astype(jnp.bfloat16).reshape(C * BT, F)
    flin = (jnp.dot(fb, wf_ref[...].astype(jnp.bfloat16),
                    preferred_element_type=jnp.float32).reshape(C, BT, S)
            + b_ref[...].astype(jnp.float32)[None])    # (C, BT, S)

    # Warm start (PreviousStepsPredictor-style): broadcast the lookback state.
    # TODO(synk): the module default is ZeroPredictor; both converge to the same
    # solution, the warm start just needs fewer Newton iterations.
    y_ref[...] = jnp.broadcast_to(y_prev[None], (C, BT, S))

    @pl.loop(0, N_NEWTON)
    def _newton(_it):
        y = y_ref[...]                                 # (C, BT, S) f32
        ti = jnp.tanh(y)                               # f32 elementwise (v5e VPU)
        lin = jnp.dot(ti.reshape(C * BT, S).astype(jnp.bfloat16), wst_bf,
                      preferred_element_type=jnp.float32).reshape(C, BT, S)
        rb = y - DT * (lin + flin)                     # R_i before the -y_{i-1} term
        # Hoist the lookback subtraction out of the serial Thomas chain:
        # full residual for the whole chunk, written once per Newton iteration.
        r_ref[0] = rb[0] - y_prev
        r_ref[1:] = rb[1:] - y[:C - 1]
        s2_ref[...] = 1.0 - ti * ti                    # sech^2(y)

        # Thomas forward substitution through the block lower-bidiagonal Newton
        # system (sub-diagonal block = -I):
        #   dx_i = J1_i^{-1} (R_i + dx_{i-1})
        # J1_i applied matrix-free: J1 x = x - dt*(sech2 (*) x) @ Wst, solved
        # with N_RICH Richardson iterations (bf16 MXU operands, f32 accumulate;
        # inexactness only perturbs the Newton direction, not the residual).
        def thomas_body(i, dx_prev):
            rhs = r_ref[i] + dx_prev                   # (BT, S)
            s2 = s2_ref[i]
            dx = rhs
            for _ in range(N_RICH):
                z = (s2 * dx).astype(jnp.bfloat16)     # product in f32, cast for MXU
                dx = rhs + DT * jnp.dot(z, wst_bf,
                                        preferred_element_type=jnp.float32)
            y_ref[i] = y_ref[i] - dx                   # in-place Newton update
            return dx

        lax.fori_loop(0, C, thomas_body, jnp.zeros((BT, S), jnp.float32))

    out_ref[...] = y_ref[...].astype(out_ref.dtype)
    carry_ref[...] = y_ref[C - 1]          # lookback carry for the next chunk


def recursive_solve(y0, n, forces, Wst, Wf, b, block_size=16, batch_tile=None):
    """Equivalent of RecursiveNonlinearEquationSolver.solve(y0, n, forces)."""
    B, S = y0.shape
    F = forces.shape[-1]
    assert n >= 2
    assert forces.shape == (n, B, F), "force batch shape must be (n,) + y0.shape[:-1]"
    assert (n - 1) % block_size == 0
    # TODO(synk): StepGenerator supports a ragged last chunk / first_block_size;
    # this kernel requires (n-1) divisible by block_size.
    if batch_tile is None:
        # >=128 rows per tile keeps the MXU M-dimension filled on the serial
        # Richardson chain; >=2 tiles lets v7x's second TensorCore participate.
        if B % 256 == 0 and B // 256 >= 2:
            batch_tile = 256
        elif B % 128 == 0 and B // 128 >= 2:
            batch_tile = 128
        else:
            batch_tile = B
    assert B % batch_tile == 0
    nchunks = (n - 1) // block_size
    n_bt = B // batch_tile

    # The synthetic func only consumes forces at the new steps.
    # TODO(synk): fold the +1 time offset into the force BlockSpec (element-offset
    # index map) to avoid this extra HBM pass over `forces` for very large n.
    f_new = forces[1:]

    out = pl.pallas_call(
        _solver_kernel,
        out_shape=jax.ShapeDtypeStruct((n - 1, B, S), y0.dtype),
        grid_spec=pltpu.PrefetchScalarGridSpec(
            num_scalar_prefetch=0,
            grid=(n_bt, nchunks),
            in_specs=[
                pl.BlockSpec((batch_tile, S), lambda t, c: (t, 0)),                  # y0
                pl.BlockSpec((block_size, batch_tile, F), lambda t, c: (c, t, 0)),   # forces
                pl.BlockSpec((S, S), lambda t, c: (0, 0)),                           # Wst
                pl.BlockSpec((F, S), lambda t, c: (0, 0)),                           # Wf
                pl.BlockSpec((1, S), lambda t, c: (0, 0)),                           # b
            ],
            out_specs=pl.BlockSpec((block_size, batch_tile, S),
                                   lambda t, c: (c, t, 0)),
            scratch_shapes=[
                pltpu.VMEM((batch_tile, S), jnp.float32),               # lookback carry
                pltpu.VMEM((block_size, batch_tile, S), jnp.float32),   # y (chunk solution)
                pltpu.VMEM((block_size, batch_tile, S), jnp.float32),   # residual rhs
                pltpu.VMEM((block_size, batch_tile, S), jnp.float32),   # sech^2(y)
            ],
        ),
        compiler_params=pltpu.CompilerParams(
            # batch tiles are independent (megacore on v7x); chunks carry state.
            dimension_semantics=("parallel", "arbitrary"),
            # footprint is ~10-15 MiB at (block_size=16, batch_tile=256);
            # 32 MiB is safe on v7x (64 MiB physical) and v5e/v6e (128 MiB).
            vmem_limit_bytes=32 * 1024 * 1024,
        ),
    )(y0, f_new, Wst, Wf, b)

    # result[0] = y0, result[1:] = solved chunks
    return jnp.concatenate([y0[None], out], axis=0)


if __name__ == "__main__":
    B, S, F = 256, 128, 16   # nbatch (2 tiles of 128), nstate (lane-dense), nforce
    block_size = 16          # StepGenerator block size
    n = 1 + 2 * block_size   # 33 time steps (step 0 is y0), 2 chunks

    key = jax.random.PRNGKey(0)
    k0, k1, k2, k3, k4 = jax.random.split(key, 5)
    y0 = 0.1 * jax.random.normal(k0, (B, S), dtype=jnp.float32)
    forces = jax.random.normal(k1, (n, B, F), dtype=jnp.float32)
    Wst = (0.5 / jnp.sqrt(S)) * jax.random.normal(k2, (S, S), dtype=jnp.float32)
    Wf = 0.1 * jax.random.normal(k3, (F, S), dtype=jnp.float32)
    b = 0.05 * jax.random.normal(k4, (1, S), dtype=jnp.float32)

    result = recursive_solve(y0, n, forces, Wst, Wf, b, block_size=block_size)
    result = jax.block_until_ready(result)

    assert result.shape == (n, B, S)
    assert bool(jnp.all(result[0] == y0))

    yk, ykm1, fk = result[1:], result[:-1], forces[1:]

    # Convergence check in the kernel's arithmetic (bf16 MXU operands, f32 acc):
    lin = jnp.dot(jnp.tanh(yk).astype(jnp.bfloat16).reshape(-1, S),
                  Wst.astype(jnp.bfloat16),
                  preferred_element_type=jnp.float32).reshape(n - 1, B, S)
    fl = jnp.dot(fk.astype(jnp.bfloat16).reshape(-1, F),
                 Wf.astype(jnp.bfloat16),
                 preferred_element_type=jnp.float32).reshape(n - 1, B, S) + b
    resid = yk - ykm1 - DT * (lin + fl)
    assert float(jnp.max(jnp.abs(resid))) < 1e-4, "nonlinear solve did not converge"

    # Full-f32 residual: dominated by the bf16-operand rounding in the residual
    # definition (~1e-4 scale), not by solver convergence.
    lin32 = jnp.dot(jnp.tanh(yk).reshape(-1, S), Wst,
                    preferred_element_type=jnp.float32,
                    precision=lax.Precision.HIGHEST).reshape(n - 1, B, S)
    fl32 = jnp.dot(fk.reshape(-1, F), Wf,
                   preferred_element_type=jnp.float32,
                   precision=lax.Precision.HIGHEST).reshape(n - 1, B, S) + b
    resid32 = yk - ykm1 - DT * (lin32 + fl32)
    assert float(jnp.max(jnp.abs(resid32))) < 3e-3

    print("KERNEL_OK")
</pallas_src>

<mosaic_0001>
module attributes {stable_mosaic.version = 11 : i64} {
  func.func @_solver_kernel(%arg0: i32, %arg1: i32, %arg2: memref<128x128xf32, #tpu.memory_space<vmem>>, %arg3: memref<16x128x16xf32, #tpu.memory_space<vmem>>, %arg4: memref<128x128xf32, #tpu.memory_space<vmem>>, %arg5: memref<16x128xf32, #tpu.memory_space<vmem>>, %arg6: memref<1x128xf32, #tpu.memory_space<vmem>>, %arg7: memref<16x128x128xf32, #tpu.memory_space<vmem>>, %arg8: memref<128x128xf32, #tpu.memory_space<vmem>>, %arg9: memref<16x128x128xf32, #tpu.memory_space<vmem>>, %arg10: memref<16x128x128xf32, #tpu.memory_space<vmem>>, %arg11: memref<16x128x128xf32, #tpu.memory_space<vmem>>) attributes {dimension_semantics = [#tpu.dimension_semantics<parallel>, #tpu.dimension_semantics<arbitrary>], iteration_bounds = array<i64: 2, 2>, scalar_prefetch = 0 : i64, scratch_operands = 4 : i64, tpu.core_type = #tpu.core_type<tc>, window_params = [{transform_indices = @transform_0, window_bounds = array<i64: 128, 128>}, {transform_indices = @transform_1, window_bounds = array<i64: 16, 128, 16>}, {pipeline_mode = #tpu.pipeline_mode<synchronous>, transform_indices = @transform_2, window_bounds = array<i64: 128, 128>}, {pipeline_mode = #tpu.pipeline_mode<synchronous>, transform_indices = @transform_3, window_bounds = array<i64: 16, 128>}, {pipeline_mode = #tpu.pipeline_mode<synchronous>, transform_indices = @transform_4, window_bounds = array<i64: 1, 128>}, {transform_indices = @transform_5, window_bounds = array<i64: 16, 128, 128>}]} {
    %c0_i32 = arith.constant 0 : i32
    %0 = arith.cmpi eq, %arg1, %c0_i32 : i32
    %1 = arith.extui %0 : i1 to i32
    %c0_i32_0 = arith.constant 0 : i32
    %2 = arith.cmpi ne, %1, %c0_i32_0 : i32
    scf.if %2 {
      %c0_25 = arith.constant 0 : index
      %c0_26 = arith.constant 0 : index
      %27 = vector.load %arg2[%c0_25, %c0_26] : memref<128x128xf32, #tpu.memory_space<vmem>>, vector<128x128xf32>
      %c0_27 = arith.constant 0 : index
      %c0_28 = arith.constant 0 : index
      %28 = vector.load %arg8[%c0_27, %c0_28] : memref<128x128xf32, #tpu.memory_space<vmem>>, vector<128x128xf32>
      tpu.vector_store %arg8[%c0_27, %c0_28], %27 {strides = array<i32>} : memref<128x128xf32, #tpu.memory_space<vmem>>, vector<128x128xf32>,
    } else {
    }
    %c0 = arith.constant 0 : index
    %c0_1 = arith.constant 0 : index
    %3 = vector.load %arg8[%c0, %c0_1] : memref<128x128xf32, #tpu.memory_space<vmem>>, vector<128x128xf32>
    %c0_2 = arith.constant 0 : index
    %c0_3 = arith.constant 0 : index
    %4 = vector.load %arg4[%c0_2, %c0_3] : memref<128x128xf32, #tpu.memory_space<vmem>>, vector<128x128xf32>
    %5 = arith.truncf %4 : vector<128x128xf32> to vector<128x128xbf16>
    %c0_4 = arith.constant 0 : index
    %c0_5 = arith.constant 0 : index
    %c0_6 = arith.constant 0 : index
    %6 = vector.load %arg3[%c0_4, %c0_5, %c0_6] : memref<16x128x16xf32, #tpu.memory_space<vmem>>, vector<16x128x16xf32>
    %7 = arith.truncf %6 : vector<16x128x16xf32> to vector<16x128x16xbf16>
    %8 = vector.shape_cast %7 : vector<16x128x16xbf16> to vector<2048x16xbf16>
    %c0_7 = arith.constant 0 : index
    %c0_8 = arith.constant 0 : index
    %9 = vector.load %arg5[%c0_7, %c0_8] : memref<16x128xf32, #tpu.memory_space<vmem>>, vector<16x128xf32>
    %10 = arith.truncf %9 : vector<16x128xf32> to vector<16x128xbf16>
    %cst = arith.constant dense<0.000000e+00> : vector<2048x128xf32>
    %11 = tpu.matmul %8, %10, %cst {dimension_numbers = #tpu.dot_dimension_numbers<[1], [0], [0], [1], [0, 0, 1, 1], [], []>} : vector<2048x16xbf16>, vector<16x128xbf16>, vector<2048x128xf32> -> vector<2048x128xf32>
    %12 = vector.shape_cast %11 : vector<2048x128xf32> to vector<16x128x128xf32>
    %c0_9 = arith.constant 0 : index
    %c0_10 = arith.constant 0 : index
    %13 = vector.load %arg6[%c0_9, %c0_10] : memref<1x128xf32, #tpu.memory_space<vmem>>, vector<1x128xf32>
    %14 = vector.shape_cast %13 : vector<1x128xf32> to vector<1x1x128xf32>
    %15 = vector.broadcast %14 : vector<1x1x128xf32> to vector<16x128x128xf32>
    %16 = arith.addf %12, %15 : vector<16x128x128xf32>
    %17 = vector.shape_cast %3 : vector<128x128xf32> to vector<1x128x128xf32>
    %18 = vector.shape_cast %17 : vector<1x128x128xf32> to vector<1x128x128xf32>
    %19 = vector.broadcast %18 : vector<1x128x128xf32> to vector<16x128x128xf32>
    %c0_11 = arith.constant 0 : index
    %c0_12 = arith.constant 0 : index
    %c0_13 = arith.constant 0 : index
    %20 = vector.load %arg9[%c0_11, %c0_12, %c0_13] : memref<16x128x128xf32, #tpu.memory_space<vmem>>, vector<16x128x128xf32>
    tpu.vector_store %arg9[%c0_11, %c0_12, %c0_13], %19 {strides = array<i32>} : memref<16x128x128xf32, #tpu.memory_space<vmem>>, vector<16x128x128xf32>,
    %c0_i32_14 = arith.constant 0 : i32
    %c5_i32 = arith.constant 5 : i32
    %21 = arith.addi %c0_i32_14, %c5_i32 : i32
    %c1_i32 = arith.constant 1 : i32
    scf.for %arg12 = %c0_i32_14 to %21 step %c1_i32  : i32 {
      %c0_25 = arith.constant 0 : index
      %c0_26 = arith.constant 0 : index
      %c0_27 = arith.constant 0 : index
      %27 = vector.load %arg9[%c0_25, %c0_26, %c0_27] : memref<16x128x128xf32, #tpu.memory_space<vmem>>, vector<16x128x128xf32>
      %28 = math.tanh %27 : vector<16x128x128xf32>
      %29 = vector.shape_cast %28 : vector<16x128x128xf32> to vector<2048x128xf32>
      %30 = arith.truncf %29 : vector<2048x128xf32> to vector<2048x128xbf16>
      %cst_28 = arith.constant dense<0.000000e+00> : vector<2048x128xf32>
      %31 = tpu.matmul %30, %5, %cst_28 {dimension_numbers = #tpu.dot_dimension_numbers<[1], [0], [0], [1], [0, 0, 1, 1], [], []>} : vector<2048x128xbf16>, vector<128x128xbf16>, vector<2048x128xf32> -> vector<2048x128xf32>
      %32 = vector.shape_cast %31 : vector<2048x128xf32> to vector<16x128x128xf32>
      %33 = arith.addf %32, %16 : vector<16x128x128xf32>
      %cst_29 = arith.constant 5.000000e-02 : f32
      %34 = vector.broadcast %cst_29 : f32 to vector<16x128x128xf32>
      %35 = arith.mulf %34, %33 : vector<16x128x128xf32>
      %36 = arith.subf %27, %35 : vector<16x128x128xf32>
      %37 = vector.extract_strided_slice %36 {offsets = [0, 0, 0], sizes = [1, 128, 128], strides = [1, 1, 1]} : vector<16x128x128xf32> to vector<1x128x128xf32>
      %38 = vector.shape_cast %37 : vector<1x128x128xf32> to vector<128x128xf32>
      %39 = arith.subf %38, %3 : vector<128x128xf32>
      %c0_30 = arith.constant 0 : index
      %c0_31 = arith.constant 0 : index
      %c0_32 = arith.constant 0 : index
      %40 = vector.load %arg10[%c0_30, %c0_31, %c0_32] : memref<16x128x128xf32, #tpu.memory_space<vmem>>, vector<1x128x128xf32>
      %41 = vector.shape_cast %40 : vector<1x128x128xf32> to vector<128x128xf32>
      %42 = vector.shape_cast %39 : vector<128x128xf32> to vector<1x128x128xf32>
      tpu.vector_store %arg10[%c0_30, %c0_31, %c0_32], %42 {strides = array<i32>} : memref<16x128x128xf32, #tpu.memory_space<vmem>>, vector<1x128x128xf32>,
      %43 = vector.extract_strided_slice %36 {offsets = [1, 0, 0], sizes = [15, 128, 128], strides = [1, 1, 1]} : vector<16x128x128xf32> to vector<15x128x128xf32>
      %44 = vector.extract_strided_slice %27 {offsets = [0, 0, 0], sizes = [15, 128, 128], strides = [1, 1, 1]} : vector<16x128x128xf32> to vector<15x128x128xf32>
      %45 = arith.subf %43, %44 : vector<15x128x128xf32>
      %c1 = arith.constant 1 : index
      %c0_33 = arith.constant 0 : index
      %c0_34 = arith.constant 0 : index
      %46 = vector.load %arg10[%c1, %c0_33, %c0_34] : memref<16x128x128xf32, #tpu.memory_space<vmem>>, vector<15x128x128xf32>
      tpu.vector_store %arg10[%c1, %c0_33, %c0_34], %45 {strides = array<i32>} : memref<16x128x128xf32, #tpu.memory_space<vmem>>, vector<15x128x128xf32>,
      %47 = arith.mulf %28, %28 : vector<16x128x128xf32>
      %cst_35 = arith.constant 1.000000e+00 : f32
      %48 = vector.broadcast %cst_35 : f32 to vector<16x128x128xf32>
      %49 = arith.subf %48, %47 : vector<16x128x128xf32>
      %c0_36 = arith.constant 0 : index
      %c0_37 = arith.constant 0 : index
      %c0_38 = arith.constant 0 : index
      %50 = vector.load %arg11[%c0_36, %c0_37, %c0_38] : memref<16x128x128xf32, #tpu.memory_space<vmem>>, vector<16x128x128xf32>
      tpu.vector_store %arg11[%c0_36, %c0_37, %c0_38], %49 {strides = array<i32>} : memref<16x128x128xf32, #tpu.memory_space<vmem>>, vector<16x128x128xf32>,
      %cst_39 = arith.constant 0.000000e+00 : f32
      %51 = vector.broadcast %cst_39 : f32 to vector<128x128xf32>
      %c0_i32_40 = arith.constant 0 : i32
      %c16_i32 = arith.constant 16 : i32
      %52 = arith.addi %c0_i32_40, %c16_i32 : i32
      %c1_i32_41 = arith.constant 1 : i32
      %53 = scf.for %arg13 = %c0_i32_40 to %52 step %c1_i32_41 iter_args(%arg14 = %51) -> (vector<128x128xf32>)  : i32 {
        %54 = arith.index_cast %arg13 : i32 to index
        %c0_43 = arith.constant 0 : index
        %c0_44 = arith.constant 0 : index
        %55 = vector.load %arg10[%54, %c0_43, %c0_44] : memref<16x128x128xf32, #tpu.memory_space<vmem>>, vector<1x128x128xf32>
        %56 = vector.shape_cast %55 : vector<1x128x128xf32> to vector<128x128xf32>
        %57 = arith.addf %56, %arg14 : vector<128x128xf32>
        %58 = arith.index_cast %arg13 : i32 to index
        %c0_45 = arith.constant 0 : index
        %c0_46 = arith.constant 0 : index
        %59 = vector.load %arg11[%58, %c0_45, %c0_46] : memref<16x128x128xf32, #tpu.memory_space<vmem>>, vector<1x128x128xf32>
        %60 = vector.shape_cast %59 : vector<1x128x128xf32> to vector<128x128xf32>
        %61 = arith.mulf %60, %57 : vector<128x128xf32>
        %62 = arith.truncf %61 : vector<128x128xf32> to vector<128x128xbf16>
        %cst_47 = arith.constant dense<0.000000e+00> : vector<128x128xf32>
        %63 = tpu.matmul %62, %5, %cst_47 {dimension_numbers = #tpu.dot_dimension_numbers<[1], [0], [0], [1], [0, 0, 1, 1], [], []>} : vector<128x128xbf16>, vector<128x128xbf16>, vector<128x128xf32> -> vector<128x128xf32>
        %cst_48 = arith.constant 5.000000e-02 : f32
        %64 = vector.broadcast %cst_48 : f32 to vector<128x128xf32>
        %65 = arith.mulf %64, %63 : vector<128x128xf32>
        %66 = arith.addf %57, %65 : vector<128x128xf32>
        %67 = arith.mulf %60, %66 : vector<128x128xf32>
        %68 = arith.truncf %67 : vector<128x128xf32> to vector<128x128xbf16>
        %cst_49 = arith.constant dense<0.000000e+00> : vector<128x128xf32>
        %69 = tpu.matmul %68, %5, %cst_49 {dimension_numbers = #tpu.dot_dimension_numbers<[1], [0], [0], [1], [0, 0, 1, 1], [], []>} : vector<128x128xbf16>, vector<128x128xbf16>, vector<128x128xf32> -> vector<128x128xf32>
        %cst_50 = arith.constant 5.000000e-02 : f32
        %70 = vector.broadcast %cst_50 : f32 to vector<128x128xf32>
        %71 = arith.mulf %70, %69 : vector<128x128xf32>
        %72 = arith.addf %57, %71 : vector<128x128xf32>
        %73 = arith.index_cast %arg13 : i32 to index
        %c0_51 = arith.constant 0 : index
        %c0_52 = arith.constant 0 : index
        %74 = vector.load %arg9[%73, %c0_51, %c0_52] : memref<16x128x128xf32, #tpu.memory_space<vmem>>, vector<1x128x128xf32>
        %75 = vector.shape_cast %74 : vector<1x128x128xf32> to vector<128x128xf32>
        %76 = arith.subf %75, %72 : vector<128x128xf32>
        %77 = arith.index_cast %arg13 : i32 to index
        %c0_53 = arith.constant 0 : index
        %c0_54 = arith.constant 0 : index
        %78 = vector.load %arg9[%77, %c0_53, %c0_54] : memref<16x128x128xf32, #tpu.memory_space<vmem>>, vector<1x128x128xf32>
        %79 = vector.shape_cast %78 : vector<1x128x128xf32> to vector<128x128xf32>
        %80 = vector.shape_cast %76 : vector<128x128xf32> to vector<1x128x128xf32>
        tpu.vector_store %arg9[%77, %c0_53, %c0_54], %80 {strides = array<i32>} : memref<16x128x128xf32, #tpu.memory_space<vmem>>, vector<1x128x128xf32>,
        scf.yield %72 : vector<128x128xf32>
      }
      %c16_i32_42 = arith.constant 16 : i32
    }
    %c0_15 = arith.constant 0 : index
    %c0_16 = arith.constant 0 : index
    %c0_17 = arith.constant 0 : index
    %22 = vector.load %arg9[%c0_15, %c0_16, %c0_17] : memref<16x128x128xf32, #tpu.memory_space<vmem>>, vector<16x128x128xf32>
    %c0_18 = arith.constant 0 : index
    %c0_19 = arith.constant 0 : index
    %c0_20 = arith.constant 0 : index
    %23 = vector.load %arg7[%c0_18, %c0_19, %c0_20] : memref<16x128x128xf32, #tpu.memory_space<vmem>>, vector<16x128x128xf32>
    tpu.vector_store %arg7[%c0_18, %c0_19, %c0_20], %22 {strides = array<i32>} : memref<16x128x128xf32, #tpu.memory_space<vmem>>, vector<16x128x128xf32>,
    %c15 = arith.constant 15 : index
    %c0_21 = arith.constant 0 : index
    %c0_22 = arith.constant 0 : index
    %24 = vector.load %arg9[%c15, %c0_21, %c0_22] : memref<16x128x128xf32, #tpu.memory_space<vmem>>, vector<1x128x128xf32>
    %25 = vector.shape_cast %24 : vector<1x128x128xf32> to vector<128x128xf32>
    %c0_23 = arith.constant 0 : index
    %c0_24 = arith.constant 0 : index
    %26 = vector.load %arg8[%c0_23, %c0_24] : memref<128x128xf32, #tpu.memory_space<vmem>>, vector<128x128xf32>
    tpu.vector_store %arg8[%c0_23, %c0_24], %25 {strides = array<i32>} : memref<128x128xf32, #tpu.memory_space<vmem>>, vector<128x128xf32>,
    return
  }
  func.func @transform_0(%arg0: i32, %arg1: i32) -> (i32, i32) {
    %c0_i32 = arith.constant 0 : i32
    %c0_i32_0 = arith.constant 0 : i32
    return %arg0, %c0_i32 : i32, i32
  }
  func.func @transform_1(%arg0: i32, %arg1: i32) -> (i32, i32, i32) {
    %c0_i32 = arith.constant 0 : i32
    %c0_i32_0 = arith.constant 0 : i32
    return %arg1, %arg0, %c0_i32 : i32, i32, i32
  }
  func.func @transform_2(%arg0: i32, %arg1: i32) -> (i32, i32) {
    %c0_i32 = arith.constant 0 : i32
    %c0_i32_0 = arith.constant 0 : i32
    %c0_i32_1 = arith.constant 0 : i32
    return %c0_i32, %c0_i32_0 : i32, i32
  }
  func.func @transform_3(%arg0: i32, %arg1: i32) -> (i32, i32) {
    %c0_i32 = arith.constant 0 : i32
    %c0_i32_0 = arith.constant 0 : i32
    %c0_i32_1 = arith.constant 0 : i32
    return %c0_i32, %c0_i32_0 : i32, i32
  }
  func.func @transform_4(%arg0: i32, %arg1: i32) -> (i32, i32) {
    %c0_i32 = arith.constant 0 : i32
    %c0_i32_0 = arith.constant 0 : i32
    %c0_i32_1 = arith.constant 0 : i32
    return %c0_i32, %c0_i32_0 : i32, i32
  }
  func.func @transform_5(%arg0: i32, %arg1: i32) -> (i32, i32, i32) {
    %c0_i32 = arith.constant 0 : i32
    %c0_i32_0 = arith.constant 0 : i32
    return %arg1, %arg0, %c0_i32 : i32, i32, i32
  }
}

</mosaic_0001>

<llo_original>
// kernel: tpu_custom_call.1
$region0: #{tpu_custom_call.1}
  #allocation0 [shape = 'u32[]', space=smem, size = 0x4, offset = 0x4, fixed_abs, tag = 'smem constant byte address 0x4 - core index']
  #allocation1 [shape = 'u32[144,128]{1,0:T(1,128)}', space=vmem, size = 0x12000, scoped, tag = 'internal scratch']
  #allocation2 [shape = 'f32[128,128]{1,0:T(8,128)}', space=vmem, size = 0x10000, scoped, tag = 'scratch operand']
  #allocation3 [shape = 'f32[16,128,128]{2,1,0:T(8,128)}', space=vmem, size = 0x100000, scoped, tag = 'scratch operand']
  #allocation4 [shape = 'f32[16,128,128]{2,1,0:T(8,128)}', space=vmem, size = 0x100000, scoped, tag = 'scratch operand']
  #allocation5 [shape = 'f32[16,128,128]{2,1,0:T(8,128)}', space=vmem, size = 0x100000, scoped, tag = 'scratch operand']
  #allocation9 [shape = 's32[]', space=sflag, size = 0x4, offset = 0, fixed_abs, tag = 'sflag constant byte address 0x0 - dummy sync flag']
  %s0 = inlined_call_operand.vmem [shape: f32[256,128], index: 0, kind: input, shape index: {}]
  %s1 = inlined_call_operand.vmem [shape: f32[32,256,16], index: 1, kind: input, shape index: {}]
  %s2 = inlined_call_operand.vmem [shape: f32[128,128], index: 2, kind: input, shape index: {}]
  %s3 = inlined_call_operand.vmem [shape: f32[16,128], index: 3, kind: input, shape index: {}]
  %s4 = inlined_call_operand.vmem [shape: f32[1,128], index: 4, kind: input, shape index: {}]
  %s5 = inlined_call_operand.hbm [shape: f32[32,256,128], index: 5, kind: output, shape index: {}]
  %s6 = sld [smem:[#allocation0]]
  $region109: #{tpu_custom_call.1} parent=0
    _
  %s8 = ssub.s32 1, %s6
  %s9 = scalar_select 0, %s8, %s6
  $region1: #{tpu_custom_call.1} parent=0
    #allocation6 [shape = 'u8[2097152]{0}', space=vmem, size = 0x200000, scoped, tag = 'input window, operand 1']
    #allocation7 [shape = 'u8[2097152]{0}', space=vmem, size = 0x200000, scoped, tag = 'output window, operand 0']
    #allocation8 [shape = 's32[2]{0}', space=sflag, size = 0x8, scoped, tag = 'scoped memory for tpu_custom_call.1']
    %10 = vsyncpa [#allocation8], 0
    %s11 = scalar_lea.sflag [#allocation8], 1
    %12 = vsyncpa %s11, 0
    loop: start=0, step=1, limit=6
    $region2: #{tpu_custom_call.1} parent=1 // loop_pre_header
      _
    $region3: #{tpu_custom_call.1} parent=1 // loop_header
      %s14 = sphi 0, %s18
      %p15 = scmp.ge.s32.totalorder %s14, 6
      %s21 = sphi 0, %s33
      %s22 = sphi 0, %s29
      %s23 = sphi 0, %s21
      %s24 = sphi 0, %s22
      %s25 = sphi 0, %s23
      %s26 = sphi 0, %s24
      %s36 = sphi 0, %s38
      %s39 = sphi 0, %s36
      %s40 = sphi 0, %s39
      %s56 = sphi 0, %s40
      %s64 = sphi 0, %s66
      %s67 = sphi 0, %s64
      %s68 = sphi 0, %s67
      %s84 = sphi 0, %s68
      %s88 = sphi 0, %s88
      %s90 = sphi 0, %s88
      %s91 = sphi 0, %s90
      %s105 = sphi 0, %s91
      %s109 = sphi 0, %s109
      %s111 = sphi 0, %s109
      %s112 = sphi 0, %s111
      %s126 = sphi 0, %s112
      %s130 = sphi 0, %s130
      %s132 = sphi 0, %s130
      %s133 = sphi 0, %s132
      %s147 = sphi 0, %s133
      %s155 = sphi 0, %s157
      %s158 = sphi 0, %s155
      %s159 = sphi 0, %s158
      %s175 = sphi 0, %s159
    $region4: #{tpu_custom_call.1} parent=1 // loop_header_branch
      %17 = sbr.rel (%p15) target = $region8
    $region5: #{tpu_custom_call.1} parent=1 // loop_body
      %s19 = ssub.s32 %s14, 1
      %s20 = ssub.s32 %s14, 2
      %s27 = sadd.s32 1, %s22
      %p28 = scmp.ge.s32.totalorder %s27, 2
      %s29 = scalar_select %p28, 0, %s27
      %s30 = sadd.s32 1, %s21
      %s31 = scalar_select %p28, %s30, %s21
      %p32 = scmp.ge.s32.totalorder %s31, 2
      %s33 = scalar_select %p32, 0, %s31
      %s34 = ssub.s32 %s21, %s33
      %p35 = scmp.eq.s32.totalorder %s34, 0
      %s37 = sadd.s32 %s36, 1
      %s38 = scalar_select %p35, %s36, %s37
      %p41 = pneg %p35
      %p42 = scmp.eq.s32.totalorder %s14, 3
      %p43 = por %p41, %p42
      %p44 = scmp.ne.s32.totalorder %s36, %s39
      %p45 = scmp.eq.s32.totalorder %s14, 0
      %p46 = por %p44, %p45
      %p47 = scmp.ne.s32.totalorder %s36, %s39
      %p48 = scmp.eq.s32.totalorder %s19, 3
      %p49 = por %p47, %p48
      %p50 = scmp.ne.s32.totalorder %s39, %s40
      %p51 = scmp.eq.s32.totalorder %s19, 0
      %p52 = por %p50, %p51
      %p53 = scmp.ne.s32.totalorder %s39, %s40
      %p54 = scmp.eq.s32.totalorder %s20, 3
      %p55 = por %p53, %p54
      %p57 = scmp.ne.s32.totalorder %s40, %s56
      %p58 = scmp.eq.s32.totalorder %s20, 0
      %p59 = por %p57, %p58
      %s60 = ssub.s32 %s22, %s29
      %s61 = ssub.s32 %s21, %s33
      %s62 = sor.u32 %s60, %s61
      %p63 = scmp.eq.s32.totalorder %s62, 0
      %s65 = sadd.s32 %s64, 1
      %s66 = scalar_select %p63, %s64, %s65
      %p69 = pneg %p63
      %p70 = scmp.eq.s32.totalorder %s14, 3
      %p71 = por %p69, %p70
      %p72 = scmp.ne.s32.totalorder %s64, %s67
      %p73 = scmp.eq.s32.totalorder %s14, 0
      %p74 = por %p72, %p73
      %p75 = scmp.ne.s32.totalorder %s64, %s67
      %p76 = scmp.eq.s32.totalorder %s19, 3
      %p77 = por %p75, %p76
      %p78 = scmp.ne.s32.totalorder %s67, %s68
      %p79 = scmp.eq.s32.totalorder %s19, 0
      %p80 = por %p78, %p79
      %p81 = scmp.ne.s32.totalorder %s67, %s68
      %p82 = scmp.eq.s32.totalorder %s20, 3
      %p83 = por %p81, %p82
      %p85 = scmp.ne.s32.totalorder %s68, %s84
      %p86 = scmp.eq.s32.totalorder %s20, 0
      %p87 = por %p85, %p86
      %s89 = sadd.s32 %s88, 1
      %p92 = scmp.eq.s32.totalorder %s14, 3
      %p93 = scmp.ne.s32.totalorder %s88, %s90
      %p94 = scmp.eq.s32.totalorder %s14, 0
      %p95 = por %p93, %p94
      %p96 = scmp.ne.s32.totalorder %s88, %s90
      %p97 = scmp.eq.s32.totalorder %s19, 3
      %p98 = por %p96, %p97
      %p99 = scmp.ne.s32.totalorder %s90, %s91
      %p100 = scmp.eq.s32.totalorder %s19, 0
      %p101 = por %p99, %p100
      %p102 = scmp.ne.s32.totalorder %s90, %s91
      %p103 = scmp.eq.s32.totalorder %s20, 3
      %p104 = por %p102, %p103
      %p106 = scmp.ne.s32.totalorder %s91, %s105
      %p107 = scmp.eq.s32.totalorder %s20, 0
      %p108 = por %p106, %p107
      %s110 = sadd.s32 %s109, 1
      %p113 = scmp.eq.s32.totalorder %s14, 3
      %p114 = scmp.ne.s32.totalorder %s109, %s111
      %p115 = scmp.eq.s32.totalorder %s14, 0
      %p116 = por %p114, %p115
      %p117 = scmp.ne.s32.totalorder %s109, %s111
      %p118 = scmp.eq.s32.totalorder %s19, 3
      %p119 = por %p117, %p118
      %p120 = scmp.ne.s32.totalorder %s111, %s112
      %p121 = scmp.eq.s32.totalorder %s19, 0
      %p122 = por %p120, %p121
      %p123 = scmp.ne.s32.totalorder %s111, %s112
      %p124 = scmp.eq.s32.totalorder %s20, 3
      %p125 = por %p123, %p124
      %p127 = scmp.ne.s32.totalorder %s112, %s126
      %p128 = scmp.eq.s32.totalorder %s20, 0
      %p129 = por %p127, %p128
      %s131 = sadd.s32 %s130, 1
      %p134 = scmp.eq.s32.totalorder %s14, 3
      %p135 = scmp.ne.s32.totalorder %s130, %s132
      %p136 = scmp.eq.s32.totalorder %s14, 0
      %p137 = por %p135, %p136
      %p138 = scmp.ne.s32.totalorder %s130, %s132
      %p139 = scmp.eq.s32.totalorder %s19, 3
      %p140 = por %p138, %p139
      %p141 = scmp.ne.s32.totalorder %s132, %s133
      %p142 = scmp.eq.s32.totalorder %s19, 0
      %p143 = por %p141, %p142
      %p144 = scmp.ne.s32.totalorder %s132, %s133
      %p145 = scmp.eq.s32.totalorder %s20, 3
      %p146 = por %p144, %p145
      %p148 = scmp.ne.s32.totalorder %s133, %s147
      %p149 = scmp.eq.s32.totalorder %s20, 0
      %p150 = por %p148, %p149
      %s151 = ssub.s32 %s22, %s29
      %s152 = ssub.s32 %s21, %s33
      %s153 = sor.u32 %s151, %s152
      %p154 = scmp.eq.s32.totalorder %s153, 0
      %s156 = sadd.s32 %s155, 1
      %s157 = scalar_select %p154, %s155, %s156
      %p160 = pneg %p154
      %p161 = scmp.eq.s32.totalorder %s14, 3
      %p162 = por %p160, %p161
      %p163 = scmp.ne.s32.totalorder %s155, %s158
      %p164 = scmp.eq.s32.totalorder %s14, 0
      %p165 = por %p163, %p164
      %p166 = scmp.ne.s32.totalorder %s155, %s158
      %p167 = scmp.eq.s32.totalorder %s19, 3
      %p168 = por %p166, %p167
      %p169 = scmp.ne.s32.totalorder %s158, %s159
      %p170 = scmp.eq.s32.totalorder %s19, 0
      %p171 = por %p169, %p170
      %p172 = scmp.ne.s32.totalorder %s158, %s159
      %p173 = scmp.eq.s32.totalorder %s20, 3
      %p174 = por %p172, %p173
      %p176 = scmp.ne.s32.totalorder %s159, %s175
      %p177 = scmp.eq.s32.totalorder %s20, 0
      %p178 = por %p176, %p177
      %p179 = scmp.le.s32.totalorder 1, %s14
      %p180 = scmp.lt.s32.totalorder %s14, 5
      %p181 = pnand %p179, %p180
      %p182 = pneg %p181
      // Predicated region
      $region9: #{tpu_custom_call.1} parent=5 // pred_check
        _
      $region10: #{tpu_custom_call.1} parent=5 // pred_check_branch
        %184 = sbr.rel (%p181) target = $region12
      $region11: #{tpu_custom_call.1} parent=5 // pred_region
        %s185 = ssub.s32 %s14, 1
        // Predicated region
        $region13: #{tpu_custom_call.1} parent=11 // pred_check
          %p186 = pneg %p101
        $region14: #{tpu_custom_call.1} parent=11 // pred_check_branch
          %188 = sbr.rel (%p186) target = $region16
        $region15: #{tpu_custom_call.1} parent=11 // pred_region
          _
        $region16: #{tpu_custom_call.1} parent=11 // pred_fallthru
          _
        // Predicated region
        $region17: #{tpu_custom_call.1} parent=11 // pred_check
          %p189 = pneg %p122
        $region18: #{tpu_custom_call.1} parent=11 // pred_check_branch
          %191 = sbr.rel (%p189) target = $region20
        $region19: #{tpu_custom_call.1} parent=11 // pred_region
          _
        $region20: #{tpu_custom_call.1} parent=11 // pred_fallthru
          _
        // Predicated region
        $region21: #{tpu_custom_call.1} parent=11 // pred_check
          %p192 = pneg %p143
        $region22: #{tpu_custom_call.1} parent=11 // pred_check_branch
          %194 = sbr.rel (%p192) target = $region24
        $region23: #{tpu_custom_call.1} parent=11 // pred_region
          _
        $region24: #{tpu_custom_call.1} parent=11 // pred_fallthru
          _
      $region12: #{tpu_custom_call.1} parent=5 // pred_fallthru
        _
      %p195 = scmp.lt.s32.totalorder %s14, 4
      // Predicated region
      $region25: #{tpu_custom_call.1} parent=5 // pred_check
        %p196 = pneg %p195
      $region26: #{tpu_custom_call.1} parent=5 // pred_check_branch
        %198 = sbr.rel (%p196) target = $region28
      $region27: #{tpu_custom_call.1} parent=5 // pred_region
        // Predicated region
        $region29: #{tpu_custom_call.1} parent=27 // pred_check
          %p199 = pneg %p46
        $region30: #{tpu_custom_call.1} parent=27 // pred_check_branch
          %201 = sbr.rel (%p199) target = $region32
        $region31: #{tpu_custom_call.1} parent=27 // pred_region
          %s202 = smul.u32 16, %s21
          %p203 = scmp.lt.s32.totalorder %s202, 31
          %s204 = scalar_select %p203, %s202, 31
          %s205 = smul.addr %s204, 8
          %s206 = scalar_lea.vmem %s0, %s205
          %s207 = smul.u32 16, %s21
        $region32: #{tpu_custom_call.1} parent=27 // pred_fallthru
          _
        // Predicated region
        $region33: #{tpu_custom_call.1} parent=27 // pred_check
          %p208 = pneg %p74
        $region34: #{tpu_custom_call.1} parent=27 // pred_check_branch
          %210 = sbr.rel (%p208) target = $region36
        $region35: #{tpu_custom_call.1} parent=27 // pred_region
          %s211 = sand.u32 %s64, 1
          %s212 = sand.u32 %s64, 1
          %s213 = smul.addr %s212, 2048
          %s214 = scalar_lea.vmem [#allocation6], %s213
          %s215 = smul.u32 16, %s22
          %s216 = smul.u32 16, %s21
          %s217 = smul.addr %s215, 32
          %s218 = sadd.s32 %s216, %s217
          %s219 = smul.addr %s218, 8
          %s220 = scalar_lea.vmem %s1, %s219
          // Predicated region
          $region37: #{tpu_custom_call.1} parent=35 // pred_check
            _
          $region38: #{tpu_custom_call.1} parent=35 // pred_check_branch
            %222 = sbr.rel (0) target = $region40
          $region39: #{tpu_custom_call.1} parent=35 // pred_region
            // Predicated region
            $region41: #{tpu_custom_call.1} parent=39 // pred_check
              _
            $region42: #{tpu_custom_call.1} parent=39 // pred_check_branch
              %224 = sbr.rel (0) target = $region44
            $region43: #{tpu_custom_call.1} parent=39 // pred_region
              // Predicated region
              $region56: #{tpu_custom_call.1} parent=43 // pred_check
                _
              $region57: #{tpu_custom_call.1} parent=43 // pred_check_branch
                %750 = sbr.rel (0) target = $region59
              $region58: #{tpu_custom_call.1} parent=43 // pred_region
                loop: start=0, step=1, limit=1
                $region60: #{tpu_custom_call.1} parent=58 // loop_pre_header
                  _
                $region61: #{tpu_custom_call.1} parent=58 // loop_header
                  %s752 = sphi 0, %s756
                  %p753 = scmp.ge.s32.totalorder %s752, 1
                  %s757 = sphi %s220, %s220
                  %s758 = sphi %s214, %s214
                $region62: #{tpu_custom_call.1} parent=58 // loop_header_branch
                  %755 = sbr.rel (%p753) target = $region66
                $region63: #{tpu_custom_call.1} parent=58 // loop_body
                  %v759 = vld [vmem:[%s757] sm:$0xff]
                  %760 = vst [vmem:[%s758] sm:$0xff] %v759
                  %v761 = vld [vmem:[%s757 + $0x8] sm:$0xff]
                  %762 = vst [vmem:[%s758 + $0x8] sm:$0xff] %v761
                  %v763 = vld [vmem:[%s757 + $0x10] sm:$0xff]
                  %764 = vst [vmem:[%s758 + $0x10] sm:$0xff] %v763
                  %v765 = vld [vmem:[%s757 + $0x18] sm:$0xff]
                  %766 = vst [vmem:[%s758 + $0x18] sm:$0xff] %v765
                  %v767 = vld [vmem:[%s757 + $0x20] sm:$0xff]
                  %768 = vst [vmem:[%s758 + $0x20] sm:$0xff] %v767
                  %v769 = vld [vmem:[%s757 + $0x28] sm:$0xff]
                  %770 = vst [vmem:[%s758 + $0x28] sm:$0xff] %v769
                  %v771 = vld [vmem:[%s757 + $0x30] sm:$0xff]
                  %772 = vst [vmem:[%s758 + $0x30] sm:$0xff] %v771
                  %v773 = vld [vmem:[%s757 + $0x38] sm:$0xff]
                  %774 = vst [vmem:[%s758 + $0x38] sm:$0xff] %v773
                  %v775 = vld [vmem:[%s757 + $0x40] sm:$0xff]
                  %776 = vst [vmem:[%s758 + $0x40] sm:$0xff] %v775
                  %v777 = vld [vmem:[%s757 + $0x48] sm:$0xff]
                  %778 = vst [vmem:[%s758 + $0x48] sm:$0xff] %v777
                  %v779 = vld [vmem:[%s757 + $0x50] sm:$0xff]
                  %780 = vst [vmem:[%s758 + $0x50] sm:$0xff] %v779
                  %v781 = vld [vmem:[%s757 + $0x58] sm:$0xff]
                  %782 = vst [vmem:[%s758 + $0x58] sm:$0xff] %v781
                  %v783 = vld [vmem:[%s757 + $0x60] sm:$0xff]
                  %784 = vst [vmem:[%s758 + $0x60] sm:$0xff] %v783
                  %v785 = vld [vmem:[%s757 + $0x68] sm:$0xff]
                  %786 = vst [vmem:[%s758 + $0x68] sm:$0xff] %v785
                  %v787 = vld [vmem:[%s757 + $0x70] sm:$0xff]
                  %788 = vst [vmem:[%s758 + $0x70] sm:$0xff] %v787
                  %v789 = vld [vmem:[%s757 + $0x78] sm:$0xff]
                  %790 = vst [vmem:[%s758 + $0x78] sm:$0xff] %v789
                  %v791 = vld [vmem:[%s757 + $0x100] sm:$0xff]
                  %792 = vst [vmem:[%s758 + $0x80] sm:$0xff] %v791
                  %v793 = vld [vmem:[%s757 + $0x108] sm:$0xff]
                  %794 = vst [vmem:[%s758 + $0x88] sm:$0xff] %v793
                  %v795 = vld [vmem:[%s757 + $0x110] sm:$0xff]
                  %796 = vst [vmem:[%s758 + $0x90] sm:$0xff] %v795
                  %v797 = vld [vmem:[%s757 + $0x118] sm:$0xff]
                  %798 = vst [vmem:[%s758 + $0x98] sm:$0xff] %v797
                  %v799 = vld [vmem:[%s757 + $0x120] sm:$0xff]
                  %800 = vst [vmem:[%s758 + $0xa0] sm:$0xff] %v799
                  %v801 = vld [vmem:[%s757 + $0x128] sm:$0xff]
                  %802 = vst [vmem:[%s758 + $0xa8] sm:$0xff] %v801
                  %v803 = vld [vmem:[%s757 + $0x130] sm:$0xff]
                  %804 = vst [vmem:[%s758 + $0xb0] sm:$0xff] %v803
                  %v805 = vld [vmem:[%s757 + $0x138] sm:$0xff]
                  %806 = vst [vmem:[%s758 + $0xb8] sm:$0xff] %v805
                  %v807 = vld [vmem:[%s757 + $0x140] sm:$0xff]
                  %808 = vst [vmem:[%s758 + $0xc0] sm:$0xff] %v807
                  %v809 = vld [vmem:[%s757 + $0x148] sm:$0xff]
                  %810 = vst [vmem:[%s758 + $0xc8] sm:$0xff] %v809
                  %v811 = vld [vmem:[%s757 + $0x150] sm:$0xff]
                  %812 = vst [vmem:[%s758 + $0xd0] sm:$0xff] %v811
                  %v813 = vld [vmem:[%s757 + $0x158] sm:$0xff]
                  %814 = vst [vmem:[%s758 + $0xd8] sm:$0xff] %v813
                  %v815 = vld [vmem:[%s757 + $0x160] sm:$0xff]
                  %816 = vst [vmem:[%s758 + $0xe0] sm:$0xff] %v815
                  %v817 = vld [vmem:[%s757 + $0x168] sm:$0xff]
                  %818 = vst [vmem:[%s758 + $0xe8] sm:$0xff] %v817
                  %v819 = vld [vmem:[%s757 + $0x170] sm:$0xff]
                  %820 = vst [vmem:[%s758 + $0xf0] sm:$0xff] %v819
                  %v821 = vld [vmem:[%s757 + $0x178] sm:$0xff]
                  %822 = vst [vmem:[%s758 + $0xf8] sm:$0xff] %v821
                  %v823 = vld [vmem:[%s757 + $0x200] sm:$0xff]
                  %824 = vst [vmem:[%s758 + $0x100] sm:$0xff] %v823
                  %v825 = vld [vmem:[%s757 + $0x208] sm:$0xff]
                  %826 = vst [vmem:[%s758 + $0x108] sm:$0xff] %v825
                  %v827 = vld [vmem:[%s757 + $0x210] sm:$0xff]
                  %828 = vst [vmem:[%s758 + $0x110] sm:$0xff] %v827
                  %v829 = vld [vmem:[%s757 + $0x218] sm:$0xff]
                  %830 = vst [vmem:[%s758 + $0x118] sm:$0xff] %v829
                  %v831 = vld [vmem:[%s757 + $0x220] sm:$0xff]
                  %832 = vst [vmem:[%s758 + $0x120] sm:$0xff] %v831
                  %v833 = vld [vmem:[%s757 + $0x228] sm:$0xff]
                  %834 = vst [vmem:[%s758 + $0x128] sm:$0xff] %v833
                  %v835 = vld [vmem:[%s757 + $0x230] sm:$0xff]
                  %836 = vst [vmem:[%s758 + $0x130] sm:$0xff] %v835
                  %v837 = vld [vmem:[%s757 + $0x238] sm:$0xff]
                  %838 = vst [vmem:[%s758 + $0x138] sm:$0xff] %v837
                  %v839 = vld [vmem:[%s757 + $0x240] sm:$0xff]
                  %840 = vst [vmem:[%s758 + $0x140] sm:$0xff] %v839
                  %v841 = vld [vmem:[%s757 + $0x248] sm:$0xff]
                  %842 = vst [vmem:[%s758 + $0x148] sm:$0xff] %v841
                  %v843 = vld [vmem:[%s757 + $0x250] sm:$0xff]
                  %844 = vst [vmem:[%s758 + $0x150] sm:$0xff] %v843
                  %v845 = vld [vmem:[%s757 + $0x258] sm:$0xff]
                  %846 = vst [vmem:[%s758 + $0x158] sm:$0xff] %v845
                  %v847 = vld [vmem:[%s757 + $0x260] sm:$0xff]
                  %848 = vst [vmem:[%s758 + $0x160] sm:$0xff] %v847
                  %v849 = vld [vmem:[%s757 + $0x268] sm:$0xff]
                  %850 = vst [vmem:[%s758 + $0x168] sm:$0xff] %v849
                  %v851 = vld [vmem:[%s757 + $0x270] sm:$0xff]
                  %852 = vst [vmem:[%s758 + $0x170] sm:$0xff] %v851
                  %v853 = vld [vmem:[%s757 + $0x278] sm:$0xff]
                  %854 = vst [vmem:[%s758 + $0x178] sm:$0xff] %v853
                  %v855 = vld [vmem:[%s757 + $0x300] sm:$0xff]
                  %856 = vst [vmem:[%s758 + $0x180] sm:$0xff] %v855
                  %v857 = vld [vmem:[%s757 + $0x308] sm:$0xff]
                  %858 = vst [vmem:[%s758 + $0x188] sm:$0xff] %v857
                  %v859 = vld [vmem:[%s757 + $0x310] sm:$0xff]
                  %860 = vst [vmem:[%s758 + $0x190] sm:$0xff] %v859
                  %v861 = vld [vmem:[%s757 + $0x318] sm:$0xff]
                  %862 = vst [vmem:[%s758 + $0x198] sm:$0xff] %v861
                  %v863 = vld [vmem:[%s757 + $0x320] sm:$0xff]
                  %864 = vst [vmem:[%s758 + $0x1a0] sm:$0xff] %v863
                  %v865 = vld [vmem:[%s757 + $0x328] sm:$0xff]
                  %866 = vst [vmem:[%s758 + $0x1a8] sm:$0xff] %v865
                  %v867 = vld [vmem:[%s757 + $0x330] sm:$0xff]
                  %868 = vst [vmem:[%s758 + $0x1b0] sm:$0xff] %v867
                  %v869 = vld [vmem:[%s757 + $0x338] sm:$0xff]
                  %870 = vst [vmem:[%s758 + $0x1b8] sm:$0xff] %v869
                  %v871 = vld [vmem:[%s757 + $0x340] sm:$0xff]
                  %872 = vst [vmem:[%s758 + $0x1c0] sm:$0xff] %v871
                  %v873 = vld [vmem:[%s757 + $0x348] sm:$0xff]
                  %874 = vst [vmem:[%s758 + $0x1c8] sm:$0xff] %v873
                  %v875 = vld [vmem:[%s757 + $0x350] sm:$0xff]
                  %876 = vst [vmem:[%s758 + $0x1d0] sm:$0xff] %v875
                  %v877 = vld [vmem:[%s757 + $0x358] sm:$0xff]
                  %878 = vst [vmem:[%s758 + $0x1d8] sm:$0xff] %v877
                  %v879 = vld [vmem:[%s757 + $0x360] sm:$0xff]
                  %880 = vst [vmem:[%s758 + $0x1e0] sm:$0xff] %v879
                  %v881 = vld [vmem:[%s757 + $0x368] sm:$0xff]
                  %882 = vst [vmem:[%s758 + $0x1e8] sm:$0xff] %v881
                  %v883 = vld [vmem:[%s757 + $0x370] sm:$0xff]
                  %884 = vst [vmem:[%s758 + $0x1f0] sm:$0xff] %v883
                  %v885 = vld [vmem:[%s757 + $0x378] sm:$0xff]
                  %886 = vst [vmem:[%s758 + $0x1f8] sm:$0xff] %v885
                  %v887 = vld [vmem:[%s757 + $0x400] sm:$0xff]
                  %888 = vst [vmem:[%s758 + $0x200] sm:$0xff] %v887
                  %v889 = vld [vmem:[%s757 + $0x408] sm:$0xff]
                  %890 = vst [vmem:[%s758 + $0x208] sm:$0xff] %v889
                  %v891 = vld [vmem:[%s757 + $0x410] sm:$0xff]
                  %892 = vst [vmem:[%s758 + $0x210] sm:$0xff] %v891
                  %v893 = vld [vmem:[%s757 + $0x418] sm:$0xff]
                  %894 = vst [vmem:[%s758 + $0x218] sm:$0xff] %v893
                  %v895 = vld [vmem:[%s757 + $0x420] sm:$0xff]
                  %896 = vst [vmem:[%s758 + $0x220] sm:$0xff] %v895
                  %v897 = vld [vmem:[%s757 + $0x428] sm:$0xff]
                  %898 = vst [vmem:[%s758 + $0x228] sm:$0xff] %v897
                  %v899 = vld [vmem:[%s757 + $0x430] sm:$0xff]
                  %900 = vst [vmem:[%s758 + $0x230] sm:$0xff] %v899
                  %v901 = vld [vmem:[%s757 + $0x438] sm:$0xff]
                  %902 = vst [vmem:[%s758 + $0x238] sm:$0xff] %v901
                  %v903 = vld [vmem:[%s757 + $0x440] sm:$0xff]
                  %904 = vst [vmem:[%s758 + $0x240] sm:$0xff] %v903
                  %v905 = vld [vmem:[%s757 + $0x448] sm:$0xff]
                  %906 = vst [vmem:[%s758 + $0x248] sm:$0xff] %v905
                  %v907 = vld [vmem:[%s757 + $0x450] sm:$0xff]
                  %908 = vst [vmem:[%s758 + $0x250] sm:$0xff] %v907
                  %v909 = vld [vmem:[%s757 + $0x458] sm:$0xff]
                  %910 = vst [vmem:[%s758 + $0x258] sm:$0xff] %v909
                  %v911 = vld [vmem:[%s757 + $0x460] sm:$0xff]
                  %912 = vst [vmem:[%s758 + $0x260] sm:$0xff] %v911
                  %v913 = vld [vmem:[%s757 + $0x468] sm:$0xff]
                  %914 = vst [vmem:[%s758 + $0x268] sm:$0xff] %v913
                  %v915 = vld [vmem:[%s757 + $0x470] sm:$0xff]
                  %916 = vst [vmem:[%s758 + $0x270] sm:$0xff] %v915
                  %v917 = vld [vmem:[%s757 + $0x478] sm:$0xff]
                  %918 = vst [vmem:[%s758 + $0x278] sm:$0xff] %v917
                  %v919 = vld [vmem:[%s757 + $0x500] sm:$0xff]
                  %920 = vst [vmem:[%s758 + $0x280] sm:$0xff] %v919
                  %v921 = vld [vmem:[%s757 + $0x508] sm:$0xff]
                  %922 = vst [vmem:[%s758 + $0x288] sm:$0xff] %v921
                  %v923 = vld [vmem:[%s757 + $0x510] sm:$0xff]
                  %924 = vst [vmem:[%s758 + $0x290] sm:$0xff] %v923
                  %v925 = vld [vmem:[%s757 + $0x518] sm:$0xff]
                  %926 = vst [vmem:[%s758 + $0x298] sm:$0xff] %v925
                  %v927 = vld [vmem:[%s757 + $0x520] sm:$0xff]
                  %928 = vst [vmem:[%s758 + $0x2a0] sm:$0xff] %v927
                  %v929 = vld [vmem:[%s757 + $0x528] sm:$0xff]
                  %930 = vst [vmem:[%s758 + $0x2a8] sm:$0xff] %v929
                  %v931 = vld [vmem:[%s757 + $0x530] sm:$0xff]
                  %932 = vst [vmem:[%s758 + $0x2b0] sm:$0xff] %v931
                  %v933 = vld [vmem:[%s757 + $0x538] sm:$0xff]
                  %934 = vst [vmem:[%s758 + $0x2b8] sm:$0xff] %v933
                  %v935 = vld [vmem:[%s757 + $0x540] sm:$0xff]
                  %936 = vst [vmem:[%s758 + $0x2c0] sm:$0xff] %v935
                  %v937 = vld [vmem:[%s757 + $0x548] sm:$0xff]
                  %938 = vst [vmem:[%s758 + $0x2c8] sm:$0xff] %v937
                  %v939 = vld [vmem:[%s757 + $0x550] sm:$0xff]
                  %940 = vst [vmem:[%s758 + $0x2d0] sm:$0xff] %v939
                  %v941 = vld [vmem:[%s757 + $0x558] sm:$0xff]
                  %942 = vst [vmem:[%s758 + $0x2d8] sm:$0xff] %v941
                  %v943 = vld [vmem:[%s757 + $0x560] sm:$0xff]
                  %944 = vst [vmem:[%s758 + $0x2e0] sm:$0xff] %v943
                  %v945 = vld [vmem:[%s757 + $0x568] sm:$0xff]
                  %946 = vst [vmem:[%s758 + $0x2e8] sm:$0xff] %v945
                  %v947 = vld [vmem:[%s757 + $0x570] sm:$0xff]
                  %948 = vst [vmem:[%s758 + $0x2f0] sm:$0xff] %v947
                  %v949 = vld [vmem:[%s757 + $0x578] sm:$0xff]
                  %950 = vst [vmem:[%s758 + $0x2f8] sm:$0xff] %v949
                  %v951 = vld [vmem:[%s757 + $0x600] sm:$0xff]
                  %952 = vst [vmem:[%s758 + $0x300] sm:$0xff] %v951
                  %v953 = vld [vmem:[%s757 + $0x608] sm:$0xff]
                  %954 = vst [vmem:[%s758 + $0x308] sm:$0xff] %v953
                  %v955 = vld [vmem:[%s757 + $0x610] sm:$0xff]
                  %956 = vst [vmem:[%s758 + $0x310] sm:$0xff] %v955
                  %v957 = vld [vmem:[%s757 + $0x618] sm:$0xff]
                  %958 = vst [vmem:[%s758 + $0x318] sm:$0xff] %v957
                  %v959 = vld [vmem:[%s757 + $0x620] sm:$0xff]
                  %960 = vst [vmem:[%s758 + $0x320] sm:$0xff] %v959
                  %v961 = vld [vmem:[%s757 + $0x628] sm:$0xff]
                  %962 = vst [vmem:[%s758 + $0x328] sm:$0xff] %v961
                  %v963 = vld [vmem:[%s757 + $0x630] sm:$0xff]
                  %964 = vst [vmem:[%s758 + $0x330] sm:$0xff] %v963
                  %v965 = vld [vmem:[%s757 + $0x638] sm:$0xff]
                  %966 = vst [vmem:[%s758 + $0x338] sm:$0xff] %v965
                  %v967 = vld [vmem:[%s757 + $0x640] sm:$0xff]
                  %968 = vst [vmem:[%s758 + $0x340] sm:$0xff] %v967
                  %v969 = vld [vmem:[%s757 + $0x648] sm:$0xff]
                  %970 = vst [vmem:[%s758 + $0x348] sm:$0xff] %v969
                  %v971 = vld [vmem:[%s757 + $0x650] sm:$0xff]
                  %972 = vst [vmem:[%s758 + $0x350] sm:$0xff] %v971
                  %v973 = vld [vmem:[%s757 + $0x658] sm:$0xff]
                  %974 = vst [vmem:[%s758 + $0x358] sm:$0xff] %v973
                  %v975 = vld [vmem:[%s757 + $0x660] sm:$0xff]
                  %976 = vst [vmem:[%s758 + $0x360] sm:$0xff] %v975
                  %v977 = vld [vmem:[%s757 + $0x668] sm:$0xff]
                  %978 = vst [vmem:[%s758 + $0x368] sm:$0xff] %v977
                  %v979 = vld [vmem:[%s757 + $0x670] sm:$0xff]
                  %980 = vst [vmem:[%s758 + $0x370] sm:$0xff] %v979
                  %v981 = vld [vmem:[%s757 + $0x678] sm:$0xff]
                  %982 = vst [vmem:[%s758 + $0x378] sm:$0xff] %v981
                  %v983 = vld [vmem:[%s757 + $0x700] sm:$0xff]
                  %984 = vst [vmem:[%s758 + $0x380] sm:$0xff] %v983
                  %v985 = vld [vmem:[%s757 + $0x708] sm:$0xff]
                  %986 = vst [vmem:[%s758 + $0x388] sm:$0xff] %v985
                  %v987 = vld [vmem:[%s757 + $0x710] sm:$0xff]
                  %988 = vst [vmem:[%s758 + $0x390] sm:$0xff] %v987
                  %v989 = vld [vmem:[%s757 + $0x718] sm:$0xff]
                  %990 = vst [vmem:[%s758 + $0x398] sm:$0xff] %v989
                  %v991 = vld [vmem:[%s757 + $0x720] sm:$0xff]
                  %992 = vst [vmem:[%s758 + $0x3a0] sm:$0xff] %v991
                  %v993 = vld [vmem:[%s757 + $0x728] sm:$0xff]
                  %994 = vst [vmem:[%s758 + $0x3a8] sm:$0xff] %v993
                  %v995 = vld [vmem:[%s757 + $0x730] sm:$0xff]
                  %996 = vst [vmem:[%s758 + $0x3b0] sm:$0xff] %v995
                  %v997 = vld [vmem:[%s757 + $0x738] sm:$0xff]
                  %998 = vst [vmem:[%s758 + $0x3b8] sm:$0xff] %v997
                  %v999 = vld [vmem:[%s757 + $0x740] sm:$0xff]
                  %1000 = vst [vmem:[%s758 + $0x3c0] sm:$0xff] %v999
                  %v1001 = vld [vmem:[%s757 + $0x748] sm:$0xff]
                  %1002 = vst [vmem:[%s758 + $0x3c8] sm:$0xff] %v1001
                  %v1003 = vld [vmem:[%s757 + $0x750] sm:$0xff]
                  %1004 = vst [vmem:[%s758 + $0x3d0] sm:$0xff] %v1003
                  %v1005 = vld [vmem:[%s757 + $0x758] sm:$0xff]
                  %1006 = vst [vmem:[%s758 + $0x3d8] sm:$0xff] %v1005
                  %v1007 = vld [vmem:[%s757 + $0x760] sm:$0xff]
                  %1008 = vst [vmem:[%s758 + $0x3e0] sm:$0xff] %v1007
                  %v1009 = vld [vmem:[%s757 + $0x768] sm:$0xff]
                  %1010 = vst [vmem:[%s758 + $0x3e8] sm:$0xff] %v1009
                  %v1011 = vld [vmem:[%s757 + $0x770] sm:$0xff]
                  %1012 = vst [vmem:[%s758 + $0x3f0] sm:$0xff] %v1011
                  %v1013 = vld [vmem:[%s757 + $0x778] sm:$0xff]
                  %1014 = vst [vmem:[%s758 + $0x3f8] sm:$0xff] %v1013
                  %v1015 = vld [vmem:[%s757 + $0x800] sm:$0xff]
                  %1016 = vst [vmem:[%s758 + $0x400] sm:$0xff] %v1015
                  %v1017 = vld [vmem:[%s757 + $0x808] sm:$0xff]
                  %1018 = vst [vmem:[%s758 + $0x408] sm:$0xff] %v1017
                  %v1019 = vld [vmem:[%s757 + $0x810] sm:$0xff]
                  %1020 = vst [vmem:[%s758 + $0x410] sm:$0xff] %v1019
                  %v1021 = vld [vmem:[%s757 + $0x818] sm:$0xff]
                  %1022 = vst [vmem:[%s758 + $0x418] sm:$0xff] %v1021
                  %v1023 = vld [vmem:[%s757 + $0x820] sm:$0xff]
                  %1024 = vst [vmem:[%s758 + $0x420] sm:$0xff] %v1023
                  %v1025 = vld [vmem:[%s757 + $0x828] sm:$0xff]
                  %1026 = vst [vmem:[%s758 + $0x428] sm:$0xff] %v1025
                  %v1027 = vld [vmem:[%s757 + $0x830] sm:$0xff]
                  %1028 = vst [vmem:[%s758 + $0x430] sm:$0xff] %v1027
                  %v1029 = vld [vmem:[%s757 + $0x838] sm:$0xff]
                  %1030 = vst [vmem:[%s758 + $0x438] sm:$0xff] %v1029
                  %v1031 = vld [vmem:[%s757 + $0x840] sm:$0xff]
                  %1032 = vst [vmem:[%s758 + $0x440] sm:$0xff] %v1031
                  %v1033 = vld [vmem:[%s757 + $0x848] sm:$0xff]
                  %1034 = vst [vmem:[%s758 + $0x448] sm:$0xff] %v1033
                  %v1035 = vld [vmem:[%s757 + $0x850] sm:$0xff]
                  %1036 = vst [vmem:[%s758 + $0x450] sm:$0xff] %v1035
                  %v1037 = vld [vmem:[%s757 + $0x858] sm:$0xff]
                  %1038 = vst [vmem:[%s758 + $0x458] sm:$0xff] %v1037
                  %v1039 = vld [vmem:[%s757 + $0x860] sm:$0xff]
                  %1040 = vst [vmem:[%s758 + $0x460] sm:$0xff] %v1039
                  %v1041 = vld [vmem:[%s757 + $0x868] sm:$0xff]
                  %1042 = vst [vmem:[%s758 + $0x468] sm:$0xff] %v1041
                  %v1043 = vld [vmem:[%s757 + $0x870] sm:$0xff]
                  %1044 = vst [vmem:[%s758 + $0x470] sm:$0xff] %v1043
                  %v1045 = vld [vmem:[%s757 + $0x878] sm:$0xff]
                  %1046 = vst [vmem:[%s758 + $0x478] sm:$0xff] %v1045
                  %v1047 = vld [vmem:[%s757 + $0x900] sm:$0xff]
                  %1048 = vst [vmem:[%s758 + $0x480] sm:$0xff] %v1047
                  %v1049 = vld [vmem:[%s757 + $0x908] sm:$0xff]
                  %1050 = vst [vmem:[%s758 + $0x488] sm:$0xff] %v1049
                  %v1051 = vld [vmem:[%s757 + $0x910] sm:$0xff]
                  %1052 = vst [vmem:[%s758 + $0x490] sm:$0xff] %v1051
                  %v1053 = vld [vmem:[%s757 + $0x918] sm:$0xff]
                  %1054 = vst [vmem:[%s758 + $0x498] sm:$0xff] %v1053
                  %v1055 = vld [vmem:[%s757 + $0x920] sm:$0xff]
                  %1056 = vst [vmem:[%s758 + $0x4a0] sm:$0xff] %v1055
                  %v1057 = vld [vmem:[%s757 + $0x928] sm:$0xff]
                  %1058 = vst [vmem:[%s758 + $0x4a8] sm:$0xff] %v1057
                  %v1059 = vld [vmem:[%s757 + $0x930] sm:$0xff]
                  %1060 = vst [vmem:[%s758 + $0x4b0] sm:$0xff] %v1059
                  %v1061 = vld [vmem:[%s757 + $0x938] sm:$0xff]
                  %1062 = vst [vmem:[%s758 + $0x4b8] sm:$0xff] %v1061
                  %v1063 = vld [vmem:[%s757 + $0x940] sm:$0xff]
                  %1064 = vst [vmem:[%s758 + $0x4c0] sm:$0xff] %v1063
                  %v1065 = vld [vmem:[%s757 + $0x948] sm:$0xff]
                  %1066 = vst [vmem:[%s758 + $0x4c8] sm:$0xff] %v1065
                  %v1067 = vld [vmem:[%s757 + $0x950] sm:$0xff]
                  %1068 = vst [vmem:[%s758 + $0x4d0] sm:$0xff] %v1067
                  %v1069 = vld [vmem:[%s757 + $0x958] sm:$0xff]
                  %1070 = vst [vmem:[%s758 + $0x4d8] sm:$0xff] %v1069
                  %v1071 = vld [vmem:[%s757 + $0x960] sm:$0xff]
                  %1072 = vst [vmem:[%s758 + $0x4e0] sm:$0xff] %v1071
                  %v1073 = vld [vmem:[%s757 + $0x968] sm:$0xff]
                  %1074 = vst [vmem:[%s758 + $0x4e8] sm:$0xff] %v1073
                  %v1075 = vld [vmem:[%s757 + $0x970] sm:$0xff]
                  %1076 = vst [vmem:[%s758 + $0x4f0] sm:$0xff] %v1075
                  %v1077 = vld [vmem:[%s757 + $0x978] sm:$0xff]
                  %1078 = vst [vmem:[%s758 + $0x4f8] sm:$0xff] %v1077
                  %v1079 = vld [vmem:[%s757 + $0xa00] sm:$0xff]
                  %1080 = vst [vmem:[%s758 + $0x500] sm:$0xff] %v1079
                  %v1081 = vld [vmem:[%s757 + $0xa08] sm:$0xff]
                  %1082 = vst [vmem:[%s758 + $0x508] sm:$0xff] %v1081
                  %v1083 = vld [vmem:[%s757 + $0xa10] sm:$0xff]
                  %1084 = vst [vmem:[%s758 + $0x510] sm:$0xff] %v1083
                  %v1085 = vld [vmem:[%s757 + $0xa18] sm:$0xff]
                  %1086 = vst [vmem:[%s758 + $0x518] sm:$0xff] %v1085
                  %v1087 = vld [vmem:[%s757 + $0xa20] sm:$0xff]
                  %1088 = vst [vmem:[%s758 + $0x520] sm:$0xff] %v1087
                  %v1089 = vld [vmem:[%s757 + $0xa28] sm:$0xff]
                  %1090 = vst [vmem:[%s758 + $0x528] sm:$0xff] %v1089
                  %v1091 = vld [vmem:[%s757 + $0xa30] sm:$0xff]
                  %1092 = vst [vmem:[%s758 + $0x530] sm:$0xff] %v1091
                  %v1093 = vld [vmem:[%s757 + $0xa38] sm:$0xff]
                  %1094 = vst [vmem:[%s758 + $0x538] sm:$0xff] %v1093
                  %v1095 = vld [vmem:[%s757 + $0xa40] sm:$0xff]
                  %1096 = vst [vmem:[%s758 + $0x540] sm:$0xff] %v1095
                  %v1097 = vld [vmem:[%s757 + $0xa48] sm:$0xff]
                  %1098 = vst [vmem:[%s758 + $0x548] sm:$0xff] %v1097
                  %v1099 = vld [vmem:[%s757 + $0xa50] sm:$0xff]
                  %1100 = vst [vmem:[%s758 + $0x550] sm:$0xff] %v1099
                  %v1101 = vld [vmem:[%s757 + $0xa58] sm:$0xff]
                  %1102 = vst [vmem:[%s758 + $0x558] sm:$0xff] %v1101
                  %v1103 = vld [vmem:[%s757 + $0xa60] sm:$0xff]
                  %1104 = vst [vmem:[%s758 + $0x560] sm:$0xff] %v1103
                  %v1105 = vld [vmem:[%s757 + $0xa68] sm:$0xff]
                  %1106 = vst [vmem:[%s758 + $0x568] sm:$0xff] %v1105
                  %v1107 = vld [vmem:[%s757 + $0xa70] sm:$0xff]
                  %1108 = vst [vmem:[%s758 + $0x570] sm:$0xff] %v1107
                  %v1109 = vld [vmem:[%s757 + $0xa78] sm:$0xff]
                  %1110 = vst [vmem:[%s758 + $0x578] sm:$0xff] %v1109
                  %v1111 = vld [vmem:[%s757 + $0xb00] sm:$0xff]
                  %1112 = vst [vmem:[%s758 + $0x580] sm:$0xff] %v1111
                  %v1113 = vld [vmem:[%s757 + $0xb08] sm:$0xff]
                  %1114 = vst [vmem:[%s758 + $0x588] sm:$0xff] %v1113
                  %v1115 = vld [vmem:[%s757 + $0xb10] sm:$0xff]
                  %1116 = vst [vmem:[%s758 + $0x590] sm:$0xff] %v1115
                  %v1117 = vld [vmem:[%s757 + $0xb18] sm:$0xff]
                  %1118 = vst [vmem:[%s758 + $0x598] sm:$0xff] %v1117
                  %v1119 = vld [vmem:[%s757 + $0xb20] sm:$0xff]
                  %1120 = vst [vmem:[%s758 + $0x5a0] sm:$0xff] %v1119
                  %v1121 = vld [vmem:[%s757 + $0xb28] sm:$0xff]
                  %1122 = vst [vmem:[%s758 + $0x5a8] sm:$0xff] %v1121
                  %v1123 = vld [vmem:[%s757 + $0xb30] sm:$0xff]
                  %1124 = vst [vmem:[%s758 + $0x5b0] sm:$0xff] %v1123
                  %v1125 = vld [vmem:[%s757 + $0xb38] sm:$0xff]
                  %1126 = vst [vmem:[%s758 + $0x5b8] sm:$0xff] %v1125
                  %v1127 = vld [vmem:[%s757 + $0xb40] sm:$0xff]
                  %1128 = vst [vmem:[%s758 + $0x5c0] sm:$0xff] %v1127
                  %v1129 = vld [vmem:[%s757 + $0xb48] sm:$0xff]
                  %1130 = vst [vmem:[%s758 + $0x5c8] sm:$0xff] %v1129
                  %v1131 = vld [vmem:[%s757 + $0xb50] sm:$0xff]
                  %1132 = vst [vmem:[%s758 + $0x5d0] sm:$0xff] %v1131
                  %v1133 = vld [vmem:[%s757 + $0xb58] sm:$0xff]
                  %1134 = vst [vmem:[%s758 + $0x5d8] sm:$0xff] %v1133
                  %v1135 = vld [vmem:[%s757 + $0xb60] sm:$0xff]
                  %1136 = vst [vmem:[%s758 + $0x5e0] sm:$0xff] %v1135
                  %v1137 = vld [vmem:[%s757 + $0xb68] sm:$0xff]
                  %1138 = vst [vmem:[%s758 + $0x5e8] sm:$0xff] %v1137
                  %v1139 = vld [vmem:[%s757 + $0xb70] sm:$0xff]
                  %1140 = vst [vmem:[%s758 + $0x5f0] sm:$0xff] %v1139
                  %v1141 = vld [vmem:[%s757 + $0xb78] sm:$0xff]
                  %1142 = vst [vmem:[%s758 + $0x5f8] sm:$0xff] %v1141
                  %v1143 = vld [vmem:[%s757 + $0xc00] sm:$0xff]
                  %1144 = vst [vmem:[%s758 + $0x600] sm:$0xff] %v1143
                  %v1145 = vld [vmem:[%s757 + $0xc08] sm:$0xff]
                  %1146 = vst [vmem:[%s758 + $0x608] sm:$0xff] %v1145
                  %v1147 = vld [vmem:[%s757 + $0xc10] sm:$0xff]
                  %1148 = vst [vmem:[%s758 + $0x610] sm:$0xff] %v1147
                  %v1149 = vld [vmem:[%s757 + $0xc18] sm:$0xff]
                  %1150 = vst [vmem:[%s758 + $0x618] sm:$0xff] %v1149
                  %v1151 = vld [vmem:[%s757 + $0xc20] sm:$0xff]
                  %1152 = vst [vmem:[%s758 + $0x620] sm:$0xff] %v1151
                  %v1153 = vld [vmem:[%s757 + $0xc28] sm:$0xff]
                  %1154 = vst [vmem:[%s758 + $0x628] sm:$0xff] %v1153
                  %v1155 = vld [vmem:[%s757 + $0xc30] sm:$0xff]
                  %1156 = vst [vmem:[%s758 + $0x630] sm:$0xff] %v1155
                  %v1157 = vld [vmem:[%s757 + $0xc38] sm:$0xff]
                  %1158 = vst [vmem:[%s758 + $0x638] sm:$0xff] %v1157
                  %v1159 = vld [vmem:[%s757 + $0xc40] sm:$0xff]
                  %1160 = vst [vmem:[%s758 + $0x640] sm:$0xff] %v1159
                  %v1161 = vld [vmem:[%s757 + $0xc48] sm:$0xff]
                  %1162 = vst [vmem:[%s758 + $0x648] sm:$0xff] %v1161
                  %v1163 = vld [vmem:[%s757 + $0xc50] sm:$0xff]
                  %1164 = vst [vmem:[%s758 + $0x650] sm:$0xff] %v1163
                  %v1165 = vld [vmem:[%s757 + $0xc58] sm:$0xff]
                  %1166 = vst [vmem:[%s758 + $0x658] sm:$0xff] %v1165
                  %v1167 = vld [vmem:[%s757 + $0xc60] sm:$0xff]
                  %1168 = vst [vmem:[%s758 + $0x660] sm:$0xff] %v1167
                  %v1169 = vld [vmem:[%s757 + $0xc68] sm:$0xff]
                  %1170 = vst [vmem:[%s758 + $0x668] sm:$0xff] %v1169
                  %v1171 = vld [vmem:[%s757 + $0xc70] sm:$0xff]
                  %1172 = vst [vmem:[%s758 + $0x670] sm:$0xff] %v1171
                  %v1173 = vld [vmem:[%s757 + $0xc78] sm:$0xff]
                  %1174 = vst [vmem:[%s758 + $0x678] sm:$0xff] %v1173
                  %v1175 = vld [vmem:[%s757 + $0xd00] sm:$0xff]
                  %1176 = vst [vmem:[%s758 + $0x680] sm:$0xff] %v1175
                  %v1177 = vld [vmem:[%s757 + $0xd08] sm:$0xff]
                  %1178 = vst [vmem:[%s758 + $0x688] sm:$0xff] %v1177
                  %v1179 = vld [vmem:[%s757 + $0xd10] sm:$0xff]
                  %1180 = vst [vmem:[%s758 + $0x690] sm:$0xff] %v1179
                  %v1181 = vld [vmem:[%s757 + $0xd18] sm:$0xff]
                  %1182 = vst [vmem:[%s758 + $0x698] sm:$0xff] %v1181
                  %v1183 = vld [vmem:[%s757 + $0xd20] sm:$0xff]
                  %1184 = vst [vmem:[%s758 + $0x6a0] sm:$0xff] %v1183
                  %v1185 = vld [vmem:[%s757 + $0xd28] sm:$0xff]
                  %1186 = vst [vmem:[%s758 + $0x6a8] sm:$0xff] %v1185
                  %v1187 = vld [vmem:[%s757 + $0xd30] sm:$0xff]
                  %1188 = vst [vmem:[%s758 + $0x6b0] sm:$0xff] %v1187
                  %v1189 = vld [vmem:[%s757 + $0xd38] sm:$0xff]
                  %1190 = vst [vmem:[%s758 + $0x6b8] sm:$0xff] %v1189
                  %v1191 = vld [vmem:[%s757 + $0xd40] sm:$0xff]
                  %1192 = vst [vmem:[%s758 + $0x6c0] sm:$0xff] %v1191
                  %v1193 = vld [vmem:[%s757 + $0xd48] sm:$0xff]
                  %1194 = vst [vmem:[%s758 + $0x6c8] sm:$0xff] %v1193
                  %v1195 = vld [vmem:[%s757 + $0xd50] sm:$0xff]
                  %1196 = vst [vmem:[%s758 + $0x6d0] sm:$0xff] %v1195
                  %v1197 = vld [vmem:[%s757 + $0xd58] sm:$0xff]
                  %1198 = vst [vmem:[%s758 + $0x6d8] sm:$0xff] %v1197
                  %v1199 = vld [vmem:[%s757 + $0xd60] sm:$0xff]
                  %1200 = vst [vmem:[%s758 + $0x6e0] sm:$0xff] %v1199
                  %v1201 = vld [vmem:[%s757 + $0xd68] sm:$0xff]
                  %1202 = vst [vmem:[%s758 + $0x6e8] sm:$0xff] %v1201
                  %v1203 = vld [vmem:[%s757 + $0xd70] sm:$0xff]
                  %1204 = vst [vmem:[%s758 + $0x6f0] sm:$0xff] %v1203
                  %v1205 = vld [vmem:[%s757 + $0xd78] sm:$0xff]
                  %1206 = vst [vmem:[%s758 + $0x6f8] sm:$0xff] %v1205
                  %v1207 = vld [vmem:[%s757 + $0xe00] sm:$0xff]
                  %1208 = vst [vmem:[%s758 + $0x700] sm:$0xff] %v1207
                  %v1209 = vld [vmem:[%s757 + $0xe08] sm:$0xff]
                  %1210 = vst [vmem:[%s758 + $0x708] sm:$0xff] %v1209
                  %v1211 = vld [vmem:[%s757 + $0xe10] sm:$0xff]
                  %1212 = vst [vmem:[%s758 + $0x710] sm:$0xff] %v1211
                  %v1213 = vld [vmem:[%s757 + $0xe18] sm:$0xff]
                  %1214 = vst [vmem:[%s758 + $0x718] sm:$0xff] %v1213
                  %v1215 = vld [vmem:[%s757 + $0xe20] sm:$0xff]
                  %1216 = vst [vmem:[%s758 + $0x720] sm:$0xff] %v1215
                  %v1217 = vld [vmem:[%s757 + $0xe28] sm:$0xff]
                  %1218 = vst [vmem:[%s758 + $0x728] sm:$0xff] %v1217
                  %v1219 = vld [vmem:[%s757 + $0xe30] sm:$0xff]
                  %1220 = vst [vmem:[%s758 + $0x730] sm:$0xff] %v1219
                  %v1221 = vld [vmem:[%s757 + $0xe38] sm:$0xff]
                  %1222 = vst [vmem:[%s758 + $0x738] sm:$0xff] %v1221
                  %v1223 = vld [vmem:[%s757 + $0xe40] sm:$0xff]
                  %1224 = vst [vmem:[%s758 + $0x740] sm:$0xff] %v1223
                  %v1225 = vld [vmem:[%s757 + $0xe48] sm:$0xff]
                  %1226 = vst [vmem:[%s758 + $0x748] sm:$0xff] %v1225
                  %v1227 = vld [vmem:[%s757 + $0xe50] sm:$0xff]
                  %1228 = vst [vmem:[%s758 + $0x750] sm:$0xff] %v1227
                  %v1229 = vld [vmem:[%s757 + $0xe58] sm:$0xff]
                  %1230 = vst [vmem:[%s758 + $0x758] sm:$0xff] %v1229
                  %v1231 = vld [vmem:[%s757 + $0xe60] sm:$0xff]
                  %1232 = vst [vmem:[%s758 + $0x760] sm:$0xff] %v1231
                  %v1233 = vld [vmem:[%s757 + $0xe68] sm:$0xff]
                  %1234 = vst [vmem:[%s758 + $0x768] sm:$0xff] %v1233
                  %v1235 = vld [vmem:[%s757 + $0xe70] sm:$0xff]
                  %1236 = vst [vmem:[%s758 + $0x770] sm:$0xff] %v1235
                  %v1237 = vld [vmem:[%s757 + $0xe78] sm:$0xff]
                  %1238 = vst [vmem:[%s758 + $0x778] sm:$0xff] %v1237
                  %v1239 = vld [vmem:[%s757 + $0xf00] sm:$0xff]
                  %1240 = vst [vmem:[%s758 + $0x780] sm:$0xff] %v1239
                  %v1241 = vld [vmem:[%s757 + $0xf08] sm:$0xff]
                  %1242 = vst [vmem:[%s758 + $0x788] sm:$0xff] %v1241
                  %v1243 = vld [vmem:[%s757 + $0xf10] sm:$0xff]
                  %1244 = vst [vmem:[%s758 + $0x790] sm:$0xff] %v1243
                  %v1245 = vld [vmem:[%s757 + $0xf18] sm:$0xff]
                  %1246 = vst [vmem:[%s758 + $0x798] sm:$0xff] %v1245
                  %v1247 = vld [vmem:[%s757 + $0xf20] sm:$0xff]
                  %1248 = vst [vmem:[%s758 + $0x7a0] sm:$0xff] %v1247
                  %v1249 = vld [vmem:[%s757 + $0xf28] sm:$0xff]
                  %1250 = vst [vmem:[%s758 + $0x7a8] sm:$0xff] %v1249
                  %v1251 = vld [vmem:[%s757 + $0xf30] sm:$0xff]
                  %1252 = vst [vmem:[%s758 + $0x7b0] sm:$0xff] %v1251
                  %v1253 = vld [vmem:[%s757 + $0xf38] sm:$0xff]
                  %1254 = vst [vmem:[%s758 + $0x7b8] sm:$0xff] %v1253
                  %v1255 = vld [vmem:[%s757 + $0xf40] sm:$0xff]
                  %1256 = vst [vmem:[%s758 + $0x7c0] sm:$0xff] %v1255
                  %v1257 = vld [vmem:[%s757 + $0xf48] sm:$0xff]
                  %1258 = vst [vmem:[%s758 + $0x7c8] sm:$0xff] %v1257
                  %v1259 = vld [vmem:[%s757 + $0xf50] sm:$0xff]
                  %1260 = vst [vmem:[%s758 + $0x7d0] sm:$0xff] %v1259
                  %v1261 = vld [vmem:[%s757 + $0xf58] sm:$0xff]
                  %1262 = vst [vmem:[%s758 + $0x7d8] sm:$0xff] %v1261
                  %v1263 = vld [vmem:[%s757 + $0xf60] sm:$0xff]
                  %1264 = vst [vmem:[%s758 + $0x7e0] sm:$0xff] %v1263
                  %v1265 = vld [vmem:[%s757 + $0xf68] sm:$0xff]
                  %1266 = vst [vmem:[%s758 + $0x7e8] sm:$0xff] %v1265
                  %v1267 = vld [vmem:[%s757 + $0xf70] sm:$0xff]
                  %1268 = vst [vmem:[%s758 + $0x7f0] sm:$0xff] %v1267
                  %v1269 = vld [vmem:[%s757 + $0xf78] sm:$0xff]
                  %1270 = vst [vmem:[%s758 + $0x7f8] sm:$0xff] %v1269
                $region64: #{tpu_custom_call.1} parent=58 // loop_footer
                  %s756 = sadd.s32 1, %s752
                $region65: #{tpu_custom_call.1} parent=58 // loop_footer_branch
                  %751 = sbr.rel target = $region61
                $region66: #{tpu_custom_call.1} parent=58 // loop_exit
                  _
              $region59: #{tpu_custom_call.1} parent=43 // pred_fallthru
                _
              // Predicated region
              $region67: #{tpu_custom_call.1} parent=43 // pred_check
                _
              $region68: #{tpu_custom_call.1} parent=43 // pred_check_branch
                %1272 = sbr.rel target = $region70
              $region69: #{tpu_custom_call.1} parent=43 // pred_region
                _
              $region70: #{tpu_custom_call.1} parent=43 // pred_fallthru
                _
            $region44: #{tpu_custom_call.1} parent=39 // pred_fallthru
              _
            // Predicated region
            $region45: #{tpu_custom_call.1} parent=39 // pred_check
              _
            $region46: #{tpu_custom_call.1} parent=39 // pred_check_branch
              %226 = sbr.rel target = $region48
            $region47: #{tpu_custom_call.1} parent=39 // pred_region
              %s228 = ssub.s32 256, 1
              loop: start=0, step=1, limit=1
              $region49: #{tpu_custom_call.1} parent=47 // loop_pre_header
                _
              $region50: #{tpu_custom_call.1} parent=47 // loop_header
                %s230 = sphi 0, %s234
                %p231 = scmp.ge.s32.totalorder %s230, 1
                %s235 = sphi %s220, %s220
                %s236 = sphi %s214, %s214
              $region51: #{tpu_custom_call.1} parent=47 // loop_header_branch
                %233 = sbr.rel (%p231) target = $region55
              $region52: #{tpu_custom_call.1} parent=47 // loop_body
                %v237 = vld [vmem:[%s235] sm:%s228]
                %238 = vst [vmem:[%s236] sm:%s228] %v237
                %v239 = vld [vmem:[%s235 + $0x8] sm:%s228]
                %240 = vst [vmem:[%s236 + $0x8] sm:%s228] %v239
                %v241 = vld [vmem:[%s235 + $0x10] sm:%s228]
                %242 = vst [vmem:[%s236 + $0x10] sm:%s228] %v241
                %v243 = vld [vmem:[%s235 + $0x18] sm:%s228]
                %244 = vst [vmem:[%s236 + $0x18] sm:%s228] %v243
                %v245 = vld [vmem:[%s235 + $0x20] sm:%s228]
                %246 = vst [vmem:[%s236 + $0x20] sm:%s228] %v245
                %v247 = vld [vmem:[%s235 + $0x28] sm:%s228]
                %248 = vst [vmem:[%s236 + $0x28] sm:%s228] %v247
                %v249 = vld [vmem:[%s235 + $0x30] sm:%s228]
                %250 = vst [vmem:[%s236 + $0x30] sm:%s228] %v249
                %v251 = vld [vmem:[%s235 + $0x38] sm:%s228]
                %252 = vst [vmem:[%s236 + $0x38] sm:%s228] %v251
                %v253 = vld [vmem:[%s235 + $0x40] sm:%s228]
                %254 = vst [vmem:[%s236 + $0x40] sm:%s228] %v253
                %v255 = vld [vmem:[%s235 + $0x48] sm:%s228]
                %256 = vst [vmem:[%s236 + $0x48] sm:%s228] %v255
                %v257 = vld [vmem:[%s235 + $0x50] sm:%s228]
                %258 = vst [vmem:[%s236 + $0x50] sm:%s228] %v257
                %v259 = vld [vmem:[%s235 + $0x58] sm:%s228]
                %260 = vst [vmem:[%s236 + $0x58] sm:%s228] %v259
                %v261 = vld [vmem:[%s235 + $0x60] sm:%s228]
                %262 = vst [vmem:[%s236 + $0x60] sm:%s228] %v261
                %v263 = vld [vmem:[%s235 + $0x68] sm:%s228]
                %264 = vst [vmem:[%s236 + $0x68] sm:%s228] %v263
                %v265 = vld [vmem:[%s235 + $0x70] sm:%s228]
                %266 = vst [vmem:[%s236 + $0x70] sm:%s228] %v265
                %v267 = vld [vmem:[%s235 + $0x78] sm:%s228]
                %268 = vst [vmem:[%s236 + $0x78] sm:%s228] %v267
                %v269 = vld [vmem:[%s235 + $0x100] sm:%s228]
                %270 = vst [vmem:[%s236 + $0x80] sm:%s228] %v269
                %v271 = vld [vmem:[%s235 + $0x108] sm:%s228]
                %272 = vst [vmem:[%s236 + $0x88] sm:%s228] %v271
                %v273 = vld [vmem:[%s235 + $0x110] sm:%s228]
                %274 = vst [vmem:[%s236 + $0x90] sm:%s228] %v273
                %v275 = vld [vmem:[%s235 + $0x118] sm:%s228]
                %276 = vst [vmem:[%s236 + $0x98] sm:%s228] %v275
                %v277 = vld [vmem:[%s235 + $0x120] sm:%s228]
                %278 = vst [vmem:[%s236 + $0xa0] sm:%s228] %v277
                %v279 = vld [vmem:[%s235 + $0x128] sm:%s228]
                %280 = vst [vmem:[%s236 + $0xa8] sm:%s228] %v279
                %v281 = vld [vmem:[%s235 + $0x130] sm:%s228]
                %282 = vst [vmem:[%s236 + $0xb0] sm:%s228] %v281
                %v283 = vld [vmem:[%s235 + $0x138] sm:%s228]
                %284 = vst [vmem:[%s236 + $0xb8] sm:%s228] %v283
                %v285 = vld [vmem:[%s235 + $0x140] sm:%s228]
                %286 = vst [vmem:[%s236 + $0xc0] sm:%s228] %v285
                %v287 = vld [vmem:[%s235 + $0x148] sm:%s228]
                %288 = vst [vmem:[%s236 + $0xc8] sm:%s228] %v287
                %v289 = vld [vmem:[%s235 + $0x150] sm:%s228]
                %290 = vst [vmem:[%s236 + $0xd0] sm:%s228] %v289
                %v291 = vld [vmem:[%s235 + $0x158] sm:%s228]
                %292 = vst [vmem:[%s236 + $0xd8] sm:%s228] %v291
                %v293 = vld [vmem:[%s235 + $0x160] sm:%s228]
                %294 = vst [vmem:[%s236 + $0xe0] sm:%s228] %v293
                %v295 = vld [vmem:[%s235 + $0x168] sm:%s228]
                %296 = vst [vmem:[%s236 + $0xe8] sm:%s228] %v295
                %v297 = vld [vmem:[%s235 + $0x170] sm:%s228]
                %298 = vst [vmem:[%s236 + $0xf0] sm:%s228] %v297
                %v299 = vld [vmem:[%s235 + $0x178] sm:%s228]
                %300 = vst [vmem:[%s236 + $0xf8] sm:%s228] %v299
                %v301 = vld [vmem:[%s235 + $0x200] sm:%s228]
                %302 = vst [vmem:[%s236 + $0x100] sm:%s228] %v301
                %v303 = vld [vmem:[%s235 + $0x208] sm:%s228]
                %304 = vst [vmem:[%s236 + $0x108] sm:%s228] %v303
                %v305 = vld [vmem:[%s235 + $0x210] sm:%s228]
                %306 = vst [vmem:[%s236 + $0x110] sm:%s228] %v305
                %v307 = vld [vmem:[%s235 + $0x218] sm:%s228]
                %308 = vst [vmem:[%s236 + $0x118] sm:%s228] %v307
                %v309 = vld [vmem:[%s235 + $0x220] sm:%s228]
                %310 = vst [vmem:[%s236 + $0x120] sm:%s228] %v309
                %v311 = vld [vmem:[%s235 + $0x228] sm:%s228]
                %312 = vst [vmem:[%s236 + $0x128] sm:%s228] %v311
                %v313 = vld [vmem:[%s235 + $0x230] sm:%s228]
                %314 = vst [vmem:[%s236 + $0x130] sm:%s228] %v313
                %v315 = vld [vmem:[%s235 + $0x238] sm:%s228]
                %316 = vst [vmem:[%s236 + $0x138] sm:%s228] %v315
                %v317 = vld [vmem:[%s235 + $0x240] sm:%s228]
                %318 = vst [vmem:[%s236 + $0x140] sm:%s228] %v317
                %v319 = vld [vmem:[%s235 + $0x248] sm:%s228]
                %320 = vst [vmem:[%s236 + $0x148] sm:%s228] %v319
                %v321 = vld [vmem:[%s235 + $0x250] sm:%s228]
                %322 = vst [vmem:[%s236 + $0x150] sm:%s228] %v321
                %v323 = vld [vmem:[%s235 + $0x258] sm:%s228]
                %324 = vst [vmem:[%s236 + $0x158] sm:%s228] %v323
                %v325 = vld [vmem:[%s235 + $0x260] sm:%s228]
                %326 = vst [vmem:[%s236 + $0x160] sm:%s228] %v325
                %v327 = vld [vmem:[%s235 + $0x268] sm:%s228]
                %328 = vst [vmem:[%s236 + $0x168] sm:%s228] %v327
                %v329 = vld [vmem:[%s235 + $0x270] sm:%s228]
                %330 = vst [vmem:[%s236 + $0x170] sm:%s228] %v329
                %v331 = vld [vmem:[%s235 + $0x278] sm:%s228]
                %332 = vst [vmem:[%s236 + $0x178] sm:%s228] %v331
                %v333 = vld [vmem:[%s235 + $0x300] sm:%s228]
                %334 = vst [vmem:[%s236 + $0x180] sm:%s228] %v333
                %v335 = vld [vmem:[%s235 + $0x308] sm:%s228]
                %336 = vst [vmem:[%s236 + $0x188] sm:%s228] %v335
                %v337 = vld [vmem:[%s235 + $0x310] sm:%s228]
                %338 = vst [vmem:[%s236 + $0x190] sm:%s228] %v337
                %v339 = vld [vmem:[%s235 + $0x318] sm:%s228]
                %340 = vst [vmem:[%s236 + $0x198] sm:%s228] %v339
                %v341 = vld [vmem:[%s235 + $0x320] sm:%s228]
                %342 = vst [vmem:[%s236 + $0x1a0] sm:%s228] %v341
                %v343 = vld [vmem:[%s235 + $0x328] sm:%s228]
                %344 = vst [vmem:[%s236 + $0x1a8] sm:%s228] %v343
                %v345 = vld [vmem:[%s235 + $0x330] sm:%s228]
                %346 = vst [vmem:[%s236 + $0x1b0] sm:%s228] %v345
                %v347 = vld [vmem:[%s235 + $0x338] sm:%s228]
                %348 = vst [vmem:[%s236 + $0x1b8] sm:%s228] %v347
                %v349 = vld [vmem:[%s235 + $0x340] sm:%s228]
                %350 = vst [vmem:[%s236 + $0x1c0] sm:%s228] %v349
                %v351 = vld [vmem:[%s235 + $0x348] sm:%s228]
                %352 = vst [vmem:[%s236 + $0x1c8] sm:%s228] %v351
                %v353 = vld [vmem:[%s235 + $0x350] sm:%s228]
                %354 = vst [vmem:[%s236 + $0x1d0] sm:%s228] %v353
                %v355 = vld [vmem:[%s235 + $0x358] sm:%s228]
                %356 = vst [vmem:[%s236 + $0x1d8] sm:%s228] %v355
                %v357 = vld [vmem:[%s235 + $0x360] sm:%s228]
                %358 = vst [vmem:[%s236 + $0x1e0] sm:%s228] %v357
                %v359 = vld [vmem:[%s235 + $0x368] sm:%s228]
                %360 = vst [vmem:[%s236 + $0x1e8] sm:%s228] %v359
                %v361 = vld [vmem:[%s235 + $0x370] sm:%s228]
                %362 = vst [vmem:[%s236 + $0x1f0] sm:%s228] %v361
                %v363 = vld [vmem:[%s235 + $0x378] sm:%s228]
                %364 = vst [vmem:[%s236 + $0x1f8] sm:%s228] %v363
                %v365 = vld [vmem:[%s235 + $0x400] sm:%s228]
                %366 = vst [vmem:[%s236 + $0x200] sm:%s228] %v365
                %v367 = vld [vmem:[%s235 + $0x408] sm:%s228]
                %368 = vst [vmem:[%s236 + $0x208] sm:%s228] %v367
                %v369 = vld [vmem:[%s235 + $0x410] sm:%s228]
                %370 = vst [vmem:[%s236 + $0x210] sm:%s228] %v369
                %v371 = vld [vmem:[%s235 + $0x418] sm:%s228]
                %372 = vst [vmem:[%s236 + $0x218] sm:%s228] %v371
                %v373 = vld [vmem:[%s235 + $0x420] sm:%s228]
                %374 = vst [vmem:[%s236 + $0x220] sm:%s228] %v373
                %v375 = vld [vmem:[%s235 + $0x428] sm:%s228]
                %376 = vst [vmem:[%s236 + $0x228] sm:%s228] %v375
                %v377 = vld [vmem:[%s235 + $0x430] sm:%s228]
                %378 = vst [vmem:[%s236 + $0x230] sm:%s228] %v377
                %v379 = vld [vmem:[%s235 + $0x438] sm:%s228]
                %380 = vst [vmem:[%s236 + $0x238] sm:%s228] %v379
                %v381 = vld [vmem:[%s235 + $0x440] sm:%s228]
                %382 = vst [vmem:[%s236 + $0x240] sm:%s228] %v381
                %v383 = vld [vmem:[%s235 + $0x448] sm:%s228]
                %384 = vst [vmem:[%s236 + $0x248] sm:%s228] %v383
                %v385 = vld [vmem:[%s235 + $0x450] sm:%s228]
                %386 = vst [vmem:[%s236 + $0x250] sm:%s228] %v385
                %v387 = vld [vmem:[%s235 + $0x458] sm:%s228]
                %388 = vst [vmem:[%s236 + $0x258] sm:%s228] %v387
                %v389 = vld [vmem:[%s235 + $0x460] sm:%s228]
                %390 = vst [vmem:[%s236 + $0x260] sm:%s228] %v389
                %v391 = vld [vmem:[%s235 + $0x468] sm:%s228]
                %392 = vst [vmem:[%s236 + $0x268] sm:%s228] %v391
                %v393 = vld [vmem:[%s235 + $0x470] sm:%s228]
                %394 = vst [vmem:[%s236 + $0x270] sm:%s228] %v393
                %v395 = vld [vmem:[%s235 + $0x478] sm:%s228]
                %396 = vst [vmem:[%s236 + $0x278] sm:%s228] %v395
                %v397 = vld [vmem:[%s235 + $0x500] sm:%s228]
                %398 = vst [vmem:[%s236 + $0x280] sm:%s228] %v397
                %v399 = vld [vmem:[%s235 + $0x508] sm:%s228]
                %400 = vst [vmem:[%s236 + $0x288] sm:%s228] %v399
                %v401 = vld [vmem:[%s235 + $0x510] sm:%s228]
                %402 = vst [vmem:[%s236 + $0x290] sm:%s228] %v401
                %v403 = vld [vmem:[%s235 + $0x518] sm:%s228]
                %404 = vst [vmem:[%s236 + $0x298] sm:%s228] %v403
                %v405 = vld [vmem:[%s235 + $0x520] sm:%s228]
                %406 = vst [vmem:[%s236 + $0x2a0] sm:%s228] %v405
                %v407 = vld [vmem:[%s235 + $0x528] sm:%s228]
                %408 = vst [vmem:[%s236 + $0x2a8] sm:%s228] %v407
                %v409 = vld [vmem:[%s235 + $0x530] sm:%s228]
                %410 = vst [vmem:[%s236 + $0x2b0] sm:%s228] %v409
                %v411 = vld [vmem:[%s235 + $0x538] sm:%s228]
                %412 = vst [vmem:[%s236 + $0x2b8] sm:%s228] %v411
                %v413 = vld [vmem:[%s235 + $0x540] sm:%s228]
                %414 = vst [vmem:[%s236 + $0x2c0] sm:%s228] %v413
                %v415 = vld [vmem:[%s235 + $0x548] sm:%s228]
                %416 = vst [vmem:[%s236 + $0x2c8] sm:%s228] %v415
                %v417 = vld [vmem:[%s235 + $0x550] sm:%s228]
                %418 = vst [vmem:[%s236 + $0x2d0] sm:%s228] %v417
                %v419 = vld [vmem:[%s235 + $0x558] sm:%s228]
                %420 = vst [vmem:[%s236 + $0x2d8] sm:%s228] %v419
                %v421 = vld [vmem:[%s235 + $0x560] sm:%s228]
                %422 = vst [vmem:[%s236 + $0x2e0] sm:%s228] %v421
                %v423 = vld [vmem:[%s235 + $0x568] sm:%s228]
                %424 = vst [vmem:[%s236 + $0x2e8] sm:%s228] %v423
                %v425 = vld [vmem:[%s235 + $0x570] sm:%s228]
                %426 = vst [vmem:[%s236 + $0x2f0] sm:%s228] %v425
                %v427 = vld [vmem:[%s235 + $0x578] sm:%s228]
                %428 = vst [vmem:[%s236 + $0x2f8] sm:%s228] %v427
                %v429 = vld [vmem:[%s235 + $0x600] sm:%s228]
                %430 = vst [vmem:[%s236 + $0x300] sm:%s228] %v429
                %v431 = vld [vmem:[%s235 + $0x608] sm:%s228]
                %432 = vst [vmem:[%s236 + $0x308] sm:%s228] %v431
                %v433 = vld [vmem:[%s235 + $0x610] sm:%s228]
                %434 = vst [vmem:[%s236 + $0x310] sm:%s228] %v433
                %v435 = vld [vmem:[%s235 + $0x618] sm:%s228]
                %436 = vst [vmem:[%s236 + $0x318] sm:%s228] %v435
                %v437 = vld [vmem:[%s235 + $0x620] sm:%s228]
                %438 = vst [vmem:[%s236 + $0x320] sm:%s228] %v437
                %v439 = vld [vmem:[%s235 + $0x628] sm:%s228]
                %440 = vst [vmem:[%s236 + $0x328] sm:%s228] %v439
                %v441 = vld [vmem:[%s235 + $0x630] sm:%s228]
                %442 = vst [vmem:[%s236 + $0x330] sm:%s228] %v441
                %v443 = vld [vmem:[%s235 + $0x638] sm:%s228]
                %444 = vst [vmem:[%s236 + $0x338] sm:%s228] %v443
                %v445 = vld [vmem:[%s235 + $0x640] sm:%s228]
                %446 = vst [vmem:[%s236 + $0x340] sm:%s228] %v445
                %v447 = vld [vmem:[%s235 + $0x648] sm:%s228]
                %448 = vst [vmem:[%s236 + $0x348] sm:%s228] %v447
                %v449 = vld [vmem:[%s235 + $0x650] sm:%s228]
                %450 = vst [vmem:[%s236 + $0x350] sm:%s228] %v449
                %v451 = vld [vmem:[%s235 + $0x658] sm:%s228]
                %452 = vst [vmem:[%s236 + $0x358] sm:%s228] %v451
                %v453 = vld [vmem:[%s235 + $0x660] sm:%s228]
                %454 = vst [vmem:[%s236 + $0x360] sm:%s228] %v453
                %v455 = vld [vmem:[%s235 + $0x668] sm:%s228]
                %456 = vst [vmem:[%s236 + $0x368] sm:%s228] %v455
                %v457 = vld [vmem:[%s235 + $0x670] sm:%s228]
                %458 = vst [vmem:[%s236 + $0x370] sm:%s228] %v457
                %v459 = vld [vmem:[%s235 + $0x678] sm:%s228]
                %460 = vst [vmem:[%s236 + $0x378] sm:%s228] %v459
                %v461 = vld [vmem:[%s235 + $0x700] sm:%s228]
                %462 = vst [vmem:[%s236 + $0x380] sm:%s228] %v461
                %v463 = vld [vmem:[%s235 + $0x708] sm:%s228]
                %464 = vst [vmem:[%s236 + $0x388] sm:%s228] %v463
                %v465 = vld [vmem:[%s235 + $0x710] sm:%s228]
                %466 = vst [vmem:[%s236 + $0x390] sm:%s228] %v465
                %v467 = vld [vmem:[%s235 + $0x718] sm:%s228]
                %468 = vst [vmem:[%s236 + $0x398] sm:%s228] %v467
                %v469 = vld [vmem:[%s235 + $0x720] sm:%s228]
                %470 = vst [vmem:[%s236 + $0x3a0] sm:%s228] %v469
                %v471 = vld [vmem:[%s235 + $0x728] sm:%s228]
                %472 = vst [vmem:[%s236 + $0x3a8] sm:%s228] %v471
                %v473 = vld [vmem:[%s235 + $0x730] sm:%s228]
                %474 = vst [vmem:[%s236 + $0x3b0] sm:%s228] %v473
                %v475 = vld [vmem:[%s235 + $0x738] sm:%s228]
                %476 = vst [vmem:[%s236 + $0x3b8] sm:%s228] %v475
                %v477 = vld [vmem:[%s235 + $0x740] sm:%s228]
                %478 = vst [vmem:[%s236 + $0x3c0] sm:%s228] %v477
                %v479 = vld [vmem:[%s235 + $0x748] sm:%s228]
                %480 = vst [vmem:[%s236 + $0x3c8] sm:%s228] %v479
                %v481 = vld [vmem:[%s235 + $0x750] sm:%s228]
                %482 = vst [vmem:[%s236 + $0x3d0] sm:%s228] %v481
                %v483 = vld [vmem:[%s235 + $0x758] sm:%s228]
                %484 = vst [vmem:[%s236 + $0x3d8] sm:%s228] %v483
                %v485 = vld [vmem:[%s235 + $0x760] sm:%s228]
                %486 = vst [vmem:[%s236 + $0x3e0] sm:%s228] %v485
                %v487 = vld [vmem:[%s235 + $0x768] sm:%s228]
                %488 = vst [vmem:[%s236 + $0x3e8] sm:%s228] %v487
                %v489 = vld [vmem:[%s235 + $0x770] sm:%s228]
                %490 = vst [vmem:[%s236 + $0x3f0] sm:%s228] %v489
                %v491 = vld [vmem:[%s235 + $0x778] sm:%s228]
                %492 = vst [vmem:[%s236 + $0x3f8] sm:%s228] %v491
                %v493 = vld [vmem:[%s235 + $0x800] sm:%s228]
                %494 = vst [vmem:[%s236 + $0x400] sm:%s228] %v493
                %v495 = vld [vmem:[%s235 + $0x808] sm:%s228]
                %496 = vst [vmem:[%s236 + $0x408] sm:%s228] %v495
                %v497 = vld [vmem:[%s235 + $0x810] sm:%s228]
                %498 = vst [vmem:[%s236 + $0x410] sm:%s228] %v497
                %v499 = vld [vmem:[%s235 + $0x818] sm:%s228]
                %500 = vst [vmem:[%s236 + $0x418] sm:%s228] %v499
                %v501 = vld [vmem:[%s235 + $0x820] sm:%s228]
                %502 = vst [vmem:[%s236 + $0x420] sm:%s228] %v501
                %v503 = vld [vmem:[%s235 + $0x828] sm:%s228]
                %504 = vst [vmem:[%s236 + $0x428] sm:%s228] %v503
                %v505 = vld [vmem:[%s235 + $0x830] sm:%s228]
                %506 = vst [vmem:[%s236 + $0x430] sm:%s228] %v505
                %v507 = vld [vmem:[%s235 + $0x838] sm:%s228]
                %508 = vst [vmem:[%s236 + $0x438] sm:%s228] %v507
                %v509 = vld [vmem:[%s235 + $0x840] sm:%s228]
                %510 = vst [vmem:[%s236 + $0x440] sm:%s228] %v509
                %v511 = vld [vmem:[%s235 + $0x848] sm:%s228]
                %512 = vst [vmem:[%s236 + $0x448] sm:%s228] %v511
                %v513 = vld [vmem:[%s235 + $0x850] sm:%s228]
                %514 = vst [vmem:[%s236 + $0x450] sm:%s228] %v513
                %v515 = vld [vmem:[%s235 + $0x858] sm:%s228]
                %516 = vst [vmem:[%s236 + $0x458] sm:%s228] %v515
                %v517 = vld [vmem:[%s235 + $0x860] sm:%s228]
                %518 = vst [vmem:[%s236 + $0x460] sm:%s228] %v517
                %v519 = vld [vmem:[%s235 + $0x868] sm:%s228]
                %520 = vst [vmem:[%s236 + $0x468] sm:%s228] %v519
                %v521 = vld [vmem:[%s235 + $0x870] sm:%s228]
                %522 = vst [vmem:[%s236 + $0x470] sm:%s228] %v521
                %v523 = vld [vmem:[%s235 + $0x878] sm:%s228]
                %524 = vst [vmem:[%s236 + $0x478] sm:%s228] %v523
                %v525 = vld [vmem:[%s235 + $0x900] sm:%s228]
                %526 = vst [vmem:[%s236 + $0x480] sm:%s228] %v525
                %v527 = vld [vmem:[%s235 + $0x908] sm:%s228]
                %528 = vst [vmem:[%s236 + $0x488] sm:%s228] %v527
                %v529 = vld [vmem:[%s235 + $0x910] sm:%s228]
                %530 = vst [vmem:[%s236 + $0x490] sm:%s228] %v529
                %v531 = vld [vmem:[%s235 + $0x918] sm:%s228]
                %532 = vst [vmem:[%s236 + $0x498] sm:%s228] %v531
                %v533 = vld [vmem:[%s235 + $0x920] sm:%s228]
                %534 = vst [vmem:[%s236 + $0x4a0] sm:%s228] %v533
                %v535 = vld [vmem:[%s235 + $0x928] sm:%s228]
                %536 = vst [vmem:[%s236 + $0x4a8] sm:%s228] %v535
                %v537 = vld [vmem:[%s235 + $0x930] sm:%s228]
                %538 = vst [vmem:[%s236 + $0x4b0] sm:%s228] %v537
                %v539 = vld [vmem:[%s235 + $0x938] sm:%s228]
                %540 = vst [vmem:[%s236 + $0x4b8] sm:%s228] %v539
                %v541 = vld [vmem:[%s235 + $0x940] sm:%s228]
                %542 = vst [vmem:[%s236 + $0x4c0] sm:%s228] %v541
                %v543 = vld [vmem:[%s235 + $0x948] sm:%s228]
                %544 = vst [vmem:[%s236 + $0x4c8] sm:%s228] %v543
                %v545 = vld [vmem:[%s235 + $0x950] sm:%s228]
                %546 = vst [vmem:[%s236 + $0x4d0] sm:%s228] %v545
                %v547 = vld [vmem:[%s235 + $0x958] sm:%s228]
                %548 = vst [vmem:[%s236 + $0x4d8] sm:%s228] %v547
                %v549 = vld [vmem:[%s235 + $0x960] sm:%s228]
                %550 = vst [vmem:[%s236 + $0x4e0] sm:%s228] %v549
                %v551 = vld [vmem:[%s235 + $0x968] sm:%s228]
                %552 = vst [vmem:[%s236 + $0x4e8] sm:%s228] %v551
                %v553 = vld [vmem:[%s235 + $0x970] sm:%s228]
                %554 = vst [vmem:[%s236 + $0x4f0] sm:%s228] %v553
                %v555 = vld [vmem:[%s235 + $0x978] sm:%s228]
                %556 = vst [vmem:[%s236 + $0x4f8] sm:%s228] %v555
                %v557 = vld [vmem:[%s235 + $0xa00] sm:%s228]
                %558 = vst [vmem:[%s236 + $0x500] sm:%s228] %v557
                %v559 = vld [vmem:[%s235 + $0xa08] sm:%s228]
                %560 = vst [vmem:[%s236 + $0x508] sm:%s228] %v559
                %v561 = vld [vmem:[%s235 + $0xa10] sm:%s228]
                %562 = vst [vmem:[%s236 + $0x510] sm:%s228] %v561
                %v563 = vld [vmem:[%s235 + $0xa18] sm:%s228]
                %564 = vst [vmem:[%s236 + $0x518] sm:%s228] %v563
                %v565 = vld [vmem:[%s235 + $0xa20] sm:%s228]
                %566 = vst [vmem:[%s236 + $0x520] sm:%s228] %v565
                %v567 = vld [vmem:[%s235 + $0xa28] sm:%s228]
                %568 = vst [vmem:[%s236 + $0x528] sm:%s228] %v567
                %v569 = vld [vmem:[%s235 + $0xa30] sm:%s228]
                %570 = vst [vmem:[%s236 + $0x530] sm:%s228] %v569
                %v571 = vld [vmem:[%s235 + $0xa38] sm:%s228]
                %572 = vst [vmem:[%s236 + $0x538] sm:%s228] %v571
                %v573 = vld [vmem:[%s235 + $0xa40] sm:%s228]
                %574 = vst [vmem:[%s236 + $0x540] sm:%s228] %v573
                %v575 = vld [vmem:[%s235 + $0xa48] sm:%s228]
                %576 = vst [vmem:[%s236 + $0x548] sm:%s228] %v575
                %v577 = vld [vmem:[%s235 + $0xa50] sm:%s228]
                %578 = vst [vmem:[%s236 + $0x550] sm:%s228] %v577
                %v579 = vld [vmem:[%s235 + $0xa58] sm:%s228]
                %580 = vst [vmem:[%s236 + $0x558] sm:%s228] %v579
                %v581 = vld [vmem:[%s235 + $0xa60] sm:%s228]
                %582 = vst [vmem:[%s236 + $0x560] sm:%s228] %v581
                %v583 = vld [vmem:[%s235 + $0xa68] sm:%s228]
                %584 = vst [vmem:[%s236 + $0x568] sm:%s228] %v583
                %v585 = vld [vmem:[%s235 + $0xa70] sm:%s228]
                %586 = vst [vmem:[%s236 + $0x570] sm:%s228] %v585
                %v587 = vld [vmem:[%s235 + $0xa78] sm:%s228]
                %588 = vst [vmem:[%s236 + $0x578] sm:%s228] %v587
                %v589 = vld [vmem:[%s235 + $0xb00] sm:%s228]
                %590 = vst [vmem:[%s236 + $0x580] sm:%s228] %v589
                %v591 = vld [vmem:[%s235 + $0xb08] sm:%s228]
                %592 = vst [vmem:[%s236 + $0x588] sm:%s228] %v591
                %v593 = vld [vmem:[%s235 + $0xb10] sm:%s228]
                %594 = vst [vmem:[%s236 + $0x590] sm:%s228] %v593
                %v595 = vld [vmem:[%s235 + $0xb18] sm:%s228]
                %596 = vst [vmem:[%s236 + $0x598] sm:%s228] %v595
                %v597 = vld [vmem:[%s235 + $0xb20] sm:%s228]
                %598 = vst [vmem:[%s236 + $0x5a0] sm:%s228] %v597
                %v599 = vld [vmem:[%s235 + $0xb28] sm:%s228]
                %600 = vst [vmem:[%s236 + $0x5a8] sm:%s228] %v599
                %v601 = vld [vmem:[%s235 + $0xb30] sm:%s228]
                %602 = vst [vmem:[%s236 + $0x5b0] sm:%s228] %v601
                %v603 = vld [vmem:[%s235 + $0xb38] sm:%s228]
                %604 = vst [vmem:[%s236 + $0x5b8] sm:%s228] %v603
                %v605 = vld [vmem:[%s235 + $0xb40] sm:%s228]
                %606 = vst [vmem:[%s236 + $0x5c0] sm:%s228] %v605
                %v607 = vld [vmem:[%s235 + $0xb48] sm:%s228]
                %608 = vst [vmem:[%s236 + $0x5c8] sm:%s228] %v607
                %v609 = vld [vmem:[%s235 + $0xb50] sm:%s228]
                %610 = vst [vmem:[%s236 + $0x5d0] sm:%s228] %v609
                %v611 = vld [vmem:[%s235 + $0xb58] sm:%s228]
                %612 = vst [vmem:[%s236 + $0x5d8] sm:%s228] %v611
                %v613 = vld [vmem:[%s235 + $0xb60] sm:%s228]
                %614 = vst [vmem:[%s236 + $0x5e0] sm:%s228] %v613
                %v615 = vld [vmem:[%s235 + $0xb68] sm:%s228]
                %616 = vst [vmem:[%s236 + $0x5e8] sm:%s228] %v615
                %v617 = vld [vmem:[%s235 + $0xb70] sm:%s228]
                %618 = vst [vmem:[%s236 + $0x5f0] sm:%s228] %v617
                %v619 = vld [vmem:[%s235 + $0xb78] sm:%s228]
                %620 = vst [vmem:[%s236 + $0x5f8] sm:%s228] %v619
                %v621 = vld [vmem:[%s235 + $0xc00] sm:%s228]
                %622 = vst [vmem:[%s236 + $0x600] sm:%s228] %v621
                %v623 = vld [vmem:[%s235 + $0xc08] sm:%s228]
                %624 = vst [vmem:[%s236 + $0x608] sm:%s228] %v623
                %v625 = vld [vmem:[%s235 + $0xc10] sm:%s228]
                %626 = vst [vmem:[%s236 + $0x610] sm:%s228] %v625
                %v627 = vld [vmem:[%s235 + $0xc18] sm:%s228]
                %628 = vst [vmem:[%s236 + $0x618] sm:%s228] %v627
                %v629 = vld [vmem:[%s235 + $0xc20] sm:%s228]
                %630 = vst [vmem:[%s236 + $0x620] sm:%s228] %v629
                %v631 = vld [vmem:[%s235 + $0xc28] sm:%s228]
                %632 = vst [vmem:[%s236 + $0x628] sm:%s228] %v631
                %v633 = vld [vmem:[%s235 + $0xc30] sm:%s228]
                %634 = vst [vmem:[%s236 + $0x630] sm:%s228] %v633
                %v635 = vld [vmem:[%s235 + $0xc38] sm:%s228]
                %636 = vst [vmem:[%s236 + $0x638] sm:%s228] %v635
                %v637 = vld [vmem:[%s235 + $0xc40] sm:%s228]
                %638 = vst [vmem:[%s236 + $0x640] sm:%s228] %v637
                %v639 = vld [vmem:[%s235 + $0xc48] sm:%s228]
                %640 = vst [vmem:[%s236 + $0x648] sm:%s228] %v639
                %v641 = vld [vmem:[%s235 + $0xc50] sm:%s228]
                %642 = vst [vmem:[%s236 + $0x650] sm:%s228] %v641
                %v643 = vld [vmem:[%s235 + $0xc58] sm:%s228]
                %644 = vst [vmem:[%s236 + $0x658] sm:%s228] %v643
                %v645 = vld [vmem:[%s235 + $0xc60] sm:%s228]
                %646 = vst [vmem:[%s236 + $0x660] sm:%s228] %v645
                %v647 = vld [vmem:[%s235 + $0xc68] sm:%s228]
                %648 = vst [vmem:[%s236 + $0x668] sm:%s228] %v647
                %v649 = vld [vmem:[%s235 + $0xc70] sm:%s228]
                %650 = vst [vmem:[%s236 + $0x670] sm:%s228] %v649
                %v651 = vld [vmem:[%s235 + $0xc78] sm:%s228]
                %652 = vst [vmem:[%s236 + $0x678] sm:%s228] %v651
                %v653 = vld [vmem:[%s235 + $0xd00] sm:%s228]
                %654 = vst [vmem:[%s236 + $0x680] sm:%s228] %v653
                %v655 = vld [vmem:[%s235 + $0xd08] sm:%s228]
                %656 = vst [vmem:[%s236 + $0x688] sm:%s228] %v655
                %v657 = vld [vmem:[%s235 + $0xd10] sm:%s228]
                %658 = vst [vmem:[%s236 + $0x690] sm:%s228] %v657
                %v659 = vld [vmem:[%s235 + $0xd18] sm:%s228]
                %660 = vst [vmem:[%s236 + $0x698] sm:%s228] %v659
                %v661 = vld [vmem:[%s235 + $0xd20] sm:%s228]
                %662 = vst [vmem:[%s236 + $0x6a0] sm:%s228] %v661
                %v663 = vld [vmem:[%s235 + $0xd28] sm:%s228]
                %664 = vst [vmem:[%s236 + $0x6a8] sm:%s228] %v663
                %v665 = vld [vmem:[%s235 + $0xd30] sm:%s228]
                %666 = vst [vmem:[%s236 + $0x6b0] sm:%s228] %v665
                %v667 = vld [vmem:[%s235 + $0xd38] sm:%s228]
                %668 = vst [vmem:[%s236 + $0x6b8] sm:%s228] %v667
                %v669 = vld [vmem:[%s235 + $0xd40] sm:%s228]
                %670 = vst [vmem:[%s236 + $0x6c0] sm:%s228] %v669
                %v671 = vld [vmem:[%s235 + $0xd48] sm:%s228]
                %672 = vst [vmem:[%s236 + $0x6c8] sm:%s228] %v671
                %v673 = vld [vmem:[%s235 + $0xd50] sm:%s228]
                %674 = vst [vmem:[%s236 + $0x6d0] sm:%s228] %v673
                %v675 = vld [vmem:[%s235 + $0xd58] sm:%s228]
                %676 = vst [vmem:[%s236 + $0x6d8] sm:%s228] %v675
                %v677 = vld [vmem:[%s235 + $0xd60] sm:%s228]
                %678 = vst [vmem:[%s236 + $0x6e0] sm:%s228] %v677
                %v679 = vld [vmem:[%s235 + $0xd68] sm:%s228]
                %680 = vst [vmem:[%s236 + $0x6e8] sm:%s228] %v679
                %v681 = vld [vmem:[%s235 + $0xd70] sm:%s228]
                %682 = vst [vmem:[%s236 + $0x6f0] sm:%s228] %v681
                %v683 = vld [vmem:[%s235 + $0xd78] sm:%s228]
                %684 = vst [vmem:[%s236 + $0x6f8] sm:%s228] %v683
                %v685 = vld [vmem:[%s235 + $0xe00] sm:%s228]
                %686 = vst [vmem:[%s236 + $0x700] sm:%s228] %v685
                %v687 = vld [vmem:[%s235 + $0xe08] sm:%s228]
                %688 = vst [vmem:[%s236 + $0x708] sm:%s228] %v687
                %v689 = vld [vmem:[%s235 + $0xe10] sm:%s228]
                %690 = vst [vmem:[%s236 + $0x710] sm:%s228] %v689
                %v691 = vld [vmem:[%s235 + $0xe18] sm:%s228]
                %692 = vst [vmem:[%s236 + $0x718] sm:%s228] %v691
                %v693 = vld [vmem:[%s235 + $0xe20] sm:%s228]
                %694 = vst [vmem:[%s236 + $0x720] sm:%s228] %v693
                %v695 = vld [vmem:[%s235 + $0xe28] sm:%s228]
                %696 = vst [vmem:[%s236 + $0x728] sm:%s228] %v695
                %v697 = vld [vmem:[%s235 + $0xe30] sm:%s228]
                %698 = vst [vmem:[%s236 + $0x730] sm:%s228] %v697
                %v699 = vld [vmem:[%s235 + $0xe38] sm:%s228]
                %700 = vst [vmem:[%s236 + $0x738] sm:%s228] %v699
                %v701 = vld [vmem:[%s235 + $0xe40] sm:%s228]
                %702 = vst [vmem:[%s236 + $0x740] sm:%s228] %v701
                %v703 = vld [vmem:[%s235 + $0xe48] sm:%s228]
                %704 = vst [vmem:[%s236 + $0x748] sm:%s228] %v703
                %v705 = vld [vmem:[%s235 + $0xe50] sm:%s228]
                %706 = vst [vmem:[%s236 + $0x750] sm:%s228] %v705
                %v707 = vld [vmem:[%s235 + $0xe58] sm:%s228]
                %708 = vst [vmem:[%s236 + $0x758] sm:%s228] %v707
                %v709 = vld [vmem:[%s235 + $0xe60] sm:%s228]
                %710 = vst [vmem:[%s236 + $0x760] sm:%s228] %v709
                %v711 = vld [vmem:[%s235 + $0xe68] sm:%s228]
                %712 = vst [vmem:[%s236 + $0x768] sm:%s228] %v711
                %v713 = vld [vmem:[%s235 + $0xe70] sm:%s228]
                %714 = vst [vmem:[%s236 + $0x770] sm:%s228] %v713
                %v715 = vld [vmem:[%s235 + $0xe78] sm:%s228]
                %716 = vst [vmem:[%s236 + $0x778] sm:%s228] %v715
                %v717 = vld [vmem:[%s235 + $0xf00] sm:%s228]
                %718 = vst [vmem:[%s236 + $0x780] sm:%s228] %v717
                %v719 = vld [vmem:[%s235 + $0xf08] sm:%s228]
                %720 = vst [vmem:[%s236 + $0x788] sm:%s228] %v719
                %v721 = vld [vmem:[%s235 + $0xf10] sm:%s228]
                %722 = vst [vmem:[%s236 + $0x790] sm:%s228] %v721
                %v723 = vld [vmem:[%s235 + $0xf18] sm:%s228]
                %724 = vst [vmem:[%s236 + $0x798] sm:%s228] %v723
                %v725 = vld [vmem:[%s235 + $0xf20] sm:%s228]
                %726 = vst [vmem:[%s236 + $0x7a0] sm:%s228] %v725
                %v727 = vld [vmem:[%s235 + $0xf28] sm:%s228]
                %728 = vst [vmem:[%s236 + $0x7a8] sm:%s228] %v727
                %v729 = vld [vmem:[%s235 + $0xf30] sm:%s228]
                %730 = vst [vmem:[%s236 + $0x7b0] sm:%s228] %v729
                %v731 = vld [vmem:[%s235 + $0xf38] sm:%s228]
                %732 = vst [vmem:[%s236 + $0x7b8] sm:%s228] %v731
                %v733 = vld [vmem:[%s235 + $0xf40] sm:%s228]
                %734 = vst [vmem:[%s236 + $0x7c0] sm:%s228] %v733
                %v735 = vld [vmem:[%s235 + $0xf48] sm:%s228]
                %736 = vst [vmem:[%s236 + $0x7c8] sm:%s228] %v735
                %v737 = vld [vmem:[%s235 + $0xf50] sm:%s228]
                %738 = vst [vmem:[%s236 + $0x7d0] sm:%s228] %v737
                %v739 = vld [vmem:[%s235 + $0xf58] sm:%s228]
                %740 = vst [vmem:[%s236 + $0x7d8] sm:%s228] %v739
                %v741 = vld [vmem:[%s235 + $0xf60] sm:%s228]
                %742 = vst [vmem:[%s236 + $0x7e0] sm:%s228] %v741
                %v743 = vld [vmem:[%s235 + $0xf68] sm:%s228]
                %744 = vst [vmem:[%s236 + $0x7e8] sm:%s228] %v743
                %v745 = vld [vmem:[%s235 + $0xf70] sm:%s228]
                %746 = vst [vmem:[%s236 + $0x7f0] sm:%s228] %v745
                %v747 = vld [vmem:[%s235 + $0xf78] sm:%s228]
                %748 = vst [vmem:[%s236 + $0x7f8] sm:%s228] %v747
              $region53: #{tpu_custom_call.1} parent=47 // loop_footer
                %s234 = sadd.s32 1, %s230
              $region54: #{tpu_custom_call.1} parent=47 // loop_footer_branch
                %229 = sbr.rel target = $region50
              $region55: #{tpu_custom_call.1} parent=47 // loop_exit
                _
            $region48: #{tpu_custom_call.1} parent=39 // pred_fallthru
              _
          $region40: #{tpu_custom_call.1} parent=35 // pred_fallthru
            _
          %1273 = vnop
        $region36: #{tpu_custom_call.1} parent=27 // pred_fallthru
          _
      $region28: #{tpu_custom_call.1} parent=5 // pred_fallthru
        _
      %p1274 = scmp.le.s32.totalorder 1, %s14
      %p1275 = scmp.lt.s32.totalorder %s14, 5
      %p1276 = pnand %p1274, %p1275
      %p1277 = pneg %p1276
      // Predicated region
      $region71: #{tpu_custom_call.1} parent=5 // pred_check
        _
      $region72: #{tpu_custom_call.1} parent=5 // pred_check_branch
        %1279 = sbr.rel (%p1276) target = $region74
      $region73: #{tpu_custom_call.1} parent=5 // pred_region
        %s1280 = ssub.s32 %s14, 1
        %s1281 = sand.u32 %s67, 1
        %s1282 = sand.u32 %s67, 1
        %s1283 = smul.addr %s1282, 2048
        %s1284 = scalar_lea.vmem [#allocation6], %s1283
        // Predicated region
        $region75: #{tpu_custom_call.1} parent=73 // pred_check
          %p1285 = pneg %p80
        $region76: #{tpu_custom_call.1} parent=73 // pred_check_branch
          %1287 = sbr.rel (%p1285) target = $region78
        $region77: #{tpu_custom_call.1} parent=73 // pred_region
          _
        $region78: #{tpu_custom_call.1} parent=73 // pred_fallthru
          _
        %s1288 = smul.u32 16, %s23
        %p1289 = scmp.lt.s32.totalorder %s1288, 31
        %s1290 = scalar_select %p1289, %s1288, 31
        %s1291 = smul.addr %s1290, 8
        %s1292 = scalar_lea.vmem %s0, %s1291
        %p1293 = pneg %p52
        %p1294 = pneg %p49
        %s1295 = sand.u32 %s67, 1
        %s1296 = sand.u32 %s67, 1
        %s1297 = smul.addr %s1296, 2048
        %s1298 = scalar_lea.vmem [#allocation6], %s1297
        %p1299 = pneg %p80
        %p1300 = pneg %p77
        %p1301 = pneg %p101
        %p1302 = pneg %p98
        %p1303 = pneg %p122
        %p1304 = pneg %p119
        %p1305 = pneg %p143
        %p1306 = pneg %p140
        %p1307 = pneg %p171
        %p1308 = pneg %p168
        %s1309 = sand.u32 %s158, 1
        %s1310 = scalar_lea.sflag [#allocation8], %s1309
        %s1311 = sand.u32 %s158, 1
        %s1312 = smul.addr %s1311, 2048
        %s1313 = scalar_lea.vmem [#allocation7], %s1312
        %s1314 = smul.u32 16, %s23
        %p1315 = scmp.lt.s32.totalorder %s1314, 31
        %s1316 = scalar_select %p1315, %s1314, 31
        %s1317 = smul.addr %s1316, 8
        %s1318 = scalar_lea.vmem %s0, %s1317
        %s1319 = smul.u32 16, %s23
        %s1320 = smul.u32 16, %s24
        %s1321 = smul.u32 16, %s23
        %s1322 = smul.u32 16, %s24
        %s1323 = smul.u32 16, %s23
        %p1325 = scmp.eq.s32.totalorder %s24, 0
        // Predicated region
        $region79: #{tpu_custom_call.1} parent=73 // pred_check
          %p1326 = pneg %p1325
        $region80: #{tpu_custom_call.1} parent=73 // pred_check_branch
          %1328 = sbr.rel (%p1326) target = $region82
        $region81: #{tpu_custom_call.1} parent=73 // pred_region
          %v1329 = vld [vmem:[%s1318] sm:$0xff]
          %v1330 = vld [vmem:[%s1318 + $0x8] sm:$0xff]
          %v1331 = vld [vmem:[%s1318 + $0x10] sm:$0xff]
          %v1332 = vld [vmem:[%s1318 + $0x18] sm:$0xff]
          %v1333 = vld [vmem:[%s1318 + $0x20] sm:$0xff]
          %v1334 = vld [vmem:[%s1318 + $0x28] sm:$0xff]
          %v1335 = vld [vmem:[%s1318 + $0x30] sm:$0xff]
          %v1336 = vld [vmem:[%s1318 + $0x38] sm:$0xff]
          %v1337 = vld [vmem:[%s1318 + $0x40] sm:$0xff]
          %v1338 = vld [vmem:[%s1318 + $0x48] sm:$0xff]
          %v1339 = vld [vmem:[%s1318 + $0x50] sm:$0xff]
          %v1340 = vld [vmem:[%s1318 + $0x58] sm:$0xff]
          %v1341 = vld [vmem:[%s1318 + $0x60] sm:$0xff]
          %v1342 = vld [vmem:[%s1318 + $0x68] sm:$0xff]
          %v1343 = vld [vmem:[%s1318 + $0x70] sm:$0xff]
          %v1344 = vld [vmem:[%s1318 + $0x78] sm:$0xff]
          %1345 = vst [vmem:[#allocation2] sm:$0xff] %v1329
          %1346 = vst [vmem:[#allocation2 + $0x8] sm:$0xff] %v1330
          %1347 = vst [vmem:[#allocation2 + $0x10] sm:$0xff] %v1331
          %1348 = vst [vmem:[#allocation2 + $0x18] sm:$0xff] %v1332
          %1349 = vst [vmem:[#allocation2 + $0x20] sm:$0xff] %v1333
          %1350 = vst [vmem:[#allocation2 + $0x28] sm:$0xff] %v1334
          %1351 = vst [vmem:[#allocation2 + $0x30] sm:$0xff] %v1335
          %1352 = vst [vmem:[#allocation2 + $0x38] sm:$0xff] %v1336
          %1353 = vst [vmem:[#allocation2 + $0x40] sm:$0xff] %v1337
          %1354 = vst [vmem:[#allocation2 + $0x48] sm:$0xff] %v1338
          %1355 = vst [vmem:[#allocation2 + $0x50] sm:$0xff] %v1339
          %1356 = vst [vmem:[#allocation2 + $0x58] sm:$0xff] %v1340
          %1357 = vst [vmem:[#allocation2 + $0x60] sm:$0xff] %v1341
          %1358 = vst [vmem:[#allocation2 + $0x68] sm:$0xff] %v1342
          %1359 = vst [vmem:[#allocation2 + $0x70] sm:$0xff] %v1343
          %1360 = vst [vmem:[#allocation2 + $0x78] sm:$0xff] %v1344
        $region82: #{tpu_custom_call.1} parent=73 // pred_fallthru
          _
        %v1361 = vld [vmem:[#allocation2] sm:$0xff]
        %v1362 = vld [vmem:[#allocation2 + $0x8] sm:$0xff]
        %v1363 = vld [vmem:[#allocation2 + $0x10] sm:$0xff]
        %v1364 = vld [vmem:[#allocation2 + $0x18] sm:$0xff]
        %v1365 = vld [vmem:[#allocation2 + $0x20] sm:$0xff]
        %v1366 = vld [vmem:[#allocation2 + $0x28] sm:$0xff]
        %v1367 = vld [vmem:[#allocation2 + $0x30] sm:$0xff]
        %v1368 = vld [vmem:[#allocation2 + $0x38] sm:$0xff]
        %v1369 = vld [vmem:[#allocation2 + $0x40] sm:$0xff]
        %v1370 = vld [vmem:[#allocation2 + $0x48] sm:$0xff]
        %v1371 = vld [vmem:[#allocation2 + $0x50] sm:$0xff]
        %v1372 = vld [vmem:[#allocation2 + $0x58] sm:$0xff]
        %v1373 = vld [vmem:[#allocation2 + $0x60] sm:$0xff]
        %v1374 = vld [vmem:[#allocation2 + $0x68] sm:$0xff]
        %v1375 = vld [vmem:[#allocation2 + $0x70] sm:$0xff]
        %v1376 = vld [vmem:[#allocation2 + $0x78] sm:$0xff]
        %v1377 = vld [vmem:[%s2] sm:$0xff]
        %v1378 = vld [vmem:[%s2 + $0x8] sm:$0xff]
        %v1379 = vld [vmem:[%s2 + $0x10] sm:$0xff]
        %v1380 = vld [vmem:[%s2 + $0x18] sm:$0xff]
        %v1381 = vld [vmem:[%s2 + $0x20] sm:$0xff]
        %v1382 = vld [vmem:[%s2 + $0x28] sm:$0xff]
        %v1383 = vld [vmem:[%s2 + $0x30] sm:$0xff]
        %v1384 = vld [vmem:[%s2 + $0x38] sm:$0xff]
        %v1385 = vld [vmem:[%s2 + $0x40] sm:$0xff]
        %v1386 = vld [vmem:[%s2 + $0x48] sm:$0xff]
        %v1387 = vld [vmem:[%s2 + $0x50] sm:$0xff]
        %v1388 = vld [vmem:[%s2 + $0x58] sm:$0xff]
        %v1389 = vld [vmem:[%s2 + $0x60] sm:$0xff]
        %v1390 = vld [vmem:[%s2 + $0x68] sm:$0xff]
        %v1391 = vld [vmem:[%s2 + $0x70] sm:$0xff]
        %v1392 = vld [vmem:[%s2 + $0x78] sm:$0xff]
        %v1393 = vpack.c.bf16 %v1378, %v1377
        %v1394 = vpack.c.bf16 %v1380, %v1379
        %v1395 = vpack.c.bf16 %v1382, %v1381
        %v1396 = vpack.c.bf16 %v1384, %v1383
        %v1397 = vpack.c.bf16 %v1386, %v1385
        %v1398 = vpack.c.bf16 %v1388, %v1387
        %v1399 = vpack.c.bf16 %v1390, %v1389
        %v1400 = vpack.c.bf16 %v1392, %v1391
        %v1401 = vld [vmem:[%s1284] sm:$0xff]
        %v1402 = vld [vmem:[%s1284 + $0x8] sm:$0xff]
        %v1403 = vld [vmem:[%s1284 + $0x10] sm:$0xff]
        %v1404 = vld [vmem:[%s1284 + $0x18] sm:$0xff]
        %v1405 = vld [vmem:[%s1284 + $0x20] sm:$0xff]
        %v1406 = vld [vmem:[%s1284 + $0x28] sm:$0xff]
        %v1407 = vld [vmem:[%s1284 + $0x30] sm:$0xff]
        %v1408 = vld [vmem:[%s1284 + $0x38] sm:$0xff]
        %v1409 = vld [vmem:[%s1284 + $0x40] sm:$0xff]
        %v1410 = vld [vmem:[%s1284 + $0x48] sm:$0xff]
        %v1411 = vld [vmem:[%s1284 + $0x50] sm:$0xff]
        %v1412 = vld [vmem:[%s1284 + $0x58] sm:$0xff]
        %v1413 = vld [vmem:[%s1284 + $0x60] sm:$0xff]
        %v1414 = vld [vmem:[%s1284 + $0x68] sm:$0xff]
        %v1415 = vld [vmem:[%s1284 + $0x70] sm:$0xff]
        %v1416 = vld [vmem:[%s1284 + $0x78] sm:$0xff]
        %v1417 = vld [vmem:[%s1284 + $0x80] sm:$0xff]
        %v1418 = vld [vmem:[%s1284 + $0x88] sm:$0xff]
        %v1419 = vld [vmem:[%s1284 + $0x90] sm:$0xff]
        %v1420 = vld [vmem:[%s1284 + $0x98] sm:$0xff]
        %v1421 = vld [vmem:[%s1284 + $0xa0] sm:$0xff]
        %v1422 = vld [vmem:[%s1284 + $0xa8] sm:$0xff]
        %v1423 = vld [vmem:[%s1284 + $0xb0] sm:$0xff]
        %v1424 = vld [vmem:[%s1284 + $0xb8] sm:$0xff]
        %v1425 = vld [vmem:[%s1284 + $0xc0] sm:$0xff]
        %v1426 = vld [vmem:[%s1284 + $0xc8] sm:$0xff]
        %v1427 = vld [vmem:[%s1284 + $0xd0] sm:$0xff]
        %v1428 = vld [vmem:[%s1284 + $0xd8] sm:$0xff]
        %v1429 = vld [vmem:[%s1284 + $0xe0] sm:$0xff]
        %v1430 = vld [vmem:[%s1284 + $0xe8] sm:$0xff]
        %v1431 = vld [vmem:[%s1284 + $0xf0] sm:$0xff]
        %v1432 = vld [vmem:[%s1284 + $0xf8] sm:$0xff]
        %v1433 = vld [vmem:[%s1284 + $0x100] sm:$0xff]
        %v1434 = vld [vmem:[%s1284 + $0x108] sm:$0xff]
        %v1435 = vld [vmem:[%s1284 + $0x110] sm:$0xff]
        %v1436 = vld [vmem:[%s1284 + $0x118] sm:$0xff]
        %v1437 = vld [vmem:[%s1284 + $0x120] sm:$0xff]
        %v1438 = vld [vmem:[%s1284 + $0x128] sm:$0xff]
        %v1439 = vld [vmem:[%s1284 + $0x130] sm:$0xff]
        %v1440 = vld [vmem:[%s1284 + $0x138] sm:$0xff]
        %v1441 = vld [vmem:[%s1284 + $0x140] sm:$0xff]
        %v1442 = vld [vmem:[%s1284 + $0x148] sm:$0xff]
        %v1443 = vld [vmem:[%s1284 + $0x150] sm:$0xff]
        %v1444 = vld [vmem:[%s1284 + $0x158] sm:$0xff]
        %v1445 = vld [vmem:[%s1284 + $0x160] sm:$0xff]
        %v1446 = vld [vmem:[%s1284 + $0x168] sm:$0xff]
        %v1447 = vld [vmem:[%s1284 + $0x170] sm:$0xff]
        %v1448 = vld [vmem:[%s1284 + $0x178] sm:$0xff]
        %v1449 = vld [vmem:[%s1284 + $0x180] sm:$0xff]
        %v1450 = vld [vmem:[%s1284 + $0x188] sm:$0xff]
        %v1451 = vld [vmem:[%s1284 + $0x190] sm:$0xff]
        %v1452 = vld [vmem:[%s1284 + $0x198] sm:$0xff]
        %v1453 = vld [vmem:[%s1284 + $0x1a0] sm:$0xff]
        %v1454 = vld [vmem:[%s1284 + $0x1a8] sm:$0xff]
        %v1455 = vld [vmem:[%s1284 + $0x1b0] sm:$0xff]
        %v1456 = vld [vmem:[%s1284 + $0x1b8] sm:$0xff]
        %v1457 = vld [vmem:[%s1284 + $0x1c0] sm:$0xff]
        %v1458 = vld [vmem:[%s1284 + $0x1c8] sm:$0xff]
        %v1459 = vld [vmem:[%s1284 + $0x1d0] sm:$0xff]
        %v1460 = vld [vmem:[%s1284 + $0x1d8] sm:$0xff]
        %v1461 = vld [vmem:[%s1284 + $0x1e0] sm:$0xff]
        %v1462 = vld [vmem:[%s1284 + $0x1e8] sm:$0xff]
        %v1463 = vld [vmem:[%s1284 + $0x1f0] sm:$0xff]
        %v1464 = vld [vmem:[%s1284 + $0x1f8] sm:$0xff]
        %v1465 = vld [vmem:[%s1284 + $0x200] sm:$0xff]
        %v1466 = vld [vmem:[%s1284 + $0x208] sm:$0xff]
        %v1467 = vld [vmem:[%s1284 + $0x210] sm:$0xff]
        %v1468 = vld [vmem:[%s1284 + $0x218] sm:$0xff]
        %v1469 = vld [vmem:[%s1284 + $0x220] sm:$0xff]
        %v1470 = vld [vmem:[%s1284 + $0x228] sm:$0xff]
        %v1471 = vld [vmem:[%s1284 + $0x230] sm:$0xff]
        %v1472 = vld [vmem:[%s1284 + $0x238] sm:$0xff]
        %v1473 = vld [vmem:[%s1284 + $0x240] sm:$0xff]
        %v1474 = vld [vmem:[%s1284 + $0x248] sm:$0xff]
        %v1475 = vld [vmem:[%s1284 + $0x250] sm:$0xff]
        %v1476 = vld [vmem:[%s1284 + $0x258] sm:$0xff]
        %v1477 = vld [vmem:[%s1284 + $0x260] sm:$0xff]
        %v1478 = vld [vmem:[%s1284 + $0x268] sm:$0xff]
        %v1479 = vld [vmem:[%s1284 + $0x270] sm:$0xff]
        %v1480 = vld [vmem:[%s1284 + $0x278] sm:$0xff]
        %v1481 = vld [vmem:[%s1284 + $0x280] sm:$0xff]
        %v1482 = vld [vmem:[%s1284 + $0x288] sm:$0xff]
        %v1483 = vld [vmem:[%s1284 + $0x290] sm:$0xff]
        %v1484 = vld [vmem:[%s1284 + $0x298] sm:$0xff]
        %v1485 = vld [vmem:[%s1284 + $0x2a0] sm:$0xff]
        %v1486 = vld [vmem:[%s1284 + $0x2a8] sm:$0xff]
        %v1487 = vld [vmem:[%s1284 + $0x2b0] sm:$0xff]
        %v1488 = vld [vmem:[%s1284 + $0x2b8] sm:$0xff]
        %v1489 = vld [vmem:[%s1284 + $0x2c0] sm:$0xff]
        %v1490 = vld [vmem:[%s1284 + $0x2c8] sm:$0xff]
        %v1491 = vld [vmem:[%s1284 + $0x2d0] sm:$0xff]
        %v1492 = vld [vmem:[%s1284 + $0x2d8] sm:$0xff]
        %v1493 = vld [vmem:[%s1284 + $0x2e0] sm:$0xff]
        %v1494 = vld [vmem:[%s1284 + $0x2e8] sm:$0xff]
        %v1495 = vld [vmem:[%s1284 + $0x2f0] sm:$0xff]
        %v1496 = vld [vmem:[%s1284 + $0x2f8] sm:$0xff]
        %v1497 = vld [vmem:[%s1284 + $0x300] sm:$0xff]
        %v1498 = vld [vmem:[%s1284 + $0x308] sm:$0xff]
        %v1499 = vld [vmem:[%s1284 + $0x310] sm:$0xff]
        %v1500 = vld [vmem:[%s1284 + $0x318] sm:$0xff]
        %v1501 = vld [vmem:[%s1284 + $0x320] sm:$0xff]
        %v1502 = vld [vmem:[%s1284 + $0x328] sm:$0xff]
        %v1503 = vld [vmem:[%s1284 + $0x330] sm:$0xff]
        %v1504 = vld [vmem:[%s1284 + $0x338] sm:$0xff]
        %v1505 = vld [vmem:[%s1284 + $0x340] sm:$0xff]
        %v1506 = vld [vmem:[%s1284 + $0x348] sm:$0xff]
        %v1507 = vld [vmem:[%s1284 + $0x350] sm:$0xff]
        %v1508 = vld [vmem:[%s1284 + $0x358] sm:$0xff]
        %v1509 = vld [vmem:[%s1284 + $0x360] sm:$0xff]
        %v1510 = vld [vmem:[%s1284 + $0x368] sm:$0xff]
        %v1511 = vld [vmem:[%s1284 + $0x370] sm:$0xff]
        %v1512 = vld [vmem:[%s1284 + $0x378] sm:$0xff]
        %v1513 = vld [vmem:[%s1284 + $0x380] sm:$0xff]
        %v1514 = vld [vmem:[%s1284 + $0x388] sm:$0xff]
        %v1515 = vld [vmem:[%s1284 + $0x390] sm:$0xff]
        %v1516 = vld [vmem:[%s1284 + $0x398] sm:$0xff]
        %v1517 = vld [vmem:[%s1284 + $0x3a0] sm:$0xff]
        %v1518 = vld [vmem:[%s1284 + $0x3a8] sm:$0xff]
        %v1519 = vld [vmem:[%s1284 + $0x3b0] sm:$0xff]
        %v1520 = vld [vmem:[%s1284 + $0x3b8] sm:$0xff]
        %v1521 = vld [vmem:[%s1284 + $0x3c0] sm:$0xff]
        %v1522 = vld [vmem:[%s1284 + $0x3c8] sm:$0xff]
        %v1523 = vld [vmem:[%s1284 + $0x3d0] sm:$0xff]
        %v1524 = vld [vmem:[%s1284 + $0x3d8] sm:$0xff]
        %v1525 = vld [vmem:[%s1284 + $0x3e0] sm:$0xff]
        %v1526 = vld [vmem:[%s1284 + $0x3e8] sm:$0xff]
        %v1527 = vld [vmem:[%s1284 + $0x3f0] sm:$0xff]
        %v1528 = vld [vmem:[%s1284 + $0x3f8] sm:$0xff]
        %v1529 = vld [vmem:[%s1284 + $0x400] sm:$0xff]
        %v1530 = vld [vmem:[%s1284 + $0x408] sm:$0xff]
        %v1531 = vld [vmem:[%s1284 + $0x410] sm:$0xff]
        %v1532 = vld [vmem:[%s1284 + $0x418] sm:$0xff]
        %v1533 = vld [vmem:[%s1284 + $0x420] sm:$0xff]
        %v1534 = vld [vmem:[%s1284 + $0x428] sm:$0xff]
        %v1535 = vld [vmem:[%s1284 + $0x430] sm:$0xff]
        %v1536 = vld [vmem:[%s1284 + $0x438] sm:$0xff]
        %v1537 = vld [vmem:[%s1284 + $0x440] sm:$0xff]
        %v1538 = vld [vmem:[%s1284 + $0x448] sm:$0xff]
        %v1539 = vld [vmem:[%s1284 + $0x450] sm:$0xff]
        %v1540 = vld [vmem:[%s1284 + $0x458] sm:$0xff]
        %v1541 = vld [vmem:[%s1284 + $0x460] sm:$0xff]
        %v1542 = vld [vmem:[%s1284 + $0x468] sm:$0xff]
        %v1543 = vld [vmem:[%s1284 + $0x470] sm:$0xff]
        %v1544 = vld [vmem:[%s1284 + $0x478] sm:$0xff]
        %v1545 = vld [vmem:[%s1284 + $0x480] sm:$0xff]
        %v1546 = vld [vmem:[%s1284 + $0x488] sm:$0xff]
        %v1547 = vld [vmem:[%s1284 + $0x490] sm:$0xff]
        %v1548 = vld [vmem:[%s1284 + $0x498] sm:$0xff]
        %v1549 = vld [vmem:[%s1284 + $0x4a0] sm:$0xff]
        %v1550 = vld [vmem:[%s1284 + $0x4a8] sm:$0xff]
        %v1551 = vld [vmem:[%s1284 + $0x4b0] sm:$0xff]
        %v1552 = vld [vmem:[%s1284 + $0x4b8] sm:$0xff]
        %v1553 = vld [vmem:[%s1284 + $0x4c0] sm:$0xff]
        %v1554 = vld [vmem:[%s1284 + $0x4c8] sm:$0xff]
        %v1555 = vld [vmem:[%s1284 + $0x4d0] sm:$0xff]
        %v1556 = vld [vmem:[%s1284 + $0x4d8] sm:$0xff]
        %v1557 = vld [vmem:[%s1284 + $0x4e0] sm:$0xff]
        %v1558 = vld [vmem:[%s1284 + $0x4e8] sm:$0xff]
        %v1559 = vld [vmem:[%s1284 + $0x4f0] sm:$0xff]
        %v1560 = vld [vmem:[%s1284 + $0x4f8] sm:$0xff]
        %v1561 = vld [vmem:[%s1284 + $0x500] sm:$0xff]
        %v1562 = vld [vmem:[%s1284 + $0x508] sm:$0xff]
        %v1563 = vld [vmem:[%s1284 + $0x510] sm:$0xff]
        %v1564 = vld [vmem:[%s1284 + $0x518] sm:$0xff]
        %v1565 = vld [vmem:[%s1284 + $0x520] sm:$0xff]
        %v1566 = vld [vmem:[%s1284 + $0x528] sm:$0xff]
        %v1567 = vld [vmem:[%s1284 + $0x530] sm:$0xff]
        %v1568 = vld [vmem:[%s1284 + $0x538] sm:$0xff]
        %v1569 = vld [vmem:[%s1284 + $0x540] sm:$0xff]
        %v1570 = vld [vmem:[%s1284 + $0x548] sm:$0xff]
        %v1571 = vld [vmem:[%s1284 + $0x550] sm:$0xff]
        %v1572 = vld [vmem:[%s1284 + $0x558] sm:$0xff]
        %v1573 = vld [vmem:[%s1284 + $0x560] sm:$0xff]
        %v1574 = vld [vmem:[%s1284 + $0x568] sm:$0xff]
        %v1575 = vld [vmem:[%s1284 + $0x570] sm:$0xff]
        %v1576 = vld [vmem:[%s1284 + $0x578] sm:$0xff]
        %v1577 = vld [vmem:[%s1284 + $0x580] sm:$0xff]
        %v1578 = vld [vmem:[%s1284 + $0x588] sm:$0xff]
        %v1579 = vld [vmem:[%s1284 + $0x590] sm:$0xff]
        %v1580 = vld [vmem:[%s1284 + $0x598] sm:$0xff]
        %v1581 = vld [vmem:[%s1284 + $0x5a0] sm:$0xff]
        %v1582 = vld [vmem:[%s1284 + $0x5a8] sm:$0xff]
        %v1583 = vld [vmem:[%s1284 + $0x5b0] sm:$0xff]
        %v1584 = vld [vmem:[%s1284 + $0x5b8] sm:$0xff]
        %v1585 = vld [vmem:[%s1284 + $0x5c0] sm:$0xff]
        %v1586 = vld [vmem:[%s1284 + $0x5c8] sm:$0xff]
        %v1587 = vld [vmem:[%s1284 + $0x5d0] sm:$0xff]
        %v1588 = vld [vmem:[%s1284 + $0x5d8] sm:$0xff]
        %v1589 = vld [vmem:[%s1284 + $0x5e0] sm:$0xff]
        %v1590 = vld [vmem:[%s1284 + $0x5e8] sm:$0xff]
        %v1591 = vld [vmem:[%s1284 + $0x5f0] sm:$0xff]
        %v1592 = vld [vmem:[%s1284 + $0x5f8] sm:$0xff]
        %v1593 = vld [vmem:[%s1284 + $0x600] sm:$0xff]
        %v1594 = vld [vmem:[%s1284 + $0x608] sm:$0xff]
        %v1595 = vld [vmem:[%s1284 + $0x610] sm:$0xff]
        %v1596 = vld [vmem:[%s1284 + $0x618] sm:$0xff]
        %v1597 = vld [vmem:[%s1284 + $0x620] sm:$0xff]
        %v1598 = vld [vmem:[%s1284 + $0x628] sm:$0xff]
        %v1599 = vld [vmem:[%s1284 + $0x630] sm:$0xff]
        %v1600 = vld [vmem:[%s1284 + $0x638] sm:$0xff]
        %v1601 = vld [vmem:[%s1284 + $0x640] sm:$0xff]
        %v1602 = vld [vmem:[%s1284 + $0x648] sm:$0xff]
        %v1603 = vld [vmem:[%s1284 + $0x650] sm:$0xff]
        %v1604 = vld [vmem:[%s1284 + $0x658] sm:$0xff]
        %v1605 = vld [vmem:[%s1284 + $0x660] sm:$0xff]
        %v1606 = vld [vmem:[%s1284 + $0x668] sm:$0xff]
        %v1607 = vld [vmem:[%s1284 + $0x670] sm:$0xff]
        %v1608 = vld [vmem:[%s1284 + $0x678] sm:$0xff]
        %v1609 = vld [vmem:[%s1284 + $0x680] sm:$0xff]
        %v1610 = vld [vmem:[%s1284 + $0x688] sm:$0xff]
        %v1611 = vld [vmem:[%s1284 + $0x690] sm:$0xff]
        %v1612 = vld [vmem:[%s1284 + $0x698] sm:$0xff]
        %v1613 = vld [vmem:[%s1284 + $0x6a0] sm:$0xff]
        %v1614 = vld [vmem:[%s1284 + $0x6a8] sm:$0xff]
        %v1615 = vld [vmem:[%s1284 + $0x6b0] sm:$0xff]
        %v1616 = vld [vmem:[%s1284 + $0x6b8] sm:$0xff]
        %v1617 = vld [vmem:[%s1284 + $0x6c0] sm:$0xff]
        %v1618 = vld [vmem:[%s1284 + $0x6c8] sm:$0xff]
        %v1619 = vld [vmem:[%s1284 + $0x6d0] sm:$0xff]
        %v1620 = vld [vmem:[%s1284 + $0x6d8] sm:$0xff]
        %v1621 = vld [vmem:[%s1284 + $0x6e0] sm:$0xff]
        %v1622 = vld [vmem:[%s1284 + $0x6e8] sm:$0xff]
        %v1623 = vld [vmem:[%s1284 + $0x6f0] sm:$0xff]
        %v1624 = vld [vmem:[%s1284 + $0x6f8] sm:$0xff]
        %v1625 = vld [vmem:[%s1284 + $0x700] sm:$0xff]
        %v1626 = vld [vmem:[%s1284 + $0x708] sm:$0xff]
        %v1627 = vld [vmem:[%s1284 + $0x710] sm:$0xff]
        %v1628 = vld [vmem:[%s1284 + $0x718] sm:$0xff]
        %v1629 = vld [vmem:[%s1284 + $0x720] sm:$0xff]
        %v1630 = vld [vmem:[%s1284 + $0x728] sm:$0xff]
        %v1631 = vld [vmem:[%s1284 + $0x730] sm:$0xff]
        %v1632 = vld [vmem:[%s1284 + $0x738] sm:$0xff]
        %v1633 = vld [vmem:[%s1284 + $0x740] sm:$0xff]
        %v1634 = vld [vmem:[%s1284 + $0x748] sm:$0xff]
        %v1635 = vld [vmem:[%s1284 + $0x750] sm:$0xff]
        %v1636 = vld [vmem:[%s1284 + $0x758] sm:$0xff]
        %v1637 = vld [vmem:[%s1284 + $0x760] sm:$0xff]
        %v1638 = vld [vmem:[%s1284 + $0x768] sm:$0xff]
        %v1639 = vld [vmem:[%s1284 + $0x770] sm:$0xff]
        %v1640 = vld [vmem:[%s1284 + $0x778] sm:$0xff]
        %v1641 = vld [vmem:[%s1284 + $0x780] sm:$0xff]
        %v1642 = vld [vmem:[%s1284 + $0x788] sm:$0xff]
        %v1643 = vld [vmem:[%s1284 + $0x790] sm:$0xff]
        %v1644 = vld [vmem:[%s1284 + $0x798] sm:$0xff]
        %v1645 = vld [vmem:[%s1284 + $0x7a0] sm:$0xff]
        %v1646 = vld [vmem:[%s1284 + $0x7a8] sm:$0xff]
        %v1647 = vld [vmem:[%s1284 + $0x7b0] sm:$0xff]
        %v1648 = vld [vmem:[%s1284 + $0x7b8] sm:$0xff]
        %v1649 = vld [vmem:[%s1284 + $0x7c0] sm:$0xff]
        %v1650 = vld [vmem:[%s1284 + $0x7c8] sm:$0xff]
        %v1651 = vld [vmem:[%s1284 + $0x7d0] sm:$0xff]
        %v1652 = vld [vmem:[%s1284 + $0x7d8] sm:$0xff]
        %v1653 = vld [vmem:[%s1284 + $0x7e0] sm:$0xff]
        %v1654 = vld [vmem:[%s1284 + $0x7e8] sm:$0xff]
        %v1655 = vld [vmem:[%s1284 + $0x7f0] sm:$0xff]
        %v1656 = vld [vmem:[%s1284 + $0x7f8] sm:$0xff]
        %v1657 = vpack.c.bf16 %v1402, %v1401
        %v1658 = vpack.c.bf16 %v1404, %v1403
        %v1659 = vpack.c.bf16 %v1406, %v1405
        %v1660 = vpack.c.bf16 %v1408, %v1407
        %v1661 = vpack.c.bf16 %v1410, %v1409
        %v1662 = vpack.c.bf16 %v1412, %v1411
        %v1663 = vpack.c.bf16 %v1414, %v1413
        %v1664 = vpack.c.bf16 %v1416, %v1415
        %v1665 = vpack.c.bf16 %v1418, %v1417
        %v1666 = vpack.c.bf16 %v1420, %v1419
        %v1667 = vpack.c.bf16 %v1422, %v1421
        %v1668 = vpack.c.bf16 %v1424, %v1423
        %v1669 = vpack.c.bf16 %v1426, %v1425
        %v1670 = vpack.c.bf16 %v1428, %v1427
        %v1671 = vpack.c.bf16 %v1430, %v1429
        %v1672 = vpack.c.bf16 %v1432, %v1431
        %v1673 = vpack.c.bf16 %v1434, %v1433
        %v1674 = vpack.c.bf16 %v1436, %v1435
        %v1675 = vpack.c.bf16 %v1438, %v1437
        %v1676 = vpack.c.bf16 %v1440, %v1439
        %v1677 = vpack.c.bf16 %v1442, %v1441
        %v1678 = vpack.c.bf16 %v1444, %v1443
        %v1679 = vpack.c.bf16 %v1446, %v1445
        %v1680 = vpack.c.bf16 %v1448, %v1447
        %v1681 = vpack.c.bf16 %v1450, %v1449
        %v1682 = vpack.c.bf16 %v1452, %v1451
        %v1683 = vpack.c.bf16 %v1454, %v1453
        %v1684 = vpack.c.bf16 %v1456, %v1455
        %v1685 = vpack.c.bf16 %v1458, %v1457
        %v1686 = vpack.c.bf16 %v1460, %v1459
        %v1687 = vpack.c.bf16 %v1462, %v1461
        %v1688 = vpack.c.bf16 %v1464, %v1463
        %v1689 = vpack.c.bf16 %v1466, %v1465
        %v1690 = vpack.c.bf16 %v1468, %v1467
        %v1691 = vpack.c.bf16 %v1470, %v1469
        %v1692 = vpack.c.bf16 %v1472, %v1471
        %v1693 = vpack.c.bf16 %v1474, %v1473
        %v1694 = vpack.c.bf16 %v1476, %v1475
        %v1695 = vpack.c.bf16 %v1478, %v1477
        %v1696 = vpack.c.bf16 %v1480, %v1479
        %v1697 = vpack.c.bf16 %v1482, %v1481
        %v1698 = vpack.c.bf16 %v1484, %v1483
        %v1699 = vpack.c.bf16 %v1486, %v1485
        %v1700 = vpack.c.bf16 %v1488, %v1487
        %v1701 = vpack.c.bf16 %v1490, %v1489
        %v1702 = vpack.c.bf16 %v1492, %v1491
        %v1703 = vpack.c.bf16 %v1494, %v1493
        %v1704 = vpack.c.bf16 %v1496, %v1495
        %v1705 = vpack.c.bf16 %v1498, %v1497
        %v1706 = vpack.c.bf16 %v1500, %v1499
        %v1707 = vpack.c.bf16 %v1502, %v1501
        %v1708 = vpack.c.bf16 %v1504, %v1503
        %v1709 = vpack.c.bf16 %v1506, %v1505
        %v1710 = vpack.c.bf16 %v1508, %v1507
        %v1711 = vpack.c.bf16 %v1510, %v1509
        %v1712 = vpack.c.bf16 %v1512, %v1511
        %v1713 = vpack.c.bf16 %v1514, %v1513
        %v1714 = vpack.c.bf16 %v1516, %v1515
        %v1715 = vpack.c.bf16 %v1518, %v1517
        %v1716 = vpack.c.bf16 %v1520, %v1519
        %v1717 = vpack.c.bf16 %v1522, %v1521
        %v1718 = vpack.c.bf16 %v1524, %v1523
        %v1719 = vpack.c.bf16 %v1526, %v1525
        %v1720 = vpack.c.bf16 %v1528, %v1527
        %v1721 = vpack.c.bf16 %v1530, %v1529
        %v1722 = vpack.c.bf16 %v1532, %v1531
        %v1723 = vpack.c.bf16 %v1534, %v1533
        %v1724 = vpack.c.bf16 %v1536, %v1535
        %v1725 = vpack.c.bf16 %v1538, %v1537
        %v1726 = vpack.c.bf16 %v1540, %v1539
        %v1727 = vpack.c.bf16 %v1542, %v1541
        %v1728 = vpack.c.bf16 %v1544, %v1543
        %v1729 = vpack.c.bf16 %v1546, %v1545
        %v1730 = vpack.c.bf16 %v1548, %v1547
        %v1731 = vpack.c.bf16 %v1550, %v1549
        %v1732 = vpack.c.bf16 %v1552, %v1551
        %v1733 = vpack.c.bf16 %v1554, %v1553
        %v1734 = vpack.c.bf16 %v1556, %v1555
        %v1735 = vpack.c.bf16 %v1558, %v1557
        %v1736 = vpack.c.bf16 %v1560, %v1559
        %v1737 = vpack.c.bf16 %v1562, %v1561
        %v1738 = vpack.c.bf16 %v1564, %v1563
        %v1739 = vpack.c.bf16 %v1566, %v1565
        %v1740 = vpack.c.bf16 %v1568, %v1567
        %v1741 = vpack.c.bf16 %v1570, %v1569
        %v1742 = vpack.c.bf16 %v1572, %v1571
        %v1743 = vpack.c.bf16 %v1574, %v1573
        %v1744 = vpack.c.bf16 %v1576, %v1575
        %v1745 = vpack.c.bf16 %v1578, %v1577
        %v1746 = vpack.c.bf16 %v1580, %v1579
        %v1747 = vpack.c.bf16 %v1582, %v1581
        %v1748 = vpack.c.bf16 %v1584, %v1583
        %v1749 = vpack.c.bf16 %v1586, %v1585
        %v1750 = vpack.c.bf16 %v1588, %v1587
        %v1751 = vpack.c.bf16 %v1590, %v1589
        %v1752 = vpack.c.bf16 %v1592, %v1591
        %v1753 = vpack.c.bf16 %v1594, %v1593
        %v1754 = vpack.c.bf16 %v1596, %v1595
        %v1755 = vpack.c.bf16 %v1598, %v1597
        %v1756 = vpack.c.bf16 %v1600, %v1599
        %v1757 = vpack.c.bf16 %v1602, %v1601
        %v1758 = vpack.c.bf16 %v1604, %v1603
        %v1759 = vpack.c.bf16 %v1606, %v1605
        %v1760 = vpack.c.bf16 %v1608, %v1607
        %v1761 = vpack.c.bf16 %v1610, %v1609
        %v1762 = vpack.c.bf16 %v1612, %v1611
        %v1763 = vpack.c.bf16 %v1614, %v1613
        %v1764 = vpack.c.bf16 %v1616, %v1615
        %v1765 = vpack.c.bf16 %v1618, %v1617
        %v1766 = vpack.c.bf16 %v1620, %v1619
        %v1767 = vpack.c.bf16 %v1622, %v1621
        %v1768 = vpack.c.bf16 %v1624, %v1623
        %v1769 = vpack.c.bf16 %v1626, %v1625
        %v1770 = vpack.c.bf16 %v1628, %v1627
        %v1771 = vpack.c.bf16 %v1630, %v1629
        %v1772 = vpack.c.bf16 %v1632, %v1631
        %v1773 = vpack.c.bf16 %v1634, %v1633
        %v1774 = vpack.c.bf16 %v1636, %v1635
        %v1775 = vpack.c.bf16 %v1638, %v1637
        %v1776 = vpack.c.bf16 %v1640, %v1639
        %v1777 = vpack.c.bf16 %v1642, %v1641
        %v1778 = vpack.c.bf16 %v1644, %v1643
        %v1779 = vpack.c.bf16 %v1646, %v1645
        %v1780 = vpack.c.bf16 %v1648, %v1647
        %v1781 = vpack.c.bf16 %v1650, %v1649
        %v1782 = vpack.c.bf16 %v1652, %v1651
        %v1783 = vpack.c.bf16 %v1654, %v1653
        %v1784 = vpack.c.bf16 %v1656, %v1655
        %v1785 = vld [vmem:[%s3] sm:$0xff]
        %v1786 = vld [vmem:[%s3 + $0x8] sm:$0xff]
        %v1787 = vpack.c.bf16 %v1786, %v1785
        %vm1788 = vcmask 130048
        %v1790 = vsel %vm1788, %v1657, 0
        %v1793 = vsel %vm1788, %v1658, 0
        %v1796 = vsel %vm1788, %v1659, 0
        %v1799 = vsel %vm1788, %v1660, 0
        %v1802 = vsel %vm1788, %v1661, 0
        %v1805 = vsel %vm1788, %v1662, 0
        %v1808 = vsel %vm1788, %v1663, 0
        %v1811 = vsel %vm1788, %v1664, 0
        %v1814 = vsel %vm1788, %v1665, 0
        %v1817 = vsel %vm1788, %v1666, 0
        %v1820 = vsel %vm1788, %v1667, 0
        %v1823 = vsel %vm1788, %v1668, 0
        %v1826 = vsel %vm1788, %v1669, 0
        %v1829 = vsel %vm1788, %v1670, 0
        %v1832 = vsel %vm1788, %v1671, 0
        %v1835 = vsel %vm1788, %v1672, 0
        %v1838 = vsel %vm1788, %v1673, 0
        %v1841 = vsel %vm1788, %v1674, 0
        %v1844 = vsel %vm1788, %v1675, 0
        %v1847 = vsel %vm1788, %v1676, 0
        %v1850 = vsel %vm1788, %v1677, 0
        %v1853 = vsel %vm1788, %v1678, 0
        %v1856 = vsel %vm1788, %v1679, 0
        %v1859 = vsel %vm1788, %v1680, 0
        %v1862 = vsel %vm1788, %v1681, 0
        %v1865 = vsel %vm1788, %v1682, 0
        %v1868 = vsel %vm1788, %v1683, 0
        %v1871 = vsel %vm1788, %v1684, 0
        %v1874 = vsel %vm1788, %v1685, 0
        %v1877 = vsel %vm1788, %v1686, 0
        %v1880 = vsel %vm1788, %v1687, 0
        %v1883 = vsel %vm1788, %v1688, 0
        %v1886 = vsel %vm1788, %v1689, 0
        %v1889 = vsel %vm1788, %v1690, 0
        %v1892 = vsel %vm1788, %v1691, 0
        %v1895 = vsel %vm1788, %v1692, 0
        %v1898 = vsel %vm1788, %v1693, 0
        %v1901 = vsel %vm1788, %v1694, 0
        %v1904 = vsel %vm1788, %v1695, 0
        %v1907 = vsel %vm1788, %v1696, 0
        %v1910 = vsel %vm1788, %v1697, 0
        %v1913 = vsel %vm1788, %v1698, 0
        %v1916 = vsel %vm1788, %v1699, 0
        %v1919 = vsel %vm1788, %v1700, 0
        %v1922 = vsel %vm1788, %v1701, 0
        %v1925 = vsel %vm1788, %v1702, 0
        %v1928 = vsel %vm1788, %v1703, 0
        %v1931 = vsel %vm1788, %v1704, 0
        %v1934 = vsel %vm1788, %v1705, 0
        %v1937 = vsel %vm1788, %v1706, 0
        %v1940 = vsel %vm1788, %v1707, 0
        %v1943 = vsel %vm1788, %v1708, 0
        %v1946 = vsel %vm1788, %v1709, 0
        %v1949 = vsel %vm1788, %v1710, 0
        %v1952 = vsel %vm1788, %v1711, 0
        %v1955 = vsel %vm1788, %v1712, 0
        %v1958 = vsel %vm1788, %v1713, 0
        %v1961 = vsel %vm1788, %v1714, 0
        %v1964 = vsel %vm1788, %v1715, 0
        %v1967 = vsel %vm1788, %v1716, 0
        %v1970 = vsel %vm1788, %v1717, 0
        %v1973 = vsel %vm1788, %v1718, 0
        %v1976 = vsel %vm1788, %v1719, 0
        %v1979 = vsel %vm1788, %v1720, 0
        %v1982 = vsel %vm1788, %v1721, 0
        %v1985 = vsel %vm1788, %v1722, 0
        %v1988 = vsel %vm1788, %v1723, 0
        %v1991 = vsel %vm1788, %v1724, 0
        %v1994 = vsel %vm1788, %v1725, 0
        %v1997 = vsel %vm1788, %v1726, 0
        %v2000 = vsel %vm1788, %v1727, 0
        %v2003 = vsel %vm1788, %v1728, 0
        %v2006 = vsel %vm1788, %v1729, 0
        %v2009 = vsel %vm1788, %v1730, 0
        %v2012 = vsel %vm1788, %v1731, 0
        %v2015 = vsel %vm1788, %v1732, 0
        %v2018 = vsel %vm1788, %v1733, 0
        %v2021 = vsel %vm1788, %v1734, 0
        %v2024 = vsel %vm1788, %v1735, 0
        %v2027 = vsel %vm1788, %v1736, 0
        %v2030 = vsel %vm1788, %v1737, 0
        %v2033 = vsel %vm1788, %v1738, 0
        %v2036 = vsel %vm1788, %v1739, 0
        %v2039 = vsel %vm1788, %v1740, 0
        %v2042 = vsel %vm1788, %v1741, 0
        %v2045 = vsel %vm1788, %v1742, 0
        %v2048 = vsel %vm1788, %v1743, 0
        %v2051 = vsel %vm1788, %v1744, 0
        %v2054 = vsel %vm1788, %v1745, 0
        %v2057 = vsel %vm1788, %v1746, 0
        %v2060 = vsel %vm1788, %v1747, 0
        %v2063 = vsel %vm1788, %v1748, 0
        %v2066 = vsel %vm1788, %v1749, 0
        %v2069 = vsel %vm1788, %v1750, 0
        %v2072 = vsel %vm1788, %v1751, 0
        %v2075 = vsel %vm1788, %v1752, 0
        %v2078 = vsel %vm1788, %v1753, 0
        %v2081 = vsel %vm1788, %v1754, 0
        %v2084 = vsel %vm1788, %v1755, 0
        %v2087 = vsel %vm1788, %v1756, 0
        %v2090 = vsel %vm1788, %v1757, 0
        %v2093 = vsel %vm1788, %v1758, 0
        %v2096 = vsel %vm1788, %v1759, 0
        %v2099 = vsel %vm1788, %v1760, 0
        %v2102 = vsel %vm1788, %v1761, 0
        %v2105 = vsel %vm1788, %v1762, 0
        %v2108 = vsel %vm1788, %v1763, 0
        %v2111 = vsel %vm1788, %v1764, 0
        %v2114 = vsel %vm1788, %v1765, 0
        %v2117 = vsel %vm1788, %v1766, 0
        %v2120 = vsel %vm1788, %v1767, 0
        %v2123 = vsel %vm1788, %v1768, 0
        %v2126 = vsel %vm1788, %v1769, 0
        %v2129 = vsel %vm1788, %v1770, 0
        %v2132 = vsel %vm1788, %v1771, 0
        %v2135 = vsel %vm1788, %v1772, 0
        %v2138 = vsel %vm1788, %v1773, 0
        %v2141 = vsel %vm1788, %v1774, 0
        %v2144 = vsel %vm1788, %v1775, 0
        %v2147 = vsel %vm1788, %v1776, 0
        %v2150 = vsel %vm1788, %v1777, 0
        %v2153 = vsel %vm1788, %v1778, 0
        %v2156 = vsel %vm1788, %v1779, 0
        %v2159 = vsel %vm1788, %v1780, 0
        %v2162 = vsel %vm1788, %v1781, 0
        %v2165 = vsel %vm1788, %v1782, 0
        %v2168 = vsel %vm1788, %v1783, 0
        %v2171 = vsel %vm1788, %v1784, 0
        %2173 = vmatprep.subr.bf16.mxu0 0
        %2174 = vmatpush1.bf16.msra.mxu0 0
        %2175 = vmatprep.subr.bf16.mxu0 0
        %2176 = vmatpush1.bf16.msra.mxu0 0
        %2177 = vmatprep.subr.bf16.mxu0 0
        %2178 = vmatpush1.bf16.msra.mxu0 0
        %2179 = vmatprep.subr.bf16.mxu0 0
        %2180 = vmatpush1.bf16.msra.mxu0 0
        %2181 = vmatprep.subr.bf16.mxu0 0
        %2182 = vmatpush1.bf16.msra.mxu0 0
        %2183 = vmatprep.subr.bf16.mxu0 0
        %2184 = vmatpush1.bf16.msra.mxu0 0
        %2185 = vmatprep.subr.bf16.mxu0 0
        %2186 = vmatpush1.bf16.msra.mxu0 0
        %2187 = vmatprep.subr.bf16.mxu0 0
        %2188 = vmatpush1.bf16.msra.mxu0 %v1787
        %2189 = vmatprep.subr.bf16.mxu0 0
        %2190 = vmatpush2.bf16.msra.mxu0 0
        %2191 = vmatprep.subr.bf16.mxu0 0
        %2192 = vmatpush2.bf16.msra.mxu0 0
        %2193 = vmatprep.subr.bf16.mxu0 0
        %2194 = vmatpush2.bf16.msra.mxu0 0
        %2195 = vmatprep.subr.bf16.mxu0 0
        %2196 = vmatpush2.bf16.msra.mxu0 0
        %2197 = vmatprep.subr.bf16.mxu0 0
        %2198 = vmatpush2.bf16.msra.mxu0 0
        %2199 = vmatprep.subr.bf16.mxu0 0
        %2200 = vmatpush2.bf16.msra.mxu0 0
        %2201 = vmatprep.subr.bf16.mxu0 0
        %2202 = vmatpush2.bf16.msra.mxu0 0
        %2203 = vmatprep.subr.bf16.mxu0 0
        %2204 = vmatpush2.bf16.msra.mxu0 0
        %2205 = vmatprep.mubr.bf16.mxu0 0
        %2206 = vmatmul.mubr.bf16.gmra.mxu0 %v1790
        %v2207 = vpop.f32.mrf.mxu0
        %v2208 = vadd.f32 0.0, %v2207
        %v2209 = vpop.f32.mrf.mxu0
        %v2210 = vpop.f32.mrf.mxu0
        %v2211 = vadd.f32 0.0, %v2210
        %v2212 = vpop.f32.mrf.mxu0
        %2213 = vmatprep.mubr.bf16.mxu0 0
        %2214 = vmatmul.mubr.bf16.gmra.mxu0 %v1793
        %v2215 = vpop.f32.mrf.mxu0
        %v2216 = vadd.f32 0.0, %v2215
        %v2217 = vpop.f32.mrf.mxu0
        %v2218 = vpop.f32.mrf.mxu0
        %v2219 = vadd.f32 0.0, %v2218
        %v2220 = vpop.f32.mrf.mxu0
        %2221 = vmatprep.mubr.bf16.mxu0 0
        %2222 = vmatmul.mubr.bf16.gmra.mxu0 %v1796
        %v2223 = vpop.f32.mrf.mxu0
        %v2224 = vadd.f32 0.0, %v2223
        %v2225 = vpop.f32.mrf.mxu0
        %v2226 = vpop.f32.mrf.mxu0
        %v2227 = vadd.f32 0.0, %v2226
        %v2228 = vpop.f32.mrf.mxu0
        %2229 = vmatprep.mubr.bf16.mxu0 0
        %2230 = vmatmul.mubr.bf16.gmra.mxu0 %v1799
        %v2231 = vpop.f32.mrf.mxu0
        %v2232 = vadd.f32 0.0, %v2231
        %v2233 = vpop.f32.mrf.mxu0
        %v2234 = vpop.f32.mrf.mxu0
        %v2235 = vadd.f32 0.0, %v2234
        %v2236 = vpop.f32.mrf.mxu0
        %2237 = vmatprep.mubr.bf16.mxu0 0
        %2238 = vmatmul.mubr.bf16.gmra.mxu0 %v1802
        %v2239 = vpop.f32.mrf.mxu0
        %v2240 = vadd.f32 0.0, %v2239
        %v2241 = vpop.f32.mrf.mxu0
        %v2242 = vpop.f32.mrf.mxu0
        %v2243 = vadd.f32 0.0, %v2242
        %v2244 = vpop.f32.mrf.mxu0
        %2245 = vmatprep.mubr.bf16.mxu0 0
        %2246 = vmatmul.mubr.bf16.gmra.mxu0 %v1805
        %v2247 = vpop.f32.mrf.mxu0
        %v2248 = vadd.f32 0.0, %v2247
        %v2249 = vpop.f32.mrf.mxu0
        %v2250 = vpop.f32.mrf.mxu0
        %v2251 = vadd.f32 0.0, %v2250
        %v2252 = vpop.f32.mrf.mxu0
        %2253 = vmatprep.mubr.bf16.mxu0 0
        %2254 = vmatmul.mubr.bf16.gmra.mxu0 %v1808
        %v2255 = vpop.f32.mrf.mxu0
        %v2256 = vadd.f32 0.0, %v2255
        %v2257 = vpop.f32.mrf.mxu0
        %v2258 = vpop.f32.mrf.mxu0
        %v2259 = vadd.f32 0.0, %v2258
        %v2260 = vpop.f32.mrf.mxu0
        %2261 = vmatprep.mubr.bf16.mxu0 0
        %2262 = vmatmul.mubr.bf16.gmra.mxu0 %v1811
        %v2263 = vpop.f32.mrf.mxu0
        %v2264 = vadd.f32 0.0, %v2263
        %v2265 = vpop.f32.mrf.mxu0
        %v2266 = vpop.f32.mrf.mxu0
        %v2267 = vadd.f32 0.0, %v2266
        %v2268 = vpop.f32.mrf.mxu0
        %2269 = vmatprep.mubr.bf16.mxu0 0
        %2270 = vmatmul.mubr.bf16.gmra.mxu0 %v1814
        %v2271 = vpop.f32.mrf.mxu0
        %v2272 = vadd.f32 0.0, %v2271
        %v2273 = vpop.f32.mrf.mxu0
        %v2274 = vpop.f32.mrf.mxu0
        %v2275 = vadd.f32 0.0, %v2274
        %v2276 = vpop.f32.mrf.mxu0
        %2277 = vmatprep.mubr.bf16.mxu0 0
        %2278 = vmatmul.mubr.bf16.gmra.mxu0 %v1817
        %v2279 = vpop.f32.mrf.mxu0
        %v2280 = vadd.f32 0.0, %v2279
        %v2281 = vpop.f32.mrf.mxu0
        %v2282 = vpop.f32.mrf.mxu0
        %v2283 = vadd.f32 0.0, %v2282
        %v2284 = vpop.f32.mrf.mxu0
        %2285 = vmatprep.mubr.bf16.mxu0 0
        %2286 = vmatmul.mubr.bf16.gmra.mxu0 %v1820
        %v2287 = vpop.f32.mrf.mxu0
        %v2288 = vadd.f32 0.0, %v2287
        %v2289 = vpop.f32.mrf.mxu0
        %v2290 = vpop.f32.mrf.mxu0
        %v2291 = vadd.f32 0.0, %v2290
        %v2292 = vpop.f32.mrf.mxu0
        %2293 = vmatprep.mubr.bf16.mxu0 0
        %2294 = vmatmul.mubr.bf16.gmra.mxu0 %v1823
        %v2295 = vpop.f32.mrf.mxu0
        %v2296 = vadd.f32 0.0, %v2295
        %v2297 = vpop.f32.mrf.mxu0
        %v2298 = vpop.f32.mrf.mxu0
        %v2299 = vadd.f32 0.0, %v2298
        %v2300 = vpop.f32.mrf.mxu0
        %2301 = vmatprep.mubr.bf16.mxu0 0
        %2302 = vmatmul.mubr.bf16.gmra.mxu0 %v1826
        %v2303 = vpop.f32.mrf.mxu0
        %v2304 = vadd.f32 0.0, %v2303
        %v2305 = vpop.f32.mrf.mxu0
        %v2306 = vpop.f32.mrf.mxu0
        %v2307 = vadd.f32 0.0, %v2306
        %v2308 = vpop.f32.mrf.mxu0
        %2309 = vmatprep.mubr.bf16.mxu0 0
        %2310 = vmatmul.mubr.bf16.gmra.mxu0 %v1829
        %v2311 = vpop.f32.mrf.mxu0
        %v2312 = vadd.f32 0.0, %v2311
        %v2313 = vpop.f32.mrf.mxu0
        %v2314 = vpop.f32.mrf.mxu0
        %v2315 = vadd.f32 0.0, %v2314
        %v2316 = vpop.f32.mrf.mxu0
        %2317 = vmatprep.mubr.bf16.mxu0 0
        %2318 = vmatmul.mubr.bf16.gmra.mxu0 %v1832
        %v2319 = vpop.f32.mrf.mxu0
        %v2320 = vadd.f32 0.0, %v2319
        %v2321 = vpop.f32.mrf.mxu0
        %v2322 = vpop.f32.mrf.mxu0
        %v2323 = vadd.f32 0.0, %v2322
        %v2324 = vpop.f32.mrf.mxu0
        %2325 = vmatprep.mubr.bf16.mxu0 0
        %2326 = vmatmul.mubr.bf16.gmra.mxu0 %v1835
        %v2327 = vpop.f32.mrf.mxu0
        %v2328 = vadd.f32 0.0, %v2327
        %v2329 = vpop.f32.mrf.mxu0
        %v2330 = vpop.f32.mrf.mxu0
        %v2331 = vadd.f32 0.0, %v2330
        %v2332 = vpop.f32.mrf.mxu0
        %2333 = vmatprep.mubr.bf16.mxu0 0
        %2334 = vmatmul.mubr.bf16.gmra.mxu0 %v1838
        %v2335 = vpop.f32.mrf.mxu0
        %v2336 = vadd.f32 0.0, %v2335
        %v2337 = vpop.f32.mrf.mxu0
        %v2338 = vpop.f32.mrf.mxu0
        %v2339 = vadd.f32 0.0, %v2338
        %v2340 = vpop.f32.mrf.mxu0
        %2341 = vmatprep.mubr.bf16.mxu0 0
        %2342 = vmatmul.mubr.bf16.gmra.mxu0 %v1841
        %v2343 = vpop.f32.mrf.mxu0
        %v2344 = vadd.f32 0.0, %v2343
        %v2345 = vpop.f32.mrf.mxu0
        %v2346 = vpop.f32.mrf.mxu0
        %v2347 = vadd.f32 0.0, %v2346
        %v2348 = vpop.f32.mrf.mxu0
        %2349 = vmatprep.mubr.bf16.mxu0 0
        %2350 = vmatmul.mubr.bf16.gmra.mxu0 %v1844
        %v2351 = vpop.f32.mrf.mxu0
        %v2352 = vadd.f32 0.0, %v2351
        %v2353 = vpop.f32.mrf.mxu0
        %v2354 = vpop.f32.mrf.mxu0
        %v2355 = vadd.f32 0.0, %v2354
        %v2356 = vpop.f32.mrf.mxu0
        %2357 = vmatprep.mubr.bf16.mxu0 0
        %2358 = vmatmul.mubr.bf16.gmra.mxu0 %v1847
        %v2359 = vpop.f32.mrf.mxu0
        %v2360 = vadd.f32 0.0, %v2359
        %v2361 = vpop.f32.mrf.mxu0
        %v2362 = vpop.f32.mrf.mxu0
        %v2363 = vadd.f32 0.0, %v2362
        %v2364 = vpop.f32.mrf.mxu0
        %2365 = vmatprep.mubr.bf16.mxu0 0
        %2366 = vmatmul.mubr.bf16.gmra.mxu0 %v1850
        %v2367 = vpop.f32.mrf.mxu0
        %v2368 = vadd.f32 0.0, %v2367
        %v2369 = vpop.f32.mrf.mxu0
        %v2370 = vpop.f32.mrf.mxu0
        %v2371 = vadd.f32 0.0, %v2370
        %v2372 = vpop.f32.mrf.mxu0
        %2373 = vmatprep.mubr.bf16.mxu0 0
        %2374 = vmatmul.mubr.bf16.gmra.mxu0 %v1853
        %v2375 = vpop.f32.mrf.mxu0
        %v2376 = vadd.f32 0.0, %v2375
        %v2377 = vpop.f32.mrf.mxu0
        %v2378 = vpop.f32.mrf.mxu0
        %v2379 = vadd.f32 0.0, %v2378
        %v2380 = vpop.f32.mrf.mxu0
        %2381 = vmatprep.mubr.bf16.mxu0 0
        %2382 = vmatmul.mubr.bf16.gmra.mxu0 %v1856
        %v2383 = vpop.f32.mrf.mxu0
        %v2384 = vadd.f32 0.0, %v2383
        %v2385 = vpop.f32.mrf.mxu0
        %v2386 = vpop.f32.mrf.mxu0
        %v2387 = vadd.f32 0.0, %v2386
        %v2388 = vpop.f32.mrf.mxu0
        %2389 = vmatprep.mubr.bf16.mxu0 0
        %2390 = vmatmul.mubr.bf16.gmra.mxu0 %v1859
        %v2391 = vpop.f32.mrf.mxu0
        %v2392 = vadd.f32 0.0, %v2391
        %v2393 = vpop.f32.mrf.mxu0
        %v2394 = vpop.f32.mrf.mxu0
        %v2395 = vadd.f32 0.0, %v2394
        %v2396 = vpop.f32.mrf.mxu0
        %2397 = vmatprep.mubr.bf16.mxu0 0
        %2398 = vmatmul.mubr.bf16.gmra.mxu0 %v1862
        %v2399 = vpop.f32.mrf.mxu0
        %v2400 = vadd.f32 0.0, %v2399
        %v2401 = vpop.f32.mrf.mxu0
        %v2402 = vpop.f32.mrf.mxu0
        %v2403 = vadd.f32 0.0, %v2402
        %v2404 = vpop.f32.mrf.mxu0
        %2405 = vmatprep.mubr.bf16.mxu0 0
        %2406 = vmatmul.mubr.bf16.gmra.mxu0 %v1865
        %v2407 = vpop.f32.mrf.mxu0
        %v2408 = vadd.f32 0.0, %v2407
        %v2409 = vpop.f32.mrf.mxu0
        %v2410 = vpop.f32.mrf.mxu0
        %v2411 = vadd.f32 0.0, %v2410
        %v2412 = vpop.f32.mrf.mxu0
        %2413 = vmatprep.mubr.bf16.mxu0 0
        %2414 = vmatmul.mubr.bf16.gmra.mxu0 %v1868
        %v2415 = vpop.f32.mrf.mxu0
        %v2416 = vadd.f32 0.0, %v2415
        %v2417 = vpop.f32.mrf.mxu0
        %v2418 = vpop.f32.mrf.mxu0
        %v2419 = vadd.f32 0.0, %v2418
        %v2420 = vpop.f32.mrf.mxu0
        %2421 = vmatprep.mubr.bf16.mxu0 0
        %2422 = vmatmul.mubr.bf16.gmra.mxu0 %v1871
        %v2423 = vpop.f32.mrf.mxu0
        %v2424 = vadd.f32 0.0, %v2423
        %v2425 = vpop.f32.mrf.mxu0
        %v2426 = vpop.f32.mrf.mxu0
        %v2427 = vadd.f32 0.0, %v2426
        %v2428 = vpop.f32.mrf.mxu0
        %2429 = vmatprep.mubr.bf16.mxu0 0
        %2430 = vmatmul.mubr.bf16.gmra.mxu0 %v1874
        %v2431 = vpop.f32.mrf.mxu0
        %v2432 = vadd.f32 0.0, %v2431
        %v2433 = vpop.f32.mrf.mxu0
        %v2434 = vpop.f32.mrf.mxu0
        %v2435 = vadd.f32 0.0, %v2434
        %v2436 = vpop.f32.mrf.mxu0
        %2437 = vmatprep.mubr.bf16.mxu0 0
        %2438 = vmatmul.mubr.bf16.gmra.mxu0 %v1877
        %v2439 = vpop.f32.mrf.mxu0
        %v2440 = vadd.f32 0.0, %v2439
        %v2441 = vpop.f32.mrf.mxu0
        %v2442 = vpop.f32.mrf.mxu0
        %v2443 = vadd.f32 0.0, %v2442
        %v2444 = vpop.f32.mrf.mxu0
        %2445 = vmatprep.mubr.bf16.mxu0 0
        %2446 = vmatmul.mubr.bf16.gmra.mxu0 %v1880
        %v2447 = vpop.f32.mrf.mxu0
        %v2448 = vadd.f32 0.0, %v2447
        %v2449 = vpop.f32.mrf.mxu0
        %v2450 = vpop.f32.mrf.mxu0
        %v2451 = vadd.f32 0.0, %v2450
        %v2452 = vpop.f32.mrf.mxu0
        %2453 = vmatprep.mubr.bf16.mxu0 0
        %2454 = vmatmul.mubr.bf16.gmra.mxu0 %v1883
        %v2455 = vpop.f32.mrf.mxu0
        %v2456 = vadd.f32 0.0, %v2455
        %v2457 = vpop.f32.mrf.mxu0
        %v2458 = vpop.f32.mrf.mxu0
        %v2459 = vadd.f32 0.0, %v2458
        %v2460 = vpop.f32.mrf.mxu0
        %2461 = vmatprep.mubr.bf16.mxu0 0
        %2462 = vmatmul.mubr.bf16.gmra.mxu0 %v1886
        %v2463 = vpop.f32.mrf.mxu0
        %v2464 = vadd.f32 0.0, %v2463
        %v2465 = vpop.f32.mrf.mxu0
        %v2466 = vpop.f32.mrf.mxu0
        %v2467 = vadd.f32 0.0, %v2466
        %v2468 = vpop.f32.mrf.mxu0
        %2469 = vmatprep.mubr.bf16.mxu0 0
        %2470 = vmatmul.mubr.bf16.gmra.mxu0 %v1889
        %v2471 = vpop.f32.mrf.mxu0
        %v2472 = vadd.f32 0.0, %v2471
        %v2473 = vpop.f32.mrf.mxu0
        %v2474 = vpop.f32.mrf.mxu0
        %v2475 = vadd.f32 0.0, %v2474
        %v2476 = vpop.f32.mrf.mxu0
        %2477 = vmatprep.mubr.bf16.mxu0 0
        %2478 = vmatmul.mubr.bf16.gmra.mxu0 %v1892
        %v2479 = vpop.f32.mrf.mxu0
        %v2480 = vadd.f32 0.0, %v2479
        %v2481 = vpop.f32.mrf.mxu0
        %v2482 = vpop.f32.mrf.mxu0
        %v2483 = vadd.f32 0.0, %v2482
        %v2484 = vpop.f32.mrf.mxu0
        %2485 = vmatprep.mubr.bf16.mxu0 0
        %2486 = vmatmul.mubr.bf16.gmra.mxu0 %v1895
        %v2487 = vpop.f32.mrf.mxu0
        %v2488 = vadd.f32 0.0, %v2487
        %v2489 = vpop.f32.mrf.mxu0
        %v2490 = vpop.f32.mrf.mxu0
        %v2491 = vadd.f32 0.0, %v2490
        %v2492 = vpop.f32.mrf.mxu0
        %2493 = vmatprep.mubr.bf16.mxu0 0
        %2494 = vmatmul.mubr.bf16.gmra.mxu0 %v1898
        %v2495 = vpop.f32.mrf.mxu0
        %v2496 = vadd.f32 0.0, %v2495
        %v2497 = vpop.f32.mrf.mxu0
        %v2498 = vpop.f32.mrf.mxu0
        %v2499 = vadd.f32 0.0, %v2498
        %v2500 = vpop.f32.mrf.mxu0
        %2501 = vmatprep.mubr.bf16.mxu0 0
        %2502 = vmatmul.mubr.bf16.gmra.mxu0 %v1901
        %v2503 = vpop.f32.mrf.mxu0
        %v2504 = vadd.f32 0.0, %v2503
        %v2505 = vpop.f32.mrf.mxu0
        %v2506 = vpop.f32.mrf.mxu0
        %v2507 = vadd.f32 0.0, %v2506
        %v2508 = vpop.f32.mrf.mxu0
        %2509 = vmatprep.mubr.bf16.mxu0 0
        %2510 = vmatmul.mubr.bf16.gmra.mxu0 %v1904
        %v2511 = vpop.f32.mrf.mxu0
        %v2512 = vadd.f32 0.0, %v2511
        %v2513 = vpop.f32.mrf.mxu0
        %v2514 = vpop.f32.mrf.mxu0
        %v2515 = vadd.f32 0.0, %v2514
        %v2516 = vpop.f32.mrf.mxu0
        %2517 = vmatprep.mubr.bf16.mxu0 0
        %2518 = vmatmul.mubr.bf16.gmra.mxu0 %v1907
        %v2519 = vpop.f32.mrf.mxu0
        %v2520 = vadd.f32 0.0, %v2519
        %v2521 = vpop.f32.mrf.mxu0
        %v2522 = vpop.f32.mrf.mxu0
        %v2523 = vadd.f32 0.0, %v2522
        %v2524 = vpop.f32.mrf.mxu0
        %2525 = vmatprep.mubr.bf16.mxu0 0
        %2526 = vmatmul.mubr.bf16.gmra.mxu0 %v1910
        %v2527 = vpop.f32.mrf.mxu0
        %v2528 = vadd.f32 0.0, %v2527
        %v2529 = vpop.f32.mrf.mxu0
        %v2530 = vpop.f32.mrf.mxu0
        %v2531 = vadd.f32 0.0, %v2530
        %v2532 = vpop.f32.mrf.mxu0
        %2533 = vmatprep.mubr.bf16.mxu0 0
        %2534 = vmatmul.mubr.bf16.gmra.mxu0 %v1913
        %v2535 = vpop.f32.mrf.mxu0
        %v2536 = vadd.f32 0.0, %v2535
        %v2537 = vpop.f32.mrf.mxu0
        %v2538 = vpop.f32.mrf.mxu0
        %v2539 = vadd.f32 0.0, %v2538
        %v2540 = vpop.f32.mrf.mxu0
        %2541 = vmatprep.mubr.bf16.mxu0 0
        %2542 = vmatmul.mubr.bf16.gmra.mxu0 %v1916
        %v2543 = vpop.f32.mrf.mxu0
        %v2544 = vadd.f32 0.0, %v2543
        %v2545 = vpop.f32.mrf.mxu0
        %v2546 = vpop.f32.mrf.mxu0
        %v2547 = vadd.f32 0.0, %v2546
        %v2548 = vpop.f32.mrf.mxu0
        %2549 = vmatprep.mubr.bf16.mxu0 0
        %2550 = vmatmul.mubr.bf16.gmra.mxu0 %v1919
        %v2551 = vpop.f32.mrf.mxu0
        %v2552 = vadd.f32 0.0, %v2551
        %v2553 = vpop.f32.mrf.mxu0
        %v2554 = vpop.f32.mrf.mxu0
        %v2555 = vadd.f32 0.0, %v2554
        %v2556 = vpop.f32.mrf.mxu0
        %2557 = vmatprep.mubr.bf16.mxu0 0
        %2558 = vmatmul.mubr.bf16.gmra.mxu0 %v1922
        %v2559 = vpop.f32.mrf.mxu0
        %v2560 = vadd.f32 0.0, %v2559
        %v2561 = vpop.f32.mrf.mxu0
        %v2562 = vpop.f32.mrf.mxu0
        %v2563 = vadd.f32 0.0, %v2562
        %v2564 = vpop.f32.mrf.mxu0
        %2565 = vmatprep.mubr.bf16.mxu0 0
        %2566 = vmatmul.mubr.bf16.gmra.mxu0 %v1925
        %v2567 = vpop.f32.mrf.mxu0
        %v2568 = vadd.f32 0.0, %v2567
        %v2569 = vpop.f32.mrf.mxu0
        %v2570 = vpop.f32.mrf.mxu0
        %v2571 = vadd.f32 0.0, %v2570
        %v2572 = vpop.f32.mrf.mxu0
        %2573 = vmatprep.mubr.bf16.mxu0 0
        %2574 = vmatmul.mubr.bf16.gmra.mxu0 %v1928
        %v2575 = vpop.f32.mrf.mxu0
        %v2576 = vadd.f32 0.0, %v2575
        %v2577 = vpop.f32.mrf.mxu0
        %v2578 = vpop.f32.mrf.mxu0
        %v2579 = vadd.f32 0.0, %v2578
        %v2580 = vpop.f32.mrf.mxu0
        %2581 = vmatprep.mubr.bf16.mxu0 0
        %2582 = vmatmul.mubr.bf16.gmra.mxu0 %v1931
        %v2583 = vpop.f32.mrf.mxu0
        %v2584 = vadd.f32 0.0, %v2583
        %v2585 = vpop.f32.mrf.mxu0
        %v2586 = vpop.f32.mrf.mxu0
        %v2587 = vadd.f32 0.0, %v2586
        %v2588 = vpop.f32.mrf.mxu0
        %2589 = vmatprep.mubr.bf16.mxu0 0
        %2590 = vmatmul.mubr.bf16.gmra.mxu0 %v1934
        %v2591 = vpop.f32.mrf.mxu0
        %v2592 = vadd.f32 0.0, %v2591
        %v2593 = vpop.f32.mrf.mxu0
        %v2594 = vpop.f32.mrf.mxu0
        %v2595 = vadd.f32 0.0, %v2594
        %v2596 = vpop.f32.mrf.mxu0
        %2597 = vmatprep.mubr.bf16.mxu0 0
        %2598 = vmatmul.mubr.bf16.gmra.mxu0 %v1937
        %v2599 = vpop.f32.mrf.mxu0
        %v2600 = vadd.f32 0.0, %v2599
        %v2601 = vpop.f32.mrf.mxu0
        %v2602 = vpop.f32.mrf.mxu0
        %v2603 = vadd.f32 0.0, %v2602
        %v2604 = vpop.f32.mrf.mxu0
        %2605 = vmatprep.mubr.bf16.mxu0 0
        %2606 = vmatmul.mubr.bf16.gmra.mxu0 %v1940
        %v2607 = vpop.f32.mrf.mxu0
        %v2608 = vadd.f32 0.0, %v2607
        %v2609 = vpop.f32.mrf.mxu0
        %v2610 = vpop.f32.mrf.mxu0
        %v2611 = vadd.f32 0.0, %v2610
        %v2612 = vpop.f32.mrf.mxu0
        %2613 = vmatprep.mubr.bf16.mxu0 0
        %2614 = vmatmul.mubr.bf16.gmra.mxu0 %v1943
        %v2615 = vpop.f32.mrf.mxu0
        %v2616 = vadd.f32 0.0, %v2615
        %v2617 = vpop.f32.mrf.mxu0
        %v2618 = vpop.f32.mrf.mxu0
        %v2619 = vadd.f32 0.0, %v2618
        %v2620 = vpop.f32.mrf.mxu0
        %2621 = vmatprep.mubr.bf16.mxu0 0
        %2622 = vmatmul.mubr.bf16.gmra.mxu0 %v1946
        %v2623 = vpop.f32.mrf.mxu0
        %v2624 = vadd.f32 0.0, %v2623
        %v2625 = vpop.f32.mrf.mxu0
        %v2626 = vpop.f32.mrf.mxu0
        %v2627 = vadd.f32 0.0, %v2626
        %v2628 = vpop.f32.mrf.mxu0
        %2629 = vmatprep.mubr.bf16.mxu0 0
        %2630 = vmatmul.mubr.bf16.gmra.mxu0 %v1949
        %v2631 = vpop.f32.mrf.mxu0
        %v2632 = vadd.f32 0.0, %v2631
        %v2633 = vpop.f32.mrf.mxu0
        %v2634 = vpop.f32.mrf.mxu0
        %v2635 = vadd.f32 0.0, %v2634
        %v2636 = vpop.f32.mrf.mxu0
        %2637 = vmatprep.mubr.bf16.mxu0 0
        %2638 = vmatmul.mubr.bf16.gmra.mxu0 %v1952
        %v2639 = vpop.f32.mrf.mxu0
        %v2640 = vadd.f32 0.0, %v2639
        %v2641 = vpop.f32.mrf.mxu0
        %v2642 = vpop.f32.mrf.mxu0
        %v2643 = vadd.f32 0.0, %v2642
        %v2644 = vpop.f32.mrf.mxu0
        %2645 = vmatprep.mubr.bf16.mxu0 0
        %2646 = vmatmul.mubr.bf16.gmra.mxu0 %v1955
        %v2647 = vpop.f32.mrf.mxu0
        %v2648 = vadd.f32 0.0, %v2647
        %v2649 = vpop.f32.mrf.mxu0
        %v2650 = vpop.f32.mrf.mxu0
        %v2651 = vadd.f32 0.0, %v2650
        %v2652 = vpop.f32.mrf.mxu0
        %2653 = vmatprep.mubr.bf16.mxu0 0
        %2654 = vmatmul.mubr.bf16.gmra.mxu0 %v1958
        %v2655 = vpop.f32.mrf.mxu0
        %v2656 = vadd.f32 0.0, %v2655
        %v2657 = vpop.f32.mrf.mxu0
        %v2658 = vpop.f32.mrf.mxu0
        %v2659 = vadd.f32 0.0, %v2658
        %v2660 = vpop.f32.mrf.mxu0
        %2661 = vmatprep.mubr.bf16.mxu0 0
        %2662 = vmatmul.mubr.bf16.gmra.mxu0 %v1961
        %v2663 = vpop.f32.mrf.mxu0
        %v2664 = vadd.f32 0.0, %v2663
        %v2665 = vpop.f32.mrf.mxu0
        %v2666 = vpop.f32.mrf.mxu0
        %v2667 = vadd.f32 0.0, %v2666
        %v2668 = vpop.f32.mrf.mxu0
        %2669 = vmatprep.mubr.bf16.mxu0 0
        %2670 = vmatmul.mubr.bf16.gmra.mxu0 %v1964
        %v2671 = vpop.f32.mrf.mxu0
        %v2672 = vadd.f32 0.0, %v2671
        %v2673 = vpop.f32.mrf.mxu0
        %v2674 = vpop.f32.mrf.mxu0
        %v2675 = vadd.f32 0.0, %v2674
        %v2676 = vpop.f32.mrf.mxu0
        %2677 = vmatprep.mubr.bf16.mxu0 0
        %2678 = vmatmul.mubr.bf16.gmra.mxu0 %v1967
        %v2679 = vpop.f32.mrf.mxu0
        %v2680 = vadd.f32 0.0, %v2679
        %v2681 = vpop.f32.mrf.mxu0
        %v2682 = vpop.f32.mrf.mxu0
        %v2683 = vadd.f32 0.0, %v2682
        %v2684 = vpop.f32.mrf.mxu0
        %2685 = vmatprep.mubr.bf16.mxu0 0
        %2686 = vmatmul.mubr.bf16.gmra.mxu0 %v1970
        %v2687 = vpop.f32.mrf.mxu0
        %v2688 = vadd.f32 0.0, %v2687
        %v2689 = vpop.f32.mrf.mxu0
        %v2690 = vpop.f32.mrf.mxu0
        %v2691 = vadd.f32 0.0, %v2690
        %v2692 = vpop.f32.mrf.mxu0
        %2693 = vmatprep.mubr.bf16.mxu0 0
        %2694 = vmatmul.mubr.bf16.gmra.mxu0 %v1973
        %v2695 = vpop.f32.mrf.mxu0
        %v2696 = vadd.f32 0.0, %v2695
        %v2697 = vpop.f32.mrf.mxu0
        %v2698 = vpop.f32.mrf.mxu0
        %v2699 = vadd.f32 0.0, %v2698
        %v2700 = vpop.f32.mrf.mxu0
        %2701 = vmatprep.mubr.bf16.mxu0 0
        %2702 = vmatmul.mubr.bf16.gmra.mxu0 %v1976
        %v2703 = vpop.f32.mrf.mxu0
        %v2704 = vadd.f32 0.0, %v2703
        %v2705 = vpop.f32.mrf.mxu0
        %v2706 = vpop.f32.mrf.mxu0
        %v2707 = vadd.f32 0.0, %v2706
        %v2708 = vpop.f32.mrf.mxu0
        %2709 = vmatprep.mubr.bf16.mxu0 0
        %2710 = vmatmul.mubr.bf16.gmra.mxu0 %v1979
        %v2711 = vpop.f32.mrf.mxu0
        %v2712 = vadd.f32 0.0, %v2711
        %v2713 = vpop.f32.mrf.mxu0
        %v2714 = vpop.f32.mrf.mxu0
        %v2715 = vadd.f32 0.0, %v2714
        %v2716 = vpop.f32.mrf.mxu0
        %2717 = vmatprep.mubr.bf16.mxu0 0
        %2718 = vmatmul.mubr.bf16.gmra.mxu0 %v1982
        %v2719 = vpop.f32.mrf.mxu0
        %v2720 = vadd.f32 0.0, %v2719
        %v2721 = vpop.f32.mrf.mxu0
        %v2722 = vpop.f32.mrf.mxu0
        %v2723 = vadd.f32 0.0, %v2722
        %v2724 = vpop.f32.mrf.mxu0
        %2725 = vmatprep.mubr.bf16.mxu0 0
        %2726 = vmatmul.mubr.bf16.gmra.mxu0 %v1985
        %v2727 = vpop.f32.mrf.mxu0
        %v2728 = vadd.f32 0.0, %v2727
        %v2729 = vpop.f32.mrf.mxu0
        %v2730 = vpop.f32.mrf.mxu0
        %v2731 = vadd.f32 0.0, %v2730
        %v2732 = vpop.f32.mrf.mxu0
        %2733 = vmatprep.mubr.bf16.mxu0 0
        %2734 = vmatmul.mubr.bf16.gmra.mxu0 %v1988
        %v2735 = vpop.f32.mrf.mxu0
        %v2736 = vadd.f32 0.0, %v2735
        %v2737 = vpop.f32.mrf.mxu0
        %v2738 = vpop.f32.mrf.mxu0
        %v2739 = vadd.f32 0.0, %v2738
        %v2740 = vpop.f32.mrf.mxu0
        %2741 = vmatprep.mubr.bf16.mxu0 0
        %2742 = vmatmul.mubr.bf16.gmra.mxu0 %v1991
        %v2743 = vpop.f32.mrf.mxu0
        %v2744 = vadd.f32 0.0, %v2743
        %v2745 = vpop.f32.mrf.mxu0
        %v2746 = vpop.f32.mrf.mxu0
        %v2747 = vadd.f32 0.0, %v2746
        %v2748 = vpop.f32.mrf.mxu0
        %2749 = vmatprep.mubr.bf16.mxu0 0
        %2750 = vmatmul.mubr.bf16.gmra.mxu0 %v1994
        %v2751 = vpop.f32.mrf.mxu0
        %v2752 = vadd.f32 0.0, %v2751
        %v2753 = vpop.f32.mrf.mxu0
        %v2754 = vpop.f32.mrf.mxu0
        %v2755 = vadd.f32 0.0, %v2754
        %v2756 = vpop.f32.mrf.mxu0
        %2757 = vmatprep.mubr.bf16.mxu0 0
        %2758 = vmatmul.mubr.bf16.gmra.mxu0 %v1997
        %v2759 = vpop.f32.mrf.mxu0
        %v2760 = vadd.f32 0.0, %v2759
        %v2761 = vpop.f32.mrf.mxu0
        %v2762 = vpop.f32.mrf.mxu0
        %v2763 = vadd.f32 0.0, %v2762
        %v2764 = vpop.f32.mrf.mxu0
        %2765 = vmatprep.mubr.bf16.mxu0 0
        %2766 = vmatmul.mubr.bf16.gmra.mxu0 %v2000
        %v2767 = vpop.f32.mrf.mxu0
        %v2768 = vadd.f32 0.0, %v2767
        %v2769 = vpop.f32.mrf.mxu0
        %v2770 = vpop.f32.mrf.mxu0
        %v2771 = vadd.f32 0.0, %v2770
        %v2772 = vpop.f32.mrf.mxu0
        %2773 = vmatprep.mubr.bf16.mxu0 0
        %2774 = vmatmul.mubr.bf16.gmra.mxu0 %v2003
        %v2775 = vpop.f32.mrf.mxu0
        %v2776 = vadd.f32 0.0, %v2775
        %v2777 = vpop.f32.mrf.mxu0
        %v2778 = vpop.f32.mrf.mxu0
        %v2779 = vadd.f32 0.0, %v2778
        %v2780 = vpop.f32.mrf.mxu0
        %2781 = vmatprep.mubr.bf16.mxu0 0
        %2782 = vmatmul.mubr.bf16.gmra.mxu0 %v2006
        %v2783 = vpop.f32.mrf.mxu0
        %v2784 = vadd.f32 0.0, %v2783
        %v2785 = vpop.f32.mrf.mxu0
        %v2786 = vpop.f32.mrf.mxu0
        %v2787 = vadd.f32 0.0, %v2786
        %v2788 = vpop.f32.mrf.mxu0
        %2789 = vmatprep.mubr.bf16.mxu0 0
        %2790 = vmatmul.mubr.bf16.gmra.mxu0 %v2009
        %v2791 = vpop.f32.mrf.mxu0
        %v2792 = vadd.f32 0.0, %v2791
        %v2793 = vpop.f32.mrf.mxu0
        %v2794 = vpop.f32.mrf.mxu0
        %v2795 = vadd.f32 0.0, %v2794
        %v2796 = vpop.f32.mrf.mxu0
        %2797 = vmatprep.mubr.bf16.mxu0 0
        %2798 = vmatmul.mubr.bf16.gmra.mxu0 %v2012
        %v2799 = vpop.f32.mrf.mxu0
        %v2800 = vadd.f32 0.0, %v2799
        %v2801 = vpop.f32.mrf.mxu0
        %v2802 = vpop.f32.mrf.mxu0
        %v2803 = vadd.f32 0.0, %v2802
        %v2804 = vpop.f32.mrf.mxu0
        %2805 = vmatprep.mubr.bf16.mxu0 0
        %2806 = vmatmul.mubr.bf16.gmra.mxu0 %v2015
        %v2807 = vpop.f32.mrf.mxu0
        %v2808 = vadd.f32 0.0, %v2807
        %v2809 = vpop.f32.mrf.mxu0
        %v2810 = vpop.f32.mrf.mxu0
        %v2811 = vadd.f32 0.0, %v2810
        %v2812 = vpop.f32.mrf.mxu0
        %2813 = vmatprep.mubr.bf16.mxu0 0
        %2814 = vmatmul.mubr.bf16.gmra.mxu0 %v2018
        %v2815 = vpop.f32.mrf.mxu0
        %v2816 = vadd.f32 0.0, %v2815
        %v2817 = vpop.f32.mrf.mxu0
        %v2818 = vpop.f32.mrf.mxu0
        %v2819 = vadd.f32 0.0, %v2818
        %v2820 = vpop.f32.mrf.mxu0
        %2821 = vmatprep.mubr.bf16.mxu0 0
        %2822 = vmatmul.mubr.bf16.gmra.mxu0 %v2021
        %v2823 = vpop.f32.mrf.mxu0
        %v2824 = vadd.f32 0.0, %v2823
        %v2825 = vpop.f32.mrf.mxu0
        %v2826 = vpop.f32.mrf.mxu0
        %v2827 = vadd.f32 0.0, %v2826
        %v2828 = vpop.f32.mrf.mxu0
        %2829 = vmatprep.mubr.bf16.mxu0 0
        %2830 = vmatmul.mubr.bf16.gmra.mxu0 %v2024
        %v2831 = vpop.f32.mrf.mxu0
        %v2832 = vadd.f32 0.0, %v2831
        %v2833 = vpop.f32.mrf.mxu0
        %v2834 = vpop.f32.mrf.mxu0
        %v2835 = vadd.f32 0.0, %v2834
        %v2836 = vpop.f32.mrf.mxu0
        %2837 = vmatprep.mubr.bf16.mxu0 0
        %2838 = vmatmul.mubr.bf16.gmra.mxu0 %v2027
        %v2839 = vpop.f32.mrf.mxu0
        %v2840 = vadd.f32 0.0, %v2839
        %v2841 = vpop.f32.mrf.mxu0
        %v2842 = vpop.f32.mrf.mxu0
        %v2843 = vadd.f32 0.0, %v2842
        %v2844 = vpop.f32.mrf.mxu0
        %2845 = vmatprep.mubr.bf16.mxu0 0
        %2846 = vmatmul.mubr.bf16.gmra.mxu0 %v2030
        %v2847 = vpop.f32.mrf.mxu0
        %v2848 = vadd.f32 0.0, %v2847
        %v2849 = vpop.f32.mrf.mxu0
        %v2850 = vpop.f32.mrf.mxu0
        %v2851 = vadd.f32 0.0, %v2850
        %v2852 = vpop.f32.mrf.mxu0
        %2853 = vmatprep.mubr.bf16.mxu0 0
        %2854 = vmatmul.mubr.bf16.gmra.mxu0 %v2033
        %v2855 = vpop.f32.mrf.mxu0
        %v2856 = vadd.f32 0.0, %v2855
        %v2857 = vpop.f32.mrf.mxu0
        %v2858 = vpop.f32.mrf.mxu0
        %v2859 = vadd.f32 0.0, %v2858
        %v2860 = vpop.f32.mrf.mxu0
        %2861 = vmatprep.mubr.bf16.mxu0 0
        %2862 = vmatmul.mubr.bf16.gmra.mxu0 %v2036
        %v2863 = vpop.f32.mrf.mxu0
        %v2864 = vadd.f32 0.0, %v2863
        %v2865 = vpop.f32.mrf.mxu0
        %v2866 = vpop.f32.mrf.mxu0
        %v2867 = vadd.f32 0.0, %v2866
        %v2868 = vpop.f32.mrf.mxu0
        %2869 = vmatprep.mubr.bf16.mxu0 0
        %2870 = vmatmul.mubr.bf16.gmra.mxu0 %v2039
        %v2871 = vpop.f32.mrf.mxu0
        %v2872 = vadd.f32 0.0, %v2871
        %v2873 = vpop.f32.mrf.mxu0
        %v2874 = vpop.f32.mrf.mxu0
        %v2875 = vadd.f32 0.0, %v2874
        %v2876 = vpop.f32.mrf.mxu0
        %2877 = vmatprep.mubr.bf16.mxu0 0
        %2878 = vmatmul.mubr.bf16.gmra.mxu0 %v2042
        %v2879 = vpop.f32.mrf.mxu0
        %v2880 = vadd.f32 0.0, %v2879
        %v2881 = vpop.f32.mrf.mxu0
        %v2882 = vpop.f32.mrf.mxu0
        %v2883 = vadd.f32 0.0, %v2882
        %v2884 = vpop.f32.mrf.mxu0
        %2885 = vmatprep.mubr.bf16.mxu0 0
        %2886 = vmatmul.mubr.bf16.gmra.mxu0 %v2045
        %v2887 = vpop.f32.mrf.mxu0
        %v2888 = vadd.f32 0.0, %v2887
        %v2889 = vpop.f32.mrf.mxu0
        %v2890 = vpop.f32.mrf.mxu0
        %v2891 = vadd.f32 0.0, %v2890
        %v2892 = vpop.f32.mrf.mxu0
        %2893 = vmatprep.mubr.bf16.mxu0 0
        %2894 = vmatmul.mubr.bf16.gmra.mxu0 %v2048
        %v2895 = vpop.f32.mrf.mxu0
        %v2896 = vadd.f32 0.0, %v2895
        %v2897 = vpop.f32.mrf.mxu0
        %v2898 = vpop.f32.mrf.mxu0
        %v2899 = vadd.f32 0.0, %v2898
        %v2900 = vpop.f32.mrf.mxu0
        %2901 = vmatprep.mubr.bf16.mxu0 0
        %2902 = vmatmul.mubr.bf16.gmra.mxu0 %v2051
        %v2903 = vpop.f32.mrf.mxu0
        %v2904 = vadd.f32 0.0, %v2903
        %v2905 = vpop.f32.mrf.mxu0
        %v2906 = vpop.f32.mrf.mxu0
        %v2907 = vadd.f32 0.0, %v2906
        %v2908 = vpop.f32.mrf.mxu0
        %2909 = vmatprep.mubr.bf16.mxu0 0
        %2910 = vmatmul.mubr.bf16.gmra.mxu0 %v2054
        %v2911 = vpop.f32.mrf.mxu0
        %v2912 = vadd.f32 0.0, %v2911
        %v2913 = vpop.f32.mrf.mxu0
        %v2914 = vpop.f32.mrf.mxu0
        %v2915 = vadd.f32 0.0, %v2914
        %v2916 = vpop.f32.mrf.mxu0
        %2917 = vmatprep.mubr.bf16.mxu0 0
        %2918 = vmatmul.mubr.bf16.gmra.mxu0 %v2057
        %v2919 = vpop.f32.mrf.mxu0
        %v2920 = vadd.f32 0.0, %v2919
        %v2921 = vpop.f32.mrf.mxu0
        %v2922 = vpop.f32.mrf.mxu0
        %v2923 = vadd.f32 0.0, %v2922
        %v2924 = vpop.f32.mrf.mxu0
        %2925 = vmatprep.mubr.bf16.mxu0 0
        %2926 = vmatmul.mubr.bf16.gmra.mxu0 %v2060
        %v2927 = vpop.f32.mrf.mxu0
        %v2928 = vadd.f32 0.0, %v2927
        %v2929 = vpop.f32.mrf.mxu0
        %v2930 = vpop.f32.mrf.mxu0
        %v2931 = vadd.f32 0.0, %v2930
        %v2932 = vpop.f32.mrf.mxu0
        %2933 = vmatprep.mubr.bf16.mxu0 0
        %2934 = vmatmul.mubr.bf16.gmra.mxu0 %v2063
        %v2935 = vpop.f32.mrf.mxu0
        %v2936 = vadd.f32 0.0, %v2935
        %v2937 = vpop.f32.mrf.mxu0
        %v2938 = vpop.f32.mrf.mxu0
        %v2939 = vadd.f32 0.0, %v2938
        %v2940 = vpop.f32.mrf.mxu0
        %2941 = vmatprep.mubr.bf16.mxu0 0
        %2942 = vmatmul.mubr.bf16.gmra.mxu0 %v2066
        %v2943 = vpop.f32.mrf.mxu0
        %v2944 = vadd.f32 0.0, %v2943
        %v2945 = vpop.f32.mrf.mxu0
        %v2946 = vpop.f32.mrf.mxu0
        %v2947 = vadd.f32 0.0, %v2946
        %v2948 = vpop.f32.mrf.mxu0
        %2949 = vmatprep.mubr.bf16.mxu0 0
        %2950 = vmatmul.mubr.bf16.gmra.mxu0 %v2069
        %v2951 = vpop.f32.mrf.mxu0
        %v2952 = vadd.f32 0.0, %v2951
        %v2953 = vpop.f32.mrf.mxu0
        %v2954 = vpop.f32.mrf.mxu0
        %v2955 = vadd.f32 0.0, %v2954
        %v2956 = vpop.f32.mrf.mxu0
        %2957 = vmatprep.mubr.bf16.mxu0 0
        %2958 = vmatmul.mubr.bf16.gmra.mxu0 %v2072
        %v2959 = vpop.f32.mrf.mxu0
        %v2960 = vadd.f32 0.0, %v2959
        %v2961 = vpop.f32.mrf.mxu0
        %v2962 = vpop.f32.mrf.mxu0
        %v2963 = vadd.f32 0.0, %v2962
        %v2964 = vpop.f32.mrf.mxu0
        %2965 = vmatprep.mubr.bf16.mxu0 0
        %2966 = vmatmul.mubr.bf16.gmra.mxu0 %v2075
        %v2967 = vpop.f32.mrf.mxu0
        %v2968 = vadd.f32 0.0, %v2967
        %v2969 = vpop.f32.mrf.mxu0
        %v2970 = vpop.f32.mrf.mxu0
        %v2971 = vadd.f32 0.0, %v2970
        %v2972 = vpop.f32.mrf.mxu0
        %2973 = vmatprep.mubr.bf16.mxu0 0
        %2974 = vmatmul.mubr.bf16.gmra.mxu0 %v2078
        %v2975 = vpop.f32.mrf.mxu0
        %v2976 = vadd.f32 0.0, %v2975
        %v2977 = vpop.f32.mrf.mxu0
        %v2978 = vpop.f32.mrf.mxu0
        %v2979 = vadd.f32 0.0, %v2978
        %v2980 = vpop.f32.mrf.mxu0
        %2981 = vmatprep.mubr.bf16.mxu0 0
        %2982 = vmatmul.mubr.bf16.gmra.mxu0 %v2081
        %v2983 = vpop.f32.mrf.mxu0
        %v2984 = vadd.f32 0.0, %v2983
        %v2985 = vpop.f32.mrf.mxu0
        %v2986 = vpop.f32.mrf.mxu0
        %v2987 = vadd.f32 0.0, %v2986
        %v2988 = vpop.f32.mrf.mxu0
        %2989 = vmatprep.mubr.bf16.mxu0 0
        %2990 = vmatmul.mubr.bf16.gmra.mxu0 %v2084
        %v2991 = vpop.f32.mrf.mxu0
        %v2992 = vadd.f32 0.0, %v2991
        %v2993 = vpop.f32.mrf.mxu0
        %v2994 = vpop.f32.mrf.mxu0
        %v2995 = vadd.f32 0.0, %v2994
        %v2996 = vpop.f32.mrf.mxu0
        %2997 = vmatprep.mubr.bf16.mxu0 0
        %2998 = vmatmul.mubr.bf16.gmra.mxu0 %v2087
        %v2999 = vpop.f32.mrf.mxu0
        %v3000 = vadd.f32 0.0, %v2999
        %v3001 = vpop.f32.mrf.mxu0
        %v3002 = vpop.f32.mrf.mxu0
        %v3003 = vadd.f32 0.0, %v3002
        %v3004 = vpop.f32.mrf.mxu0
        %3005 = vmatprep.mubr.bf16.mxu0 0
        %3006 = vmatmul.mubr.bf16.gmra.mxu0 %v2090
        %v3007 = vpop.f32.mrf.mxu0
        %v3008 = vadd.f32 0.0, %v3007
        %v3009 = vpop.f32.mrf.mxu0
        %v3010 = vpop.f32.mrf.mxu0
        %v3011 = vadd.f32 0.0, %v3010
        %v3012 = vpop.f32.mrf.mxu0
        %3013 = vmatprep.mubr.bf16.mxu0 0
        %3014 = vmatmul.mubr.bf16.gmra.mxu0 %v2093
        %v3015 = vpop.f32.mrf.mxu0
        %v3016 = vadd.f32 0.0, %v3015
        %v3017 = vpop.f32.mrf.mxu0
        %v3018 = vpop.f32.mrf.mxu0
        %v3019 = vadd.f32 0.0, %v3018
        %v3020 = vpop.f32.mrf.mxu0
        %3021 = vmatprep.mubr.bf16.mxu0 0
        %3022 = vmatmul.mubr.bf16.gmra.mxu0 %v2096
        %v3023 = vpop.f32.mrf.mxu0
        %v3024 = vadd.f32 0.0, %v3023
        %v3025 = vpop.f32.mrf.mxu0
        %v3026 = vpop.f32.mrf.mxu0
        %v3027 = vadd.f32 0.0, %v3026
        %v3028 = vpop.f32.mrf.mxu0
        %3029 = vmatprep.mubr.bf16.mxu0 0
        %3030 = vmatmul.mubr.bf16.gmra.mxu0 %v2099
        %v3031 = vpop.f32.mrf.mxu0
        %v3032 = vadd.f32 0.0, %v3031
        %v3033 = vpop.f32.mrf.mxu0
        %v3034 = vpop.f32.mrf.mxu0
        %v3035 = vadd.f32 0.0, %v3034
        %v3036 = vpop.f32.mrf.mxu0
        %3037 = vmatprep.mubr.bf16.mxu0 0
        %3038 = vmatmul.mubr.bf16.gmra.mxu0 %v2102
        %v3039 = vpop.f32.mrf.mxu0
        %v3040 = vadd.f32 0.0, %v3039
        %v3041 = vpop.f32.mrf.mxu0
        %v3042 = vpop.f32.mrf.mxu0
        %v3043 = vadd.f32 0.0, %v3042
        %v3044 = vpop.f32.mrf.mxu0
        %3045 = vmatprep.mubr.bf16.mxu0 0
        %3046 = vmatmul.mubr.bf16.gmra.mxu0 %v2105
        %v3047 = vpop.f32.mrf.mxu0
        %v3048 = vadd.f32 0.0, %v3047
        %v3049 = vpop.f32.mrf.mxu0
        %v3050 = vpop.f32.mrf.mxu0
        %v3051 = vadd.f32 0.0, %v3050
        %v3052 = vpop.f32.mrf.mxu0
        %3053 = vmatprep.mubr.bf16.mxu0 0
        %3054 = vmatmul.mubr.bf16.gmra.mxu0 %v2108
        %v3055 = vpop.f32.mrf.mxu0
        %v3056 = vadd.f32 0.0, %v3055
        %v3057 = vpop.f32.mrf.mxu0
        %v3058 = vpop.f32.mrf.mxu0
        %v3059 = vadd.f32 0.0, %v3058
        %v3060 = vpop.f32.mrf.mxu0
        %3061 = vmatprep.mubr.bf16.mxu0 0
        %3062 = vmatmul.mubr.bf16.gmra.mxu0 %v2111
        %v3063 = vpop.f32.mrf.mxu0
        %v3064 = vadd.f32 0.0, %v3063
        %v3065 = vpop.f32.mrf.mxu0
        %v3066 = vpop.f32.mrf.mxu0
        %v3067 = vadd.f32 0.0, %v3066
        %v3068 = vpop.f32.mrf.mxu0
        %3069 = vmatprep.mubr.bf16.mxu0 0
        %3070 = vmatmul.mubr.bf16.gmra.mxu0 %v2114
        %v3071 = vpop.f32.mrf.mxu0
        %v3072 = vadd.f32 0.0, %v3071
        %v3073 = vpop.f32.mrf.mxu0
        %v3074 = vpop.f32.mrf.mxu0
        %v3075 = vadd.f32 0.0, %v3074
        %v3076 = vpop.f32.mrf.mxu0
        %3077 = vmatprep.mubr.bf16.mxu0 0
        %3078 = vmatmul.mubr.bf16.gmra.mxu0 %v2117
        %v3079 = vpop.f32.mrf.mxu0
        %v3080 = vadd.f32 0.0, %v3079
        %v3081 = vpop.f32.mrf.mxu0
        %v3082 = vpop.f32.mrf.mxu0
        %v3083 = vadd.f32 0.0, %v3082
        %v3084 = vpop.f32.mrf.mxu0
        %3085 = vmatprep.mubr.bf16.mxu0 0
        %3086 = vmatmul.mubr.bf16.gmra.mxu0 %v2120
        %v3087 = vpop.f32.mrf.mxu0
        %v3088 = vadd.f32 0.0, %v3087
        %v3089 = vpop.f32.mrf.mxu0
        %v3090 = vpop.f32.mrf.mxu0
        %v3091 = vadd.f32 0.0, %v3090
        %v3092 = vpop.f32.mrf.mxu0
        %3093 = vmatprep.mubr.bf16.mxu0 0
        %3094 = vmatmul.mubr.bf16.gmra.mxu0 %v2123
        %v3095 = vpop.f32.mrf.mxu0
        %v3096 = vadd.f32 0.0, %v3095
        %v3097 = vpop.f32.mrf.mxu0
        %v3098 = vpop.f32.mrf.mxu0
        %v3099 = vadd.f32 0.0, %v3098
        %v3100 = vpop.f32.mrf.mxu0
        %3101 = vmatprep.mubr.bf16.mxu0 0
        %3102 = vmatmul.mubr.bf16.gmra.mxu0 %v2126
        %v3103 = vpop.f32.mrf.mxu0
        %v3104 = vadd.f32 0.0, %v3103
        %v3105 = vpop.f32.mrf.mxu0
        %v3106 = vpop.f32.mrf.mxu0
        %v3107 = vadd.f32 0.0, %v3106
        %v3108 = vpop.f32.mrf.mxu0
        %3109 = vmatprep.mubr.bf16.mxu0 0
        %3110 = vmatmul.mubr.bf16.gmra.mxu0 %v2129
        %v3111 = vpop.f32.mrf.mxu0
        %v3112 = vadd.f32 0.0, %v3111
        %v3113 = vpop.f32.mrf.mxu0
        %v3114 = vpop.f32.mrf.mxu0
        %v3115 = vadd.f32 0.0, %v3114
        %v3116 = vpop.f32.mrf.mxu0
        %3117 = vmatprep.mubr.bf16.mxu0 0
        %3118 = vmatmul.mubr.bf16.gmra.mxu0 %v2132
        %v3119 = vpop.f32.mrf.mxu0
        %v3120 = vadd.f32 0.0, %v3119
        %v3121 = vpop.f32.mrf.mxu0
        %v3122 = vpop.f32.mrf.mxu0
        %v3123 = vadd.f32 0.0, %v3122
        %v3124 = vpop.f32.mrf.mxu0
        %3125 = vmatprep.mubr.bf16.mxu0 0
        %3126 = vmatmul.mubr.bf16.gmra.mxu0 %v2135
        %v3127 = vpop.f32.mrf.mxu0
        %v3128 = vadd.f32 0.0, %v3127
        %v3129 = vpop.f32.mrf.mxu0
        %v3130 = vpop.f32.mrf.mxu0
        %v3131 = vadd.f32 0.0, %v3130
        %v3132 = vpop.f32.mrf.mxu0
        %3133 = vmatprep.mubr.bf16.mxu0 0
        %3134 = vmatmul.mubr.bf16.gmra.mxu0 %v2138
        %v3135 = vpop.f32.mrf.mxu0
        %v3136 = vadd.f32 0.0, %v3135
        %v3137 = vpop.f32.mrf.mxu0
        %v3138 = vpop.f32.mrf.mxu0
        %v3139 = vadd.f32 0.0, %v3138
        %v3140 = vpop.f32.mrf.mxu0
        %3141 = vmatprep.mubr.bf16.mxu0 0
        %3142 = vmatmul.mubr.bf16.gmra.mxu0 %v2141
        %v3143 = vpop.f32.mrf.mxu0
        %v3144 = vadd.f32 0.0, %v3143
        %v3145 = vpop.f32.mrf.mxu0
        %v3146 = vpop.f32.mrf.mxu0
        %v3147 = vadd.f32 0.0, %v3146
        %v3148 = vpop.f32.mrf.mxu0
        %3149 = vmatprep.mubr.bf16.mxu0 0
        %3150 = vmatmul.mubr.bf16.gmra.mxu0 %v2144
        %v3151 = vpop.f32.mrf.mxu0
        %v3152 = vadd.f32 0.0, %v3151
        %v3153 = vpop.f32.mrf.mxu0
        %v3154 = vpop.f32.mrf.mxu0
        %v3155 = vadd.f32 0.0, %v3154
        %v3156 = vpop.f32.mrf.mxu0
        %3157 = vmatprep.mubr.bf16.mxu0 0
        %3158 = vmatmul.mubr.bf16.gmra.mxu0 %v2147
        %v3159 = vpop.f32.mrf.mxu0
        %v3160 = vadd.f32 0.0, %v3159
        %v3161 = vpop.f32.mrf.mxu0
        %v3162 = vpop.f32.mrf.mxu0
        %v3163 = vadd.f32 0.0, %v3162
        %v3164 = vpop.f32.mrf.mxu0
        %3165 = vmatprep.mubr.bf16.mxu0 0
        %3166 = vmatmul.mubr.bf16.gmra.mxu0 %v2150
        %v3167 = vpop.f32.mrf.mxu0
        %v3168 = vadd.f32 0.0, %v3167
        %v3169 = vpop.f32.mrf.mxu0
        %v3170 = vpop.f32.mrf.mxu0
        %v3171 = vadd.f32 0.0, %v3170
        %v3172 = vpop.f32.mrf.mxu0
        %3173 = vmatprep.mubr.bf16.mxu0 0
        %3174 = vmatmul.mubr.bf16.gmra.mxu0 %v2153
        %v3175 = vpop.f32.mrf.mxu0
        %v3176 = vadd.f32 0.0, %v3175
        %v3177 = vpop.f32.mrf.mxu0
        %v3178 = vpop.f32.mrf.mxu0
        %v3179 = vadd.f32 0.0, %v3178
        %v3180 = vpop.f32.mrf.mxu0
        %3181 = vmatprep.mubr.bf16.mxu0 0
        %3182 = vmatmul.mubr.bf16.gmra.mxu0 %v2156
        %v3183 = vpop.f32.mrf.mxu0
        %v3184 = vadd.f32 0.0, %v3183
        %v3185 = vpop.f32.mrf.mxu0
        %v3186 = vpop.f32.mrf.mxu0
        %v3187 = vadd.f32 0.0, %v3186
        %v3188 = vpop.f32.mrf.mxu0
        %3189 = vmatprep.mubr.bf16.mxu0 0
        %3190 = vmatmul.mubr.bf16.gmra.mxu0 %v2159
        %v3191 = vpop.f32.mrf.mxu0
        %v3192 = vadd.f32 0.0, %v3191
        %v3193 = vpop.f32.mrf.mxu0
        %v3194 = vpop.f32.mrf.mxu0
        %v3195 = vadd.f32 0.0, %v3194
        %v3196 = vpop.f32.mrf.mxu0
        %3197 = vmatprep.mubr.bf16.mxu0 0
        %3198 = vmatmul.mubr.bf16.gmra.mxu0 %v2162
        %v3199 = vpop.f32.mrf.mxu0
        %v3200 = vadd.f32 0.0, %v3199
        %v3201 = vpop.f32.mrf.mxu0
        %v3202 = vpop.f32.mrf.mxu0
        %v3203 = vadd.f32 0.0, %v3202
        %v3204 = vpop.f32.mrf.mxu0
        %3205 = vmatprep.mubr.bf16.mxu0 0
        %3206 = vmatmul.mubr.bf16.gmra.mxu0 %v2165
        %v3207 = vpop.f32.mrf.mxu0
        %v3208 = vadd.f32 0.0, %v3207
        %v3209 = vpop.f32.mrf.mxu0
        %v3210 = vpop.f32.mrf.mxu0
        %v3211 = vadd.f32 0.0, %v3210
        %v3212 = vpop.f32.mrf.mxu0
        %3213 = vmatprep.mubr.bf16.mxu0 0
        %3214 = vmatmul.mubr.bf16.gmra.mxu0 %v2168
        %v3215 = vpop.f32.mrf.mxu0
        %v3216 = vadd.f32 0.0, %v3215
        %v3217 = vpop.f32.mrf.mxu0
        %v3218 = vpop.f32.mrf.mxu0
        %v3219 = vadd.f32 0.0, %v3218
        %v3220 = vpop.f32.mrf.mxu0
        %3221 = vmatprep.mubr.bf16.mxu0 0
        %3222 = vmatmul.mubr.bf16.gmra.mxu0 %v2171
        %v3223 = vpop.f32.mrf.mxu0
        %v3224 = vadd.f32 0.0, %v3223
        %v3225 = vpop.f32.mrf.mxu0
        %v3226 = vpop.f32.mrf.mxu0
        %v3227 = vadd.f32 0.0, %v3226
        %v3228 = vpop.f32.mrf.mxu0
        %3229 = vdwg.mxu0
        %v3230 = vld [vmem:[%s4] sm:$0x1]
        %v3232 = vlaneseq
        %v3233 = vshrl.u32 %v3232, 7
        %v3234 = vsub.s32 0, %v3233
        %v3235 = vrot.slane %v3230, %v3234
        %v3237 = vadd.f32 %v2208, %v3235
        %v3238 = vadd.f32 %v2211, %v3235
        %v3239 = vadd.f32 %v2216, %v3235
        %v3240 = vadd.f32 %v2219, %v3235
        %v3241 = vadd.f32 %v2224, %v3235
        %v3242 = vadd.f32 %v2227, %v3235
        %v3243 = vadd.f32 %v2232, %v3235
        %v3244 = vadd.f32 %v2235, %v3235
        %v3245 = vadd.f32 %v2240, %v3235
        %v3246 = vadd.f32 %v2243, %v3235
        %v3247 = vadd.f32 %v2248, %v3235
        %v3248 = vadd.f32 %v2251, %v3235
        %v3249 = vadd.f32 %v2256, %v3235
        %v3250 = vadd.f32 %v2259, %v3235
        %v3251 = vadd.f32 %v2264, %v3235
        %v3252 = vadd.f32 %v2267, %v3235
        %v3253 = vadd.f32 %v2272, %v3235
        %v3254 = vadd.f32 %v2275, %v3235
        %v3255 = vadd.f32 %v2280, %v3235
        %v3256 = vadd.f32 %v2283, %v3235
        %v3257 = vadd.f32 %v2288, %v3235
        %v3258 = vadd.f32 %v2291, %v3235
        %v3259 = vadd.f32 %v2296, %v3235
        %v3260 = vadd.f32 %v2299, %v3235
        %v3261 = vadd.f32 %v2304, %v3235
        %v3262 = vadd.f32 %v2307, %v3235
        %v3263 = vadd.f32 %v2312, %v3235
        %v3264 = vadd.f32 %v2315, %v3235
        %v3265 = vadd.f32 %v2320, %v3235
        %v3266 = vadd.f32 %v2323, %v3235
        %v3267 = vadd.f32 %v2328, %v3235
        %v3268 = vadd.f32 %v2331, %v3235
        %v3269 = vadd.f32 %v2336, %v3235
        %v3270 = vadd.f32 %v2339, %v3235
        %v3271 = vadd.f32 %v2344, %v3235
        %v3272 = vadd.f32 %v2347, %v3235
        %v3273 = vadd.f32 %v2352, %v3235
        %v3274 = vadd.f32 %v2355, %v3235
        %v3275 = vadd.f32 %v2360, %v3235
        %v3276 = vadd.f32 %v2363, %v3235
        %v3277 = vadd.f32 %v2368, %v3235
        %v3278 = vadd.f32 %v2371, %v3235
        %v3279 = vadd.f32 %v2376, %v3235
        %v3280 = vadd.f32 %v2379, %v3235
        %v3281 = vadd.f32 %v2384, %v3235
        %v3282 = vadd.f32 %v2387, %v3235
        %v3283 = vadd.f32 %v2392, %v3235
        %v3284 = vadd.f32 %v2395, %v3235
        %v3285 = vadd.f32 %v2400, %v3235
        %v3286 = vadd.f32 %v2403, %v3235
        %v3287 = vadd.f32 %v2408, %v3235
        %v3288 = vadd.f32 %v2411, %v3235
        %v3289 = vadd.f32 %v2416, %v3235
        %v3290 = vadd.f32 %v2419, %v3235
        %v3291 = vadd.f32 %v2424, %v3235
        %v3292 = vadd.f32 %v2427, %v3235
        %v3293 = vadd.f32 %v2432, %v3235
        %v3294 = vadd.f32 %v2435, %v3235
        %v3295 = vadd.f32 %v2440, %v3235
        %v3296 = vadd.f32 %v2443, %v3235
        %v3297 = vadd.f32 %v2448, %v3235
        %v3298 = vadd.f32 %v2451, %v3235
        %v3299 = vadd.f32 %v2456, %v3235
        %v3300 = vadd.f32 %v2459, %v3235
        %v3301 = vadd.f32 %v2464, %v3235
        %v3302 = vadd.f32 %v2467, %v3235
        %v3303 = vadd.f32 %v2472, %v3235
        %v3304 = vadd.f32 %v2475, %v3235
        %v3305 = vadd.f32 %v2480, %v3235
        %v3306 = vadd.f32 %v2483, %v3235
        %v3307 = vadd.f32 %v2488, %v3235
        %v3308 = vadd.f32 %v2491, %v3235
        %v3309 = vadd.f32 %v2496, %v3235
        %v3310 = vadd.f32 %v2499, %v3235
        %v3311 = vadd.f32 %v2504, %v3235
        %v3312 = vadd.f32 %v2507, %v3235
        %v3313 = vadd.f32 %v2512, %v3235
        %v3314 = vadd.f32 %v2515, %v3235
        %v3315 = vadd.f32 %v2520, %v3235
        %v3316 = vadd.f32 %v2523, %v3235
        %v3317 = vadd.f32 %v2528, %v3235
        %v3318 = vadd.f32 %v2531, %v3235
        %v3319 = vadd.f32 %v2536, %v3235
        %v3320 = vadd.f32 %v2539, %v3235
        %v3321 = vadd.f32 %v2544, %v3235
        %v3322 = vadd.f32 %v2547, %v3235
        %v3323 = vadd.f32 %v2552, %v3235
        %v3324 = vadd.f32 %v2555, %v3235
        %v3325 = vadd.f32 %v2560, %v3235
        %v3326 = vadd.f32 %v2563, %v3235
        %v3327 = vadd.f32 %v2568, %v3235
        %v3328 = vadd.f32 %v2571, %v3235
        %v3329 = vadd.f32 %v2576, %v3235
        %v3330 = vadd.f32 %v2579, %v3235
        %v3331 = vadd.f32 %v2584, %v3235
        %v3332 = vadd.f32 %v2587, %v3235
        %v3333 = vadd.f32 %v2592, %v3235
        %v3334 = vadd.f32 %v2595, %v3235
        %v3335 = vadd.f32 %v2600, %v3235
        %v3336 = vadd.f32 %v2603, %v3235
        %v3337 = vadd.f32 %v2608, %v3235
        %v3338 = vadd.f32 %v2611, %v3235
        %v3339 = vadd.f32 %v2616, %v3235
        %v3340 = vadd.f32 %v2619, %v3235
        %v3341 = vadd.f32 %v2624, %v3235
        %v3342 = vadd.f32 %v2627, %v3235
        %v3343 = vadd.f32 %v2632, %v3235
        %v3344 = vadd.f32 %v2635, %v3235
        %v3345 = vadd.f32 %v2640, %v3235
        %v3346 = vadd.f32 %v2643, %v3235
        %v3347 = vadd.f32 %v2648, %v3235
        %v3348 = vadd.f32 %v2651, %v3235
        %v3349 = vadd.f32 %v2656, %v3235
        %v3350 = vadd.f32 %v2659, %v3235
        %v3351 = vadd.f32 %v2664, %v3235
        %v3352 = vadd.f32 %v2667, %v3235
        %v3353 = vadd.f32 %v2672, %v3235
        %v3354 = vadd.f32 %v2675, %v3235
        %v3355 = vadd.f32 %v2680, %v3235
        %v3356 = vadd.f32 %v2683, %v3235
        %v3357 = vadd.f32 %v2688, %v3235
        %v3358 = vadd.f32 %v2691, %v3235
        %v3359 = vadd.f32 %v2696, %v3235
        %v3360 = vadd.f32 %v2699, %v3235
        %v3361 = vadd.f32 %v2704, %v3235
        %v3362 = vadd.f32 %v2707, %v3235
        %v3363 = vadd.f32 %v2712, %v3235
        %v3364 = vadd.f32 %v2715, %v3235
        %v3365 = vadd.f32 %v2720, %v3235
        %v3366 = vadd.f32 %v2723, %v3235
        %v3367 = vadd.f32 %v2728, %v3235
        %v3368 = vadd.f32 %v2731, %v3235
        %v3369 = vadd.f32 %v2736, %v3235
        %v3370 = vadd.f32 %v2739, %v3235
        %v3371 = vadd.f32 %v2744, %v3235
        %v3372 = vadd.f32 %v2747, %v3235
        %v3373 = vadd.f32 %v2752, %v3235
        %v3374 = vadd.f32 %v2755, %v3235
        %v3375 = vadd.f32 %v2760, %v3235
        %v3376 = vadd.f32 %v2763, %v3235
        %v3377 = vadd.f32 %v2768, %v3235
        %v3378 = vadd.f32 %v2771, %v3235
        %v3379 = vadd.f32 %v2776, %v3235
        %v3380 = vadd.f32 %v2779, %v3235
        %v3381 = vadd.f32 %v2784, %v3235
        %v3382 = vadd.f32 %v2787, %v3235
        %v3383 = vadd.f32 %v2792, %v3235
        %v3384 = vadd.f32 %v2795, %v3235
        %v3385 = vadd.f32 %v2800, %v3235
        %v3386 = vadd.f32 %v2803, %v3235
        %v3387 = vadd.f32 %v2808, %v3235
        %v3388 = vadd.f32 %v2811, %v3235
        %v3389 = vadd.f32 %v2816, %v3235
        %v3390 = vadd.f32 %v2819, %v3235
        %v3391 = vadd.f32 %v2824, %v3235
        %v3392 = vadd.f32 %v2827, %v3235
        %v3393 = vadd.f32 %v2832, %v3235
        %v3394 = vadd.f32 %v2835, %v3235
        %v3395 = vadd.f32 %v2840, %v3235
        %v3396 = vadd.f32 %v2843, %v3235
        %v3397 = vadd.f32 %v2848, %v3235
        %v3398 = vadd.f32 %v2851, %v3235
        %v3399 = vadd.f32 %v2856, %v3235
        %v3400 = vadd.f32 %v2859, %v3235
        %v3401 = vadd.f32 %v2864, %v3235
        %v3402 = vadd.f32 %v2867, %v3235
        %v3403 = vadd.f32 %v2872, %v3235
        %v3404 = vadd.f32 %v2875, %v3235
        %v3405 = vadd.f32 %v2880, %v3235
        %v3406 = vadd.f32 %v2883, %v3235
        %v3407 = vadd.f32 %v2888, %v3235
        %v3408 = vadd.f32 %v2891, %v3235
        %v3409 = vadd.f32 %v2896, %v3235
        %v3410 = vadd.f32 %v2899, %v3235
        %v3411 = vadd.f32 %v2904, %v3235
        %v3412 = vadd.f32 %v2907, %v3235
        %v3413 = vadd.f32 %v2912, %v3235
        %v3414 = vadd.f32 %v2915, %v3235
        %v3415 = vadd.f32 %v2920, %v3235
        %v3416 = vadd.f32 %v2923, %v3235
        %v3417 = vadd.f32 %v2928, %v3235
        %v3418 = vadd.f32 %v2931, %v3235
        %v3419 = vadd.f32 %v2936, %v3235
        %v3420 = vadd.f32 %v2939, %v3235
        %v3421 = vadd.f32 %v2944, %v3235
        %v3422 = vadd.f32 %v2947, %v3235
        %v3423 = vadd.f32 %v2952, %v3235
        %v3424 = vadd.f32 %v2955, %v3235
        %v3425 = vadd.f32 %v2960, %v3235
        %v3426 = vadd.f32 %v2963, %v3235
        %v3427 = vadd.f32 %v2968, %v3235
        %v3428 = vadd.f32 %v2971, %v3235
        %v3429 = vadd.f32 %v2976, %v3235
        %v3430 = vadd.f32 %v2979, %v3235
        %v3431 = vadd.f32 %v2984, %v3235
        %v3432 = vadd.f32 %v2987, %v3235
        %v3433 = vadd.f32 %v2992, %v3235
        %v3434 = vadd.f32 %v2995, %v3235
        %v3435 = vadd.f32 %v3000, %v3235
        %v3436 = vadd.f32 %v3003, %v3235
        %v3437 = vadd.f32 %v3008, %v3235
        %v3438 = vadd.f32 %v3011, %v3235
        %v3439 = vadd.f32 %v3016, %v3235
        %v3440 = vadd.f32 %v3019, %v3235
        %v3441 = vadd.f32 %v3024, %v3235
        %v3442 = vadd.f32 %v3027, %v3235
        %v3443 = vadd.f32 %v3032, %v3235
        %v3444 = vadd.f32 %v3035, %v3235
        %v3445 = vadd.f32 %v3040, %v3235
        %v3446 = vadd.f32 %v3043, %v3235
        %v3447 = vadd.f32 %v3048, %v3235
        %v3448 = vadd.f32 %v3051, %v3235
        %v3449 = vadd.f32 %v3056, %v3235
        %v3450 = vadd.f32 %v3059, %v3235
        %v3451 = vadd.f32 %v3064, %v3235
        %v3452 = vadd.f32 %v3067, %v3235
        %v3453 = vadd.f32 %v3072, %v3235
        %v3454 = vadd.f32 %v3075, %v3235
        %v3455 = vadd.f32 %v3080, %v3235
        %v3456 = vadd.f32 %v3083, %v3235
        %v3457 = vadd.f32 %v3088, %v3235
        %v3458 = vadd.f32 %v3091, %v3235
        %v3459 = vadd.f32 %v3096, %v3235
        %v3460 = vadd.f32 %v3099, %v3235
        %v3461 = vadd.f32 %v3104, %v3235
        %v3462 = vadd.f32 %v3107, %v3235
        %v3463 = vadd.f32 %v3112, %v3235
        %v3464 = vadd.f32 %v3115, %v3235
        %v3465 = vadd.f32 %v3120, %v3235
        %v3466 = vadd.f32 %v3123, %v3235
        %v3467 = vadd.f32 %v3128, %v3235
        %v3468 = vadd.f32 %v3131, %v3235
        %v3469 = vadd.f32 %v3136, %v3235
        %v3470 = vadd.f32 %v3139, %v3235
        %v3471 = vadd.f32 %v3144, %v3235
        %v3472 = vadd.f32 %v3147, %v3235
        %v3473 = vadd.f32 %v3152, %v3235
        %v3474 = vadd.f32 %v3155, %v3235
        %v3475 = vadd.f32 %v3160, %v3235
        %v3476 = vadd.f32 %v3163, %v3235
        %v3477 = vadd.f32 %v3168, %v3235
        %v3478 = vadd.f32 %v3171, %v3235
        %v3479 = vadd.f32 %v3176, %v3235
        %v3480 = vadd.f32 %v3179, %v3235
        %v3481 = vadd.f32 %v3184, %v3235
        %v3482 = vadd.f32 %v3187, %v3235
        %v3483 = vadd.f32 %v3192, %v3235
        %v3484 = vadd.f32 %v3195, %v3235
        %v3485 = vadd.f32 %v3200, %v3235
        %v3486 = vadd.f32 %v3203, %v3235
        %v3487 = vadd.f32 %v3208, %v3235
        %v3488 = vadd.f32 %v3211, %v3235
        %v3489 = vadd.f32 %v3216, %v3235
        %v3490 = vadd.f32 %v3219, %v3235
        %v3491 = vadd.f32 %v3224, %v3235
        %v3492 = vadd.f32 %v3227, %v3235
        %3493 = vst [vmem:[#allocation3] sm:$0xff] %v1361
        %3494 = vst [vmem:[#allocation3 + $0x8] sm:$0xff] %v1362
        %3495 = vst [vmem:[#allocation3 + $0x10] sm:$0xff] %v1363
        %3496 = vst [vmem:[#allocation3 + $0x18] sm:$0xff] %v1364
        %3497 = vst [vmem:[#allocation3 + $0x20] sm:$0xff] %v1365
        %3498 = vst [vmem:[#allocation3 + $0x28] sm:$0xff] %v1366
        %3499 = vst [vmem:[#allocation3 + $0x30] sm:$0xff] %v1367
        %3500 = vst [vmem:[#allocation3 + $0x38] sm:$0xff] %v1368
        %3501 = vst [vmem:[#allocation3 + $0x40] sm:$0xff] %v1369
        %3502 = vst [vmem:[#allocation3 + $0x48] sm:$0xff] %v1370
        %3503 = vst [vmem:[#allocation3 + $0x50] sm:$0xff] %v1371
        %3504 = vst [vmem:[#allocation3 + $0x58] sm:$0xff] %v1372
        %3505 = vst [vmem:[#allocation3 + $0x60] sm:$0xff] %v1373
        %3506 = vst [vmem:[#allocation3 + $0x68] sm:$0xff] %v1374
        %3507 = vst [vmem:[#allocation3 + $0x70] sm:$0xff] %v1375
        %3508 = vst [vmem:[#allocation3 + $0x78] sm:$0xff] %v1376
        %3509 = vst [vmem:[#allocation3 + $0x80] sm:$0xff] %v1361
        %3510 = vst [vmem:[#allocation3 + $0x88] sm:$0xff] %v1362
        %3511 = vst [vmem:[#allocation3 + $0x90] sm:$0xff] %v1363
        %3512 = vst [vmem:[#allocation3 + $0x98] sm:$0xff] %v1364
        %3513 = vst [vmem:[#allocation3 + $0xa0] sm:$0xff] %v1365
        %3514 = vst [vmem:[#allocation3 + $0xa8] sm:$0xff] %v1366
        %3515 = vst [vmem:[#allocation3 + $0xb0] sm:$0xff] %v1367
        %3516 = vst [vmem:[#allocation3 + $0xb8] sm:$0xff] %v1368
        %3517 = vst [vmem:[#allocation3 + $0xc0] sm:$0xff] %v1369
        %3518 = vst [vmem:[#allocation3 + $0xc8] sm:$0xff] %v1370
        %3519 = vst [vmem:[#allocation3 + $0xd0] sm:$0xff] %v1371
        %3520 = vst [vmem:[#allocation3 + $0xd8] sm:$0xff] %v1372
        %3521 = vst [vmem:[#allocation3 + $0xe0] sm:$0xff] %v1373
        %3522 = vst [vmem:[#allocation3 + $0xe8] sm:$0xff] %v1374
        %3523 = vst [vmem:[#allocation3 + $0xf0] sm:$0xff] %v1375
        %3524 = vst [vmem:[#allocation3 + $0xf8] sm:$0xff] %v1376
        %3525 = vst [vmem:[#allocation3 + $0x100] sm:$0xff] %v1361
        %3526 = vst [vmem:[#allocation3 + $0x108] sm:$0xff] %v1362
        %3527 = vst [vmem:[#allocation3 + $0x110] sm:$0xff] %v1363
        %3528 = vst [vmem:[#allocation3 + $0x118] sm:$0xff] %v1364
        %3529 = vst [vmem:[#allocation3 + $0x120] sm:$0xff] %v1365
        %3530 = vst [vmem:[#allocation3 + $0x128] sm:$0xff] %v1366
        %3531 = vst [vmem:[#allocation3 + $0x130] sm:$0xff] %v1367
        %3532 = vst [vmem:[#allocation3 + $0x138] sm:$0xff] %v1368
        %3533 = vst [vmem:[#allocation3 + $0x140] sm:$0xff] %v1369
        %3534 = vst [vmem:[#allocation3 + $0x148] sm:$0xff] %v1370
        %3535 = vst [vmem:[#allocation3 + $0x150] sm:$0xff] %v1371
        %3536 = vst [vmem:[#allocation3 + $0x158] sm:$0xff] %v1372
        %3537 = vst [vmem:[#allocation3 + $0x160] sm:$0xff] %v1373
        %3538 = vst [vmem:[#allocation3 + $0x168] sm:$0xff] %v1374
        %3539 = vst [vmem:[#allocation3 + $0x170] sm:$0xff] %v1375
        %3540 = vst [vmem:[#allocation3 + $0x178] sm:$0xff] %v1376
        %3541 = vst [vmem:[#allocation3 + $0x180] sm:$0xff] %v1361
        %3542 = vst [vmem:[#allocation3 + $0x188] sm:$0xff] %v1362
        %3543 = vst [vmem:[#allocation3 + $0x190] sm:$0xff] %v1363
        %3544 = vst [vmem:[#allocation3 + $0x198] sm:$0xff] %v1364
        %3545 = vst [vmem:[#allocation3 + $0x1a0] sm:$0xff] %v1365
        %3546 = vst [vmem:[#allocation3 + $0x1a8] sm:$0xff] %v1366
        %3547 = vst [vmem:[#allocation3 + $0x1b0] sm:$0xff] %v1367
        %3548 = vst [vmem:[#allocation3 + $0x1b8] sm:$0xff] %v1368
        %3549 = vst [vmem:[#allocation3 + $0x1c0] sm:$0xff] %v1369
        %3550 = vst [vmem:[#allocation3 + $0x1c8] sm:$0xff] %v1370
        %3551 = vst [vmem:[#allocation3 + $0x1d0] sm:$0xff] %v1371
        %3552 = vst [vmem:[#allocation3 + $0x1d8] sm:$0xff] %v1372
        %3553 = vst [vmem:[#allocation3 + $0x1e0] sm:$0xff] %v1373
        %3554 = vst [vmem:[#allocation3 + $0x1e8] sm:$0xff] %v1374
        %3555 = vst [vmem:[#allocation3 + $0x1f0] sm:$0xff] %v1375
        %3556 = vst [vmem:[#allocation3 + $0x1f8] sm:$0xff] %v1376
        %3557 = vst [vmem:[#allocation3 + $0x200] sm:$0xff] %v1361
        %3558 = vst [vmem:[#allocation3 + $0x208] sm:$0xff] %v1362
        %3559 = vst [vmem:[#allocation3 + $0x210] sm:$0xff] %v1363
        %3560 = vst [vmem:[#allocation3 + $0x218] sm:$0xff] %v1364
        %3561 = vst [vmem:[#allocation3 + $0x220] sm:$0xff] %v1365
        %3562 = vst [vmem:[#allocation3 + $0x228] sm:$0xff] %v1366
        %3563 = vst [vmem:[#allocation3 + $0x230] sm:$0xff] %v1367
        %3564 = vst [vmem:[#allocation3 + $0x238] sm:$0xff] %v1368
        %3565 = vst [vmem:[#allocation3 + $0x240] sm:$0xff] %v1369
        %3566 = vst [vmem:[#allocation3 + $0x248] sm:$0xff] %v1370
        %3567 = vst [vmem:[#allocation3 + $0x250] sm:$0xff] %v1371
        %3568 = vst [vmem:[#allocation3 + $0x258] sm:$0xff] %v1372
        %3569 = vst [vmem:[#allocation3 + $0x260] sm:$0xff] %v1373
        %3570 = vst [vmem:[#allocation3 + $0x268] sm:$0xff] %v1374
        %3571 = vst [vmem:[#allocation3 + $0x270] sm:$0xff] %v1375
        %3572 = vst [vmem:[#allocation3 + $0x278] sm:$0xff] %v1376
        %3573 = vst [vmem:[#allocation3 + $0x280] sm:$0xff] %v1361
        %3574 = vst [vmem:[#allocation3 + $0x288] sm:$0xff] %v1362
        %3575 = vst [vmem:[#allocation3 + $0x290] sm:$0xff] %v1363
        %3576 = vst [vmem:[#allocation3 + $0x298] sm:$0xff] %v1364
        %3577 = vst [vmem:[#allocation3 + $0x2a0] sm:$0xff] %v1365
        %3578 = vst [vmem:[#allocation3 + $0x2a8] sm:$0xff] %v1366
        %3579 = vst [vmem:[#allocation3 + $0x2b0] sm:$0xff] %v1367
        %3580 = vst [vmem:[#allocation3 + $0x2b8] sm:$0xff] %v1368
        %3581 = vst [vmem:[#allocation3 + $0x2c0] sm:$0xff] %v1369
        %3582 = vst [vmem:[#allocation3 + $0x2c8] sm:$0xff] %v1370
        %3583 = vst [vmem:[#allocation3 + $0x2d0] sm:$0xff] %v1371
        %3584 = vst [vmem:[#allocation3 + $0x2d8] sm:$0xff] %v1372
        %3585 = vst [vmem:[#allocation3 + $0x2e0] sm:$0xff] %v1373
        %3586 = vst [vmem:[#allocation3 + $0x2e8] sm:$0xff] %v1374
        %3587 = vst [vmem:[#allocation3 + $0x2f0] sm:$0xff] %v1375
        %3588 = vst [vmem:[#allocation3 + $0x2f8] sm:$0xff] %v1376
        %3589 = vst [vmem:[#allocation3 + $0x300] sm:$0xff] %v1361
        %3590 = vst [vmem:[#allocation3 + $0x308] sm:$0xff] %v1362
        %3591 = vst [vmem:[#allocation3 + $0x310] sm:$0xff] %v1363
        %3592 = vst [vmem:[#allocation3 + $0x318] sm:$0xff] %v1364
        %3593 = vst [vmem:[#allocation3 + $0x320] sm:$0xff] %v1365
        %3594 = vst [vmem:[#allocation3 + $0x328] sm:$0xff] %v1366
        %3595 = vst [vmem:[#allocation3 + $0x330] sm:$0xff] %v1367
        %3596 = vst [vmem:[#allocation3 + $0x338] sm:$0xff] %v1368
        %3597 = vst [vmem:[#allocation3 + $0x340] sm:$0xff] %v1369
        %3598 = vst [vmem:[#allocation3 + $0x348] sm:$0xff] %v1370
        %3599 = vst [vmem:[#allocation3 + $0x350] sm:$0xff] %v1371
        %3600 = vst [vmem:[#allocation3 + $0x358] sm:$0xff] %v1372
        %3601 = vst [vmem:[#allocation3 + $0x360] sm:$0xff] %v1373
        %3602 = vst [vmem:[#allocation3 + $0x368] sm:$0xff] %v1374
        %3603 = vst [vmem:[#allocation3 + $0x370] sm:$0xff] %v1375
        %3604 = vst [vmem:[#allocation3 + $0x378] sm:$0xff] %v1376
        %3605 = vst [vmem:[#allocation3 + $0x380] sm:$0xff] %v1361
        %3606 = vst [vmem:[#allocation3 + $0x388] sm:$0xff] %v1362
        %3607 = vst [vmem:[#allocation3 + $0x390] sm:$0xff] %v1363
        %3608 = vst [vmem:[#allocation3 + $0x398] sm:$0xff] %v1364
        %3609 = vst [vmem:[#allocation3 + $0x3a0] sm:$0xff] %v1365
        %3610 = vst [vmem:[#allocation3 + $0x3a8] sm:$0xff] %v1366
        %3611 = vst [vmem:[#allocation3 + $0x3b0] sm:$0xff] %v1367
        %3612 = vst [vmem:[#allocation3 + $0x3b8] sm:$0xff] %v1368
        %3613 = vst [vmem:[#allocation3 + $0x3c0] sm:$0xff] %v1369
        %3614 = vst [vmem:[#allocation3 + $0x3c8] sm:$0xff] %v1370
        %3615 = vst [vmem:[#allocation3 + $0x3d0] sm:$0xff] %v1371
        %3616 = vst [vmem:[#allocation3 + $0x3d8] sm:$0xff] %v1372
        %3617 = vst [vmem:[#allocation3 + $0x3e0] sm:$0xff] %v1373
        %3618 = vst [vmem:[#allocation3 + $0x3e8] sm:$0xff] %v1374
        %3619 = vst [vmem:[#allocation3 + $0x3f0] sm:$0xff] %v1375
        %3620 = vst [vmem:[#allocation3 + $0x3f8] sm:$0xff] %v1376
        %3621 = vst [vmem:[#allocation3 + $0x400] sm:$0xff] %v1361
        %3622 = vst [vmem:[#allocation3 + $0x408] sm:$0xff] %v1362
        %3623 = vst [vmem:[#allocation3 + $0x410] sm:$0xff] %v1363
        %3624 = vst [vmem:[#allocation3 + $0x418] sm:$0xff] %v1364
        %3625 = vst [vmem:[#allocation3 + $0x420] sm:$0xff] %v1365
        %3626 = vst [vmem:[#allocation3 + $0x428] sm:$0xff] %v1366
        %3627 = vst [vmem:[#allocation3 + $0x430] sm:$0xff] %v1367
        %3628 = vst [vmem:[#allocation3 + $0x438] sm:$0xff] %v1368
        %3629 = vst [vmem:[#allocation3 + $0x440] sm:$0xff] %v1369
        %3630 = vst [vmem:[#allocation3 + $0x448] sm:$0xff] %v1370
        %3631 = vst [vmem:[#allocation3 + $0x450] sm:$0xff] %v1371
        %3632 = vst [vmem:[#allocation3 + $0x458] sm:$0xff] %v1372
        %3633 = vst [vmem:[#allocation3 + $0x460] sm:$0xff] %v1373
        %3634 = vst [vmem:[#allocation3 + $0x468] sm:$0xff] %v1374
        %3635 = vst [vmem:[#allocation3 + $0x470] sm:$0xff] %v1375
        %3636 = vst [vmem:[#allocation3 + $0x478] sm:$0xff] %v1376
        %3637 = vst [vmem:[#allocation3 + $0x480] sm:$0xff] %v1361
        %3638 = vst [vmem:[#allocation3 + $0x488] sm:$0xff] %v1362
        %3639 = vst [vmem:[#allocation3 + $0x490] sm:$0xff] %v1363
        %3640 = vst [vmem:[#allocation3 + $0x498] sm:$0xff] %v1364
        %3641 = vst [vmem:[#allocation3 + $0x4a0] sm:$0xff] %v1365
        %3642 = vst [vmem:[#allocation3 + $0x4a8] sm:$0xff] %v1366
        %3643 = vst [vmem:[#allocation3 + $0x4b0] sm:$0xff] %v1367
        %3644 = vst [vmem:[#allocation3 + $0x4b8] sm:$0xff] %v1368
        %3645 = vst [vmem:[#allocation3 + $0x4c0] sm:$0xff] %v1369
        %3646 = vst [vmem:[#allocation3 + $0x4c8] sm:$0xff] %v1370
        %3647 = vst [vmem:[#allocation3 + $0x4d0] sm:$0xff] %v1371
        %3648 = vst [vmem:[#allocation3 + $0x4d8] sm:$0xff] %v1372
        %3649 = vst [vmem:[#allocation3 + $0x4e0] sm:$0xff] %v1373
        %3650 = vst [vmem:[#allocation3 + $0x4e8] sm:$0xff] %v1374
        %3651 = vst [vmem:[#allocation3 + $0x4f0] sm:$0xff] %v1375
        %3652 = vst [vmem:[#allocation3 + $0x4f8] sm:$0xff] %v1376
        %3653 = vst [vmem:[#allocation3 + $0x500] sm:$0xff] %v1361
        %3654 = vst [vmem:[#allocation3 + $0x508] sm:$0xff] %v1362
        %3655 = vst [vmem:[#allocation3 + $0x510] sm:$0xff] %v1363
        %3656 = vst [vmem:[#allocation3 + $0x518] sm:$0xff] %v1364
        %3657 = vst [vmem:[#allocation3 + $0x520] sm:$0xff] %v1365
        %3658 = vst [vmem:[#allocation3 + $0x528] sm:$0xff] %v1366
        %3659 = vst [vmem:[#allocation3 + $0x530] sm:$0xff] %v1367
        %3660 = vst [vmem:[#allocation3 + $0x538] sm:$0xff] %v1368
        %3661 = vst [vmem:[#allocation3 + $0x540] sm:$0xff] %v1369
        %3662 = vst [vmem:[#allocation3 + $0x548] sm:$0xff] %v1370
        %3663 = vst [vmem:[#allocation3 + $0x550] sm:$0xff] %v1371
        %3664 = vst [vmem:[#allocation3 + $0x558] sm:$0xff] %v1372
        %3665 = vst [vmem:[#allocation3 + $0x560] sm:$0xff] %v1373
        %3666 = vst [vmem:[#allocation3 + $0x568] sm:$0xff] %v1374
        %3667 = vst [vmem:[#allocation3 + $0x570] sm:$0xff] %v1375
        %3668 = vst [vmem:[#allocation3 + $0x578] sm:$0xff] %v1376
        %3669 = vst [vmem:[#allocation3 + $0x580] sm:$0xff] %v1361
        %3670 = vst [vmem:[#allocation3 + $0x588] sm:$0xff] %v1362
        %3671 = vst [vmem:[#allocation3 + $0x590] sm:$0xff] %v1363
        %3672 = vst [vmem:[#allocation3 + $0x598] sm:$0xff] %v1364
        %3673 = vst [vmem:[#allocation3 + $0x5a0] sm:$0xff] %v1365
        %3674 = vst [vmem:[#allocation3 + $0x5a8] sm:$0xff] %v1366
        %3675 = vst [vmem:[#allocation3 + $0x5b0] sm:$0xff] %v1367
        %3676 = vst [vmem:[#allocation3 + $0x5b8] sm:$0xff] %v1368
        %3677 = vst [vmem:[#allocation3 + $0x5c0] sm:$0xff] %v1369
        %3678 = vst [vmem:[#allocation3 + $0x5c8] sm:$0xff] %v1370
        %3679 = vst [vmem:[#allocation3 + $0x5d0] sm:$0xff] %v1371
        %3680 = vst [vmem:[#allocation3 + $0x5d8] sm:$0xff] %v1372
        %3681 = vst [vmem:[#allocation3 + $0x5e0] sm:$0xff] %v1373
        %3682 = vst [vmem:[#allocation3 + $0x5e8] sm:$0xff] %v1374
        %3683 = vst [vmem:[#allocation3 + $0x5f0] sm:$0xff] %v1375
        %3684 = vst [vmem:[#allocation3 + $0x5f8] sm:$0xff] %v1376
        %3685 = vst [vmem:[#allocation3 + $0x600] sm:$0xff] %v1361
        %3686 = vst [vmem:[#allocation3 + $0x608] sm:$0xff] %v1362
        %3687 = vst [vmem:[#allocation3 + $0x610] sm:$0xff] %v1363
        %3688 = vst [vmem:[#allocation3 + $0x618] sm:$0xff] %v1364
        %3689 = vst [vmem:[#allocation3 + $0x620] sm:$0xff] %v1365
        %3690 = vst [vmem:[#allocation3 + $0x628] sm:$0xff] %v1366
        %3691 = vst [vmem:[#allocation3 + $0x630] sm:$0xff] %v1367
        %3692 = vst [vmem:[#allocation3 + $0x638] sm:$0xff] %v1368
        %3693 = vst [vmem:[#allocation3 + $0x640] sm:$0xff] %v1369
        %3694 = vst [vmem:[#allocation3 + $0x648] sm:$0xff] %v1370
        %3695 = vst [vmem:[#allocation3 + $0x650] sm:$0xff] %v1371
        %3696 = vst [vmem:[#allocation3 + $0x658] sm:$0xff] %v1372
        %3697 = vst [vmem:[#allocation3 + $0x660] sm:$0xff] %v1373
        %3698 = vst [vmem:[#allocation3 + $0x668] sm:$0xff] %v1374
        %3699 = vst [vmem:[#allocation3 + $0x670] sm:$0xff] %v1375
        %3700 = vst [vmem:[#allocation3 + $0x678] sm:$0xff] %v1376
        %3701 = vst [vmem:[#allocation3 + $0x680] sm:$0xff] %v1361
        %3702 = vst [vmem:[#allocation3 + $0x688] sm:$0xff] %v1362
        %3703 = vst [vmem:[#allocation3 + $0x690] sm:$0xff] %v1363
        %3704 = vst [vmem:[#allocation3 + $0x698] sm:$0xff] %v1364
        %3705 = vst [vmem:[#allocation3 + $0x6a0] sm:$0xff] %v1365
        %3706 = vst [vmem:[#allocation3 + $0x6a8] sm:$0xff] %v1366
        %3707 = vst [vmem:[#allocation3 + $0x6b0] sm:$0xff] %v1367
        %3708 = vst [vmem:[#allocation3 + $0x6b8] sm:$0xff] %v1368
        %3709 = vst [vmem:[#allocation3 + $0x6c0] sm:$0xff] %v1369
        %3710 = vst [vmem:[#allocation3 + $0x6c8] sm:$0xff] %v1370
        %3711 = vst [vmem:[#allocation3 + $0x6d0] sm:$0xff] %v1371
        %3712 = vst [vmem:[#allocation3 + $0x6d8] sm:$0xff] %v1372
        %3713 = vst [vmem:[#allocation3 + $0x6e0] sm:$0xff] %v1373
        %3714 = vst [vmem:[#allocation3 + $0x6e8] sm:$0xff] %v1374
        %3715 = vst [vmem:[#allocation3 + $0x6f0] sm:$0xff] %v1375
        %3716 = vst [vmem:[#allocation3 + $0x6f8] sm:$0xff] %v1376
        %3717 = vst [vmem:[#allocation3 + $0x700] sm:$0xff] %v1361
        %3718 = vst [vmem:[#allocation3 + $0x708] sm:$0xff] %v1362
        %3719 = vst [vmem:[#allocation3 + $0x710] sm:$0xff] %v1363
        %3720 = vst [vmem:[#allocation3 + $0x718] sm:$0xff] %v1364
        %3721 = vst [vmem:[#allocation3 + $0x720] sm:$0xff] %v1365
        %3722 = vst [vmem:[#allocation3 + $0x728] sm:$0xff] %v1366
        %3723 = vst [vmem:[#allocation3 + $0x730] sm:$0xff] %v1367
        %3724 = vst [vmem:[#allocation3 + $0x738] sm:$0xff] %v1368
        %3725 = vst [vmem:[#allocation3 + $0x740] sm:$0xff] %v1369
        %3726 = vst [vmem:[#allocation3 + $0x748] sm:$0xff] %v1370
        %3727 = vst [vmem:[#allocation3 + $0x750] sm:$0xff] %v1371
        %3728 = vst [vmem:[#allocation3 + $0x758] sm:$0xff] %v1372
        %3729 = vst [vmem:[#allocation3 + $0x760] sm:$0xff] %v1373
        %3730 = vst [vmem:[#allocation3 + $0x768] sm:$0xff] %v1374
        %3731 = vst [vmem:[#allocation3 + $0x770] sm:$0xff] %v1375
        %3732 = vst [vmem:[#allocation3 + $0x778] sm:$0xff] %v1376
        %3733 = vst [vmem:[#allocation3 + $0x780] sm:$0xff] %v1361
        %3734 = vst [vmem:[#allocation3 + $0x788] sm:$0xff] %v1362
        %3735 = vst [vmem:[#allocation3 + $0x790] sm:$0xff] %v1363
        %3736 = vst [vmem:[#allocation3 + $0x798] sm:$0xff] %v1364
        %3737 = vst [vmem:[#allocation3 + $0x7a0] sm:$0xff] %v1365
        %3738 = vst [vmem:[#allocation3 + $0x7a8] sm:$0xff] %v1366
        %3739 = vst [vmem:[#allocation3 + $0x7b0] sm:$0xff] %v1367
        %3740 = vst [vmem:[#allocation3 + $0x7b8] sm:$0xff] %v1368
        %3741 = vst [vmem:[#allocation3 + $0x7c0] sm:$0xff] %v1369
        %3742 = vst [vmem:[#allocation3 + $0x7c8] sm:$0xff] %v1370
        %3743 = vst [vmem:[#allocation3 + $0x7d0] sm:$0xff] %v1371
        %3744 = vst [vmem:[#allocation3 + $0x7d8] sm:$0xff] %v1372
        %3745 = vst [vmem:[#allocation3 + $0x7e0] sm:$0xff] %v1373
        %3746 = vst [vmem:[#allocation3 + $0x7e8] sm:$0xff] %v1374
        %3747 = vst [vmem:[#allocation3 + $0x7f0] sm:$0xff] %v1375
        %3748 = vst [vmem:[#allocation3 + $0x7f8] sm:$0xff] %v1376
        loop: start=0, step=1, limit=5
        $region83: #{tpu_custom_call.1} parent=73 // loop_pre_header
          _
        $region84: #{tpu_custom_call.1} parent=73 // loop_header
          %s3750 = sphi 0, %s3754
          %p3751 = scmp.ge.s32.totalorder %s3750, 5
        $region85: #{tpu_custom_call.1} parent=73 // loop_header_branch
          %3753 = sbr.rel (%p3751) target = $region89
        $region86: #{tpu_custom_call.1} parent=73 // loop_body
          %v3755 = vld [vmem:[#allocation3] sm:$0xff]
          %v3756 = vld [vmem:[#allocation3 + $0x8] sm:$0xff]
          %v3757 = vld [vmem:[#allocation3 + $0x10] sm:$0xff]
          %v3758 = vld [vmem:[#allocation3 + $0x18] sm:$0xff]
          %v3759 = vld [vmem:[#allocation3 + $0x20] sm:$0xff]
          %v3760 = vld [vmem:[#allocation3 + $0x28] sm:$0xff]
          %v3761 = vld [vmem:[#allocation3 + $0x30] sm:$0xff]
          %v3762 = vld [vmem:[#allocation3 + $0x38] sm:$0xff]
          %v3763 = vld [vmem:[#allocation3 + $0x40] sm:$0xff]
          %v3764 = vld [vmem:[#allocation3 + $0x48] sm:$0xff]
          %v3765 = vld [vmem:[#allocation3 + $0x50] sm:$0xff]
          %v3766 = vld [vmem:[#allocation3 + $0x58] sm:$0xff]
          %v3767 = vld [vmem:[#allocation3 + $0x60] sm:$0xff]
          %v3768 = vld [vmem:[#allocation3 + $0x68] sm:$0xff]
          %v3769 = vld [vmem:[#allocation3 + $0x70] sm:$0xff]
          %v3770 = vld [vmem:[#allocation3 + $0x78] sm:$0xff]
          %v3771 = vld [vmem:[#allocation3 + $0x80] sm:$0xff]
          %v3772 = vld [vmem:[#allocation3 + $0x88] sm:$0xff]
          %v3773 = vld [vmem:[#allocation3 + $0x90] sm:$0xff]
          %v3774 = vld [vmem:[#allocation3 + $0x98] sm:$0xff]
          %v3775 = vld [vmem:[#allocation3 + $0xa0] sm:$0xff]
          %v3776 = vld [vmem:[#allocation3 + $0xa8] sm:$0xff]
          %v3777 = vld [vmem:[#allocation3 + $0xb0] sm:$0xff]
          %v3778 = vld [vmem:[#allocation3 + $0xb8] sm:$0xff]
          %v3779 = vld [vmem:[#allocation3 + $0xc0] sm:$0xff]
          %v3780 = vld [vmem:[#allocation3 + $0xc8] sm:$0xff]
          %v3781 = vld [vmem:[#allocation3 + $0xd0] sm:$0xff]
          %v3782 = vld [vmem:[#allocation3 + $0xd8] sm:$0xff]
          %v3783 = vld [vmem:[#allocation3 + $0xe0] sm:$0xff]
          %v3784 = vld [vmem:[#allocation3 + $0xe8] sm:$0xff]
          %v3785 = vld [vmem:[#allocation3 + $0xf0] sm:$0xff]
          %v3786 = vld [vmem:[#allocation3 + $0xf8] sm:$0xff]
          %v3787 = vld [vmem:[#allocation3 + $0x100] sm:$0xff]
          %v3788 = vld [vmem:[#allocation3 + $0x108] sm:$0xff]
          %v3789 = vld [vmem:[#allocation3 + $0x110] sm:$0xff]
          %v3790 = vld [vmem:[#allocation3 + $0x118] sm:$0xff]
          %v3791 = vld [vmem:[#allocation3 + $0x120] sm:$0xff]
          %v3792 = vld [vmem:[#allocation3 + $0x128] sm:$0xff]
          %v3793 = vld [vmem:[#allocation3 + $0x130] sm:$0xff]
          %v3794 = vld [vmem:[#allocation3 + $0x138] sm:$0xff]
          %v3795 = vld [vmem:[#allocation3 + $0x140] sm:$0xff]
          %v3796 = vld [vmem:[#allocation3 + $0x148] sm:$0xff]
          %v3797 = vld [vmem:[#allocation3 + $0x150] sm:$0xff]
          %v3798 = vld [vmem:[#allocation3 + $0x158] sm:$0xff]
          %v3799 = vld [vmem:[#allocation3 + $0x160] sm:$0xff]
          %v3800 = vld [vmem:[#allocation3 + $0x168] sm:$0xff]
          %v3801 = vld [vmem:[#allocation3 + $0x170] sm:$0xff]
          %v3802 = vld [vmem:[#allocation3 + $0x178] sm:$0xff]
          %v3803 = vld [vmem:[#allocation3 + $0x180] sm:$0xff]
          %v3804 = vld [vmem:[#allocation3 + $0x188] sm:$0xff]
          %v3805 = vld [vmem:[#allocation3 + $0x190] sm:$0xff]
          %v3806 = vld [vmem:[#allocation3 + $0x198] sm:$0xff]
          %v3807 = vld [vmem:[#allocation3 + $0x1a0] sm:$0xff]
          %v3808 = vld [vmem:[#allocation3 + $0x1a8] sm:$0xff]
          %v3809 = vld [vmem:[#allocation3 + $0x1b0] sm:$0xff]
          %v3810 = vld [vmem:[#allocation3 + $0x1b8] sm:$0xff]
          %v3811 = vld [vmem:[#allocation3 + $0x1c0] sm:$0xff]
          %v3812 = vld [vmem:[#allocation3 + $0x1c8] sm:$0xff]
          %v3813 = vld [vmem:[#allocation3 + $0x1d0] sm:$0xff]
          %v3814 = vld [vmem:[#allocation3 + $0x1d8] sm:$0xff]
          %v3815 = vld [vmem:[#allocation3 + $0x1e0] sm:$0xff]
          %v3816 = vld [vmem:[#allocation3 + $0x1e8] sm:$0xff]
          %v3817 = vld [vmem:[#allocation3 + $0x1f0] sm:$0xff]
          %v3818 = vld [vmem:[#allocation3 + $0x1f8] sm:$0xff]
          %v3819 = vld [vmem:[#allocation3 + $0x200] sm:$0xff]
          %v3820 = vld [vmem:[#allocation3 + $0x208] sm:$0xff]
          %v3821 = vld [vmem:[#allocation3 + $0x210] sm:$0xff]
          %v3822 = vld [vmem:[#allocation3 + $0x218] sm:$0xff]
          %v3823 = vld [vmem:[#allocation3 + $0x220] sm:$0xff]
          %v3824 = vld [vmem:[#allocation3 + $0x228] sm:$0xff]
          %v3825 = vld [vmem:[#allocation3 + $0x230] sm:$0xff]
          %v3826 = vld [vmem:[#allocation3 + $0x238] sm:$0xff]
          %v3827 = vld [vmem:[#allocation3 + $0x240] sm:$0xff]
          %v3828 = vld [vmem:[#allocation3 + $0x248] sm:$0xff]
          %v3829 = vld [vmem:[#allocation3 + $0x250] sm:$0xff]
          %v3830 = vld [vmem:[#allocation3 + $0x258] sm:$0xff]
          %v3831 = vld [vmem:[#allocation3 + $0x260] sm:$0xff]
          %v3832 = vld [vmem:[#allocation3 + $0x268] sm:$0xff]
          %v3833 = vld [vmem:[#allocation3 + $0x270] sm:$0xff]
          %v3834 = vld [vmem:[#allocation3 + $0x278] sm:$0xff]
          %v3835 = vld [vmem:[#allocation3 + $0x280] sm:$0xff]
          %v3836 = vld [vmem:[#allocation3 + $0x288] sm:$0xff]
          %v3837 = vld [vmem:[#allocation3 + $0x290] sm:$0xff]
          %v3838 = vld [vmem:[#allocation3 + $0x298] sm:$0xff]
          %v3839 = vld [vmem:[#allocation3 + $0x2a0] sm:$0xff]
          %v3840 = vld [vmem:[#allocation3 + $0x2a8] sm:$0xff]
          %v3841 = vld [vmem:[#allocation3 + $0x2b0] sm:$0xff]
          %v3842 = vld [vmem:[#allocation3 + $0x2b8] sm:$0xff]
          %v3843 = vld [vmem:[#allocation3 + $0x2c0] sm:$0xff]
          %v3844 = vld [vmem:[#allocation3 + $0x2c8] sm:$0xff]
          %v3845 = vld [vmem:[#allocation3 + $0x2d0] sm:$0xff]
          %v3846 = vld [vmem:[#allocation3 + $0x2d8] sm:$0xff]
          %v3847 = vld [vmem:[#allocation3 + $0x2e0] sm:$0xff]
          %v3848 = vld [vmem:[#allocation3 + $0x2e8] sm:$0xff]
          %v3849 = vld [vmem:[#allocation3 + $0x2f0] sm:$0xff]
          %v3850 = vld [vmem:[#allocation3 + $0x2f8] sm:$0xff]
          %v3851 = vld [vmem:[#allocation3 + $0x300] sm:$0xff]
          %v3852 = vld [vmem:[#allocation3 + $0x308] sm:$0xff]
          %v3853 = vld [vmem:[#allocation3 + $0x310] sm:$0xff]
          %v3854 = vld [vmem:[#allocation3 + $0x318] sm:$0xff]
          %v3855 = vld [vmem:[#allocation3 + $0x320] sm:$0xff]
          %v3856 = vld [vmem:[#allocation3 + $0x328] sm:$0xff]
          %v3857 = vld [vmem:[#allocation3 + $0x330] sm:$0xff]
          %v3858 = vld [vmem:[#allocation3 + $0x338] sm:$0xff]
          %v3859 = vld [vmem:[#allocation3 + $0x340] sm:$0xff]
          %v3860 = vld [vmem:[#allocation3 + $0x348] sm:$0xff]
          %v3861 = vld [vmem:[#allocation3 + $0x350] sm:$0xff]
          %v3862 = vld [vmem:[#allocation3 + $0x358] sm:$0xff]
          %v3863 = vld [vmem:[#allocation3 + $0x360] sm:$0xff]
          %v3864 = vld [vmem:[#allocation3 + $0x368] sm:$0xff]
          %v3865 = vld [vmem:[#allocation3 + $0x370] sm:$0xff]
          %v3866 = vld [vmem:[#allocation3 + $0x378] sm:$0xff]
          %v3867 = vld [vmem:[#allocation3 + $0x380] sm:$0xff]
          %v3868 = vld [vmem:[#allocation3 + $0x388] sm:$0xff]
          %v3869 = vld [vmem:[#allocation3 + $0x390] sm:$0xff]
          %v3870 = vld [vmem:[#allocation3 + $0x398] sm:$0xff]
          %v3871 = vld [vmem:[#allocation3 + $0x3a0] sm:$0xff]
          %v3872 = vld [vmem:[#allocation3 + $0x3a8] sm:$0xff]
          %v3873 = vld [vmem:[#allocation3 + $0x3b0] sm:$0xff]
          %v3874 = vld [vmem:[#allocation3 + $0x3b8] sm:$0xff]
          %v3875 = vld [vmem:[#allocation3 + $0x3c0] sm:$0xff]
          %v3876 = vld [vmem:[#allocation3 + $0x3c8] sm:$0xff]
          %v3877 = vld [vmem:[#allocation3 + $0x3d0] sm:$0xff]
          %v3878 = vld [vmem:[#allocation3 + $0x3d8] sm:$0xff]
          %v3879 = vld [vmem:[#allocation3 + $0x3e0] sm:$0xff]
          %v3880 = vld [vmem:[#allocation3 + $0x3e8] sm:$0xff]
          %v3881 = vld [vmem:[#allocation3 + $0x3f0] sm:$0xff]
          %v3882 = vld [vmem:[#allocation3 + $0x3f8] sm:$0xff]
          %v3883 = vld [vmem:[#allocation3 + $0x400] sm:$0xff]
          %v3884 = vld [vmem:[#allocation3 + $0x408] sm:$0xff]
          %v3885 = vld [vmem:[#allocation3 + $0x410] sm:$0xff]
          %v3886 = vld [vmem:[#allocation3 + $0x418] sm:$0xff]
          %v3887 = vld [vmem:[#allocation3 + $0x420] sm:$0xff]
          %v3888 = vld [vmem:[#allocation3 + $0x428] sm:$0xff]
          %v3889 = vld [vmem:[#allocation3 + $0x430] sm:$0xff]
          %v3890 = vld [vmem:[#allocation3 + $0x438] sm:$0xff]
          %v3891 = vld [vmem:[#allocation3 + $0x440] sm:$0xff]
          %v3892 = vld [vmem:[#allocation3 + $0x448] sm:$0xff]
          %v3893 = vld [vmem:[#allocation3 + $0x450] sm:$0xff]
          %v3894 = vld [vmem:[#allocation3 + $0x458] sm:$0xff]
          %v3895 = vld [vmem:[#allocation3 + $0x460] sm:$0xff]
          %v3896 = vld [vmem:[#allocation3 + $0x468] sm:$0xff]
          %v3897 = vld [vmem:[#allocation3 + $0x470] sm:$0xff]
          %v3898 = vld [vmem:[#allocation3 + $0x478] sm:$0xff]
          %v3899 = vld [vmem:[#allocation3 + $0x480] sm:$0xff]
          %v3900 = vld [vmem:[#allocation3 + $0x488] sm:$0xff]
          %v3901 = vld [vmem:[#allocation3 + $0x490] sm:$0xff]
          %v3902 = vld [vmem:[#allocation3 + $0x498] sm:$0xff]
          %v3903 = vld [vmem:[#allocation3 + $0x4a0] sm:$0xff]
          %v3904 = vld [vmem:[#allocation3 + $0x4a8] sm:$0xff]
          %v3905 = vld [vmem:[#allocation3 + $0x4b0] sm:$0xff]
          %v3906 = vld [vmem:[#allocation3 + $0x4b8] sm:$0xff]
          %v3907 = vld [vmem:[#allocation3 + $0x4c0] sm:$0xff]
          %v3908 = vld [vmem:[#allocation3 + $0x4c8] sm:$0xff]
          %v3909 = vld [vmem:[#allocation3 + $0x4d0] sm:$0xff]
          %v3910 = vld [vmem:[#allocation3 + $0x4d8] sm:$0xff]
          %v3911 = vld [vmem:[#allocation3 + $0x4e0] sm:$0xff]
          %v3912 = vld [vmem:[#allocation3 + $0x4e8] sm:$0xff]
          %v3913 = vld [vmem:[#allocation3 + $0x4f0] sm:$0xff]
          %v3914 = vld [vmem:[#allocation3 + $0x4f8] sm:$0xff]
          %v3915 = vld [vmem:[#allocation3 + $0x500] sm:$0xff]
          %v3916 = vld [vmem:[#allocation3 + $0x508] sm:$0xff]
          %v3917 = vld [vmem:[#allocation3 + $0x510] sm:$0xff]
          %v3918 = vld [vmem:[#allocation3 + $0x518] sm:$0xff]
          %v3919 = vld [vmem:[#allocation3 + $0x520] sm:$0xff]
          %v3920 = vld [vmem:[#allocation3 + $0x528] sm:$0xff]
          %v3921 = vld [vmem:[#allocation3 + $0x530] sm:$0xff]
          %v3922 = vld [vmem:[#allocation3 + $0x538] sm:$0xff]
          %v3923 = vld [vmem:[#allocation3 + $0x540] sm:$0xff]
          %v3924 = vld [vmem:[#allocation3 + $0x548] sm:$0xff]
          %v3925 = vld [vmem:[#allocation3 + $0x550] sm:$0xff]
          %v3926 = vld [vmem:[#allocation3 + $0x558] sm:$0xff]
          %v3927 = vld [vmem:[#allocation3 + $0x560] sm:$0xff]
          %v3928 = vld [vmem:[#allocation3 + $0x568] sm:$0xff]
          %v3929 = vld [vmem:[#allocation3 + $0x570] sm:$0xff]
          %v3930 = vld [vmem:[#allocation3 + $0x578] sm:$0xff]
          %v3931 = vld [vmem:[#allocation3 + $0x580] sm:$0xff]
          %v3932 = vld [vmem:[#allocation3 + $0x588] sm:$0xff]
          %v3933 = vld [vmem:[#allocation3 + $0x590] sm:$0xff]
          %v3934 = vld [vmem:[#allocation3 + $0x598] sm:$0xff]
          %v3935 = vld [vmem:[#allocation3 + $0x5a0] sm:$0xff]
          %v3936 = vld [vmem:[#allocation3 + $0x5a8] sm:$0xff]
          %v3937 = vld [vmem:[#allocation3 + $0x5b0] sm:$0xff]
          %v3938 = vld [vmem:[#allocation3 + $0x5b8] sm:$0xff]
          %v3939 = vld [vmem:[#allocation3 + $0x5c0] sm:$0xff]
          %v3940 = vld [vmem:[#allocation3 + $0x5c8] sm:$0xff]
          %v3941 = vld [vmem:[#allocation3 + $0x5d0] sm:$0xff]
          %v3942 = vld [vmem:[#allocation3 + $0x5d8] sm:$0xff]
          %v3943 = vld [vmem:[#allocation3 + $0x5e0] sm:$0xff]
          %v3944 = vld [vmem:[#allocation3 + $0x5e8] sm:$0xff]
          %v3945 = vld [vmem:[#allocation3 + $0x5f0] sm:$0xff]
          %v3946 = vld [vmem:[#allocation3 + $0x5f8] sm:$0xff]
          %v3947 = vld [vmem:[#allocation3 + $0x600] sm:$0xff]
          %v3948 = vld [vmem:[#allocation3 + $0x608] sm:$0xff]
          %v3949 = vld [vmem:[#allocation3 + $0x610] sm:$0xff]
          %v3950 = vld [vmem:[#allocation3 + $0x618] sm:$0xff]
          %v3951 = vld [vmem:[#allocation3 + $0x620] sm:$0xff]
          %v3952 = vld [vmem:[#allocation3 + $0x628] sm:$0xff]
          %v3953 = vld [vmem:[#allocation3 + $0x630] sm:$0xff]
          %v3954 = vld [vmem:[#allocation3 + $0x638] sm:$0xff]
          %v3955 = vld [vmem:[#allocation3 + $0x640] sm:$0xff]
          %v3956 = vld [vmem:[#allocation3 + $0x648] sm:$0xff]
          %v3957 = vld [vmem:[#allocation3 + $0x650] sm:$0xff]
          %v3958 = vld [vmem:[#allocation3 + $0x658] sm:$0xff]
          %v3959 = vld [vmem:[#allocation3 + $0x660] sm:$0xff]
          %v3960 = vld [vmem:[#allocation3 + $0x668] sm:$0xff]
          %v3961 = vld [vmem:[#allocation3 + $0x670] sm:$0xff]
          %v3962 = vld [vmem:[#allocation3 + $0x678] sm:$0xff]
          %v3963 = vld [vmem:[#allocation3 + $0x680] sm:$0xff]
          %v3964 = vld [vmem:[#allocation3 + $0x688] sm:$0xff]
          %v3965 = vld [vmem:[#allocation3 + $0x690] sm:$0xff]
          %v3966 = vld [vmem:[#allocation3 + $0x698] sm:$0xff]
          %v3967 = vld [vmem:[#allocation3 + $0x6a0] sm:$0xff]
          %v3968 = vld [vmem:[#allocation3 + $0x6a8] sm:$0xff]
          %v3969 = vld [vmem:[#allocation3 + $0x6b0] sm:$0xff]
          %v3970 = vld [vmem:[#allocation3 + $0x6b8] sm:$0xff]
          %v3971 = vld [vmem:[#allocation3 + $0x6c0] sm:$0xff]
          %v3972 = vld [vmem:[#allocation3 + $0x6c8] sm:$0xff]
          %v3973 = vld [vmem:[#allocation3 + $0x6d0] sm:$0xff]
          %v3974 = vld [vmem:[#allocation3 + $0x6d8] sm:$0xff]
          %v3975 = vld [vmem:[#allocation3 + $0x6e0] sm:$0xff]
          %v3976 = vld [vmem:[#allocation3 + $0x6e8] sm:$0xff]
          %v3977 = vld [vmem:[#allocation3 + $0x6f0] sm:$0xff]
          %v3978 = vld [vmem:[#allocation3 + $0x6f8] sm:$0xff]
          %v3979 = vld [vmem:[#allocation3 + $0x700] sm:$0xff]
          %v3980 = vld [vmem:[#allocation3 + $0x708] sm:$0xff]
          %v3981 = vld [vmem:[#allocation3 + $0x710] sm:$0xff]
          %v3982 = vld [vmem:[#allocation3 + $0x718] sm:$0xff]
          %v3983 = vld [vmem:[#allocation3 + $0x720] sm:$0xff]
          %v3984 = vld [vmem:[#allocation3 + $0x728] sm:$0xff]
          %v3985 = vld [vmem:[#allocation3 + $0x730] sm:$0xff]
          %v3986 = vld [vmem:[#allocation3 + $0x738] sm:$0xff]
          %v3987 = vld [vmem:[#allocation3 + $0x740] sm:$0xff]
          %v3988 = vld [vmem:[#allocation3 + $0x748] sm:$0xff]
          %v3989 = vld [vmem:[#allocation3 + $0x750] sm:$0xff]
          %v3990 = vld [vmem:[#allocation3 + $0x758] sm:$0xff]
          %v3991 = vld [vmem:[#allocation3 + $0x760] sm:$0xff]
          %v3992 = vld [vmem:[#allocation3 + $0x768] sm:$0xff]
          %v3993 = vld [vmem:[#allocation3 + $0x770] sm:$0xff]
          %v3994 = vld [vmem:[#allocation3 + $0x778] sm:$0xff]
          %v3995 = vld [vmem:[#allocation3 + $0x780] sm:$0xff]
          %v3996 = vld [vmem:[#allocation3 + $0x788] sm:$0xff]
          %v3997 = vld [vmem:[#allocation3 + $0x790] sm:$0xff]
          %v3998 = vld [vmem:[#allocation3 + $0x798] sm:$0xff]
          %v3999 = vld [vmem:[#allocation3 + $0x7a0] sm:$0xff]
          %v4000 = vld [vmem:[#allocation3 + $0x7a8] sm:$0xff]
          %v4001 = vld [vmem:[#allocation3 + $0x7b0] sm:$0xff]
          %v4002 = vld [vmem:[#allocation3 + $0x7b8] sm:$0xff]
          %v4003 = vld [vmem:[#allocation3 + $0x7c0] sm:$0xff]
          %v4004 = vld [vmem:[#allocation3 + $0x7c8] sm:$0xff]
          %v4005 = vld [vmem:[#allocation3 + $0x7d0] sm:$0xff]
          %v4006 = vld [vmem:[#allocation3 + $0x7d8] sm:$0xff]
          %v4007 = vld [vmem:[#allocation3 + $0x7e0] sm:$0xff]
          %v4008 = vld [vmem:[#allocation3 + $0x7e8] sm:$0xff]
          %v4009 = vld [vmem:[#allocation3 + $0x7f0] sm:$0xff]
          %v4010 = vld [vmem:[#allocation3 + $0x7f8] sm:$0xff]
          %v4011 = vtanh.pop %v3755
          %v4012 = vtanh.pop %v3756
          %v4013 = vtanh.pop %v3757
          %v4014 = vtanh.pop %v3758
          %v4015 = vtanh.pop %v3759
          %v4016 = vtanh.pop %v3760
          %v4017 = vtanh.pop %v3761
          %v4018 = vtanh.pop %v3762
          %v4019 = vtanh.pop %v3763
          %v4020 = vtanh.pop %v3764
          %v4021 = vtanh.pop %v3765
          %v4022 = vtanh.pop %v3766
          %v4023 = vtanh.pop %v3767
          %v4024 = vtanh.pop %v3768
          %v4025 = vtanh.pop %v3769
          %v4026 = vtanh.pop %v3770
          %v4027 = vtanh.pop %v3771
          %v4028 = vtanh.pop %v3772
          %v4029 = vtanh.pop %v3773
          %v4030 = vtanh.pop %v3774
          %v4031 = vtanh.pop %v3775
          %v4032 = vtanh.pop %v3776
          %v4033 = vtanh.pop %v3777
          %v4034 = vtanh.pop %v3778
          %v4035 = vtanh.pop %v3779
          %v4036 = vtanh.pop %v3780
          %v4037 = vtanh.pop %v3781
          %v4038 = vtanh.pop %v3782
          %v4039 = vtanh.pop %v3783
          %v4040 = vtanh.pop %v3784
          %v4041 = vtanh.pop %v3785
          %v4042 = vtanh.pop %v3786
          %v4043 = vtanh.pop %v3787
          %v4044 = vtanh.pop %v3788
          %v4045 = vtanh.pop %v3789
          %v4046 = vtanh.pop %v3790
          %v4047 = vtanh.pop %v3791
          %v4048 = vtanh.pop %v3792
          %v4049 = vtanh.pop %v3793
          %v4050 = vtanh.pop %v3794
          %v4051 = vtanh.pop %v3795
          %v4052 = vtanh.pop %v3796
          %v4053 = vtanh.pop %v3797
          %v4054 = vtanh.pop %v3798
          %v4055 = vtanh.pop %v3799
          %v4056 = vtanh.pop %v3800
          %v4057 = vtanh.pop %v3801
          %v4058 = vtanh.pop %v3802
          %v4059 = vtanh.pop %v3803
          %v4060 = vtanh.pop %v3804
          %v4061 = vtanh.pop %v3805
          %v4062 = vtanh.pop %v3806
          %v4063 = vtanh.pop %v3807
          %v4064 = vtanh.pop %v3808
          %v4065 = vtanh.pop %v3809
          %v4066 = vtanh.pop %v3810
          %v4067 = vtanh.pop %v3811
          %v4068 = vtanh.pop %v3812
          %v4069 = vtanh.pop %v3813
          %v4070 = vtanh.pop %v3814
          %v4071 = vtanh.pop %v3815
          %v4072 = vtanh.pop %v3816
          %v4073 = vtanh.pop %v3817
          %v4074 = vtanh.pop %v3818
          %v4075 = vtanh.pop %v3819
          %v4076 = vtanh.pop %v3820
          %v4077 = vtanh.pop %v3821
          %v4078 = vtanh.pop %v3822
          %v4079 = vtanh.pop %v3823
          %v4080 = vtanh.pop %v3824
          %v4081 = vtanh.pop %v3825
          %v4082 = vtanh.pop %v3826
          %v4083 = vtanh.pop %v3827
          %v4084 = vtanh.pop %v3828
          %v4085 = vtanh.pop %v3829
          %v4086 = vtanh.pop %v3830
          %v4087 = vtanh.pop %v3831
          %v4088 = vtanh.pop %v3832
          %v4089 = vtanh.pop %v3833
          %v4090 = vtanh.pop %v3834
          %v4091 = vtanh.pop %v3835
          %v4092 = vtanh.pop %v3836
          %v4093 = vtanh.pop %v3837
          %v4094 = vtanh.pop %v3838
          %v4095 = vtanh.pop %v3839
          %v4096 = vtanh.pop %v3840
          %v4097 = vtanh.pop %v3841
          %v4098 = vtanh.pop %v3842
          %v4099 = vtanh.pop %v3843
          %v4100 = vtanh.pop %v3844
          %v4101 = vtanh.pop %v3845
          %v4102 = vtanh.pop %v3846
          %v4103 = vtanh.pop %v3847
          %v4104 = vtanh.pop %v3848
          %v4105 = vtanh.pop %v3849
          %v4106 = vtanh.pop %v3850
          %v4107 = vtanh.pop %v3851
          %v4108 = vtanh.pop %v3852
          %v4109 = vtanh.pop %v3853
          %v4110 = vtanh.pop %v3854
          %v4111 = vtanh.pop %v3855
          %v4112 = vtanh.pop %v3856
          %v4113 = vtanh.pop %v3857
          %v4114 = vtanh.pop %v3858
          %v4115 = vtanh.pop %v3859
          %v4116 = vtanh.pop %v3860
          %v4117 = vtanh.pop %v3861
          %v4118 = vtanh.pop %v3862
          %v4119 = vtanh.pop %v3863
          %v4120 = vtanh.pop %v3864
          %v4121 = vtanh.pop %v3865
          %v4122 = vtanh.pop %v3866
          %v4123 = vtanh.pop %v3867
          %v4124 = vtanh.pop %v3868
          %v4125 = vtanh.pop %v3869
          %v4126 = vtanh.pop %v3870
          %v4127 = vtanh.pop %v3871
          %v4128 = vtanh.pop %v3872
          %v4129 = vtanh.pop %v3873
          %v4130 = vtanh.pop %v3874
          %v4131 = vtanh.pop %v3875
          %v4132 = vtanh.pop %v3876
          %v4133 = vtanh.pop %v3877
          %v4134 = vtanh.pop %v3878
          %v4135 = vtanh.pop %v3879
          %v4136 = vtanh.pop %v3880
          %v4137 = vtanh.pop %v3881
          %v4138 = vtanh.pop %v3882
          %v4139 = vtanh.pop %v3883
          %v4140 = vtanh.pop %v3884
          %v4141 = vtanh.pop %v3885
          %v4142 = vtanh.pop %v3886
          %v4143 = vtanh.pop %v3887
          %v4144 = vtanh.pop %v3888
          %v4145 = vtanh.pop %v3889
          %v4146 = vtanh.pop %v3890
          %v4147 = vtanh.pop %v3891
          %v4148 = vtanh.pop %v3892
          %v4149 = vtanh.pop %v3893
          %v4150 = vtanh.pop %v3894
          %v4151 = vtanh.pop %v3895
          %v4152 = vtanh.pop %v3896
          %v4153 = vtanh.pop %v3897
          %v4154 = vtanh.pop %v3898
          %v4155 = vtanh.pop %v3899
          %v4156 = vtanh.pop %v3900
          %v4157 = vtanh.pop %v3901
          %v4158 = vtanh.pop %v3902
          %v4159 = vtanh.pop %v3903
          %v4160 = vtanh.pop %v3904
          %v4161 = vtanh.pop %v3905
          %v4162 = vtanh.pop %v3906
          %v4163 = vtanh.pop %v3907
          %v4164 = vtanh.pop %v3908
          %v4165 = vtanh.pop %v3909
          %v4166 = vtanh.pop %v3910
          %v4167 = vtanh.pop %v3911
          %v4168 = vtanh.pop %v3912
          %v4169 = vtanh.pop %v3913
          %v4170 = vtanh.pop %v3914
          %v4171 = vtanh.pop %v3915
          %v4172 = vtanh.pop %v3916
          %v4173 = vtanh.pop %v3917
          %v4174 = vtanh.pop %v3918
          %v4175 = vtanh.pop %v3919
          %v4176 = vtanh.pop %v3920
          %v4177 = vtanh.pop %v3921
          %v4178 = vtanh.pop %v3922
          %v4179 = vtanh.pop %v3923
          %v4180 = vtanh.pop %v3924
          %v4181 = vtanh.pop %v3925
          %v4182 = vtanh.pop %v3926
          %v4183 = vtanh.pop %v3927
          %v4184 = vtanh.pop %v3928
          %v4185 = vtanh.pop %v3929
          %v4186 = vtanh.pop %v3930
          %v4187 = vtanh.pop %v3931
          %v4188 = vtanh.pop %v3932
          %v4189 = vtanh.pop %v3933
          %v4190 = vtanh.pop %v3934
          %v4191 = vtanh.pop %v3935
          %v4192 = vtanh.pop %v3936
          %v4193 = vtanh.pop %v3937
          %v4194 = vtanh.pop %v3938
          %v4195 = vtanh.pop %v3939
          %v4196 = vtanh.pop %v3940
          %v4197 = vtanh.pop %v3941
          %v4198 = vtanh.pop %v3942
          %v4199 = vtanh.pop %v3943
          %v4200 = vtanh.pop %v3944
          %v4201 = vtanh.pop %v3945
          %v4202 = vtanh.pop %v3946
          %v4203 = vtanh.pop %v3947
          %v4204 = vtanh.pop %v3948
          %v4205 = vtanh.pop %v3949
          %v4206 = vtanh.pop %v3950
          %v4207 = vtanh.pop %v3951
          %v4208 = vtanh.pop %v3952
          %v4209 = vtanh.pop %v3953
          %v4210 = vtanh.pop %v3954
          %v4211 = vtanh.pop %v3955
          %v4212 = vtanh.pop %v3956
          %v4213 = vtanh.pop %v3957
          %v4214 = vtanh.pop %v3958
          %v4215 = vtanh.pop %v3959
          %v4216 = vtanh.pop %v3960
          %v4217 = vtanh.pop %v3961
          %v4218 = vtanh.pop %v3962
          %v4219 = vtanh.pop %v3963
          %v4220 = vtanh.pop %v3964
          %v4221 = vtanh.pop %v3965
          %v4222 = vtanh.pop %v3966
          %v4223 = vtanh.pop %v3967
          %v4224 = vtanh.pop %v3968
          %v4225 = vtanh.pop %v3969
          %v4226 = vtanh.pop %v3970
          %v4227 = vtanh.pop %v3971
          %v4228 = vtanh.pop %v3972
          %v4229 = vtanh.pop %v3973
          %v4230 = vtanh.pop %v3974
          %v4231 = vtanh.pop %v3975
          %v4232 = vtanh.pop %v3976
          %v4233 = vtanh.pop %v3977
          %v4234 = vtanh.pop %v3978
          %v4235 = vtanh.pop %v3979
          %v4236 = vtanh.pop %v3980
          %v4237 = vtanh.pop %v3981
          %v4238 = vtanh.pop %v3982
          %v4239 = vtanh.pop %v3983
          %v4240 = vtanh.pop %v3984
          %v4241 = vtanh.pop %v3985
          %v4242 = vtanh.pop %v3986
          %v4243 = vtanh.pop %v3987
          %v4244 = vtanh.pop %v3988
          %v4245 = vtanh.pop %v3989
          %v4246 = vtanh.pop %v3990
          %v4247 = vtanh.pop %v3991
          %v4248 = vtanh.pop %v3992
          %v4249 = vtanh.pop %v3993
          %v4250 = vtanh.pop %v3994
          %v4251 = vtanh.pop %v3995
          %v4252 = vtanh.pop %v3996
          %v4253 = vtanh.pop %v3997
          %v4254 = vtanh.pop %v3998
          %v4255 = vtanh.pop %v3999
          %v4256 = vtanh.pop %v4000
          %v4257 = vtanh.pop %v4001
          %v4258 = vtanh.pop %v4002
          %v4259 = vtanh.pop %v4003
          %v4260 = vtanh.pop %v4004
          %v4261 = vtanh.pop %v4005
          %v4262 = vtanh.pop %v4006
          %v4263 = vtanh.pop %v4007
          %v4264 = vtanh.pop %v4008
          %v4265 = vtanh.pop %v4009
          %v4266 = vtanh.pop %v4010
          %v4267 = vpack.c.bf16 %v4012, %v4011
          %v4268 = vpack.c.bf16 %v4014, %v4013
          %v4269 = vpack.c.bf16 %v4016, %v4015
          %v4270 = vpack.c.bf16 %v4018, %v4017
          %v4271 = vpack.c.bf16 %v4020, %v4019
          %v4272 = vpack.c.bf16 %v4022, %v4021
          %v4273 = vpack.c.bf16 %v4024, %v4023
          %v4274 = vpack.c.bf16 %v4026, %v4025
          %v4275 = vpack.c.bf16 %v4028, %v4027
          %v4276 = vpack.c.bf16 %v4030, %v4029
          %v4277 = vpack.c.bf16 %v4032, %v4031
          %v4278 = vpack.c.bf16 %v4034, %v4033
          %v4279 = vpack.c.bf16 %v4036, %v4035
          %v4280 = vpack.c.bf16 %v4038, %v4037
          %v4281 = vpack.c.bf16 %v4040, %v4039
          %v4282 = vpack.c.bf16 %v4042, %v4041
          %v4283 = vpack.c.bf16 %v4044, %v4043
          %v4284 = vpack.c.bf16 %v4046, %v4045
          %v4285 = vpack.c.bf16 %v4048, %v4047
          %v4286 = vpack.c.bf16 %v4050, %v4049
          %v4287 = vpack.c.bf16 %v4052, %v4051
          %v4288 = vpack.c.bf16 %v4054, %v4053
          %v4289 = vpack.c.bf16 %v4056, %v4055
          %v4290 = vpack.c.bf16 %v4058, %v4057
          %v4291 = vpack.c.bf16 %v4060, %v4059
          %v4292 = vpack.c.bf16 %v4062, %v4061
          %v4293 = vpack.c.bf16 %v4064, %v4063
          %v4294 = vpack.c.bf16 %v4066, %v4065
          %v4295 = vpack.c.bf16 %v4068, %v4067
          %v4296 = vpack.c.bf16 %v4070, %v4069
          %v4297 = vpack.c.bf16 %v4072, %v4071
          %v4298 = vpack.c.bf16 %v4074, %v4073
          %v4299 = vpack.c.bf16 %v4076, %v4075
          %v4300 = vpack.c.bf16 %v4078, %v4077
          %v4301 = vpack.c.bf16 %v4080, %v4079
          %v4302 = vpack.c.bf16 %v4082, %v4081
          %v4303 = vpack.c.bf16 %v4084, %v4083
          %v4304 = vpack.c.bf16 %v4086, %v4085
          %v4305 = vpack.c.bf16 %v4088, %v4087
          %v4306 = vpack.c.bf16 %v4090, %v4089
          %v4307 = vpack.c.bf16 %v4092, %v4091
          %v4308 = vpack.c.bf16 %v4094, %v4093
          %v4309 = vpack.c.bf16 %v4096, %v4095
          %v4310 = vpack.c.bf16 %v4098, %v4097
          %v4311 = vpack.c.bf16 %v4100, %v4099
          %v4312 = vpack.c.bf16 %v4102, %v4101
          %v4313 = vpack.c.bf16 %v4104, %v4103
          %v4314 = vpack.c.bf16 %v4106, %v4105
          %v4315 = vpack.c.bf16 %v4108, %v4107
          %v4316 = vpack.c.bf16 %v4110, %v4109
          %v4317 = vpack.c.bf16 %v4112, %v4111
          %v4318 = vpack.c.bf16 %v4114, %v4113
          %v4319 = vpack.c.bf16 %v4116, %v4115
          %v4320 = vpack.c.bf16 %v4118, %v4117
          %v4321 = vpack.c.bf16 %v4120, %v4119
          %v4322 = vpack.c.bf16 %v4122, %v4121
          %v4323 = vpack.c.bf16 %v4124, %v4123
          %v4324 = vpack.c.bf16 %v4126, %v4125
          %v4325 = vpack.c.bf16 %v4128, %v4127
          %v4326 = vpack.c.bf16 %v4130, %v4129
          %v4327 = vpack.c.bf16 %v4132, %v4131
          %v4328 = vpack.c.bf16 %v4134, %v4133
          %v4329 = vpack.c.bf16 %v4136, %v4135
          %v4330 = vpack.c.bf16 %v4138, %v4137
          %v4331 = vpack.c.bf16 %v4140, %v4139
          %v4332 = vpack.c.bf16 %v4142, %v4141
          %v4333 = vpack.c.bf16 %v4144, %v4143
          %v4334 = vpack.c.bf16 %v4146, %v4145
          %v4335 = vpack.c.bf16 %v4148, %v4147
          %v4336 = vpack.c.bf16 %v4150, %v4149
          %v4337 = vpack.c.bf16 %v4152, %v4151
          %v4338 = vpack.c.bf16 %v4154, %v4153
          %v4339 = vpack.c.bf16 %v4156, %v4155
          %v4340 = vpack.c.bf16 %v4158, %v4157
          %v4341 = vpack.c.bf16 %v4160, %v4159
          %v4342 = vpack.c.bf16 %v4162, %v4161
          %v4343 = vpack.c.bf16 %v4164, %v4163
          %v4344 = vpack.c.bf16 %v4166, %v4165
          %v4345 = vpack.c.bf16 %v4168, %v4167
          %v4346 = vpack.c.bf16 %v4170, %v4169
          %v4347 = vpack.c.bf16 %v4172, %v4171
          %v4348 = vpack.c.bf16 %v4174, %v4173
          %v4349 = vpack.c.bf16 %v4176, %v4175
          %v4350 = vpack.c.bf16 %v4178, %v4177
          %v4351 = vpack.c.bf16 %v4180, %v4179
          %v4352 = vpack.c.bf16 %v4182, %v4181
          %v4353 = vpack.c.bf16 %v4184, %v4183
          %v4354 = vpack.c.bf16 %v4186, %v4185
          %v4355 = vpack.c.bf16 %v4188, %v4187
          %v4356 = vpack.c.bf16 %v4190, %v4189
          %v4357 = vpack.c.bf16 %v4192, %v4191
          %v4358 = vpack.c.bf16 %v4194, %v4193
          %v4359 = vpack.c.bf16 %v4196, %v4195
          %v4360 = vpack.c.bf16 %v4198, %v4197
          %v4361 = vpack.c.bf16 %v4200, %v4199
          %v4362 = vpack.c.bf16 %v4202, %v4201
          %v4363 = vpack.c.bf16 %v4204, %v4203
          %v4364 = vpack.c.bf16 %v4206, %v4205
          %v4365 = vpack.c.bf16 %v4208, %v4207
          %v4366 = vpack.c.bf16 %v4210, %v4209
          %v4367 = vpack.c.bf16 %v4212, %v4211
          %v4368 = vpack.c.bf16 %v4214, %v4213
          %v4369 = vpack.c.bf16 %v4216, %v4215
          %v4370 = vpack.c.bf16 %v4218, %v4217
          %v4371 = vpack.c.bf16 %v4220, %v4219
          %v4372 = vpack.c.bf16 %v4222, %v4221
          %v4373 = vpack.c.bf16 %v4224, %v4223
          %v4374 = vpack.c.bf16 %v4226, %v4225
          %v4375 = vpack.c.bf16 %v4228, %v4227
          %v4376 = vpack.c.bf16 %v4230, %v4229
          %v4377 = vpack.c.bf16 %v4232, %v4231
          %v4378 = vpack.c.bf16 %v4234, %v4233
          %v4379 = vpack.c.bf16 %v4236, %v4235
          %v4380 = vpack.c.bf16 %v4238, %v4237
          %v4381 = vpack.c.bf16 %v4240, %v4239
          %v4382 = vpack.c.bf16 %v4242, %v4241
          %v4383 = vpack.c.bf16 %v4244, %v4243
          %v4384 = vpack.c.bf16 %v4246, %v4245
          %v4385 = vpack.c.bf16 %v4248, %v4247
          %v4386 = vpack.c.bf16 %v4250, %v4249
          %v4387 = vpack.c.bf16 %v4252, %v4251
          %v4388 = vpack.c.bf16 %v4254, %v4253
          %v4389 = vpack.c.bf16 %v4256, %v4255
          %v4390 = vpack.c.bf16 %v4258, %v4257
          %v4391 = vpack.c.bf16 %v4260, %v4259
          %v4392 = vpack.c.bf16 %v4262, %v4261
          %v4393 = vpack.c.bf16 %v4264, %v4263
          %v4394 = vpack.c.bf16 %v4266, %v4265
          %4395 = vmatprep.subr.bf16.mxu0 0
          %4396 = vmatpush1.bf16.msra.mxu0 %v1400
          %4397 = vmatprep.subr.bf16.mxu0 0
          %4398 = vmatpush1.bf16.msra.mxu0 %v1399
          %4399 = vmatprep.subr.bf16.mxu0 0
          %4400 = vmatpush1.bf16.msra.mxu0 %v1398
          %4401 = vmatprep.subr.bf16.mxu0 0
          %4402 = vmatpush1.bf16.msra.mxu0 %v1397
          %4403 = vmatprep.subr.bf16.mxu0 0
          %4404 = vmatpush1.bf16.msra.mxu0 %v1396
          %4405 = vmatprep.subr.bf16.mxu0 0
          %4406 = vmatpush1.bf16.msra.mxu0 %v1395
          %4407 = vmatprep.subr.bf16.mxu0 0
          %4408 = vmatpush1.bf16.msra.mxu0 %v1394
          %4409 = vmatprep.subr.bf16.mxu0 0
          %4410 = vmatpush1.bf16.msra.mxu0 %v1393
          %4411 = vmatprep.subr.bf16.mxu0 0
          %4412 = vmatpush2.bf16.msra.mxu0 0
          %4413 = vmatprep.subr.bf16.mxu0 0
          %4414 = vmatpush2.bf16.msra.mxu0 0
          %4415 = vmatprep.subr.bf16.mxu0 0
          %4416 = vmatpush2.bf16.msra.mxu0 0
          %4417 = vmatprep.subr.bf16.mxu0 0
          %4418 = vmatpush2.bf16.msra.mxu0 0
          %4419 = vmatprep.subr.bf16.mxu0 0
          %4420 = vmatpush2.bf16.msra.mxu0 0
          %4421 = vmatprep.subr.bf16.mxu0 0
          %4422 = vmatpush2.bf16.msra.mxu0 0
          %4423 = vmatprep.subr.bf16.mxu0 0
          %4424 = vmatpush2.bf16.msra.mxu0 0
          %4425 = vmatprep.subr.bf16.mxu0 0
          %4426 = vmatpush2.bf16.msra.mxu0 0
          %4427 = vmatprep.mubr.bf16.mxu0 0
          %4428 = vmatmul.mubr.bf16.gmra.mxu0 %v4267
          %v4429 = vpop.f32.mrf.mxu0
          %v4430 = vadd.f32 0.0, %v4429
          %v4431 = vpop.f32.mrf.mxu0
          %v4432 = vpop.f32.mrf.mxu0
          %v4433 = vadd.f32 0.0, %v4432
          %v4434 = vpop.f32.mrf.mxu0
          %4435 = vmatprep.mubr.bf16.mxu0 0
          %4436 = vmatmul.mubr.bf16.gmra.mxu0 %v4268
          %v4437 = vpop.f32.mrf.mxu0
          %v4438 = vadd.f32 0.0, %v4437
          %v4439 = vpop.f32.mrf.mxu0
          %v4440 = vpop.f32.mrf.mxu0
          %v4441 = vadd.f32 0.0, %v4440
          %v4442 = vpop.f32.mrf.mxu0
          %4443 = vmatprep.mubr.bf16.mxu0 0
          %4444 = vmatmul.mubr.bf16.gmra.mxu0 %v4269
          %v4445 = vpop.f32.mrf.mxu0
          %v4446 = vadd.f32 0.0, %v4445
          %v4447 = vpop.f32.mrf.mxu0
          %v4448 = vpop.f32.mrf.mxu0
          %v4449 = vadd.f32 0.0, %v4448
          %v4450 = vpop.f32.mrf.mxu0
          %4451 = vmatprep.mubr.bf16.mxu0 0
          %4452 = vmatmul.mubr.bf16.gmra.mxu0 %v4270
          %v4453 = vpop.f32.mrf.mxu0
          %v4454 = vadd.f32 0.0, %v4453
          %v4455 = vpop.f32.mrf.mxu0
          %v4456 = vpop.f32.mrf.mxu0
          %v4457 = vadd.f32 0.0, %v4456
          %v4458 = vpop.f32.mrf.mxu0
          %4459 = vmatprep.mubr.bf16.mxu0 0
          %4460 = vmatmul.mubr.bf16.gmra.mxu0 %v4271
          %v4461 = vpop.f32.mrf.mxu0
          %v4462 = vadd.f32 0.0, %v4461
          %v4463 = vpop.f32.mrf.mxu0
          %v4464 = vpop.f32.mrf.mxu0
          %v4465 = vadd.f32 0.0, %v4464
          %v4466 = vpop.f32.mrf.mxu0
          %4467 = vmatprep.mubr.bf16.mxu0 0
          %4468 = vmatmul.mubr.bf16.gmra.mxu0 %v4272
          %v4469 = vpop.f32.mrf.mxu0
          %v4470 = vadd.f32 0.0, %v4469
          %v4471 = vpop.f32.mrf.mxu0
          %v4472 = vpop.f32.mrf.mxu0
          %v4473 = vadd.f32 0.0, %v4472
          %v4474 = vpop.f32.mrf.mxu0
          %4475 = vmatprep.mubr.bf16.mxu0 0
          %4476 = vmatmul.mubr.bf16.gmra.mxu0 %v4273
          %v4477 = vpop.f32.mrf.mxu0
          %v4478 = vadd.f32 0.0, %v4477
          %v4479 = vpop.f32.mrf.mxu0
          %v4480 = vpop.f32.mrf.mxu0
          %v4481 = vadd.f32 0.0, %v4480
          %v4482 = vpop.f32.mrf.mxu0
          %4483 = vmatprep.mubr.bf16.mxu0 0
          %4484 = vmatmul.mubr.bf16.gmra.mxu0 %v4274
          %v4485 = vpop.f32.mrf.mxu0
          %v4486 = vadd.f32 0.0, %v4485
          %v4487 = vpop.f32.mrf.mxu0
          %v4488 = vpop.f32.mrf.mxu0
          %v4489 = vadd.f32 0.0, %v4488
          %v4490 = vpop.f32.mrf.mxu0
          %4491 = vmatprep.mubr.bf16.mxu0 0
          %4492 = vmatmul.mubr.bf16.gmra.mxu0 %v4275
          %v4493 = vpop.f32.mrf.mxu0
          %v4494 = vadd.f32 0.0, %v4493
          %v4495 = vpop.f32.mrf.mxu0
          %v4496 = vpop.f32.mrf.mxu0
          %v4497 = vadd.f32 0.0, %v4496
          %v4498 = vpop.f32.mrf.mxu0
          %4499 = vmatprep.mubr.bf16.mxu0 0
          %4500 = vmatmul.mubr.bf16.gmra.mxu0 %v4276
          %v4501 = vpop.f32.mrf.mxu0
          %v4502 = vadd.f32 0.0, %v4501
          %v4503 = vpop.f32.mrf.mxu0
          %v4504 = vpop.f32.mrf.mxu0
          %v4505 = vadd.f32 0.0, %v4504
          %v4506 = vpop.f32.mrf.mxu0
          %4507 = vmatprep.mubr.bf16.mxu0 0
          %4508 = vmatmul.mubr.bf16.gmra.mxu0 %v4277
          %v4509 = vpop.f32.mrf.mxu0
          %v4510 = vadd.f32 0.0, %v4509
          %v4511 = vpop.f32.mrf.mxu0
          %v4512 = vpop.f32.mrf.mxu0
          %v4513 = vadd.f32 0.0, %v4512
          %v4514 = vpop.f32.mrf.mxu0
          %4515 = vmatprep.mubr.bf16.mxu0 0
          %4516 = vmatmul.mubr.bf16.gmra.mxu0 %v4278
          %v4517 = vpop.f32.mrf.mxu0
          %v4518 = vadd.f32 0.0, %v4517
          %v4519 = vpop.f32.mrf.mxu0
          %v4520 = vpop.f32.mrf.mxu0
          %v4521 = vadd.f32 0.0, %v4520
          %v4522 = vpop.f32.mrf.mxu0
          %4523 = vmatprep.mubr.bf16.mxu0 0
          %4524 = vmatmul.mubr.bf16.gmra.mxu0 %v4279
          %v4525 = vpop.f32.mrf.mxu0
          %v4526 = vadd.f32 0.0, %v4525
          %v4527 = vpop.f32.mrf.mxu0
          %v4528 = vpop.f32.mrf.mxu0
          %v4529 = vadd.f32 0.0, %v4528
          %v4530 = vpop.f32.mrf.mxu0
          %4531 = vmatprep.mubr.bf16.mxu0 0
          %4532 = vmatmul.mubr.bf16.gmra.mxu0 %v4280
          %v4533 = vpop.f32.mrf.mxu0
          %v4534 = vadd.f32 0.0, %v4533
          %v4535 = vpop.f32.mrf.mxu0
          %v4536 = vpop.f32.mrf.mxu0
          %v4537 = vadd.f32 0.0, %v4536
          %v4538 = vpop.f32.mrf.mxu0
          %4539 = vmatprep.mubr.bf16.mxu0 0
          %4540 = vmatmul.mubr.bf16.gmra.mxu0 %v4281
          %v4541 = vpop.f32.mrf.mxu0
          %v4542 = vadd.f32 0.0, %v4541
          %v4543 = vpop.f32.mrf.mxu0
          %v4544 = vpop.f32.mrf.mxu0
          %v4545 = vadd.f32 0.0, %v4544
          %v4546 = vpop.f32.mrf.mxu0
          %4547 = vmatprep.mubr.bf16.mxu0 0
          %4548 = vmatmul.mubr.bf16.gmra.mxu0 %v4282
          %v4549 = vpop.f32.mrf.mxu0
          %v4550 = vadd.f32 0.0, %v4549
          %v4551 = vpop.f32.mrf.mxu0
          %v4552 = vpop.f32.mrf.mxu0
          %v4553 = vadd.f32 0.0, %v4552
          %v4554 = vpop.f32.mrf.mxu0
          %4555 = vmatprep.mubr.bf16.mxu0 0
          %4556 = vmatmul.mubr.bf16.gmra.mxu0 %v4283
          %v4557 = vpop.f32.mrf.mxu0
          %v4558 = vadd.f32 0.0, %v4557
          %v4559 = vpop.f32.mrf.mxu0
          %v4560 = vpop.f32.mrf.mxu0
          %v4561 = vadd.f32 0.0, %v4560
          %v4562 = vpop.f32.mrf.mxu0
          %4563 = vmatprep.mubr.bf16.mxu0 0
          %4564 = vmatmul.mubr.bf16.gmra.mxu0 %v4284
          %v4565 = vpop.f32.mrf.mxu0
          %v4566 = vadd.f32 0.0, %v4565
          %v4567 = vpop.f32.mrf.mxu0
          %v4568 = vpop.f32.mrf.mxu0
          %v4569 = vadd.f32 0.0, %v4568
          %v4570 = vpop.f32.mrf.mxu0
          %4571 = vmatprep.mubr.bf16.mxu0 0
          %4572 = vmatmul.mubr.bf16.gmra.mxu0 %v4285
          %v4573 = vpop.f32.mrf.mxu0
          %v4574 = vadd.f32 0.0, %v4573
          %v4575 = vpop.f32.mrf.mxu0
          %v4576 = vpop.f32.mrf.mxu0
          %v4577 = vadd.f32 0.0, %v4576
          %v4578 = vpop.f32.mrf.mxu0
          %4579 = vmatprep.mubr.bf16.mxu0 0
          %4580 = vmatmul.mubr.bf16.gmra.mxu0 %v4286
          %v4581 = vpop.f32.mrf.mxu0
          %v4582 = vadd.f32 0.0, %v4581
          %v4583 = vpop.f32.mrf.mxu0
          %v4584 = vpop.f32.mrf.mxu0
          %v4585 = vadd.f32 0.0, %v4584
          %v4586 = vpop.f32.mrf.mxu0
          %4587 = vmatprep.mubr.bf16.mxu0 0
          %4588 = vmatmul.mubr.bf16.gmra.mxu0 %v4287
          %v4589 = vpop.f32.mrf.mxu0
          %v4590 = vadd.f32 0.0, %v4589
          %v4591 = vpop.f32.mrf.mxu0
          %v4592 = vpop.f32.mrf.mxu0
          %v4593 = vadd.f32 0.0, %v4592
          %v4594 = vpop.f32.mrf.mxu0
          %4595 = vmatprep.mubr.bf16.mxu0 0
          %4596 = vmatmul.mubr.bf16.gmra.mxu0 %v4288
          %v4597 = vpop.f32.mrf.mxu0
          %v4598 = vadd.f32 0.0, %v4597
          %v4599 = vpop.f32.mrf.mxu0
          %v4600 = vpop.f32.mrf.mxu0
          %v4601 = vadd.f32 0.0, %v4600
          %v4602 = vpop.f32.mrf.mxu0
          %4603 = vmatprep.mubr.bf16.mxu0 0
          %4604 = vmatmul.mubr.bf16.gmra.mxu0 %v4289
          %v4605 = vpop.f32.mrf.mxu0
          %v4606 = vadd.f32 0.0, %v4605
          %v4607 = vpop.f32.mrf.mxu0
          %v4608 = vpop.f32.mrf.mxu0
          %v4609 = vadd.f32 0.0, %v4608
          %v4610 = vpop.f32.mrf.mxu0
          %4611 = vmatprep.mubr.bf16.mxu0 0
          %4612 = vmatmul.mubr.bf16.gmra.mxu0 %v4290
          %v4613 = vpop.f32.mrf.mxu0
          %v4614 = vadd.f32 0.0, %v4613
          %v4615 = vpop.f32.mrf.mxu0
          %v4616 = vpop.f32.mrf.mxu0
          %v4617 = vadd.f32 0.0, %v4616
          %v4618 = vpop.f32.mrf.mxu0
          %4619 = vmatprep.mubr.bf16.mxu0 0
          %4620 = vmatmul.mubr.bf16.gmra.mxu0 %v4291
          %v4621 = vpop.f32.mrf.mxu0
          %v4622 = vadd.f32 0.0, %v4621
          %v4623 = vpop.f32.mrf.mxu0
          %v4624 = vpop.f32.mrf.mxu0
          %v4625 = vadd.f32 0.0, %v4624
          %v4626 = vpop.f32.mrf.mxu0
          %4627 = vmatprep.mubr.bf16.mxu0 0
          %4628 = vmatmul.mubr.bf16.gmra.mxu0 %v4292
          %v4629 = vpop.f32.mrf.mxu0
          %v4630 = vadd.f32 0.0, %v4629
          %v4631 = vpop.f32.mrf.mxu0
          %v4632 = vpop.f32.mrf.mxu0
          %v4633 = vadd.f32 0.0, %v4632
          %v4634 = vpop.f32.mrf.mxu0
          %4635 = vmatprep.mubr.bf16.mxu0 0
          %4636 = vmatmul.mubr.bf16.gmra.mxu0 %v4293
          %v4637 = vpop.f32.mrf.mxu0
          %v4638 = vadd.f32 0.0, %v4637
          %v4639 = vpop.f32.mrf.mxu0
          %v4640 = vpop.f32.mrf.mxu0
          %v4641 = vadd.f32 0.0, %v4640
          %v4642 = vpop.f32.mrf.mxu0
          %4643 = vmatprep.mubr.bf16.mxu0 0
          %4644 = vmatmul.mubr.bf16.gmra.mxu0 %v4294
          %v4645 = vpop.f32.mrf.mxu0
          %v4646 = vadd.f32 0.0, %v4645
          %v4647 = vpop.f32.mrf.mxu0
          %v4648 = vpop.f32.mrf.mxu0
          %v4649 = vadd.f32 0.0, %v4648
          %v4650 = vpop.f32.mrf.mxu0
          %4651 = vmatprep.mubr.bf16.mxu0 0
          %4652 = vmatmul.mubr.bf16.gmra.mxu0 %v4295
          %v4653 = vpop.f32.mrf.mxu0
          %v4654 = vadd.f32 0.0, %v4653
          %v4655 = vpop.f32.mrf.mxu0
          %v4656 = vpop.f32.mrf.mxu0
          %v4657 = vadd.f32 0.0, %v4656
          %v4658 = vpop.f32.mrf.mxu0
          %4659 = vmatprep.mubr.bf16.mxu0 0
          %4660 = vmatmul.mubr.bf16.gmra.mxu0 %v4296
          %v4661 = vpop.f32.mrf.mxu0
          %v4662 = vadd.f32 0.0, %v4661
          %v4663 = vpop.f32.mrf.mxu0
          %v4664 = vpop.f32.mrf.mxu0
          %v4665 = vadd.f32 0.0, %v4664
          %v4666 = vpop.f32.mrf.mxu0
          %4667 = vmatprep.mubr.bf16.mxu0 0
          %4668 = vmatmul.mubr.bf16.gmra.mxu0 %v4297
          %v4669 = vpop.f32.mrf.mxu0
          %v4670 = vadd.f32 0.0, %v4669
          %v4671 = vpop.f32.mrf.mxu0
          %v4672 = vpop.f32.mrf.mxu0
          %v4673 = vadd.f32 0.0, %v4672
          %v4674 = vpop.f32.mrf.mxu0
          %4675 = vmatprep.mubr.bf16.mxu0 0
          %4676 = vmatmul.mubr.bf16.gmra.mxu0 %v4298
          %v4677 = vpop.f32.mrf.mxu0
          %v4678 = vadd.f32 0.0, %v4677
          %v4679 = vpop.f32.mrf.mxu0
          %v4680 = vpop.f32.mrf.mxu0
          %v4681 = vadd.f32 0.0, %v4680
          %v4682 = vpop.f32.mrf.mxu0
          %4683 = vmatprep.mubr.bf16.mxu0 0
          %4684 = vmatmul.mubr.bf16.gmra.mxu0 %v4299
          %v4685 = vpop.f32.mrf.mxu0
          %v4686 = vadd.f32 0.0, %v4685
          %v4687 = vpop.f32.mrf.mxu0
          %v4688 = vpop.f32.mrf.mxu0
          %v4689 = vadd.f32 0.0, %v4688
          %v4690 = vpop.f32.mrf.mxu0
          %4691 = vmatprep.mubr.bf16.mxu0 0
          %4692 = vmatmul.mubr.bf16.gmra.mxu0 %v4300
          %v4693 = vpop.f32.mrf.mxu0
          %v4694 = vadd.f32 0.0, %v4693
          %v4695 = vpop.f32.mrf.mxu0
          %v4696 = vpop.f32.mrf.mxu0
          %v4697 = vadd.f32 0.0, %v4696
          %v4698 = vpop.f32.mrf.mxu0
          %4699 = vmatprep.mubr.bf16.mxu0 0
          %4700 = vmatmul.mubr.bf16.gmra.mxu0 %v4301
          %v4701 = vpop.f32.mrf.mxu0
          %v4702 = vadd.f32 0.0, %v4701
          %v4703 = vpop.f32.mrf.mxu0
          %v4704 = vpop.f32.mrf.mxu0
          %v4705 = vadd.f32 0.0, %v4704
          %v4706 = vpop.f32.mrf.mxu0
          %4707 = vmatprep.mubr.bf16.mxu0 0
          %4708 = vmatmul.mubr.bf16.gmra.mxu0 %v4302
          %v4709 = vpop.f32.mrf.mxu0
          %v4710 = vadd.f32 0.0, %v4709
          %v4711 = vpop.f32.mrf.mxu0
          %v4712 = vpop.f32.mrf.mxu0
          %v4713 = vadd.f32 0.0, %v4712
          %v4714 = vpop.f32.mrf.mxu0
          %4715 = vmatprep.mubr.bf16.mxu0 0
          %4716 = vmatmul.mubr.bf16.gmra.mxu0 %v4303
          %v4717 = vpop.f32.mrf.mxu0
          %v4718 = vadd.f32 0.0, %v4717
          %v4719 = vpop.f32.mrf.mxu0
          %v4720 = vpop.f32.mrf.mxu0
          %v4721 = vadd.f32 0.0, %v4720
          %v4722 = vpop.f32.mrf.mxu0
          %4723 = vmatprep.mubr.bf16.mxu0 0
          %4724 = vmatmul.mubr.bf16.gmra.mxu0 %v4304
          %v4725 = vpop.f32.mrf.mxu0
          %v4726 = vadd.f32 0.0, %v4725
          %v4727 = vpop.f32.mrf.mxu0
          %v4728 = vpop.f32.mrf.mxu0
          %v4729 = vadd.f32 0.0, %v4728
          %v4730 = vpop.f32.mrf.mxu0
          %4731 = vmatprep.mubr.bf16.mxu0 0
          %4732 = vmatmul.mubr.bf16.gmra.mxu0 %v4305
          %v4733 = vpop.f32.mrf.mxu0
          %v4734 = vadd.f32 0.0, %v4733
          %v4735 = vpop.f32.mrf.mxu0
          %v4736 = vpop.f32.mrf.mxu0
          %v4737 = vadd.f32 0.0, %v4736
          %v4738 = vpop.f32.mrf.mxu0
          %4739 = vmatprep.mubr.bf16.mxu0 0
          %4740 = vmatmul.mubr.bf16.gmra.mxu0 %v4306
          %v4741 = vpop.f32.mrf.mxu0
          %v4742 = vadd.f32 0.0, %v4741
          %v4743 = vpop.f32.mrf.mxu0
          %v4744 = vpop.f32.mrf.mxu0
          %v4745 = vadd.f32 0.0, %v4744
          %v4746 = vpop.f32.mrf.mxu0
          %4747 = vmatprep.mubr.bf16.mxu0 0
          %4748 = vmatmul.mubr.bf16.gmra.mxu0 %v4307
          %v4749 = vpop.f32.mrf.mxu0
          %v4750 = vadd.f32 0.0, %v4749
          %v4751 = vpop.f32.mrf.mxu0
          %v4752 = vpop.f32.mrf.mxu0
          %v4753 = vadd.f32 0.0, %v4752
          %v4754 = vpop.f32.mrf.mxu0
          %4755 = vmatprep.mubr.bf16.mxu0 0
          %4756 = vmatmul.mubr.bf16.gmra.mxu0 %v4308
          %v4757 = vpop.f32.mrf.mxu0
          %v4758 = vadd.f32 0.0, %v4757
          %v4759 = vpop.f32.mrf.mxu0
          %v4760 = vpop.f32.mrf.mxu0
          %v4761 = vadd.f32 0.0, %v4760
          %v4762 = vpop.f32.mrf.mxu0
          %4763 = vmatprep.mubr.bf16.mxu0 0
          %4764 = vmatmul.mubr.bf16.gmra.mxu0 %v4309
          %v4765 = vpop.f32.mrf.mxu0
          %v4766 = vadd.f32 0.0, %v4765
          %v4767 = vpop.f32.mrf.mxu0
          %v4768 = vpop.f32.mrf.mxu0
          %v4769 = vadd.f32 0.0, %v4768
          %v4770 = vpop.f32.mrf.mxu0
          %4771 = vmatprep.mubr.bf16.mxu0 0
          %4772 = vmatmul.mubr.bf16.gmra.mxu0 %v4310
          %v4773 = vpop.f32.mrf.mxu0
          %v4774 = vadd.f32 0.0, %v4773
          %v4775 = vpop.f32.mrf.mxu0
          %v4776 = vpop.f32.mrf.mxu0
          %v4777 = vadd.f32 0.0, %v4776
          %v4778 = vpop.f32.mrf.mxu0
          %4779 = vmatprep.mubr.bf16.mxu0 0
          %4780 = vmatmul.mubr.bf16.gmra.mxu0 %v4311
          %v4781 = vpop.f32.mrf.mxu0
          %v4782 = vadd.f32 0.0, %v4781
          %v4783 = vpop.f32.mrf.mxu0
          %v4784 = vpop.f32.mrf.mxu0
          %v4785 = vadd.f32 0.0, %v4784
          %v4786 = vpop.f32.mrf.mxu0
          %4787 = vmatprep.mubr.bf16.mxu0 0
          %4788 = vmatmul.mubr.bf16.gmra.mxu0 %v4312
          %v4789 = vpop.f32.mrf.mxu0
          %v4790 = vadd.f32 0.0, %v4789
          %v4791 = vpop.f32.mrf.mxu0
          %v4792 = vpop.f32.mrf.mxu0
          %v4793 = vadd.f32 0.0, %v4792
          %v4794 = vpop.f32.mrf.mxu0
          %4795 = vmatprep.mubr.bf16.mxu0 0
          %4796 = vmatmul.mubr.bf16.gmra.mxu0 %v4313
          %v4797 = vpop.f32.mrf.mxu0
          %v4798 = vadd.f32 0.0, %v4797
          %v4799 = vpop.f32.mrf.mxu0
          %v4800 = vpop.f32.mrf.mxu0
          %v4801 = vadd.f32 0.0, %v4800
          %v4802 = vpop.f32.mrf.mxu0
          %4803 = vmatprep.mubr.bf16.mxu0 0
          %4804 = vmatmul.mubr.bf16.gmra.mxu0 %v4314
          %v4805 = vpop.f32.mrf.mxu0
          %v4806 = vadd.f32 0.0, %v4805
          %v4807 = vpop.f32.mrf.mxu0
          %v4808 = vpop.f32.mrf.mxu0
          %v4809 = vadd.f32 0.0, %v4808
          %v4810 = vpop.f32.mrf.mxu0
          %4811 = vmatprep.mubr.bf16.mxu0 0
          %4812 = vmatmul.mubr.bf16.gmra.mxu0 %v4315
          %v4813 = vpop.f32.mrf.mxu0
          %v4814 = vadd.f32 0.0, %v4813
          %v4815 = vpop.f32.mrf.mxu0
          %v4816 = vpop.f32.mrf.mxu0
          %v4817 = vadd.f32 0.0, %v4816
          %v4818 = vpop.f32.mrf.mxu0
          %4819 = vmatprep.mubr.bf16.mxu0 0
          %4820 = vmatmul.mubr.bf16.gmra.mxu0 %v4316
          %v4821 = vpop.f32.mrf.mxu0
          %v4822 = vadd.f32 0.0, %v4821
          %v4823 = vpop.f32.mrf.mxu0
          %v4824 = vpop.f32.mrf.mxu0
          %v4825 = vadd.f32 0.0, %v4824
          %v4826 = vpop.f32.mrf.mxu0
          %4827 = vmatprep.mubr.bf16.mxu0 0
          %4828 = vmatmul.mubr.bf16.gmra.mxu0 %v4317
          %v4829 = vpop.f32.mrf.mxu0
          %v4830 = vadd.f32 0.0, %v4829
          %v4831 = vpop.f32.mrf.mxu0
          %v4832 = vpop.f32.mrf.mxu0
          %v4833 = vadd.f32 0.0, %v4832
          %v4834 = vpop.f32.mrf.mxu0
          %4835 = vmatprep.mubr.bf16.mxu0 0
          %4836 = vmatmul.mubr.bf16.gmra.mxu0 %v4318
          %v4837 = vpop.f32.mrf.mxu0
          %v4838 = vadd.f32 0.0, %v4837
          %v4839 = vpop.f32.mrf.mxu0
          %v4840 = vpop.f32.mrf.mxu0
          %v4841 = vadd.f32 0.0, %v4840
          %v4842 = vpop.f32.mrf.mxu0
          %4843 = vmatprep.mubr.bf16.mxu0 0
          %4844 = vmatmul.mubr.bf16.gmra.mxu0 %v4319
          %v4845 = vpop.f32.mrf.mxu0
          %v4846 = vadd.f32 0.0, %v4845
          %v4847 = vpop.f32.mrf.mxu0
          %v4848 = vpop.f32.mrf.mxu0
          %v4849 = vadd.f32 0.0, %v4848
          %v4850 = vpop.f32.mrf.mxu0
          %4851 = vmatprep.mubr.bf16.mxu0 0
          %4852 = vmatmul.mubr.bf16.gmra.mxu0 %v4320
          %v4853 = vpop.f32.mrf.mxu0
          %v4854 = vadd.f32 0.0, %v4853
          %v4855 = vpop.f32.mrf.mxu0
          %v4856 = vpop.f32.mrf.mxu0
          %v4857 = vadd.f32 0.0, %v4856
          %v4858 = vpop.f32.mrf.mxu0
          %4859 = vmatprep.mubr.bf16.mxu0 0
          %4860 = vmatmul.mubr.bf16.gmra.mxu0 %v4321
          %v4861 = vpop.f32.mrf.mxu0
          %v4862 = vadd.f32 0.0, %v4861
          %v4863 = vpop.f32.mrf.mxu0
          %v4864 = vpop.f32.mrf.mxu0
          %v4865 = vadd.f32 0.0, %v4864
          %v4866 = vpop.f32.mrf.mxu0
          %4867 = vmatprep.mubr.bf16.mxu0 0
          %4868 = vmatmul.mubr.bf16.gmra.mxu0 %v4322
          %v4869 = vpop.f32.mrf.mxu0
          %v4870 = vadd.f32 0.0, %v4869
          %v4871 = vpop.f32.mrf.mxu0
          %v4872 = vpop.f32.mrf.mxu0
          %v4873 = vadd.f32 0.0, %v4872
          %v4874 = vpop.f32.mrf.mxu0
          %4875 = vmatprep.mubr.bf16.mxu0 0
          %4876 = vmatmul.mubr.bf16.gmra.mxu0 %v4323
          %v4877 = vpop.f32.mrf.mxu0
          %v4878 = vadd.f32 0.0, %v4877
          %v4879 = vpop.f32.mrf.mxu0
          %v4880 = vpop.f32.mrf.mxu0
          %v4881 = vadd.f32 0.0, %v4880
          %v4882 = vpop.f32.mrf.mxu0
          %4883 = vmatprep.mubr.bf16.mxu0 0
          %4884 = vmatmul.mubr.bf16.gmra.mxu0 %v4324
          %v4885 = vpop.f32.mrf.mxu0
          %v4886 = vadd.f32 0.0, %v4885
          %v4887 = vpop.f32.mrf.mxu0
          %v4888 = vpop.f32.mrf.mxu0
          %v4889 = vadd.f32 0.0, %v4888
          %v4890 = vpop.f32.mrf.mxu0
          %4891 = vmatprep.mubr.bf16.mxu0 0
          %4892 = vmatmul.mubr.bf16.gmra.mxu0 %v4325
          %v4893 = vpop.f32.mrf.mxu0
          %v4894 = vadd.f32 0.0, %v4893
          %v4895 = vpop.f32.mrf.mxu0
          %v4896 = vpop.f32.mrf.mxu0
          %v4897 = vadd.f32 0.0, %v4896
          %v4898 = vpop.f32.mrf.mxu0
          %4899 = vmatprep.mubr.bf16.mxu0 0
          %4900 = vmatmul.mubr.bf16.gmra.mxu0 %v4326
          %v4901 = vpop.f32.mrf.mxu0
          %v4902 = vadd.f32 0.0, %v4901
          %v4903 = vpop.f32.mrf.mxu0
          %v4904 = vpop.f32.mrf.mxu0
          %v4905 = vadd.f32 0.0, %v4904
          %v4906 = vpop.f32.mrf.mxu0
          %4907 = vmatprep.mubr.bf16.mxu0 0
          %4908 = vmatmul.mubr.bf16.gmra.mxu0 %v4327
          %v4909 = vpop.f32.mrf.mxu0
          %v4910 = vadd.f32 0.0, %v4909
          %v4911 = vpop.f32.mrf.mxu0
          %v4912 = vpop.f32.mrf.mxu0
          %v4913 = vadd.f32 0.0, %v4912
          %v4914 = vpop.f32.mrf.mxu0
          %4915 = vmatprep.mubr.bf16.mxu0 0
          %4916 = vmatmul.mubr.bf16.gmra.mxu0 %v4328
          %v4917 = vpop.f32.mrf.mxu0
          %v4918 = vadd.f32 0.0, %v4917
          %v4919 = vpop.f32.mrf.mxu0
          %v4920 = vpop.f32.mrf.mxu0
          %v4921 = vadd.f32 0.0, %v4920
          %v4922 = vpop.f32.mrf.mxu0
          %4923 = vmatprep.mubr.bf16.mxu0 0
          %4924 = vmatmul.mubr.bf16.gmra.mxu0 %v4329
          %v4925 = vpop.f32.mrf.mxu0
          %v4926 = vadd.f32 0.0, %v4925
          %v4927 = vpop.f32.mrf.mxu0
          %v4928 = vpop.f32.mrf.mxu0
          %v4929 = vadd.f32 0.0, %v4928
          %v4930 = vpop.f32.mrf.mxu0
          %4931 = vmatprep.mubr.bf16.mxu0 0
          %4932 = vmatmul.mubr.bf16.gmra.mxu0 %v4330
          %v4933 = vpop.f32.mrf.mxu0
          %v4934 = vadd.f32 0.0, %v4933
          %v4935 = vpop.f32.mrf.mxu0
          %v4936 = vpop.f32.mrf.mxu0
          %v4937 = vadd.f32 0.0, %v4936
          %v4938 = vpop.f32.mrf.mxu0
          %4939 = vmatprep.mubr.bf16.mxu0 0
          %4940 = vmatmul.mubr.bf16.gmra.mxu0 %v4331
          %v4941 = vpop.f32.mrf.mxu0
          %v4942 = vadd.f32 0.0, %v4941
          %v4943 = vpop.f32.mrf.mxu0
          %v4944 = vpop.f32.mrf.mxu0
          %v4945 = vadd.f32 0.0, %v4944
          %v4946 = vpop.f32.mrf.mxu0
          %4947 = vmatprep.mubr.bf16.mxu0 0
          %4948 = vmatmul.mubr.bf16.gmra.mxu0 %v4332
          %v4949 = vpop.f32.mrf.mxu0
          %v4950 = vadd.f32 0.0, %v4949
          %v4951 = vpop.f32.mrf.mxu0
          %v4952 = vpop.f32.mrf.mxu0
          %v4953 = vadd.f32 0.0, %v4952
          %v4954 = vpop.f32.mrf.mxu0
          %4955 = vmatprep.mubr.bf16.mxu0 0
          %4956 = vmatmul.mubr.bf16.gmra.mxu0 %v4333
          %v4957 = vpop.f32.mrf.mxu0
          %v4958 = vadd.f32 0.0, %v4957
          %v4959 = vpop.f32.mrf.mxu0
          %v4960 = vpop.f32.mrf.mxu0
          %v4961 = vadd.f32 0.0, %v4960
          %v4962 = vpop.f32.mrf.mxu0
          %4963 = vmatprep.mubr.bf16.mxu0 0
          %4964 = vmatmul.mubr.bf16.gmra.mxu0 %v4334
          %v4965 = vpop.f32.mrf.mxu0
          %v4966 = vadd.f32 0.0, %v4965
          %v4967 = vpop.f32.mrf.mxu0
          %v4968 = vpop.f32.mrf.mxu0
          %v4969 = vadd.f32 0.0, %v4968
          %v4970 = vpop.f32.mrf.mxu0
          %4971 = vmatprep.mubr.bf16.mxu0 0
          %4972 = vmatmul.mubr.bf16.gmra.mxu0 %v4335
          %v4973 = vpop.f32.mrf.mxu0
          %v4974 = vadd.f32 0.0, %v4973
          %v4975 = vpop.f32.mrf.mxu0
          %v4976 = vpop.f32.mrf.mxu0
          %v4977 = vadd.f32 0.0, %v4976
          %v4978 = vpop.f32.mrf.mxu0
          %4979 = vmatprep.mubr.bf16.mxu0 0
          %4980 = vmatmul.mubr.bf16.gmra.mxu0 %v4336
          %v4981 = vpop.f32.mrf.mxu0
          %v4982 = vadd.f32 0.0, %v4981
          %v4983 = vpop.f32.mrf.mxu0
          %v4984 = vpop.f32.mrf.mxu0
          %v4985 = vadd.f32 0.0, %v4984
          %v4986 = vpop.f32.mrf.mxu0
          %4987 = vmatprep.mubr.bf16.mxu0 0
          %4988 = vmatmul.mubr.bf16.gmra.mxu0 %v4337
          %v4989 = vpop.f32.mrf.mxu0
          %v4990 = vadd.f32 0.0, %v4989
          %v4991 = vpop.f32.mrf.mxu0
          %v4992 = vpop.f32.mrf.mxu0
          %v4993 = vadd.f32 0.0, %v4992
          %v4994 = vpop.f32.mrf.mxu0
          %4995 = vmatprep.mubr.bf16.mxu0 0
          %4996 = vmatmul.mubr.bf16.gmra.mxu0 %v4338
          %v4997 = vpop.f32.mrf.mxu0
          %v4998 = vadd.f32 0.0, %v4997
          %v4999 = vpop.f32.mrf.mxu0
          %v5000 = vpop.f32.mrf.mxu0
          %v5001 = vadd.f32 0.0, %v5000
          %v5002 = vpop.f32.mrf.mxu0
          %5003 = vmatprep.mubr.bf16.mxu0 0
          %5004 = vmatmul.mubr.bf16.gmra.mxu0 %v4339
          %v5005 = vpop.f32.mrf.mxu0
          %v5006 = vadd.f32 0.0, %v5005
          %v5007 = vpop.f32.mrf.mxu0
          %v5008 = vpop.f32.mrf.mxu0
          %v5009 = vadd.f32 0.0, %v5008
          %v5010 = vpop.f32.mrf.mxu0
          %5011 = vmatprep.mubr.bf16.mxu0 0
          %5012 = vmatmul.mubr.bf16.gmra.mxu0 %v4340
          %v5013 = vpop.f32.mrf.mxu0
          %v5014 = vadd.f32 0.0, %v5013
          %v5015 = vpop.f32.mrf.mxu0
          %v5016 = vpop.f32.mrf.mxu0
          %v5017 = vadd.f32 0.0, %v5016
          %v5018 = vpop.f32.mrf.mxu0
          %5019 = vmatprep.mubr.bf16.mxu0 0
          %5020 = vmatmul.mubr.bf16.gmra.mxu0 %v4341
          %v5021 = vpop.f32.mrf.mxu0
          %v5022 = vadd.f32 0.0, %v5021
          %v5023 = vpop.f32.mrf.mxu0
          %v5024 = vpop.f32.mrf.mxu0
          %v5025 = vadd.f32 0.0, %v5024
          %v5026 = vpop.f32.mrf.mxu0
          %5027 = vmatprep.mubr.bf16.mxu0 0
          %5028 = vmatmul.mubr.bf16.gmra.mxu0 %v4342
          %v5029 = vpop.f32.mrf.mxu0
          %v5030 = vadd.f32 0.0, %v5029
          %v5031 = vpop.f32.mrf.mxu0
          %v5032 = vpop.f32.mrf.mxu0
          %v5033 = vadd.f32 0.0, %v5032
          %v5034 = vpop.f32.mrf.mxu0
          %5035 = vmatprep.mubr.bf16.mxu0 0
          %5036 = vmatmul.mubr.bf16.gmra.mxu0 %v4343
          %v5037 = vpop.f32.mrf.mxu0
          %v5038 = vadd.f32 0.0, %v5037
          %v5039 = vpop.f32.mrf.mxu0
          %v5040 = vpop.f32.mrf.mxu0
          %v5041 = vadd.f32 0.0, %v5040
          %v5042 = vpop.f32.mrf.mxu0
          %5043 = vmatprep.mubr.bf16.mxu0 0
          %5044 = vmatmul.mubr.bf16.gmra.mxu0 %v4344
          %v5045 = vpop.f32.mrf.mxu0
          %v5046 = vadd.f32 0.0, %v5045
          %v5047 = vpop.f32.mrf.mxu0
          %v5048 = vpop.f32.mrf.mxu0
          %v5049 = vadd.f32 0.0, %v5048
          %v5050 = vpop.f32.mrf.mxu0
          %5051 = vmatprep.mubr.bf16.mxu0 0
          %5052 = vmatmul.mubr.bf16.gmra.mxu0 %v4345
          %v5053 = vpop.f32.mrf.mxu0
          %v5054 = vadd.f32 0.0, %v5053
          %v5055 = vpop.f32.mrf.mxu0
          %v5056 = vpop.f32.mrf.mxu0
          %v5057 = vadd.f32 0.0, %v5056
          %v5058 = vpop.f32.mrf.mxu0
          %5059 = vmatprep.mubr.bf16.mxu0 0
          %5060 = vmatmul.mubr.bf16.gmra.mxu0 %v4346
          %v5061 = vpop.f32.mrf.mxu0
          %v5062 = vadd.f32 0.0, %v5061
          %v5063 = vpop.f32.mrf.mxu0
          %v5064 = vpop.f32.mrf.mxu0
          %v5065 = vadd.f32 0.0, %v5064
          %v5066 = vpop.f32.mrf.mxu0
          %5067 = vmatprep.mubr.bf16.mxu0 0
          %5068 = vmatmul.mubr.bf16.gmra.mxu0 %v4347
          %v5069 = vpop.f32.mrf.mxu0
          %v5070 = vadd.f32 0.0, %v5069
          %v5071 = vpop.f32.mrf.mxu0
          %v5072 = vpop.f32.mrf.mxu0
          %v5073 = vadd.f32 0.0, %v5072
          %v5074 = vpop.f32.mrf.mxu0
          %5075 = vmatprep.mubr.bf16.mxu0 0
          %5076 = vmatmul.mubr.bf16.gmra.mxu0 %v4348
          %v5077 = vpop.f32.mrf.mxu0
          %v5078 = vadd.f32 0.0, %v5077
          %v5079 = vpop.f32.mrf.mxu0
          %v5080 = vpop.f32.mrf.mxu0
          %v5081 = vadd.f32 0.0, %v5080
          %v5082 = vpop.f32.mrf.mxu0
          %5083 = vmatprep.mubr.bf16.mxu0 0
          %5084 = vmatmul.mubr.bf16.gmra.mxu0 %v4349
          %v5085 = vpop.f32.mrf.mxu0
          %v5086 = vadd.f32 0.0, %v5085
          %v5087 = vpop.f32.mrf.mxu0
          %v5088 = vpop.f32.mrf.mxu0
          %v5089 = vadd.f32 0.0, %v5088
          %v5090 = vpop.f32.mrf.mxu0
          %5091 = vmatprep.mubr.bf16.mxu0 0
          %5092 = vmatmul.mubr.bf16.gmra.mxu0 %v4350
          %v5093 = vpop.f32.mrf.mxu0
          %v5094 = vadd.f32 0.0, %v5093
          %v5095 = vpop.f32.mrf.mxu0
          %v5096 = vpop.f32.mrf.mxu0
          %v5097 = vadd.f32 0.0, %v5096
          %v5098 = vpop.f32.mrf.mxu0
          %5099 = vmatprep.mubr.bf16.mxu0 0
          %5100 = vmatmul.mubr.bf16.gmra.mxu0 %v4351
          %v5101 = vpop.f32.mrf.mxu0
          %v5102 = vadd.f32 0.0, %v5101
          %v5103 = vpop.f32.mrf.mxu0
          %v5104 = vpop.f32.mrf.mxu0
          %v5105 = vadd.f32 0.0, %v5104
          %v5106 = vpop.f32.mrf.mxu0
          %5107 = vmatprep.mubr.bf16.mxu0 0
          %5108 = vmatmul.mubr.bf16.gmra.mxu0 %v4352
          %v5109 = vpop.f32.mrf.mxu0
          %v5110 = vadd.f32 0.0, %v5109
          %v5111 = vpop.f32.mrf.mxu0
          %v5112 = vpop.f32.mrf.mxu0
          %v5113 = vadd.f32 0.0, %v5112
          %v5114 = vpop.f32.mrf.mxu0
          %5115 = vmatprep.mubr.bf16.mxu0 0
          %5116 = vmatmul.mubr.bf16.gmra.mxu0 %v4353
          %v5117 = vpop.f32.mrf.mxu0
          %v5118 = vadd.f32 0.0, %v5117
          %v5119 = vpop.f32.mrf.mxu0
          %v5120 = vpop.f32.mrf.mxu0
          %v5121 = vadd.f32 0.0, %v5120
          %v5122 = vpop.f32.mrf.mxu0
          %5123 = vmatprep.mubr.bf16.mxu0 0
          %5124 = vmatmul.mubr.bf16.gmra.mxu0 %v4354
          %v5125 = vpop.f32.mrf.mxu0
          %v5126 = vadd.f32 0.0, %v5125
          %v5127 = vpop.f32.mrf.mxu0
          %v5128 = vpop.f32.mrf.mxu0
          %v5129 = vadd.f32 0.0, %v5128
          %v5130 = vpop.f32.mrf.mxu0
          %5131 = vmatprep.mubr.bf16.mxu0 0
          %5132 = vmatmul.mubr.bf16.gmra.mxu0 %v4355
          %v5133 = vpop.f32.mrf.mxu0
          %v5134 = vadd.f32 0.0, %v5133
          %v5135 = vpop.f32.mrf.mxu0
          %v5136 = vpop.f32.mrf.mxu0
          %v5137 = vadd.f32 0.0, %v5136
          %v5138 = vpop.f32.mrf.mxu0
          %5139 = vmatprep.mubr.bf16.mxu0 0
          %5140 = vmatmul.mubr.bf16.gmra.mxu0 %v4356
          %v5141 = vpop.f32.mrf.mxu0
          %v5142 = vadd.f32 0.0, %v5141
          %v5143 = vpop.f32.mrf.mxu0
          %v5144 = vpop.f32.mrf.mxu0
          %v5145 = vadd.f32 0.0, %v5144
          %v5146 = vpop.f32.mrf.mxu0
          %5147 = vmatprep.mubr.bf16.mxu0 0
          %5148 = vmatmul.mubr.bf16.gmra.mxu0 %v4357
          %v5149 = vpop.f32.mrf.mxu0
          %v5150 = vadd.f32 0.0, %v5149
          %v5151 = vpop.f32.mrf.mxu0
          %v5152 = vpop.f32.mrf.mxu0
          %v5153 = vadd.f32 0.0, %v5152
          %v5154 = vpop.f32.mrf.mxu0
          %5155 = vmatprep.mubr.bf16.mxu0 0
          %5156 = vmatmul.mubr.bf16.gmra.mxu0 %v4358
          %v5157 = vpop.f32.mrf.mxu0
          %v5158 = vadd.f32 0.0, %v5157
          %v5159 = vpop.f32.mrf.mxu0
          %v5160 = vpop.f32.mrf.mxu0
          %v5161 = vadd.f32 0.0, %v5160
          %v5162 = vpop.f32.mrf.mxu0
          %5163 = vmatprep.mubr.bf16.mxu0 0
          %5164 = vmatmul.mubr.bf16.gmra.mxu0 %v4359
          %v5165 = vpop.f32.mrf.mxu0
          %v5166 = vadd.f32 0.0, %v5165
          %v5167 = vpop.f32.mrf.mxu0
          %v5168 = vpop.f32.mrf.mxu0
          %v5169 = vadd.f32 0.0, %v5168
          %v5170 = vpop.f32.mrf.mxu0
          %5171 = vmatprep.mubr.bf16.mxu0 0
          %5172 = vmatmul.mubr.bf16.gmra.mxu0 %v4360
          %v5173 = vpop.f32.mrf.mxu0
          %v5174 = vadd.f32 0.0, %v5173
          %v5175 = vpop.f32.mrf.mxu0
          %v5176 = vpop.f32.mrf.mxu0
          %v5177 = vadd.f32 0.0, %v5176
          %v5178 = vpop.f32.mrf.mxu0
          %5179 = vmatprep.mubr.bf16.mxu0 0
          %5180 = vmatmul.mubr.bf16.gmra.mxu0 %v4361
          %v5181 = vpop.f32.mrf.mxu0
          %v5182 = vadd.f32 0.0, %v5181
          %v5183 = vpop.f32.mrf.mxu0
          %v5184 = vpop.f32.mrf.mxu0
          %v5185 = vadd.f32 0.0, %v5184
          %v5186 = vpop.f32.mrf.mxu0
          %5187 = vmatprep.mubr.bf16.mxu0 0
          %5188 = vmatmul.mubr.bf16.gmra.mxu0 %v4362
          %v5189 = vpop.f32.mrf.mxu0
          %v5190 = vadd.f32 0.0, %v5189
          %v5191 = vpop.f32.mrf.mxu0
          %v5192 = vpop.f32.mrf.mxu0
          %v5193 = vadd.f32 0.0, %v5192
          %v5194 = vpop.f32.mrf.mxu0
          %5195 = vmatprep.mubr.bf16.mxu0 0
          %5196 = vmatmul.mubr.bf16.gmra.mxu0 %v4363
          %v5197 = vpop.f32.mrf.mxu0
          %v5198 = vadd.f32 0.0, %v5197
          %v5199 = vpop.f32.mrf.mxu0
          %v5200 = vpop.f32.mrf.mxu0
          %v5201 = vadd.f32 0.0, %v5200
          %v5202 = vpop.f32.mrf.mxu0
          %5203 = vmatprep.mubr.bf16.mxu0 0
          %5204 = vmatmul.mubr.bf16.gmra.mxu0 %v4364
          %v5205 = vpop.f32.mrf.mxu0
          %v5206 = vadd.f32 0.0, %v5205
          %v5207 = vpop.f32.mrf.mxu0
          %v5208 = vpop.f32.mrf.mxu0
          %v5209 = vadd.f32 0.0, %v5208
          %v5210 = vpop.f32.mrf.mxu0
          %5211 = vmatprep.mubr.bf16.mxu0 0
          %5212 = vmatmul.mubr.bf16.gmra.mxu0 %v4365
          %v5213 = vpop.f32.mrf.mxu0
          %v5214 = vadd.f32 0.0, %v5213
          %v5215 = vpop.f32.mrf.mxu0
          %v5216 = vpop.f32.mrf.mxu0
          %v5217 = vadd.f32 0.0, %v5216
          %v5218 = vpop.f32.mrf.mxu0
          %5219 = vmatprep.mubr.bf16.mxu0 0
          %5220 = vmatmul.mubr.bf16.gmra.mxu0 %v4366
          %v5221 = vpop.f32.mrf.mxu0
          %v5222 = vadd.f32 0.0, %v5221
          %v5223 = vpop.f32.mrf.mxu0
          %v5224 = vpop.f32.mrf.mxu0
          %v5225 = vadd.f32 0.0, %v5224
          %v5226 = vpop.f32.mrf.mxu0
          %5227 = vmatprep.mubr.bf16.mxu0 0
          %5228 = vmatmul.mubr.bf16.gmra.mxu0 %v4367
          %v5229 = vpop.f32.mrf.mxu0
          %v5230 = vadd.f32 0.0, %v5229
          %v5231 = vpop.f32.mrf.mxu0
          %v5232 = vpop.f32.mrf.mxu0
          %v5233 = vadd.f32 0.0, %v5232
          %v5234 = vpop.f32.mrf.mxu0
          %5235 = vmatprep.mubr.bf16.mxu0 0
          %5236 = vmatmul.mubr.bf16.gmra.mxu0 %v4368
          %v5237 = vpop.f32.mrf.mxu0
          %v5238 = vadd.f32 0.0, %v5237
          %v5239 = vpop.f32.mrf.mxu0
          %v5240 = vpop.f32.mrf.mxu0
          %v5241 = vadd.f32 0.0, %v5240
          %v5242 = vpop.f32.mrf.mxu0
          %5243 = vmatprep.mubr.bf16.mxu0 0
          %5244 = vmatmul.mubr.bf16.gmra.mxu0 %v4369
          %v5245 = vpop.f32.mrf.mxu0
          %v5246 = vadd.f32 0.0, %v5245
          %v5247 = vpop.f32.mrf.mxu0
          %v5248 = vpop.f32.mrf.mxu0
          %v5249 = vadd.f32 0.0, %v5248
          %v5250 = vpop.f32.mrf.mxu0
          %5251 = vmatprep.mubr.bf16.mxu0 0
          %5252 = vmatmul.mubr.bf16.gmra.mxu0 %v4370
          %v5253 = vpop.f32.mrf.mxu0
          %v5254 = vadd.f32 0.0, %v5253
          %v5255 = vpop.f32.mrf.mxu0
          %v5256 = vpop.f32.mrf.mxu0
          %v5257 = vadd.f32 0.0, %v5256
          %v5258 = vpop.f32.mrf.mxu0
          %5259 = vmatprep.mubr.bf16.mxu0 0
          %5260 = vmatmul.mubr.bf16.gmra.mxu0 %v4371
          %v5261 = vpop.f32.mrf.mxu0
          %v5262 = vadd.f32 0.0, %v5261
          %v5263 = vpop.f32.mrf.mxu0
          %v5264 = vpop.f32.mrf.mxu0
          %v5265 = vadd.f32 0.0, %v5264
          %v5266 = vpop.f32.mrf.mxu0
          %5267 = vmatprep.mubr.bf16.mxu0 0
          %5268 = vmatmul.mubr.bf16.gmra.mxu0 %v4372
          %v5269 = vpop.f32.mrf.mxu0
          %v5270 = vadd.f32 0.0, %v5269
          %v5271 = vpop.f32.mrf.mxu0
          %v5272 = vpop.f32.mrf.mxu0
          %v5273 = vadd.f32 0.0, %v5272
          %v5274 = vpop.f32.mrf.mxu0
          %5275 = vmatprep.mubr.bf16.mxu0 0
          %5276 = vmatmul.mubr.bf16.gmra.mxu0 %v4373
          %v5277 = vpop.f32.mrf.mxu0
          %v5278 = vadd.f32 0.0, %v5277
          %v5279 = vpop.f32.mrf.mxu0
          %v5280 = vpop.f32.mrf.mxu0
          %v5281 = vadd.f32 0.0, %v5280
          %v5282 = vpop.f32.mrf.mxu0
          %5283 = vmatprep.mubr.bf16.mxu0 0
          %5284 = vmatmul.mubr.bf16.gmra.mxu0 %v4374
          %v5285 = vpop.f32.mrf.mxu0
          %v5286 = vadd.f32 0.0, %v5285
          %v5287 = vpop.f32.mrf.mxu0
          %v5288 = vpop.f32.mrf.mxu0
          %v5289 = vadd.f32 0.0, %v5288
          %v5290 = vpop.f32.mrf.mxu0
          %5291 = vmatprep.mubr.bf16.mxu0 0
          %5292 = vmatmul.mubr.bf16.gmra.mxu0 %v4375
          %v5293 = vpop.f32.mrf.mxu0
          %v5294 = vadd.f32 0.0, %v5293
          %v5295 = vpop.f32.mrf.mxu0
          %v5296 = vpop.f32.mrf.mxu0
          %v5297 = vadd.f32 0.0, %v5296
          %v5298 = vpop.f32.mrf.mxu0
          %5299 = vmatprep.mubr.bf16.mxu0 0
          %5300 = vmatmul.mubr.bf16.gmra.mxu0 %v4376
          %v5301 = vpop.f32.mrf.mxu0
          %v5302 = vadd.f32 0.0, %v5301
          %v5303 = vpop.f32.mrf.mxu0
          %v5304 = vpop.f32.mrf.mxu0
          %v5305 = vadd.f32 0.0, %v5304
          %v5306 = vpop.f32.mrf.mxu0
          %5307 = vmatprep.mubr.bf16.mxu0 0
          %5308 = vmatmul.mubr.bf16.gmra.mxu0 %v4377
          %v5309 = vpop.f32.mrf.mxu0
          %v5310 = vadd.f32 0.0, %v5309
          %v5311 = vpop.f32.mrf.mxu0
          %v5312 = vpop.f32.mrf.mxu0
          %v5313 = vadd.f32 0.0, %v5312
          %v5314 = vpop.f32.mrf.mxu0
          %5315 = vmatprep.mubr.bf16.mxu0 0
          %5316 = vmatmul.mubr.bf16.gmra.mxu0 %v4378
          %v5317 = vpop.f32.mrf.mxu0
          %v5318 = vadd.f32 0.0, %v5317
          %v5319 = vpop.f32.mrf.mxu0
          %v5320 = vpop.f32.mrf.mxu0
          %v5321 = vadd.f32 0.0, %v5320
          %v5322 = vpop.f32.mrf.mxu0
          %5323 = vmatprep.mubr.bf16.mxu0 0
          %5324 = vmatmul.mubr.bf16.gmra.mxu0 %v4379
          %v5325 = vpop.f32.mrf.mxu0
          %v5326 = vadd.f32 0.0, %v5325
          %v5327 = vpop.f32.mrf.mxu0
          %v5328 = vpop.f32.mrf.mxu0
          %v5329 = vadd.f32 0.0, %v5328
          %v5330 = vpop.f32.mrf.mxu0
          %5331 = vmatprep.mubr.bf16.mxu0 0
          %5332 = vmatmul.mubr.bf16.gmra.mxu0 %v4380
          %v5333 = vpop.f32.mrf.mxu0
          %v5334 = vadd.f32 0.0, %v5333
          %v5335 = vpop.f32.mrf.mxu0
          %v5336 = vpop.f32.mrf.mxu0
          %v5337 = vadd.f32 0.0, %v5336
          %v5338 = vpop.f32.mrf.mxu0
          %5339 = vmatprep.mubr.bf16.mxu0 0
          %5340 = vmatmul.mubr.bf16.gmra.mxu0 %v4381
          %v5341 = vpop.f32.mrf.mxu0
          %v5342 = vadd.f32 0.0, %v5341
          %v5343 = vpop.f32.mrf.mxu0
          %v5344 = vpop.f32.mrf.mxu0
          %v5345 = vadd.f32 0.0, %v5344
          %v5346 = vpop.f32.mrf.mxu0
          %5347 = vmatprep.mubr.bf16.mxu0 0
          %5348 = vmatmul.mubr.bf16.gmra.mxu0 %v4382
          %v5349 = vpop.f32.mrf.mxu0
          %v5350 = vadd.f32 0.0, %v5349
          %v5351 = vpop.f32.mrf.mxu0
          %v5352 = vpop.f32.mrf.mxu0
          %v5353 = vadd.f32 0.0, %v5352
          %v5354 = vpop.f32.mrf.mxu0
          %5355 = vmatprep.mubr.bf16.mxu0 0
          %5356 = vmatmul.mubr.bf16.gmra.mxu0 %v4383
          %v5357 = vpop.f32.mrf.mxu0
          %v5358 = vadd.f32 0.0, %v5357
          %v5359 = vpop.f32.mrf.mxu0
          %v5360 = vpop.f32.mrf.mxu0
          %v5361 = vadd.f32 0.0, %v5360
          %v5362 = vpop.f32.mrf.mxu0
          %5363 = vmatprep.mubr.bf16.mxu0 0
          %5364 = vmatmul.mubr.bf16.gmra.mxu0 %v4384
          %v5365 = vpop.f32.mrf.mxu0
          %v5366 = vadd.f32 0.0, %v5365
          %v5367 = vpop.f32.mrf.mxu0
          %v5368 = vpop.f32.mrf.mxu0
          %v5369 = vadd.f32 0.0, %v5368
          %v5370 = vpop.f32.mrf.mxu0
          %5371 = vmatprep.mubr.bf16.mxu0 0
          %5372 = vmatmul.mubr.bf16.gmra.mxu0 %v4385
          %v5373 = vpop.f32.mrf.mxu0
          %v5374 = vadd.f32 0.0, %v5373
          %v5375 = vpop.f32.mrf.mxu0
          %v5376 = vpop.f32.mrf.mxu0
          %v5377 = vadd.f32 0.0, %v5376
          %v5378 = vpop.f32.mrf.mxu0
          %5379 = vmatprep.mubr.bf16.mxu0 0
          %5380 = vmatmul.mubr.bf16.gmra.mxu0 %v4386
          %v5381 = vpop.f32.mrf.mxu0
          %v5382 = vadd.f32 0.0, %v5381
          %v5383 = vpop.f32.mrf.mxu0
          %v5384 = vpop.f32.mrf.mxu0
          %v5385 = vadd.f32 0.0, %v5384
          %v5386 = vpop.f32.mrf.mxu0
          %5387 = vmatprep.mubr.bf16.mxu0 0
          %5388 = vmatmul.mubr.bf16.gmra.mxu0 %v4387
          %v5389 = vpop.f32.mrf.mxu0
          %v5390 = vadd.f32 0.0, %v5389
          %v5391 = vpop.f32.mrf.mxu0
          %v5392 = vpop.f32.mrf.mxu0
          %v5393 = vadd.f32 0.0, %v5392
          %v5394 = vpop.f32.mrf.mxu0
          %5395 = vmatprep.mubr.bf16.mxu0 0
          %5396 = vmatmul.mubr.bf16.gmra.mxu0 %v4388
          %v5397 = vpop.f32.mrf.mxu0
          %v5398 = vadd.f32 0.0, %v5397
          %v5399 = vpop.f32.mrf.mxu0
          %v5400 = vpop.f32.mrf.mxu0
          %v5401 = vadd.f32 0.0, %v5400
          %v5402 = vpop.f32.mrf.mxu0
          %5403 = vmatprep.mubr.bf16.mxu0 0
          %5404 = vmatmul.mubr.bf16.gmra.mxu0 %v4389
          %v5405 = vpop.f32.mrf.mxu0
          %v5406 = vadd.f32 0.0, %v5405
          %v5407 = vpop.f32.mrf.mxu0
          %v5408 = vpop.f32.mrf.mxu0
          %v5409 = vadd.f32 0.0, %v5408
          %v5410 = vpop.f32.mrf.mxu0
          %5411 = vmatprep.mubr.bf16.mxu0 0
          %5412 = vmatmul.mubr.bf16.gmra.mxu0 %v4390
          %v5413 = vpop.f32.mrf.mxu0
          %v5414 = vadd.f32 0.0, %v5413
          %v5415 = vpop.f32.mrf.mxu0
          %v5416 = vpop.f32.mrf.mxu0
          %v5417 = vadd.f32 0.0, %v5416
          %v5418 = vpop.f32.mrf.mxu0
          %5419 = vmatprep.mubr.bf16.mxu0 0
          %5420 = vmatmul.mubr.bf16.gmra.mxu0 %v4391
          %v5421 = vpop.f32.mrf.mxu0
          %v5422 = vadd.f32 0.0, %v5421
          %v5423 = vpop.f32.mrf.mxu0
          %v5424 = vpop.f32.mrf.mxu0
          %v5425 = vadd.f32 0.0, %v5424
          %v5426 = vpop.f32.mrf.mxu0
          %5427 = vmatprep.mubr.bf16.mxu0 0
          %5428 = vmatmul.mubr.bf16.gmra.mxu0 %v4392
          %v5429 = vpop.f32.mrf.mxu0
          %v5430 = vadd.f32 0.0, %v5429
          %v5431 = vpop.f32.mrf.mxu0
          %v5432 = vpop.f32.mrf.mxu0
          %v5433 = vadd.f32 0.0, %v5432
          %v5434 = vpop.f32.mrf.mxu0
          %5435 = vmatprep.mubr.bf16.mxu0 0
          %5436 = vmatmul.mubr.bf16.gmra.mxu0 %v4393
          %v5437 = vpop.f32.mrf.mxu0
          %v5438 = vadd.f32 0.0, %v5437
          %v5439 = vpop.f32.mrf.mxu0
          %v5440 = vpop.f32.mrf.mxu0
          %v5441 = vadd.f32 0.0, %v5440
          %v5442 = vpop.f32.mrf.mxu0
          %5443 = vmatprep.mubr.bf16.mxu0 0
          %5444 = vmatmul.mubr.bf16.gmra.mxu0 %v4394
          %v5445 = vpop.f32.mrf.mxu0
          %v5446 = vadd.f32 0.0, %v5445
          %v5447 = vpop.f32.mrf.mxu0
          %v5448 = vpop.f32.mrf.mxu0
          %v5449 = vadd.f32 0.0, %v5448
          %v5450 = vpop.f32.mrf.mxu0
          %5451 = vdwg.mxu0
          %v5452 = vadd.f32 %v4430, %v3237
          %v5453 = vadd.f32 %v4433, %v3238
          %v5454 = vadd.f32 %v4438, %v3239
          %v5455 = vadd.f32 %v4441, %v3240
          %v5456 = vadd.f32 %v4446, %v3241
          %v5457 = vadd.f32 %v4449, %v3242
          %v5458 = vadd.f32 %v4454, %v3243
          %v5459 = vadd.f32 %v4457, %v3244
          %v5460 = vadd.f32 %v4462, %v3245
          %v5461 = vadd.f32 %v4465, %v3246
          %v5462 = vadd.f32 %v4470, %v3247
          %v5463 = vadd.f32 %v4473, %v3248
          %v5464 = vadd.f32 %v4478, %v3249
          %v5465 = vadd.f32 %v4481, %v3250
          %v5466 = vadd.f32 %v4486, %v3251
          %v5467 = vadd.f32 %v4489, %v3252
          %v5468 = vadd.f32 %v4494, %v3253
          %v5469 = vadd.f32 %v4497, %v3254
          %v5470 = vadd.f32 %v4502, %v3255
          %v5471 = vadd.f32 %v4505, %v3256
          %v5472 = vadd.f32 %v4510, %v3257
          %v5473 = vadd.f32 %v4513, %v3258
          %v5474 = vadd.f32 %v4518, %v3259
          %v5475 = vadd.f32 %v4521, %v3260
          %v5476 = vadd.f32 %v4526, %v3261
          %v5477 = vadd.f32 %v4529, %v3262
          %v5478 = vadd.f32 %v4534, %v3263
          %v5479 = vadd.f32 %v4537, %v3264
          %v5480 = vadd.f32 %v4542, %v3265
          %v5481 = vadd.f32 %v4545, %v3266
          %v5482 = vadd.f32 %v4550, %v3267
          %v5483 = vadd.f32 %v4553, %v3268
          %v5484 = vadd.f32 %v4558, %v3269
          %v5485 = vadd.f32 %v4561, %v3270
          %v5486 = vadd.f32 %v4566, %v3271
          %v5487 = vadd.f32 %v4569, %v3272
          %v5488 = vadd.f32 %v4574, %v3273
          %v5489 = vadd.f32 %v4577, %v3274
          %v5490 = vadd.f32 %v4582, %v3275
          %v5491 = vadd.f32 %v4585, %v3276
          %v5492 = vadd.f32 %v4590, %v3277
          %v5493 = vadd.f32 %v4593, %v3278
          %v5494 = vadd.f32 %v4598, %v3279
          %v5495 = vadd.f32 %v4601, %v3280
          %v5496 = vadd.f32 %v4606, %v3281
          %v5497 = vadd.f32 %v4609, %v3282
          %v5498 = vadd.f32 %v4614, %v3283
          %v5499 = vadd.f32 %v4617, %v3284
          %v5500 = vadd.f32 %v4622, %v3285
          %v5501 = vadd.f32 %v4625, %v3286
          %v5502 = vadd.f32 %v4630, %v3287
          %v5503 = vadd.f32 %v4633, %v3288
          %v5504 = vadd.f32 %v4638, %v3289
          %v5505 = vadd.f32 %v4641, %v3290
          %v5506 = vadd.f32 %v4646, %v3291
          %v5507 = vadd.f32 %v4649, %v3292
          %v5508 = vadd.f32 %v4654, %v3293
          %v5509 = vadd.f32 %v4657, %v3294
          %v5510 = vadd.f32 %v4662, %v3295
          %v5511 = vadd.f32 %v4665, %v3296
          %v5512 = vadd.f32 %v4670, %v3297
          %v5513 = vadd.f32 %v4673, %v3298
          %v5514 = vadd.f32 %v4678, %v3299
          %v5515 = vadd.f32 %v4681, %v3300
          %v5516 = vadd.f32 %v4686, %v3301
          %v5517 = vadd.f32 %v4689, %v3302
          %v5518 = vadd.f32 %v4694, %v3303
          %v5519 = vadd.f32 %v4697, %v3304
          %v5520 = vadd.f32 %v4702, %v3305
          %v5521 = vadd.f32 %v4705, %v3306
          %v5522 = vadd.f32 %v4710, %v3307
          %v5523 = vadd.f32 %v4713, %v3308
          %v5524 = vadd.f32 %v4718, %v3309
          %v5525 = vadd.f32 %v4721, %v3310
          %v5526 = vadd.f32 %v4726, %v3311
          %v5527 = vadd.f32 %v4729, %v3312
          %v5528 = vadd.f32 %v4734, %v3313
          %v5529 = vadd.f32 %v4737, %v3314
          %v5530 = vadd.f32 %v4742, %v3315
          %v5531 = vadd.f32 %v4745, %v3316
          %v5532 = vadd.f32 %v4750, %v3317
          %v5533 = vadd.f32 %v4753, %v3318
          %v5534 = vadd.f32 %v4758, %v3319
          %v5535 = vadd.f32 %v4761, %v3320
          %v5536 = vadd.f32 %v4766, %v3321
          %v5537 = vadd.f32 %v4769, %v3322
          %v5538 = vadd.f32 %v4774, %v3323
          %v5539 = vadd.f32 %v4777, %v3324
          %v5540 = vadd.f32 %v4782, %v3325
          %v5541 = vadd.f32 %v4785, %v3326
          %v5542 = vadd.f32 %v4790, %v3327
          %v5543 = vadd.f32 %v4793, %v3328
          %v5544 = vadd.f32 %v4798, %v3329
          %v5545 = vadd.f32 %v4801, %v3330
          %v5546 = vadd.f32 %v4806, %v3331
          %v5547 = vadd.f32 %v4809, %v3332
          %v5548 = vadd.f32 %v4814, %v3333
          %v5549 = vadd.f32 %v4817, %v3334
          %v5550 = vadd.f32 %v4822, %v3335
          %v5551 = vadd.f32 %v4825, %v3336
          %v5552 = vadd.f32 %v4830, %v3337
          %v5553 = vadd.f32 %v4833, %v3338
          %v5554 = vadd.f32 %v4838, %v3339
          %v5555 = vadd.f32 %v4841, %v3340
          %v5556 = vadd.f32 %v4846, %v3341
          %v5557 = vadd.f32 %v4849, %v3342
          %v5558 = vadd.f32 %v4854, %v3343
          %v5559 = vadd.f32 %v4857, %v3344
          %v5560 = vadd.f32 %v4862, %v3345
          %v5561 = vadd.f32 %v4865, %v3346
          %v5562 = vadd.f32 %v4870, %v3347
          %v5563 = vadd.f32 %v4873, %v3348
          %v5564 = vadd.f32 %v4878, %v3349
          %v5565 = vadd.f32 %v4881, %v3350
          %v5566 = vadd.f32 %v4886, %v3351
          %v5567 = vadd.f32 %v4889, %v3352
          %v5568 = vadd.f32 %v4894, %v3353
          %v5569 = vadd.f32 %v4897, %v3354
          %v5570 = vadd.f32 %v4902, %v3355
          %v5571 = vadd.f32 %v4905, %v3356
          %v5572 = vadd.f32 %v4910, %v3357
          %v5573 = vadd.f32 %v4913, %v3358
          %v5574 = vadd.f32 %v4918, %v3359
          %v5575 = vadd.f32 %v4921, %v3360
          %v5576 = vadd.f32 %v4926, %v3361
          %v5577 = vadd.f32 %v4929, %v3362
          %v5578 = vadd.f32 %v4934, %v3363
          %v5579 = vadd.f32 %v4937, %v3364
          %v5580 = vadd.f32 %v4942, %v3365
          %v5581 = vadd.f32 %v4945, %v3366
          %v5582 = vadd.f32 %v4950, %v3367
          %v5583 = vadd.f32 %v4953, %v3368
          %v5584 = vadd.f32 %v4958, %v3369
          %v5585 = vadd.f32 %v4961, %v3370
          %v5586 = vadd.f32 %v4966, %v3371
          %v5587 = vadd.f32 %v4969, %v3372
          %v5588 = vadd.f32 %v4974, %v3373
          %v5589 = vadd.f32 %v4977, %v3374
          %v5590 = vadd.f32 %v4982, %v3375
          %v5591 = vadd.f32 %v4985, %v3376
          %v5592 = vadd.f32 %v4990, %v3377
          %v5593 = vadd.f32 %v4993, %v3378
          %v5594 = vadd.f32 %v4998, %v3379
          %v5595 = vadd.f32 %v5001, %v3380
          %v5596 = vadd.f32 %v5006, %v3381
          %v5597 = vadd.f32 %v5009, %v3382
          %v5598 = vadd.f32 %v5014, %v3383
          %v5599 = vadd.f32 %v5017, %v3384
          %v5600 = vadd.f32 %v5022, %v3385
          %v5601 = vadd.f32 %v5025, %v3386
          %v5602 = vadd.f32 %v5030, %v3387
          %v5603 = vadd.f32 %v5033, %v3388
          %v5604 = vadd.f32 %v5038, %v3389
          %v5605 = vadd.f32 %v5041, %v3390
          %v5606 = vadd.f32 %v5046, %v3391
          %v5607 = vadd.f32 %v5049, %v3392
          %v5608 = vadd.f32 %v5054, %v3393
          %v5609 = vadd.f32 %v5057, %v3394
          %v5610 = vadd.f32 %v5062, %v3395
          %v5611 = vadd.f32 %v5065, %v3396
          %v5612 = vadd.f32 %v5070, %v3397
          %v5613 = vadd.f32 %v5073, %v3398
          %v5614 = vadd.f32 %v5078, %v3399
          %v5615 = vadd.f32 %v5081, %v3400
          %v5616 = vadd.f32 %v5086, %v3401
          %v5617 = vadd.f32 %v5089, %v3402
          %v5618 = vadd.f32 %v5094, %v3403
          %v5619 = vadd.f32 %v5097, %v3404
          %v5620 = vadd.f32 %v5102, %v3405
          %v5621 = vadd.f32 %v5105, %v3406
          %v5622 = vadd.f32 %v5110, %v3407
          %v5623 = vadd.f32 %v5113, %v3408
          %v5624 = vadd.f32 %v5118, %v3409
          %v5625 = vadd.f32 %v5121, %v3410
          %v5626 = vadd.f32 %v5126, %v3411
          %v5627 = vadd.f32 %v5129, %v3412
          %v5628 = vadd.f32 %v5134, %v3413
          %v5629 = vadd.f32 %v5137, %v3414
          %v5630 = vadd.f32 %v5142, %v3415
          %v5631 = vadd.f32 %v5145, %v3416
          %v5632 = vadd.f32 %v5150, %v3417
          %v5633 = vadd.f32 %v5153, %v3418
          %v5634 = vadd.f32 %v5158, %v3419
          %v5635 = vadd.f32 %v5161, %v3420
          %v5636 = vadd.f32 %v5166, %v3421
          %v5637 = vadd.f32 %v5169, %v3422
          %v5638 = vadd.f32 %v5174, %v3423
          %v5639 = vadd.f32 %v5177, %v3424
          %v5640 = vadd.f32 %v5182, %v3425
          %v5641 = vadd.f32 %v5185, %v3426
          %v5642 = vadd.f32 %v5190, %v3427
          %v5643 = vadd.f32 %v5193, %v3428
          %v5644 = vadd.f32 %v5198, %v3429
          %v5645 = vadd.f32 %v5201, %v3430
          %v5646 = vadd.f32 %v5206, %v3431
          %v5647 = vadd.f32 %v5209, %v3432
          %v5648 = vadd.f32 %v5214, %v3433
          %v5649 = vadd.f32 %v5217, %v3434
          %v5650 = vadd.f32 %v5222, %v3435
          %v5651 = vadd.f32 %v5225, %v3436
          %v5652 = vadd.f32 %v5230, %v3437
          %v5653 = vadd.f32 %v5233, %v3438
          %v5654 = vadd.f32 %v5238, %v3439
          %v5655 = vadd.f32 %v5241, %v3440
          %v5656 = vadd.f32 %v5246, %v3441
          %v5657 = vadd.f32 %v5249, %v3442
          %v5658 = vadd.f32 %v5254, %v3443
          %v5659 = vadd.f32 %v5257, %v3444
          %v5660 = vadd.f32 %v5262, %v3445
          %v5661 = vadd.f32 %v5265, %v3446
          %v5662 = vadd.f32 %v5270, %v3447
          %v5663 = vadd.f32 %v5273, %v3448
          %v5664 = vadd.f32 %v5278, %v3449
          %v5665 = vadd.f32 %v5281, %v3450
          %v5666 = vadd.f32 %v5286, %v3451
          %v5667 = vadd.f32 %v5289, %v3452
          %v5668 = vadd.f32 %v5294, %v3453
          %v5669 = vadd.f32 %v5297, %v3454
          %v5670 = vadd.f32 %v5302, %v3455
          %v5671 = vadd.f32 %v5305, %v3456
          %v5672 = vadd.f32 %v5310, %v3457
          %v5673 = vadd.f32 %v5313, %v3458
          %v5674 = vadd.f32 %v5318, %v3459
          %v5675 = vadd.f32 %v5321, %v3460
          %v5676 = vadd.f32 %v5326, %v3461
          %v5677 = vadd.f32 %v5329, %v3462
          %v5678 = vadd.f32 %v5334, %v3463
          %v5679 = vadd.f32 %v5337, %v3464
          %v5680 = vadd.f32 %v5342, %v3465
          %v5681 = vadd.f32 %v5345, %v3466
          %v5682 = vadd.f32 %v5350, %v3467
          %v5683 = vadd.f32 %v5353, %v3468
          %v5684 = vadd.f32 %v5358, %v3469
          %v5685 = vadd.f32 %v5361, %v3470
          %v5686 = vadd.f32 %v5366, %v3471
          %v5687 = vadd.f32 %v5369, %v3472
          %v5688 = vadd.f32 %v5374, %v3473
          %v5689 = vadd.f32 %v5377, %v3474
          %v5690 = vadd.f32 %v5382, %v3475
          %v5691 = vadd.f32 %v5385, %v3476
          %v5692 = vadd.f32 %v5390, %v3477
          %v5693 = vadd.f32 %v5393, %v3478
          %v5694 = vadd.f32 %v5398, %v3479
          %v5695 = vadd.f32 %v5401, %v3480
          %v5696 = vadd.f32 %v5406, %v3481
          %v5697 = vadd.f32 %v5409, %v3482
          %v5698 = vadd.f32 %v5414, %v3483
          %v5699 = vadd.f32 %v5417, %v3484
          %v5700 = vadd.f32 %v5422, %v3485
          %v5701 = vadd.f32 %v5425, %v3486
          %v5702 = vadd.f32 %v5430, %v3487
          %v5703 = vadd.f32 %v5433, %v3488
          %v5704 = vadd.f32 %v5438, %v3489
          %v5705 = vadd.f32 %v5441, %v3490
          %v5706 = vadd.f32 %v5446, %v3491
          %v5707 = vadd.f32 %v5449, %v3492
          %v5708 = vmul.f32 %v5452, 0.05
          %v5709 = vmul.f32 %v5453, 0.05
          %v5710 = vmul.f32 %v5454, 0.05
          %v5711 = vmul.f32 %v5455, 0.05
          %v5712 = vmul.f32 %v5456, 0.05
          %v5713 = vmul.f32 %v5457, 0.05
          %v5714 = vmul.f32 %v5458, 0.05
          %v5715 = vmul.f32 %v5459, 0.05
          %v5716 = vmul.f32 %v5460, 0.05
          %v5717 = vmul.f32 %v5461, 0.05
          %v5718 = vmul.f32 %v5462, 0.05
          %v5719 = vmul.f32 %v5463, 0.05
          %v5720 = vmul.f32 %v5464, 0.05
          %v5721 = vmul.f32 %v5465, 0.05
          %v5722 = vmul.f32 %v5466, 0.05
          %v5723 = vmul.f32 %v5467, 0.05
          %v5724 = vmul.f32 %v5468, 0.05
          %v5725 = vmul.f32 %v5469, 0.05
          %v5726 = vmul.f32 %v5470, 0.05
          %v5727 = vmul.f32 %v5471, 0.05
          %v5728 = vmul.f32 %v5472, 0.05
          %v5729 = vmul.f32 %v5473, 0.05
          %v5730 = vmul.f32 %v5474, 0.05
          %v5731 = vmul.f32 %v5475, 0.05
          %v5732 = vmul.f32 %v5476, 0.05
          %v5733 = vmul.f32 %v5477, 0.05
          %v5734 = vmul.f32 %v5478, 0.05
          %v5735 = vmul.f32 %v5479, 0.05
          %v5736 = vmul.f32 %v5480, 0.05
          %v5737 = vmul.f32 %v5481, 0.05
          %v5738 = vmul.f32 %v5482, 0.05
          %v5739 = vmul.f32 %v5483, 0.05
          %v5740 = vmul.f32 %v5484, 0.05
          %v5741 = vmul.f32 %v5485, 0.05
          %v5742 = vmul.f32 %v5486, 0.05
          %v5743 = vmul.f32 %v5487, 0.05
          %v5744 = vmul.f32 %v5488, 0.05
          %v5745 = vmul.f32 %v5489, 0.05
          %v5746 = vmul.f32 %v5490, 0.05
          %v5747 = vmul.f32 %v5491, 0.05
          %v5748 = vmul.f32 %v5492, 0.05
          %v5749 = vmul.f32 %v5493, 0.05
          %v5750 = vmul.f32 %v5494, 0.05
          %v5751 = vmul.f32 %v5495, 0.05
          %v5752 = vmul.f32 %v5496, 0.05
          %v5753 = vmul.f32 %v5497, 0.05
          %v5754 = vmul.f32 %v5498, 0.05
          %v5755 = vmul.f32 %v5499, 0.05
          %v5756 = vmul.f32 %v5500, 0.05
          %v5757 = vmul.f32 %v5501, 0.05
          %v5758 = vmul.f32 %v5502, 0.05
          %v5759 = vmul.f32 %v5503, 0.05
          %v5760 = vmul.f32 %v5504, 0.05
          %v5761 = vmul.f32 %v5505, 0.05
          %v5762 = vmul.f32 %v5506, 0.05
          %v5763 = vmul.f32 %v5507, 0.05
          %v5764 = vmul.f32 %v5508, 0.05
          %v5765 = vmul.f32 %v5509, 0.05
          %v5766 = vmul.f32 %v5510, 0.05
          %v5767 = vmul.f32 %v5511, 0.05
          %v5768 = vmul.f32 %v5512, 0.05
          %v5769 = vmul.f32 %v5513, 0.05
          %v5770 = vmul.f32 %v5514, 0.05
          %v5771 = vmul.f32 %v5515, 0.05
          %v5772 = vmul.f32 %v5516, 0.05
          %v5773 = vmul.f32 %v5517, 0.05
          %v5774 = vmul.f32 %v5518, 0.05
          %v5775 = vmul.f32 %v5519, 0.05
          %v5776 = vmul.f32 %v5520, 0.05
          %v5777 = vmul.f32 %v5521, 0.05
          %v5778 = vmul.f32 %v5522, 0.05
          %v5779 = vmul.f32 %v5523, 0.05
          %v5780 = vmul.f32 %v5524, 0.05
          %v5781 = vmul.f32 %v5525, 0.05
          %v5782 = vmul.f32 %v5526, 0.05
          %v5783 = vmul.f32 %v5527, 0.05
          %v5784 = vmul.f32 %v5528, 0.05
          %v5785 = vmul.f32 %v5529, 0.05
          %v5786 = vmul.f32 %v5530, 0.05
          %v5787 = vmul.f32 %v5531, 0.05
          %v5788 = vmul.f32 %v5532, 0.05
          %v5789 = vmul.f32 %v5533, 0.05
          %v5790 = vmul.f32 %v5534, 0.05
          %v5791 = vmul.f32 %v5535, 0.05
          %v5792 = vmul.f32 %v5536, 0.05
          %v5793 = vmul.f32 %v5537, 0.05
          %v5794 = vmul.f32 %v5538, 0.05
          %v5795 = vmul.f32 %v5539, 0.05
          %v5796 = vmul.f32 %v5540, 0.05
          %v5797 = vmul.f32 %v5541, 0.05
          %v5798 = vmul.f32 %v5542, 0.05
          %v5799 = vmul.f32 %v5543, 0.05
          %v5800 = vmul.f32 %v5544, 0.05
          %v5801 = vmul.f32 %v5545, 0.05
          %v5802 = vmul.f32 %v5546, 0.05
          %v5803 = vmul.f32 %v5547, 0.05
          %v5804 = vmul.f32 %v5548, 0.05
          %v5805 = vmul.f32 %v5549, 0.05
          %v5806 = vmul.f32 %v5550, 0.05
          %v5807 = vmul.f32 %v5551, 0.05
          %v5808 = vmul.f32 %v5552, 0.05
          %v5809 = vmul.f32 %v5553, 0.05
          %v5810 = vmul.f32 %v5554, 0.05
          %v5811 = vmul.f32 %v5555, 0.05
          %v5812 = vmul.f32 %v5556, 0.05
          %v5813 = vmul.f32 %v5557, 0.05
          %v5814 = vmul.f32 %v5558, 0.05
          %v5815 = vmul.f32 %v5559, 0.05
          %v5816 = vmul.f32 %v5560, 0.05
          %v5817 = vmul.f32 %v5561, 0.05
          %v5818 = vmul.f32 %v5562, 0.05
          %v5819 = vmul.f32 %v5563, 0.05
          %v5820 = vmul.f32 %v5564, 0.05
          %v5821 = vmul.f32 %v5565, 0.05
          %v5822 = vmul.f32 %v5566, 0.05
          %v5823 = vmul.f32 %v5567, 0.05
          %v5824 = vmul.f32 %v5568, 0.05
          %v5825 = vmul.f32 %v5569, 0.05
          %v5826 = vmul.f32 %v5570, 0.05
          %v5827 = vmul.f32 %v5571, 0.05
          %v5828 = vmul.f32 %v5572, 0.05
          %v5829 = vmul.f32 %v5573, 0.05
          %v5830 = vmul.f32 %v5574, 0.05
          %v5831 = vmul.f32 %v5575, 0.05
          %v5832 = vmul.f32 %v5576, 0.05
          %v5833 = vmul.f32 %v5577, 0.05
          %v5834 = vmul.f32 %v5578, 0.05
          %v5835 = vmul.f32 %v5579, 0.05
          %v5836 = vmul.f32 %v5580, 0.05
          %v5837 = vmul.f32 %v5581, 0.05
          %v5838 = vmul.f32 %v5582, 0.05
          %v5839 = vmul.f32 %v5583, 0.05
          %v5840 = vmul.f32 %v5584, 0.05
          %v5841 = vmul.f32 %v5585, 0.05
          %v5842 = vmul.f32 %v5586, 0.05
          %v5843 = vmul.f32 %v5587, 0.05
          %v5844 = vmul.f32 %v5588, 0.05
          %v5845 = vmul.f32 %v5589, 0.05
          %v5846 = vmul.f32 %v5590, 0.05
          %v5847 = vmul.f32 %v5591, 0.05
          %v5848 = vmul.f32 %v5592, 0.05
          %v5849 = vmul.f32 %v5593, 0.05
          %v5850 = vmul.f32 %v5594, 0.05
          %v5851 = vmul.f32 %v5595, 0.05
          %v5852 = vmul.f32 %v5596, 0.05
          %v5853 = vmul.f32 %v5597, 0.05
          %v5854 = vmul.f32 %v5598, 0.05
          %v5855 = vmul.f32 %v5599, 0.05
          %v5856 = vmul.f32 %v5600, 0.05
          %v5857 = vmul.f32 %v5601, 0.05
          %v5858 = vmul.f32 %v5602, 0.05
          %v5859 = vmul.f32 %v5603, 0.05
          %v5860 = vmul.f32 %v5604, 0.05
          %v5861 = vmul.f32 %v5605, 0.05
          %v5862 = vmul.f32 %v5606, 0.05
          %v5863 = vmul.f32 %v5607, 0.05
          %v5864 = vmul.f32 %v5608, 0.05
          %v5865 = vmul.f32 %v5609, 0.05
          %v5866 = vmul.f32 %v5610, 0.05
          %v5867 = vmul.f32 %v5611, 0.05
          %v5868 = vmul.f32 %v5612, 0.05
          %v5869 = vmul.f32 %v5613, 0.05
          %v5870 = vmul.f32 %v5614, 0.05
          %v5871 = vmul.f32 %v5615, 0.05
          %v5872 = vmul.f32 %v5616, 0.05
          %v5873 = vmul.f32 %v5617, 0.05
          %v5874 = vmul.f32 %v5618, 0.05
          %v5875 = vmul.f32 %v5619, 0.05
          %v5876 = vmul.f32 %v5620, 0.05
          %v5877 = vmul.f32 %v5621, 0.05
          %v5878 = vmul.f32 %v5622, 0.05
          %v5879 = vmul.f32 %v5623, 0.05
          %v5880 = vmul.f32 %v5624, 0.05
          %v5881 = vmul.f32 %v5625, 0.05
          %v5882 = vmul.f32 %v5626, 0.05
          %v5883 = vmul.f32 %v5627, 0.05
          %v5884 = vmul.f32 %v5628, 0.05
          %v5885 = vmul.f32 %v5629, 0.05
          %v5886 = vmul.f32 %v5630, 0.05
          %v5887 = vmul.f32 %v5631, 0.05
          %v5888 = vmul.f32 %v5632, 0.05
          %v5889 = vmul.f32 %v5633, 0.05
          %v5890 = vmul.f32 %v5634, 0.05
          %v5891 = vmul.f32 %v5635, 0.05
          %v5892 = vmul.f32 %v5636, 0.05
          %v5893 = vmul.f32 %v5637, 0.05
          %v5894 = vmul.f32 %v5638, 0.05
          %v5895 = vmul.f32 %v5639, 0.05
          %v5896 = vmul.f32 %v5640, 0.05
          %v5897 = vmul.f32 %v5641, 0.05
          %v5898 = vmul.f32 %v5642, 0.05
          %v5899 = vmul.f32 %v5643, 0.05
          %v5900 = vmul.f32 %v5644, 0.05
          %v5901 = vmul.f32 %v5645, 0.05
          %v5902 = vmul.f32 %v5646, 0.05
          %v5903 = vmul.f32 %v5647, 0.05
          %v5904 = vmul.f32 %v5648, 0.05
          %v5905 = vmul.f32 %v5649, 0.05
          %v5906 = vmul.f32 %v5650, 0.05
          %v5907 = vmul.f32 %v5651, 0.05
          %v5908 = vmul.f32 %v5652, 0.05
          %v5909 = vmul.f32 %v5653, 0.05
          %v5910 = vmul.f32 %v5654, 0.05
          %v5911 = vmul.f32 %v5655, 0.05
          %v5912 = vmul.f32 %v5656, 0.05
          %v5913 = vmul.f32 %v5657, 0.05
          %v5914 = vmul.f32 %v5658, 0.05
          %v5915 = vmul.f32 %v5659, 0.05
          %v5916 = vmul.f32 %v5660, 0.05
          %v5917 = vmul.f32 %v5661, 0.05
          %v5918 = vmul.f32 %v5662, 0.05
          %v5919 = vmul.f32 %v5663, 0.05
          %v5920 = vmul.f32 %v5664, 0.05
          %v5921 = vmul.f32 %v5665, 0.05
          %v5922 = vmul.f32 %v5666, 0.05
          %v5923 = vmul.f32 %v5667, 0.05
          %v5924 = vmul.f32 %v5668, 0.05
          %v5925 = vmul.f32 %v5669, 0.05
          %v5926 = vmul.f32 %v5670, 0.05
          %v5927 = vmul.f32 %v5671, 0.05
          %v5928 = vmul.f32 %v5672, 0.05
          %v5929 = vmul.f32 %v5673, 0.05
          %v5930 = vmul.f32 %v5674, 0.05
          %v5931 = vmul.f32 %v5675, 0.05
          %v5932 = vmul.f32 %v5676, 0.05
          %v5933 = vmul.f32 %v5677, 0.05
          %v5934 = vmul.f32 %v5678, 0.05
          %v5935 = vmul.f32 %v5679, 0.05
          %v5936 = vmul.f32 %v5680, 0.05
          %v5937 = vmul.f32 %v5681, 0.05
          %v5938 = vmul.f32 %v5682, 0.05
          %v5939 = vmul.f32 %v5683, 0.05
          %v5940 = vmul.f32 %v5684, 0.05
          %v5941 = vmul.f32 %v5685, 0.05
          %v5942 = vmul.f32 %v5686, 0.05
          %v5943 = vmul.f32 %v5687, 0.05
          %v5944 = vmul.f32 %v5688, 0.05
          %v5945 = vmul.f32 %v5689, 0.05
          %v5946 = vmul.f32 %v5690, 0.05
          %v5947 = vmul.f32 %v5691, 0.05
          %v5948 = vmul.f32 %v5692, 0.05
          %v5949 = vmul.f32 %v5693, 0.05
          %v5950 = vmul.f32 %v5694, 0.05
          %v5951 = vmul.f32 %v5695, 0.05
          %v5952 = vmul.f32 %v5696, 0.05
          %v5953 = vmul.f32 %v5697, 0.05
          %v5954 = vmul.f32 %v5698, 0.05
          %v5955 = vmul.f32 %v5699, 0.05
          %v5956 = vmul.f32 %v5700, 0.05
          %v5957 = vmul.f32 %v5701, 0.05
          %v5958 = vmul.f32 %v5702, 0.05
          %v5959 = vmul.f32 %v5703, 0.05
          %v5960 = vmul.f32 %v5704, 0.05
          %v5961 = vmul.f32 %v5705, 0.05
          %v5962 = vmul.f32 %v5706, 0.05
          %v5963 = vmul.f32 %v5707, 0.05
          %v5964 = vsub.f32 %v3755, %v5708
          %v5965 = vsub.f32 %v3756, %v5709
          %v5966 = vsub.f32 %v3757, %v5710
          %v5967 = vsub.f32 %v3758, %v5711
          %v5968 = vsub.f32 %v3759, %v5712
          %v5969 = vsub.f32 %v3760, %v5713
          %v5970 = vsub.f32 %v3761, %v5714
          %v5971 = vsub.f32 %v3762, %v5715
          %v5972 = vsub.f32 %v3763, %v5716
          %v5973 = vsub.f32 %v3764, %v5717
          %v5974 = vsub.f32 %v3765, %v5718
          %v5975 = vsub.f32 %v3766, %v5719
          %v5976 = vsub.f32 %v3767, %v5720
          %v5977 = vsub.f32 %v3768, %v5721
          %v5978 = vsub.f32 %v3769, %v5722
          %v5979 = vsub.f32 %v3770, %v5723
          %v5980 = vsub.f32 %v3771, %v5724
          %v5981 = vsub.f32 %v3772, %v5725
          %v5982 = vsub.f32 %v3773, %v5726
          %v5983 = vsub.f32 %v3774, %v5727
          %v5984 = vsub.f32 %v3775, %v5728
          %v5985 = vsub.f32 %v3776, %v5729
          %v5986 = vsub.f32 %v3777, %v5730
          %v5987 = vsub.f32 %v3778, %v5731
          %v5988 = vsub.f32 %v3779, %v5732
          %v5989 = vsub.f32 %v3780, %v5733
          %v5990 = vsub.f32 %v3781, %v5734
          %v5991 = vsub.f32 %v3782, %v5735
          %v5992 = vsub.f32 %v3783, %v5736
          %v5993 = vsub.f32 %v3784, %v5737
          %v5994 = vsub.f32 %v3785, %v5738
          %v5995 = vsub.f32 %v3786, %v5739
          %v5996 = vsub.f32 %v3787, %v5740
          %v5997 = vsub.f32 %v3788, %v5741
          %v5998 = vsub.f32 %v3789, %v5742
          %v5999 = vsub.f32 %v3790, %v5743
          %v6000 = vsub.f32 %v3791, %v5744
          %v6001 = vsub.f32 %v3792, %v5745
          %v6002 = vsub.f32 %v3793, %v5746
          %v6003 = vsub.f32 %v3794, %v5747
          %v6004 = vsub.f32 %v3795, %v5748
          %v6005 = vsub.f32 %v3796, %v5749
          %v6006 = vsub.f32 %v3797, %v5750
          %v6007 = vsub.f32 %v3798, %v5751
          %v6008 = vsub.f32 %v3799, %v5752
          %v6009 = vsub.f32 %v3800, %v5753
          %v6010 = vsub.f32 %v3801, %v5754
          %v6011 = vsub.f32 %v3802, %v5755
          %v6012 = vsub.f32 %v3803, %v5756
          %v6013 = vsub.f32 %v3804, %v5757
          %v6014 = vsub.f32 %v3805, %v5758
          %v6015 = vsub.f32 %v3806, %v5759
          %v6016 = vsub.f32 %v3807, %v5760
          %v6017 = vsub.f32 %v3808, %v5761
          %v6018 = vsub.f32 %v3809, %v5762
          %v6019 = vsub.f32 %v3810, %v5763
          %v6020 = vsub.f32 %v3811, %v5764
          %v6021 = vsub.f32 %v3812, %v5765
          %v6022 = vsub.f32 %v3813, %v5766
          %v6023 = vsub.f32 %v3814, %v5767
          %v6024 = vsub.f32 %v3815, %v5768
          %v6025 = vsub.f32 %v3816, %v5769
          %v6026 = vsub.f32 %v3817, %v5770
          %v6027 = vsub.f32 %v3818, %v5771
          %v6028 = vsub.f32 %v3819, %v5772
          %v6029 = vsub.f32 %v3820, %v5773
          %v6030 = vsub.f32 %v3821, %v5774
          %v6031 = vsub.f32 %v3822, %v5775
          %v6032 = vsub.f32 %v3823, %v5776
          %v6033 = vsub.f32 %v3824, %v5777
          %v6034 = vsub.f32 %v3825, %v5778
          %v6035 = vsub.f32 %v3826, %v5779
          %v6036 = vsub.f32 %v3827, %v5780
          %v6037 = vsub.f32 %v3828, %v5781
          %v6038 = vsub.f32 %v3829, %v5782
          %v6039 = vsub.f32 %v3830, %v5783
          %v6040 = vsub.f32 %v3831, %v5784
          %v6041 = vsub.f32 %v3832, %v5785
          %v6042 = vsub.f32 %v3833, %v5786
          %v6043 = vsub.f32 %v3834, %v5787
          %v6044 = vsub.f32 %v3835, %v5788
          %v6045 = vsub.f32 %v3836, %v5789
          %v6046 = vsub.f32 %v3837, %v5790
          %v6047 = vsub.f32 %v3838, %v5791
          %v6048 = vsub.f32 %v3839, %v5792
          %v6049 = vsub.f32 %v3840, %v5793
          %v6050 = vsub.f32 %v3841, %v5794
          %v6051 = vsub.f32 %v3842, %v5795
          %v6052 = vsub.f32 %v3843, %v5796
          %v6053 = vsub.f32 %v3844, %v5797
          %v6054 = vsub.f32 %v3845, %v5798
          %v6055 = vsub.f32 %v3846, %v5799
          %v6056 = vsub.f32 %v3847, %v5800
          %v6057 = vsub.f32 %v3848, %v5801
          %v6058 = vsub.f32 %v3849, %v5802
          %v6059 = vsub.f32 %v3850, %v5803
          %v6060 = vsub.f32 %v3851, %v5804
          %v6061 = vsub.f32 %v3852, %v5805
          %v6062 = vsub.f32 %v3853, %v5806
          %v6063 = vsub.f32 %v3854, %v5807
          %v6064 = vsub.f32 %v3855, %v5808
          %v6065 = vsub.f32 %v3856, %v5809
          %v6066 = vsub.f32 %v3857, %v5810
          %v6067 = vsub.f32 %v3858, %v5811
          %v6068 = vsub.f32 %v3859, %v5812
          %v6069 = vsub.f32 %v3860, %v5813
          %v6070 = vsub.f32 %v3861, %v5814
          %v6071 = vsub.f32 %v3862, %v5815
          %v6072 = vsub.f32 %v3863, %v5816
          %v6073 = vsub.f32 %v3864, %v5817
          %v6074 = vsub.f32 %v3865, %v5818
          %v6075 = vsub.f32 %v3866, %v5819
          %v6076 = vsub.f32 %v3867, %v5820
          %v6077 = vsub.f32 %v3868, %v5821
          %v6078 = vsub.f32 %v3869, %v5822
          %v6079 = vsub.f32 %v3870, %v5823
          %v6080 = vsub.f32 %v3871, %v5824
          %v6081 = vsub.f32 %v3872, %v5825
          %v6082 = vsub.f32 %v3873, %v5826
          %v6083 = vsub.f32 %v3874, %v5827
          %v6084 = vsub.f32 %v3875, %v5828
          %v6085 = vsub.f32 %v3876, %v5829
          %v6086 = vsub.f32 %v3877, %v5830
          %v6087 = vsub.f32 %v3878, %v5831
          %v6088 = vsub.f32 %v3879, %v5832
          %v6089 = vsub.f32 %v3880, %v5833
          %v6090 = vsub.f32 %v3881, %v5834
          %v6091 = vsub.f32 %v3882, %v5835
          %v6092 = vsub.f32 %v3883, %v5836
          %v6093 = vsub.f32 %v3884, %v5837
          %v6094 = vsub.f32 %v3885, %v5838
          %v6095 = vsub.f32 %v3886, %v5839
          %v6096 = vsub.f32 %v3887, %v5840
          %v6097 = vsub.f32 %v3888, %v5841
          %v6098 = vsub.f32 %v3889, %v5842
          %v6099 = vsub.f32 %v3890, %v5843
          %v6100 = vsub.f32 %v3891, %v5844
          %v6101 = vsub.f32 %v3892, %v5845
          %v6102 = vsub.f32 %v3893, %v5846
          %v6103 = vsub.f32 %v3894, %v5847
          %v6104 = vsub.f32 %v3895, %v5848
          %v6105 = vsub.f32 %v3896, %v5849
          %v6106 = vsub.f32 %v3897, %v5850
          %v6107 = vsub.f32 %v3898, %v5851
          %v6108 = vsub.f32 %v3899, %v5852
          %v6109 = vsub.f32 %v3900, %v5853
          %v6110 = vsub.f32 %v3901, %v5854
          %v6111 = vsub.f32 %v3902, %v5855
          %v6112 = vsub.f32 %v3903, %v5856
          %v6113 = vsub.f32 %v3904, %v5857
          %v6114 = vsub.f32 %v3905, %v5858
          %v6115 = vsub.f32 %v3906, %v5859
          %v6116 = vsub.f32 %v3907, %v5860
          %v6117 = vsub.f32 %v3908, %v5861
          %v6118 = vsub.f32 %v3909, %v5862
          %v6119 = vsub.f32 %v3910, %v5863
          %v6120 = vsub.f32 %v3911, %v5864
          %v6121 = vsub.f32 %v3912, %v5865
          %v6122 = vsub.f32 %v3913, %v5866
          %v6123 = vsub.f32 %v3914, %v5867
          %v6124 = vsub.f32 %v3915, %v5868
          %v6125 = vsub.f32 %v3916, %v5869
          %v6126 = vsub.f32 %v3917, %v5870
          %v6127 = vsub.f32 %v3918, %v5871
          %v6128 = vsub.f32 %v3919, %v5872
          %v6129 = vsub.f32 %v3920, %v5873
          %v6130 = vsub.f32 %v3921, %v5874
          %v6131 = vsub.f32 %v3922, %v5875
          %v6132 = vsub.f32 %v3923, %v5876
          %v6133 = vsub.f32 %v3924, %v5877
          %v6134 = vsub.f32 %v3925, %v5878
          %v6135 = vsub.f32 %v3926, %v5879
          %v6136 = vsub.f32 %v3927, %v5880
          %v6137 = vsub.f32 %v3928, %v5881
          %v6138 = vsub.f32 %v3929, %v5882
          %v6139 = vsub.f32 %v3930, %v5883
          %v6140 = vsub.f32 %v3931, %v5884
          %v6141 = vsub.f32 %v3932, %v5885
          %v6142 = vsub.f32 %v3933, %v5886
          %v6143 = vsub.f32 %v3934, %v5887
          %v6144 = vsub.f32 %v3935, %v5888
          %v6145 = vsub.f32 %v3936, %v5889
          %v6146 = vsub.f32 %v3937, %v5890
          %v6147 = vsub.f32 %v3938, %v5891
          %v6148 = vsub.f32 %v3939, %v5892
          %v6149 = vsub.f32 %v3940, %v5893
          %v6150 = vsub.f32 %v3941, %v5894
          %v6151 = vsub.f32 %v3942, %v5895
          %v6152 = vsub.f32 %v3943, %v5896
          %v6153 = vsub.f32 %v3944, %v5897
          %v6154 = vsub.f32 %v3945, %v5898
          %v6155 = vsub.f32 %v3946, %v5899
          %v6156 = vsub.f32 %v3947, %v5900
          %v6157 = vsub.f32 %v3948, %v5901
          %v6158 = vsub.f32 %v3949, %v5902
          %v6159 = vsub.f32 %v3950, %v5903
          %v6160 = vsub.f32 %v3951, %v5904
          %v6161 = vsub.f32 %v3952, %v5905
          %v6162 = vsub.f32 %v3953, %v5906
          %v6163 = vsub.f32 %v3954, %v5907
          %v6164 = vsub.f32 %v3955, %v5908
          %v6165 = vsub.f32 %v3956, %v5909
          %v6166 = vsub.f32 %v3957, %v5910
          %v6167 = vsub.f32 %v3958, %v5911
          %v6168 = vsub.f32 %v3959, %v5912
          %v6169 = vsub.f32 %v3960, %v5913
          %v6170 = vsub.f32 %v3961, %v5914
          %v6171 = vsub.f32 %v3962, %v5915
          %v6172 = vsub.f32 %v3963, %v5916
          %v6173 = vsub.f32 %v3964, %v5917
          %v6174 = vsub.f32 %v3965, %v5918
          %v6175 = vsub.f32 %v3966, %v5919
          %v6176 = vsub.f32 %v3967, %v5920
          %v6177 = vsub.f32 %v3968, %v5921
          %v6178 = vsub.f32 %v3969, %v5922
          %v6179 = vsub.f32 %v3970, %v5923
          %v6180 = vsub.f32 %v3971, %v5924
          %v6181 = vsub.f32 %v3972, %v5925
          %v6182 = vsub.f32 %v3973, %v5926
          %v6183 = vsub.f32 %v3974, %v5927
          %v6184 = vsub.f32 %v3975, %v5928
          %v6185 = vsub.f32 %v3976, %v5929
          %v6186 = vsub.f32 %v3977, %v5930
          %v6187 = vsub.f32 %v3978, %v5931
          %v6188 = vsub.f32 %v3979, %v5932
          %v6189 = vsub.f32 %v3980, %v5933
          %v6190 = vsub.f32 %v3981, %v5934
          %v6191 = vsub.f32 %v3982, %v5935
          %v6192 = vsub.f32 %v3983, %v5936
          %v6193 = vsub.f32 %v3984, %v5937
          %v6194 = vsub.f32 %v3985, %v5938
          %v6195 = vsub.f32 %v3986, %v5939
          %v6196 = vsub.f32 %v3987, %v5940
          %v6197 = vsub.f32 %v3988, %v5941
          %v6198 = vsub.f32 %v3989, %v5942
          %v6199 = vsub.f32 %v3990, %v5943
          %v6200 = vsub.f32 %v3991, %v5944
          %v6201 = vsub.f32 %v3992, %v5945
          %v6202 = vsub.f32 %v3993, %v5946
          %v6203 = vsub.f32 %v3994, %v5947
          %v6204 = vsub.f32 %v3995, %v5948
          %v6205 = vsub.f32 %v3996, %v5949
          %v6206 = vsub.f32 %v3997, %v5950
          %v6207 = vsub.f32 %v3998, %v5951
          %v6208 = vsub.f32 %v3999, %v5952
          %v6209 = vsub.f32 %v4000, %v5953
          %v6210 = vsub.f32 %v4001, %v5954
          %v6211 = vsub.f32 %v4002, %v5955
          %v6212 = vsub.f32 %v4003, %v5956
          %v6213 = vsub.f32 %v4004, %v5957
          %v6214 = vsub.f32 %v4005, %v5958
          %v6215 = vsub.f32 %v4006, %v5959
          %v6216 = vsub.f32 %v4007, %v5960
          %v6217 = vsub.f32 %v4008, %v5961
          %v6218 = vsub.f32 %v4009, %v5962
          %v6219 = vsub.f32 %v4010, %v5963
          %v6220 = vsub.f32 %v5964, %v1361
          %v6221 = vsub.f32 %v5965, %v1362
          %v6222 = vsub.f32 %v5966, %v1363
          %v6223 = vsub.f32 %v5967, %v1364
          %v6224 = vsub.f32 %v5968, %v1365
          %v6225 = vsub.f32 %v5969, %v1366
          %v6226 = vsub.f32 %v5970, %v1367
          %v6227 = vsub.f32 %v5971, %v1368
          %v6228 = vsub.f32 %v5972, %v1369
          %v6229 = vsub.f32 %v5973, %v1370
          %v6230 = vsub.f32 %v5974, %v1371
          %v6231 = vsub.f32 %v5975, %v1372
          %v6232 = vsub.f32 %v5976, %v1373
          %v6233 = vsub.f32 %v5977, %v1374
          %v6234 = vsub.f32 %v5978, %v1375
          %v6235 = vsub.f32 %v5979, %v1376
          %6236 = vst [vmem:[#allocation4] sm:$0xff] %v6220
          %6237 = vst [vmem:[#allocation4 + $0x8] sm:$0xff] %v6221
          %6238 = vst [vmem:[#allocation4 + $0x10] sm:$0xff] %v6222
          %6239 = vst [vmem:[#allocation4 + $0x18] sm:$0xff] %v6223
          %6240 = vst [vmem:[#allocation4 + $0x20] sm:$0xff] %v6224
          %6241 = vst [vmem:[#allocation4 + $0x28] sm:$0xff] %v6225
          %6242 = vst [vmem:[#allocation4 + $0x30] sm:$0xff] %v6226
          %6243 = vst [vmem:[#allocation4 + $0x38] sm:$0xff] %v6227
          %6244 = vst [vmem:[#allocation4 + $0x40] sm:$0xff] %v6228
          %6245 = vst [vmem:[#allocation4 + $0x48] sm:$0xff] %v6229
          %6246 = vst [vmem:[#allocation4 + $0x50] sm:$0xff] %v6230
          %6247 = vst [vmem:[#allocation4 + $0x58] sm:$0xff] %v6231
          %6248 = vst [vmem:[#allocation4 + $0x60] sm:$0xff] %v6232
          %6249 = vst [vmem:[#allocation4 + $0x68] sm:$0xff] %v6233
          %6250 = vst [vmem:[#allocation4 + $0x70] sm:$0xff] %v6234
          %6251 = vst [vmem:[#allocation4 + $0x78] sm:$0xff] %v6235
          %v6252 = vsub.f32 %v5980, %v3755
          %v6253 = vsub.f32 %v5981, %v3756
          %v6254 = vsub.f32 %v5982, %v3757
          %v6255 = vsub.f32 %v5983, %v3758
          %v6256 = vsub.f32 %v5984, %v3759
          %v6257 = vsub.f32 %v5985, %v3760
          %v6258 = vsub.f32 %v5986, %v3761
          %v6259 = vsub.f32 %v5987, %v3762
          %v6260 = vsub.f32 %v5988, %v3763
          %v6261 = vsub.f32 %v5989, %v3764
          %v6262 = vsub.f32 %v5990, %v3765
          %v6263 = vsub.f32 %v5991, %v3766
          %v6264 = vsub.f32 %v5992, %v3767
          %v6265 = vsub.f32 %v5993, %v3768
          %v6266 = vsub.f32 %v5994, %v3769
          %v6267 = vsub.f32 %v5995, %v3770
          %v6268 = vsub.f32 %v5996, %v3771
          %v6269 = vsub.f32 %v5997, %v3772
          %v6270 = vsub.f32 %v5998, %v3773
          %v6271 = vsub.f32 %v5999, %v3774
          %v6272 = vsub.f32 %v6000, %v3775
          %v6273 = vsub.f32 %v6001, %v3776
          %v6274 = vsub.f32 %v6002, %v3777
          %v6275 = vsub.f32 %v6003, %v3778
          %v6276 = vsub.f32 %v6004, %v3779
          %v6277 = vsub.f32 %v6005, %v3780
          %v6278 = vsub.f32 %v6006, %v3781
          %v6279 = vsub.f32 %v6007, %v3782
          %v6280 = vsub.f32 %v6008, %v3783
          %v6281 = vsub.f32 %v6009, %v3784
          %v6282 = vsub.f32 %v6010, %v3785
          %v6283 = vsub.f32 %v6011, %v3786
          %v6284 = vsub.f32 %v6012, %v3787
          %v6285 = vsub.f32 %v6013, %v3788
          %v6286 = vsub.f32 %v6014, %v3789
          %v6287 = vsub.f32 %v6015, %v3790
          %v6288 = vsub.f32 %v6016, %v3791
          %v6289 = vsub.f32 %v6017, %v3792
          %v6290 = vsub.f32 %v6018, %v3793
          %v6291 = vsub.f32 %v6019, %v3794
          %v6292 = vsub.f32 %v6020, %v3795
          %v6293 = vsub.f32 %v6021, %v3796
          %v6294 = vsub.f32 %v6022, %v3797
          %v6295 = vsub.f32 %v6023, %v3798
          %v6296 = vsub.f32 %v6024, %v3799
          %v6297 = vsub.f32 %v6025, %v3800
          %v6298 = vsub.f32 %v6026, %v3801
          %v6299 = vsub.f32 %v6027, %v3802
          %v6300 = vsub.f32 %v6028, %v3803
          %v6301 = vsub.f32 %v6029, %v3804
          %v6302 = vsub.f32 %v6030, %v3805
          %v6303 = vsub.f32 %v6031, %v3806
          %v6304 = vsub.f32 %v6032, %v3807
          %v6305 = vsub.f32 %v6033, %v3808
          %v6306 = vsub.f32 %v6034, %v3809
          %v6307 = vsub.f32 %v6035, %v3810
          %v6308 = vsub.f32 %v6036, %v3811
          %v6309 = vsub.f32 %v6037, %v3812
          %v6310 = vsub.f32 %v6038, %v3813
          %v6311 = vsub.f32 %v6039, %v3814
          %v6312 = vsub.f32 %v6040, %v3815
          %v6313 = vsub.f32 %v6041, %v3816
          %v6314 = vsub.f32 %v6042, %v3817
          %v6315 = vsub.f32 %v6043, %v3818
          %v6316 = vsub.f32 %v6044, %v3819
          %v6317 = vsub.f32 %v6045, %v3820
          %v6318 = vsub.f32 %v6046, %v3821
          %v6319 = vsub.f32 %v6047, %v3822
          %v6320 = vsub.f32 %v6048, %v3823
          %v6321 = vsub.f32 %v6049, %v3824
          %v6322 = vsub.f32 %v6050, %v3825
          %v6323 = vsub.f32 %v6051, %v3826
          %v6324 = vsub.f32 %v6052, %v3827
          %v6325 = vsub.f32 %v6053, %v3828
          %v6326 = vsub.f32 %v6054, %v3829
          %v6327 = vsub.f32 %v6055, %v3830
          %v6328 = vsub.f32 %v6056, %v3831
          %v6329 = vsub.f32 %v6057, %v3832
          %v6330 = vsub.f32 %v6058, %v3833
          %v6331 = vsub.f32 %v6059, %v3834
          %v6332 = vsub.f32 %v6060, %v3835
          %v6333 = vsub.f32 %v6061, %v3836
          %v6334 = vsub.f32 %v6062, %v3837
          %v6335 = vsub.f32 %v6063, %v3838
          %v6336 = vsub.f32 %v6064, %v3839
          %v6337 = vsub.f32 %v6065, %v3840
          %v6338 = vsub.f32 %v6066, %v3841
          %v6339 = vsub.f32 %v6067, %v3842
          %v6340 = vsub.f32 %v6068, %v3843
          %v6341 = vsub.f32 %v6069, %v3844
          %v6342 = vsub.f32 %v6070, %v3845
          %v6343 = vsub.f32 %v6071, %v3846
          %v6344 = vsub.f32 %v6072, %v3847
          %v6345 = vsub.f32 %v6073, %v3848
          %v6346 = vsub.f32 %v6074, %v3849
          %v6347 = vsub.f32 %v6075, %v3850
          %v6348 = vsub.f32 %v6076, %v3851
          %v6349 = vsub.f32 %v6077, %v3852
          %v6350 = vsub.f32 %v6078, %v3853
          %v6351 = vsub.f32 %v6079, %v3854
          %v6352 = vsub.f32 %v6080, %v3855
          %v6353 = vsub.f32 %v6081, %v3856
          %v6354 = vsub.f32 %v6082, %v3857
          %v6355 = vsub.f32 %v6083, %v3858
          %v6356 = vsub.f32 %v6084, %v3859
          %v6357 = vsub.f32 %v6085, %v3860
          %v6358 = vsub.f32 %v6086, %v3861
          %v6359 = vsub.f32 %v6087, %v3862
          %v6360 = vsub.f32 %v6088, %v3863
          %v6361 = vsub.f32 %v6089, %v3864
          %v6362 = vsub.f32 %v6090, %v3865
          %v6363 = vsub.f32 %v6091, %v3866
          %v6364 = vsub.f32 %v6092, %v3867
          %v6365 = vsub.f32 %v6093, %v3868
          %v6366 = vsub.f32 %v6094, %v3869
          %v6367 = vsub.f32 %v6095, %v3870
          %v6368 = vsub.f32 %v6096, %v3871
          %v6369 = vsub.f32 %v6097, %v3872
          %v6370 = vsub.f32 %v6098, %v3873
          %v6371 = vsub.f32 %v6099, %v3874
          %v6372 = vsub.f32 %v6100, %v3875
          %v6373 = vsub.f32 %v6101, %v3876
          %v6374 = vsub.f32 %v6102, %v3877
          %v6375 = vsub.f32 %v6103, %v3878
          %v6376 = vsub.f32 %v6104, %v3879
          %v6377 = vsub.f32 %v6105, %v3880
          %v6378 = vsub.f32 %v6106, %v3881
          %v6379 = vsub.f32 %v6107, %v3882
          %v6380 = vsub.f32 %v6108, %v3883
          %v6381 = vsub.f32 %v6109, %v3884
          %v6382 = vsub.f32 %v6110, %v3885
          %v6383 = vsub.f32 %v6111, %v3886
          %v6384 = vsub.f32 %v6112, %v3887
          %v6385 = vsub.f32 %v6113, %v3888
          %v6386 = vsub.f32 %v6114, %v3889
          %v6387 = vsub.f32 %v6115, %v3890
          %v6388 = vsub.f32 %v6116, %v3891
          %v6389 = vsub.f32 %v6117, %v3892
          %v6390 = vsub.f32 %v6118, %v3893
          %v6391 = vsub.f32 %v6119, %v3894
          %v6392 = vsub.f32 %v6120, %v3895
          %v6393 = vsub.f32 %v6121, %v3896
          %v6394 = vsub.f32 %v6122, %v3897
          %v6395 = vsub.f32 %v6123, %v3898
          %v6396 = vsub.f32 %v6124, %v3899
          %v6397 = vsub.f32 %v6125, %v3900
          %v6398 = vsub.f32 %v6126, %v3901
          %v6399 = vsub.f32 %v6127, %v3902
          %v6400 = vsub.f32 %v6128, %v3903
          %v6401 = vsub.f32 %v6129, %v3904
          %v6402 = vsub.f32 %v6130, %v3905
          %v6403 = vsub.f32 %v6131, %v3906
          %v6404 = vsub.f32 %v6132, %v3907
          %v6405 = vsub.f32 %v6133, %v3908
          %v6406 = vsub.f32 %v6134, %v3909
          %v6407 = vsub.f32 %v6135, %v3910
          %v6408 = vsub.f32 %v6136, %v3911
          %v6409 = vsub.f32 %v6137, %v3912
          %v6410 = vsub.f32 %v6138, %v3913
          %v6411 = vsub.f32 %v6139, %v3914
          %v6412 = vsub.f32 %v6140, %v3915
          %v6413 = vsub.f32 %v6141, %v3916
          %v6414 = vsub.f32 %v6142, %v3917
          %v6415 = vsub.f32 %v6143, %v3918
          %v6416 = vsub.f32 %v6144, %v3919
          %v6417 = vsub.f32 %v6145, %v3920
          %v6418 = vsub.f32 %v6146, %v3921
          %v6419 = vsub.f32 %v6147, %v3922
          %v6420 = vsub.f32 %v6148, %v3923
          %v6421 = vsub.f32 %v6149, %v3924
          %v6422 = vsub.f32 %v6150, %v3925
          %v6423 = vsub.f32 %v6151, %v3926
          %v6424 = vsub.f32 %v6152, %v3927
          %v6425 = vsub.f32 %v6153, %v3928
          %v6426 = vsub.f32 %v6154, %v3929
          %v6427 = vsub.f32 %v6155, %v3930
          %v6428 = vsub.f32 %v6156, %v3931
          %v6429 = vsub.f32 %v6157, %v3932
          %v6430 = vsub.f32 %v6158, %v3933
          %v6431 = vsub.f32 %v6159, %v3934
          %v6432 = vsub.f32 %v6160, %v3935
          %v6433 = vsub.f32 %v6161, %v3936
          %v6434 = vsub.f32 %v6162, %v3937
          %v6435 = vsub.f32 %v6163, %v3938
          %v6436 = vsub.f32 %v6164, %v3939
          %v6437 = vsub.f32 %v6165, %v3940
          %v6438 = vsub.f32 %v6166, %v3941
          %v6439 = vsub.f32 %v6167, %v3942
          %v6440 = vsub.f32 %v6168, %v3943
          %v6441 = vsub.f32 %v6169, %v3944
          %v6442 = vsub.f32 %v6170, %v3945
          %v6443 = vsub.f32 %v6171, %v3946
          %v6444 = vsub.f32 %v6172, %v3947
          %v6445 = vsub.f32 %v6173, %v3948
          %v6446 = vsub.f32 %v6174, %v3949
          %v6447 = vsub.f32 %v6175, %v3950
          %v6448 = vsub.f32 %v6176, %v3951
          %v6449 = vsub.f32 %v6177, %v3952
          %v6450 = vsub.f32 %v6178, %v3953
          %v6451 = vsub.f32 %v6179, %v3954
          %v6452 = vsub.f32 %v6180, %v3955
          %v6453 = vsub.f32 %v6181, %v3956
          %v6454 = vsub.f32 %v6182, %v3957
          %v6455 = vsub.f32 %v6183, %v3958
          %v6456 = vsub.f32 %v6184, %v3959
          %v6457 = vsub.f32 %v6185, %v3960
          %v6458 = vsub.f32 %v6186, %v3961
          %v6459 = vsub.f32 %v6187, %v3962
          %v6460 = vsub.f32 %v6188, %v3963
          %v6461 = vsub.f32 %v6189, %v3964
          %v6462 = vsub.f32 %v6190, %v3965
          %v6463 = vsub.f32 %v6191, %v3966
          %v6464 = vsub.f32 %v6192, %v3967
          %v6465 = vsub.f32 %v6193, %v3968
          %v6466 = vsub.f32 %v6194, %v3969
          %v6467 = vsub.f32 %v6195, %v3970
          %v6468 = vsub.f32 %v6196, %v3971
          %v6469 = vsub.f32 %v6197, %v3972
          %v6470 = vsub.f32 %v6198, %v3973
          %v6471 = vsub.f32 %v6199, %v3974
          %v6472 = vsub.f32 %v6200, %v3975
          %v6473 = vsub.f32 %v6201, %v3976
          %v6474 = vsub.f32 %v6202, %v3977
          %v6475 = vsub.f32 %v6203, %v3978
          %v6476 = vsub.f32 %v6204, %v3979
          %v6477 = vsub.f32 %v6205, %v3980
          %v6478 = vsub.f32 %v6206, %v3981
          %v6479 = vsub.f32 %v6207, %v3982
          %v6480 = vsub.f32 %v6208, %v3983
          %v6481 = vsub.f32 %v6209, %v3984
          %v6482 = vsub.f32 %v6210, %v3985
          %v6483 = vsub.f32 %v6211, %v3986
          %v6484 = vsub.f32 %v6212, %v3987
          %v6485 = vsub.f32 %v6213, %v3988
          %v6486 = vsub.f32 %v6214, %v3989
          %v6487 = vsub.f32 %v6215, %v3990
          %v6488 = vsub.f32 %v6216, %v3991
          %v6489 = vsub.f32 %v6217, %v3992
          %v6490 = vsub.f32 %v6218, %v3993
          %v6491 = vsub.f32 %v6219, %v3994
          %s6492 = scalar_lea.vmem [#allocation4], 128
          %6493 = vst [vmem:[%s6492] sm:$0xff] %v6252
          %6494 = vst [vmem:[%s6492 + $0x8] sm:$0xff] %v6253
          %6495 = vst [vmem:[%s6492 + $0x10] sm:$0xff] %v6254
          %6496 = vst [vmem:[%s6492 + $0x18] sm:$0xff] %v6255
          %6497 = vst [vmem:[%s6492 + $0x20] sm:$0xff] %v6256
          %6498 = vst [vmem:[%s6492 + $0x28] sm:$0xff] %v6257
          %6499 = vst [vmem:[%s6492 + $0x30] sm:$0xff] %v6258
          %6500 = vst [vmem:[%s6492 + $0x38] sm:$0xff] %v6259
          %6501 = vst [vmem:[%s6492 + $0x40] sm:$0xff] %v6260
          %6502 = vst [vmem:[%s6492 + $0x48] sm:$0xff] %v6261
          %6503 = vst [vmem:[%s6492 + $0x50] sm:$0xff] %v6262
          %6504 = vst [vmem:[%s6492 + $0x58] sm:$0xff] %v6263
          %6505 = vst [vmem:[%s6492 + $0x60] sm:$0xff] %v6264
          %6506 = vst [vmem:[%s6492 + $0x68] sm:$0xff] %v6265
          %6507 = vst [vmem:[%s6492 + $0x70] sm:$0xff] %v6266
          %6508 = vst [vmem:[%s6492 + $0x78] sm:$0xff] %v6267
          %6509 = vst [vmem:[%s6492 + $0x80] sm:$0xff] %v6268
          %6510 = vst [vmem:[%s6492 + $0x88] sm:$0xff] %v6269
          %6511 = vst [vmem:[%s6492 + $0x90] sm:$0xff] %v6270
          %6512 = vst [vmem:[%s6492 + $0x98] sm:$0xff] %v6271
          %6513 = vst [vmem:[%s6492 + $0xa0] sm:$0xff] %v6272
          %6514 = vst [vmem:[%s6492 + $0xa8] sm:$0xff] %v6273
          %6515 = vst [vmem:[%s6492 + $0xb0] sm:$0xff] %v6274
          %6516 = vst [vmem:[%s6492 + $0xb8] sm:$0xff] %v6275
          %6517 = vst [vmem:[%s6492 + $0xc0] sm:$0xff] %v6276
          %6518 = vst [vmem:[%s6492 + $0xc8] sm:$0xff] %v6277
          %6519 = vst [vmem:[%s6492 + $0xd0] sm:$0xff] %v6278
          %6520 = vst [vmem:[%s6492 + $0xd8] sm:$0xff] %v6279
          %6521 = vst [vmem:[%s6492 + $0xe0] sm:$0xff] %v6280
          %6522 = vst [vmem:[%s6492 + $0xe8] sm:$0xff] %v6281
          %6523 = vst [vmem:[%s6492 + $0xf0] sm:$0xff] %v6282
          %6524 = vst [vmem:[%s6492 + $0xf8] sm:$0xff] %v6283
          %6525 = vst [vmem:[%s6492 + $0x100] sm:$0xff] %v6284
          %6526 = vst [vmem:[%s6492 + $0x108] sm:$0xff] %v6285
          %6527 = vst [vmem:[%s6492 + $0x110] sm:$0xff] %v6286
          %6528 = vst [vmem:[%s6492 + $0x118] sm:$0xff] %v6287
          %6529 = vst [vmem:[%s6492 + $0x120] sm:$0xff] %v6288
          %6530 = vst [vmem:[%s6492 + $0x128] sm:$0xff] %v6289
          %6531 = vst [vmem:[%s6492 + $0x130] sm:$0xff] %v6290
          %6532 = vst [vmem:[%s6492 + $0x138] sm:$0xff] %v6291
          %6533 = vst [vmem:[%s6492 + $0x140] sm:$0xff] %v6292
          %6534 = vst [vmem:[%s6492 + $0x148] sm:$0xff] %v6293
          %6535 = vst [vmem:[%s6492 + $0x150] sm:$0xff] %v6294
          %6536 = vst [vmem:[%s6492 + $0x158] sm:$0xff] %v6295
          %6537 = vst [vmem:[%s6492 + $0x160] sm:$0xff] %v6296
          %6538 = vst [vmem:[%s6492 + $0x168] sm:$0xff] %v6297
          %6539 = vst [vmem:[%s6492 + $0x170] sm:$0xff] %v6298
          %6540 = vst [vmem:[%s6492 + $0x178] sm:$0xff] %v6299
          %6541 = vst [vmem:[%s6492 + $0x180] sm:$0xff] %v6300
          %6542 = vst [vmem:[%s6492 + $0x188] sm:$0xff] %v6301
          %6543 = vst [vmem:[%s6492 + $0x190] sm:$0xff] %v6302
          %6544 = vst [vmem:[%s6492 + $0x198] sm:$0xff] %v6303
          %6545 = vst [vmem:[%s6492 + $0x1a0] sm:$0xff] %v6304
          %6546 = vst [vmem:[%s6492 + $0x1a8] sm:$0xff] %v6305
          %6547 = vst [vmem:[%s6492 + $0x1b0] sm:$0xff] %v6306
          %6548 = vst [vmem:[%s6492 + $0x1b8] sm:$0xff] %v6307
          %6549 = vst [vmem:[%s6492 + $0x1c0] sm:$0xff] %v6308
          %6550 = vst [vmem:[%s6492 + $0x1c8] sm:$0xff] %v6309
          %6551 = vst [vmem:[%s6492 + $0x1d0] sm:$0xff] %v6310
          %6552 = vst [vmem:[%s6492 + $0x1d8] sm:$0xff] %v6311
          %6553 = vst [vmem:[%s6492 + $0x1e0] sm:$0xff] %v6312
          %6554 = vst [vmem:[%s6492 + $0x1e8] sm:$0xff] %v6313
          %6555 = vst [vmem:[%s6492 + $0x1f0] sm:$0xff] %v6314
          %6556 = vst [vmem:[%s6492 + $0x1f8] sm:$0xff] %v6315
          %6557 = vst [vmem:[%s6492 + $0x200] sm:$0xff] %v6316
          %6558 = vst [vmem:[%s6492 + $0x208] sm:$0xff] %v6317
          %6559 = vst [vmem:[%s6492 + $0x210] sm:$0xff] %v6318
          %6560 = vst [vmem:[%s6492 + $0x218] sm:$0xff] %v6319
          %6561 = vst [vmem:[%s6492 + $0x220] sm:$0xff] %v6320
          %6562 = vst [vmem:[%s6492 + $0x228] sm:$0xff] %v6321
          %6563 = vst [vmem:[%s6492 + $0x230] sm:$0xff] %v6322
          %6564 = vst [vmem:[%s6492 + $0x238] sm:$0xff] %v6323
          %6565 = vst [vmem:[%s6492 + $0x240] sm:$0xff] %v6324
          %6566 = vst [vmem:[%s6492 + $0x248] sm:$0xff] %v6325
          %6567 = vst [vmem:[%s6492 + $0x250] sm:$0xff] %v6326
          %6568 = vst [vmem:[%s6492 + $0x258] sm:$0xff] %v6327
          %6569 = vst [vmem:[%s6492 + $0x260] sm:$0xff] %v6328
          %6570 = vst [vmem:[%s6492 + $0x268] sm:$0xff] %v6329
          %6571 = vst [vmem:[%s6492 + $0x270] sm:$0xff] %v6330
          %6572 = vst [vmem:[%s6492 + $0x278] sm:$0xff] %v6331
          %6573 = vst [vmem:[%s6492 + $0x280] sm:$0xff] %v6332
          %6574 = vst [vmem:[%s6492 + $0x288] sm:$0xff] %v6333
          %6575 = vst [vmem:[%s6492 + $0x290] sm:$0xff] %v6334
          %6576 = vst [vmem:[%s6492 + $0x298] sm:$0xff] %v6335
          %6577 = vst [vmem:[%s6492 + $0x2a0] sm:$0xff] %v6336
          %6578 = vst [vmem:[%s6492 + $0x2a8] sm:$0xff] %v6337
          %6579 = vst [vmem:[%s6492 + $0x2b0] sm:$0xff] %v6338
          %6580 = vst [vmem:[%s6492 + $0x2b8] sm:$0xff] %v6339
          %6581 = vst [vmem:[%s6492 + $0x2c0] sm:$0xff] %v6340
          %6582 = vst [vmem:[%s6492 + $0x2c8] sm:$0xff] %v6341
          %6583 = vst [vmem:[%s6492 + $0x2d0] sm:$0xff] %v6342
          %6584 = vst [vmem:[%s6492 + $0x2d8] sm:$0xff] %v6343
          %6585 = vst [vmem:[%s6492 + $0x2e0] sm:$0xff] %v6344
          %6586 = vst [vmem:[%s6492 + $0x2e8] sm:$0xff] %v6345
          %6587 = vst [vmem:[%s6492 + $0x2f0] sm:$0xff] %v6346
          %6588 = vst [vmem:[%s6492 + $0x2f8] sm:$0xff] %v6347
          %6589 = vst [vmem:[%s6492 + $0x300] sm:$0xff] %v6348
          %6590 = vst [vmem:[%s6492 + $0x308] sm:$0xff] %v6349
          %6591 = vst [vmem:[%s6492 + $0x310] sm:$0xff] %v6350
          %6592 = vst [vmem:[%s6492 + $0x318] sm:$0xff] %v6351
          %6593 = vst [vmem:[%s6492 + $0x320] sm:$0xff] %v6352
          %6594 = vst [vmem:[%s6492 + $0x328] sm:$0xff] %v6353
          %6595 = vst [vmem:[%s6492 + $0x330] sm:$0xff] %v6354
          %6596 = vst [vmem:[%s6492 + $0x338] sm:$0xff] %v6355
          %6597 = vst [vmem:[%s6492 + $0x340] sm:$0xff] %v6356
          %6598 = vst [vmem:[%s6492 + $0x348] sm:$0xff] %v6357
          %6599 = vst [vmem:[%s6492 + $0x350] sm:$0xff] %v6358
          %6600 = vst [vmem:[%s6492 + $0x358] sm:$0xff] %v6359
          %6601 = vst [vmem:[%s6492 + $0x360] sm:$0xff] %v6360
          %6602 = vst [vmem:[%s6492 + $0x368] sm:$0xff] %v6361
          %6603 = vst [vmem:[%s6492 + $0x370] sm:$0xff] %v6362
          %6604 = vst [vmem:[%s6492 + $0x378] sm:$0xff] %v6363
          %6605 = vst [vmem:[%s6492 + $0x380] sm:$0xff] %v6364
          %6606 = vst [vmem:[%s6492 + $0x388] sm:$0xff] %v6365
          %6607 = vst [vmem:[%s6492 + $0x390] sm:$0xff] %v6366
          %6608 = vst [vmem:[%s6492 + $0x398] sm:$0xff] %v6367
          %6609 = vst [vmem:[%s6492 + $0x3a0] sm:$0xff] %v6368
          %6610 = vst [vmem:[%s6492 + $0x3a8] sm:$0xff] %v6369
          %6611 = vst [vmem:[%s6492 + $0x3b0] sm:$0xff] %v6370
          %6612 = vst [vmem:[%s6492 + $0x3b8] sm:$0xff] %v6371
          %6613 = vst [vmem:[%s6492 + $0x3c0] sm:$0xff] %v6372
          %6614 = vst [vmem:[%s6492 + $0x3c8] sm:$0xff] %v6373
          %6615 = vst [vmem:[%s6492 + $0x3d0] sm:$0xff] %v6374
          %6616 = vst [vmem:[%s6492 + $0x3d8] sm:$0xff] %v6375
          %6617 = vst [vmem:[%s6492 + $0x3e0] sm:$0xff] %v6376
          %6618 = vst [vmem:[%s6492 + $0x3e8] sm:$0xff] %v6377
          %6619 = vst [vmem:[%s6492 + $0x3f0] sm:$0xff] %v6378
          %6620 = vst [vmem:[%s6492 + $0x3f8] sm:$0xff] %v6379
          %6621 = vst [vmem:[%s6492 + $0x400] sm:$0xff] %v6380
          %6622 = vst [vmem:[%s6492 + $0x408] sm:$0xff] %v6381
          %6623 = vst [vmem:[%s6492 + $0x410] sm:$0xff] %v6382
          %6624 = vst [vmem:[%s6492 + $0x418] sm:$0xff] %v6383
          %6625 = vst [vmem:[%s6492 + $0x420] sm:$0xff] %v6384
          %6626 = vst [vmem:[%s6492 + $0x428] sm:$0xff] %v6385
          %6627 = vst [vmem:[%s6492 + $0x430] sm:$0xff] %v6386
          %6628 = vst [vmem:[%s6492 + $0x438] sm:$0xff] %v6387
          %6629 = vst [vmem:[%s6492 + $0x440] sm:$0xff] %v6388
          %6630 = vst [vmem:[%s6492 + $0x448] sm:$0xff] %v6389
          %6631 = vst [vmem:[%s6492 + $0x450] sm:$0xff] %v6390
          %6632 = vst [vmem:[%s6492 + $0x458] sm:$0xff] %v6391
          %6633 = vst [vmem:[%s6492 + $0x460] sm:$0xff] %v6392
          %6634 = vst [vmem:[%s6492 + $0x468] sm:$0xff] %v6393
          %6635 = vst [vmem:[%s6492 + $0x470] sm:$0xff] %v6394
          %6636 = vst [vmem:[%s6492 + $0x478] sm:$0xff] %v6395
          %6637 = vst [vmem:[%s6492 + $0x480] sm:$0xff] %v6396
          %6638 = vst [vmem:[%s6492 + $0x488] sm:$0xff] %v6397
          %6639 = vst [vmem:[%s6492 + $0x490] sm:$0xff] %v6398
          %6640 = vst [vmem:[%s6492 + $0x498] sm:$0xff] %v6399
          %6641 = vst [vmem:[%s6492 + $0x4a0] sm:$0xff] %v6400
          %6642 = vst [vmem:[%s6492 + $0x4a8] sm:$0xff] %v6401
          %6643 = vst [vmem:[%s6492 + $0x4b0] sm:$0xff] %v6402
          %6644 = vst [vmem:[%s6492 + $0x4b8] sm:$0xff] %v6403
          %6645 = vst [vmem:[%s6492 + $0x4c0] sm:$0xff] %v6404
          %6646 = vst [vmem:[%s6492 + $0x4c8] sm:$0xff] %v6405
          %6647 = vst [vmem:[%s6492 + $0x4d0] sm:$0xff] %v6406
          %6648 = vst [vmem:[%s6492 + $0x4d8] sm:$0xff] %v6407
          %6649 = vst [vmem:[%s6492 + $0x4e0] sm:$0xff] %v6408
          %6650 = vst [vmem:[%s6492 + $0x4e8] sm:$0xff] %v6409
          %6651 = vst [vmem:[%s6492 + $0x4f0] sm:$0xff] %v6410
          %6652 = vst [vmem:[%s6492 + $0x4f8] sm:$0xff] %v6411
          %6653 = vst [vmem:[%s6492 + $0x500] sm:$0xff] %v6412
          %6654 = vst [vmem:[%s6492 + $0x508] sm:$0xff] %v6413
          %6655 = vst [vmem:[%s6492 + $0x510] sm:$0xff] %v6414
          %6656 = vst [vmem:[%s6492 + $0x518] sm:$0xff] %v6415
          %6657 = vst [vmem:[%s6492 + $0x520] sm:$0xff] %v6416
          %6658 = vst [vmem:[%s6492 + $0x528] sm:$0xff] %v6417
          %6659 = vst [vmem:[%s6492 + $0x530] sm:$0xff] %v6418
          %6660 = vst [vmem:[%s6492 + $0x538] sm:$0xff] %v6419
          %6661 = vst [vmem:[%s6492 + $0x540] sm:$0xff] %v6420
          %6662 = vst [vmem:[%s6492 + $0x548] sm:$0xff] %v6421
          %6663 = vst [vmem:[%s6492 + $0x550] sm:$0xff] %v6422
          %6664 = vst [vmem:[%s6492 + $0x558] sm:$0xff] %v6423
          %6665 = vst [vmem:[%s6492 + $0x560] sm:$0xff] %v6424
          %6666 = vst [vmem:[%s6492 + $0x568] sm:$0xff] %v6425
          %6667 = vst [vmem:[%s6492 + $0x570] sm:$0xff] %v6426
          %6668 = vst [vmem:[%s6492 + $0x578] sm:$0xff] %v6427
          %6669 = vst [vmem:[%s6492 + $0x580] sm:$0xff] %v6428
          %6670 = vst [vmem:[%s6492 + $0x588] sm:$0xff] %v6429
          %6671 = vst [vmem:[%s6492 + $0x590] sm:$0xff] %v6430
          %6672 = vst [vmem:[%s6492 + $0x598] sm:$0xff] %v6431
          %6673 = vst [vmem:[%s6492 + $0x5a0] sm:$0xff] %v6432
          %6674 = vst [vmem:[%s6492 + $0x5a8] sm:$0xff] %v6433
          %6675 = vst [vmem:[%s6492 + $0x5b0] sm:$0xff] %v6434
          %6676 = vst [vmem:[%s6492 + $0x5b8] sm:$0xff] %v6435
          %6677 = vst [vmem:[%s6492 + $0x5c0] sm:$0xff] %v6436
          %6678 = vst [vmem:[%s6492 + $0x5c8] sm:$0xff] %v6437
          %6679 = vst [vmem:[%s6492 + $0x5d0] sm:$0xff] %v6438
          %6680 = vst [vmem:[%s6492 + $0x5d8] sm:$0xff] %v6439
          %6681 = vst [vmem:[%s6492 + $0x5e0] sm:$0xff] %v6440
          %6682 = vst [vmem:[%s6492 + $0x5e8] sm:$0xff] %v6441
          %6683 = vst [vmem:[%s6492 + $0x5f0] sm:$0xff] %v6442
          %6684 = vst [vmem:[%s6492 + $0x5f8] sm:$0xff] %v6443
          %6685 = vst [vmem:[%s6492 + $0x600] sm:$0xff] %v6444
          %6686 = vst [vmem:[%s6492 + $0x608] sm:$0xff] %v6445
          %6687 = vst [vmem:[%s6492 + $0x610] sm:$0xff] %v6446
          %6688 = vst [vmem:[%s6492 + $0x618] sm:$0xff] %v6447
          %6689 = vst [vmem:[%s6492 + $0x620] sm:$0xff] %v6448
          %6690 = vst [vmem:[%s6492 + $0x628] sm:$0xff] %v6449
          %6691 = vst [vmem:[%s6492 + $0x630] sm:$0xff] %v6450
          %6692 = vst [vmem:[%s6492 + $0x638] sm:$0xff] %v6451
          %6693 = vst [vmem:[%s6492 + $0x640] sm:$0xff] %v6452
          %6694 = vst [vmem:[%s6492 + $0x648] sm:$0xff] %v6453
          %6695 = vst [vmem:[%s6492 + $0x650] sm:$0xff] %v6454
          %6696 = vst [vmem:[%s6492 + $0x658] sm:$0xff] %v6455
          %6697 = vst [vmem:[%s6492 + $0x660] sm:$0xff] %v6456
          %6698 = vst [vmem:[%s6492 + $0x668] sm:$0xff] %v6457
          %6699 = vst [vmem:[%s6492 + $0x670] sm:$0xff] %v6458
          %6700 = vst [vmem:[%s6492 + $0x678] sm:$0xff] %v6459
          %6701 = vst [vmem:[%s6492 + $0x680] sm:$0xff] %v6460
          %6702 = vst [vmem:[%s6492 + $0x688] sm:$0xff] %v6461
          %6703 = vst [vmem:[%s6492 + $0x690] sm:$0xff] %v6462
          %6704 = vst [vmem:[%s6492 + $0x698] sm:$0xff] %v6463
          %6705 = vst [vmem:[%s6492 + $0x6a0] sm:$0xff] %v6464
          %6706 = vst [vmem:[%s6492 + $0x6a8] sm:$0xff] %v6465
          %6707 = vst [vmem:[%s6492 + $0x6b0] sm:$0xff] %v6466
          %6708 = vst [vmem:[%s6492 + $0x6b8] sm:$0xff] %v6467
          %6709 = vst [vmem:[%s6492 + $0x6c0] sm:$0xff] %v6468
          %6710 = vst [vmem:[%s6492 + $0x6c8] sm:$0xff] %v6469
          %6711 = vst [vmem:[%s6492 + $0x6d0] sm:$0xff] %v6470
          %6712 = vst [vmem:[%s6492 + $0x6d8] sm:$0xff] %v6471
          %6713 = vst [vmem:[%s6492 + $0x6e0] sm:$0xff] %v6472
          %6714 = vst [vmem:[%s6492 + $0x6e8] sm:$0xff] %v6473
          %6715 = vst [vmem:[%s6492 + $0x6f0] sm:$0xff] %v6474
          %6716 = vst [vmem:[%s6492 + $0x6f8] sm:$0xff] %v6475
          %6717 = vst [vmem:[%s6492 + $0x700] sm:$0xff] %v6476
          %6718 = vst [vmem:[%s6492 + $0x708] sm:$0xff] %v6477
          %6719 = vst [vmem:[%s6492 + $0x710] sm:$0xff] %v6478
          %6720 = vst [vmem:[%s6492 + $0x718] sm:$0xff] %v6479
          %6721 = vst [vmem:[%s6492 + $0x720] sm:$0xff] %v6480
          %6722 = vst [vmem:[%s6492 + $0x728] sm:$0xff] %v6481
          %6723 = vst [vmem:[%s6492 + $0x730] sm:$0xff] %v6482
          %6724 = vst [vmem:[%s6492 + $0x738] sm:$0xff] %v6483
          %6725 = vst [vmem:[%s6492 + $0x740] sm:$0xff] %v6484
          %6726 = vst [vmem:[%s6492 + $0x748] sm:$0xff] %v6485
          %6727 = vst [vmem:[%s6492 + $0x750] sm:$0xff] %v6486
          %6728 = vst [vmem:[%s6492 + $0x758] sm:$0xff] %v6487
          %6729 = vst [vmem:[%s6492 + $0x760] sm:$0xff] %v6488
          %6730 = vst [vmem:[%s6492 + $0x768] sm:$0xff] %v6489
          %6731 = vst [vmem:[%s6492 + $0x770] sm:$0xff] %v6490
          %6732 = vst [vmem:[%s6492 + $0x778] sm:$0xff] %v6491
          %v6733 = vmul.f32 %v4011, %v4011
          %v6734 = vmul.f32 %v4012, %v4012
          %v6735 = vmul.f32 %v4013, %v4013
          %v6736 = vmul.f32 %v4014, %v4014
          %v6737 = vmul.f32 %v4015, %v4015
          %v6738 = vmul.f32 %v4016, %v4016
          %v6739 = vmul.f32 %v4017, %v4017
          %v6740 = vmul.f32 %v4018, %v4018
          %v6741 = vmul.f32 %v4019, %v4019
          %v6742 = vmul.f32 %v4020, %v4020
          %v6743 = vmul.f32 %v4021, %v4021
          %v6744 = vmul.f32 %v4022, %v4022
          %v6745 = vmul.f32 %v4023, %v4023
          %v6746 = vmul.f32 %v4024, %v4024
          %v6747 = vmul.f32 %v4025, %v4025
          %v6748 = vmul.f32 %v4026, %v4026
          %v6749 = vmul.f32 %v4027, %v4027
          %v6750 = vmul.f32 %v4028, %v4028
          %v6751 = vmul.f32 %v4029, %v4029
          %v6752 = vmul.f32 %v4030, %v4030
          %v6753 = vmul.f32 %v4031, %v4031
          %v6754 = vmul.f32 %v4032, %v4032
          %v6755 = vmul.f32 %v4033, %v4033
          %v6756 = vmul.f32 %v4034, %v4034
          %v6757 = vmul.f32 %v4035, %v4035
          %v6758 = vmul.f32 %v4036, %v4036
          %v6759 = vmul.f32 %v4037, %v4037
          %v6760 = vmul.f32 %v4038, %v4038
          %v6761 = vmul.f32 %v4039, %v4039
          %v6762 = vmul.f32 %v4040, %v4040
          %v6763 = vmul.f32 %v4041, %v4041
          %v6764 = vmul.f32 %v4042, %v4042
          %v6765 = vmul.f32 %v4043, %v4043
          %v6766 = vmul.f32 %v4044, %v4044
          %v6767 = vmul.f32 %v4045, %v4045
          %v6768 = vmul.f32 %v4046, %v4046
          %v6769 = vmul.f32 %v4047, %v4047
          %v6770 = vmul.f32 %v4048, %v4048
          %v6771 = vmul.f32 %v4049, %v4049
          %v6772 = vmul.f32 %v4050, %v4050
          %v6773 = vmul.f32 %v4051, %v4051
          %v6774 = vmul.f32 %v4052, %v4052
          %v6775 = vmul.f32 %v4053, %v4053
          %v6776 = vmul.f32 %v4054, %v4054
          %v6777 = vmul.f32 %v4055, %v4055
          %v6778 = vmul.f32 %v4056, %v4056
          %v6779 = vmul.f32 %v4057, %v4057
          %v6780 = vmul.f32 %v4058, %v4058
          %v6781 = vmul.f32 %v4059, %v4059
          %v6782 = vmul.f32 %v4060, %v4060
          %v6783 = vmul.f32 %v4061, %v4061
          %v6784 = vmul.f32 %v4062, %v4062
          %v6785 = vmul.f32 %v4063, %v4063
          %v6786 = vmul.f32 %v4064, %v4064
          %v6787 = vmul.f32 %v4065, %v4065
          %v6788 = vmul.f32 %v4066, %v4066
          %v6789 = vmul.f32 %v4067, %v4067
          %v6790 = vmul.f32 %v4068, %v4068
          %v6791 = vmul.f32 %v4069, %v4069
          %v6792 = vmul.f32 %v4070, %v4070
          %v6793 = vmul.f32 %v4071, %v4071
          %v6794 = vmul.f32 %v4072, %v4072
          %v6795 = vmul.f32 %v4073, %v4073
          %v6796 = vmul.f32 %v4074, %v4074
          %v6797 = vmul.f32 %v4075, %v4075
          %v6798 = vmul.f32 %v4076, %v4076
          %v6799 = vmul.f32 %v4077, %v4077
          %v6800 = vmul.f32 %v4078, %v4078
          %v6801 = vmul.f32 %v4079, %v4079
          %v6802 = vmul.f32 %v4080, %v4080
          %v6803 = vmul.f32 %v4081, %v4081
          %v6804 = vmul.f32 %v4082, %v4082
          %v6805 = vmul.f32 %v4083, %v4083
          %v6806 = vmul.f32 %v4084, %v4084
          %v6807 = vmul.f32 %v4085, %v4085
          %v6808 = vmul.f32 %v4086, %v4086
          %v6809 = vmul.f32 %v4087, %v4087
          %v6810 = vmul.f32 %v4088, %v4088
          %v6811 = vmul.f32 %v4089, %v4089
          %v6812 = vmul.f32 %v4090, %v4090
          %v6813 = vmul.f32 %v4091, %v4091
          %v6814 = vmul.f32 %v4092, %v4092
          %v6815 = vmul.f32 %v4093, %v4093
          %v6816 = vmul.f32 %v4094, %v4094
          %v6817 = vmul.f32 %v4095, %v4095
          %v6818 = vmul.f32 %v4096, %v4096
          %v6819 = vmul.f32 %v4097, %v4097
          %v6820 = vmul.f32 %v4098, %v4098
          %v6821 = vmul.f32 %v4099, %v4099
          %v6822 = vmul.f32 %v4100, %v4100
          %v6823 = vmul.f32 %v4101, %v4101
          %v6824 = vmul.f32 %v4102, %v4102
          %v6825 = vmul.f32 %v4103, %v4103
          %v6826 = vmul.f32 %v4104, %v4104
          %v6827 = vmul.f32 %v4105, %v4105
          %v6828 = vmul.f32 %v4106, %v4106
          %v6829 = vmul.f32 %v4107, %v4107
          %v6830 = vmul.f32 %v4108, %v4108
          %v6831 = vmul.f32 %v4109, %v4109
          %v6832 = vmul.f32 %v4110, %v4110
          %v6833 = vmul.f32 %v4111, %v4111
          %v6834 = vmul.f32 %v4112, %v4112
          %v6835 = vmul.f32 %v4113, %v4113
          %v6836 = vmul.f32 %v4114, %v4114
          %v6837 = vmul.f32 %v4115, %v4115
          %v6838 = vmul.f32 %v4116, %v4116
          %v6839 = vmul.f32 %v4117, %v4117
          %v6840 = vmul.f32 %v4118, %v4118
          %v6841 = vmul.f32 %v4119, %v4119
          %v6842 = vmul.f32 %v4120, %v4120
          %v6843 = vmul.f32 %v4121, %v4121
          %v6844 = vmul.f32 %v4122, %v4122
          %v6845 = vmul.f32 %v4123, %v4123
          %v6846 = vmul.f32 %v4124, %v4124
          %v6847 = vmul.f32 %v4125, %v4125
          %v6848 = vmul.f32 %v4126, %v4126
          %v6849 = vmul.f32 %v4127, %v4127
          %v6850 = vmul.f32 %v4128, %v4128
          %v6851 = vmul.f32 %v4129, %v4129
          %v6852 = vmul.f32 %v4130, %v4130
          %v6853 = vmul.f32 %v4131, %v4131
          %v6854 = vmul.f32 %v4132, %v4132
          %v6855 = vmul.f32 %v4133, %v4133
          %v6856 = vmul.f32 %v4134, %v4134
          %v6857 = vmul.f32 %v4135, %v4135
          %v6858 = vmul.f32 %v4136, %v4136
          %v6859 = vmul.f32 %v4137, %v4137
          %v6860 = vmul.f32 %v4138, %v4138
          %v6861 = vmul.f32 %v4139, %v4139
          %v6862 = vmul.f32 %v4140, %v4140
          %v6863 = vmul.f32 %v4141, %v4141
          %v6864 = vmul.f32 %v4142, %v4142
          %v6865 = vmul.f32 %v4143, %v4143
          %v6866 = vmul.f32 %v4144, %v4144
          %v6867 = vmul.f32 %v4145, %v4145
          %v6868 = vmul.f32 %v4146, %v4146
          %v6869 = vmul.f32 %v4147, %v4147
          %v6870 = vmul.f32 %v4148, %v4148
          %v6871 = vmul.f32 %v4149, %v4149
          %v6872 = vmul.f32 %v4150, %v4150
          %v6873 = vmul.f32 %v4151, %v4151
          %v6874 = vmul.f32 %v4152, %v4152
          %v6875 = vmul.f32 %v4153, %v4153
          %v6876 = vmul.f32 %v4154, %v4154
          %v6877 = vmul.f32 %v4155, %v4155
          %v6878 = vmul.f32 %v4156, %v4156
          %v6879 = vmul.f32 %v4157, %v4157
          %v6880 = vmul.f32 %v4158, %v4158
          %v6881 = vmul.f32 %v4159, %v4159
          %v6882 = vmul.f32 %v4160, %v4160
          %v6883 = vmul.f32 %v4161, %v4161
          %v6884 = vmul.f32 %v4162, %v4162
          %v6885 = vmul.f32 %v4163, %v4163
          %v6886 = vmul.f32 %v4164, %v4164
          %v6887 = vmul.f32 %v4165, %v4165
          %v6888 = vmul.f32 %v4166, %v4166
          %v6889 = vmul.f32 %v4167, %v4167
          %v6890 = vmul.f32 %v4168, %v4168
          %v6891 = vmul.f32 %v4169, %v4169
          %v6892 = vmul.f32 %v4170, %v4170
          %v6893 = vmul.f32 %v4171, %v4171
          %v6894 = vmul.f32 %v4172, %v4172
          %v6895 = vmul.f32 %v4173, %v4173
          %v6896 = vmul.f32 %v4174, %v4174
          %v6897 = vmul.f32 %v4175, %v4175
          %v6898 = vmul.f32 %v4176, %v4176
          %v6899 = vmul.f32 %v4177, %v4177
          %v6900 = vmul.f32 %v4178, %v4178
          %v6901 = vmul.f32 %v4179, %v4179
          %v6902 = vmul.f32 %v4180, %v4180
          %v6903 = vmul.f32 %v4181, %v4181
          %v6904 = vmul.f32 %v4182, %v4182
          %v6905 = vmul.f32 %v4183, %v4183
          %v6906 = vmul.f32 %v4184, %v4184
          %v6907 = vmul.f32 %v4185, %v4185
          %v6908 = vmul.f32 %v4186, %v4186
          %v6909 = vmul.f32 %v4187, %v4187
          %v6910 = vmul.f32 %v4188, %v4188
          %v6911 = vmul.f32 %v4189, %v4189
          %v6912 = vmul.f32 %v4190, %v4190
          %v6913 = vmul.f32 %v4191, %v4191
          %v6914 = vmul.f32 %v4192, %v4192
          %v6915 = vmul.f32 %v4193, %v4193
          %v6916 = vmul.f32 %v4194, %v4194
          %v6917 = vmul.f32 %v4195, %v4195
          %v6918 = vmul.f32 %v4196, %v4196
          %v6919 = vmul.f32 %v4197, %v4197
          %v6920 = vmul.f32 %v4198, %v4198
          %v6921 = vmul.f32 %v4199, %v4199
          %v6922 = vmul.f32 %v4200, %v4200
          %v6923 = vmul.f32 %v4201, %v4201
          %v6924 = vmul.f32 %v4202, %v4202
          %v6925 = vmul.f32 %v4203, %v4203
          %v6926 = vmul.f32 %v4204, %v4204
          %v6927 = vmul.f32 %v4205, %v4205
          %v6928 = vmul.f32 %v4206, %v4206
          %v6929 = vmul.f32 %v4207, %v4207
          %v6930 = vmul.f32 %v4208, %v4208
          %v6931 = vmul.f32 %v4209, %v4209
          %v6932 = vmul.f32 %v4210, %v4210
          %v6933 = vmul.f32 %v4211, %v4211
          %v6934 = vmul.f32 %v4212, %v4212
          %v6935 = vmul.f32 %v4213, %v4213
          %v6936 = vmul.f32 %v4214, %v4214
          %v6937 = vmul.f32 %v4215, %v4215
          %v6938 = vmul.f32 %v4216, %v4216
          %v6939 = vmul.f32 %v4217, %v4217
          %v6940 = vmul.f32 %v4218, %v4218
          %v6941 = vmul.f32 %v4219, %v4219
          %v6942 = vmul.f32 %v4220, %v4220
          %v6943 = vmul.f32 %v4221, %v4221
          %v6944 = vmul.f32 %v4222, %v4222
          %v6945 = vmul.f32 %v4223, %v4223
          %v6946 = vmul.f32 %v4224, %v4224
          %v6947 = vmul.f32 %v4225, %v4225
          %v6948 = vmul.f32 %v4226, %v4226
          %v6949 = vmul.f32 %v4227, %v4227
          %v6950 = vmul.f32 %v4228, %v4228
          %v6951 = vmul.f32 %v4229, %v4229
          %v6952 = vmul.f32 %v4230, %v4230
          %v6953 = vmul.f32 %v4231, %v4231
          %v6954 = vmul.f32 %v4232, %v4232
          %v6955 = vmul.f32 %v4233, %v4233
          %v6956 = vmul.f32 %v4234, %v4234
          %v6957 = vmul.f32 %v4235, %v4235
          %v6958 = vmul.f32 %v4236, %v4236
          %v6959 = vmul.f32 %v4237, %v4237
          %v6960 = vmul.f32 %v4238, %v4238
          %v6961 = vmul.f32 %v4239, %v4239
          %v6962 = vmul.f32 %v4240, %v4240
          %v6963 = vmul.f32 %v4241, %v4241
          %v6964 = vmul.f32 %v4242, %v4242
          %v6965 = vmul.f32 %v4243, %v4243
          %v6966 = vmul.f32 %v4244, %v4244
          %v6967 = vmul.f32 %v4245, %v4245
          %v6968 = vmul.f32 %v4246, %v4246
          %v6969 = vmul.f32 %v4247, %v4247
          %v6970 = vmul.f32 %v4248, %v4248
          %v6971 = vmul.f32 %v4249, %v4249
          %v6972 = vmul.f32 %v4250, %v4250
          %v6973 = vmul.f32 %v4251, %v4251
          %v6974 = vmul.f32 %v4252, %v4252
          %v6975 = vmul.f32 %v4253, %v4253
          %v6976 = vmul.f32 %v4254, %v4254
          %v6977 = vmul.f32 %v4255, %v4255
          %v6978 = vmul.f32 %v4256, %v4256
          %v6979 = vmul.f32 %v4257, %v4257
          %v6980 = vmul.f32 %v4258, %v4258
          %v6981 = vmul.f32 %v4259, %v4259
          %v6982 = vmul.f32 %v4260, %v4260
          %v6983 = vmul.f32 %v4261, %v4261
          %v6984 = vmul.f32 %v4262, %v4262
          %v6985 = vmul.f32 %v4263, %v4263
          %v6986 = vmul.f32 %v4264, %v4264
          %v6987 = vmul.f32 %v4265, %v4265
          %v6988 = vmul.f32 %v4266, %v4266
          %v6989 = vsub.f32 1.0, %v6733
          %v6990 = vsub.f32 1.0, %v6734
          %v6991 = vsub.f32 1.0, %v6735
          %v6992 = vsub.f32 1.0, %v6736
          %v6993 = vsub.f32 1.0, %v6737
          %v6994 = vsub.f32 1.0, %v6738
          %v6995 = vsub.f32 1.0, %v6739
          %v6996 = vsub.f32 1.0, %v6740
          %v6997 = vsub.f32 1.0, %v6741
          %v6998 = vsub.f32 1.0, %v6742
          %v6999 = vsub.f32 1.0, %v6743
          %v7000 = vsub.f32 1.0, %v6744
          %v7001 = vsub.f32 1.0, %v6745
          %v7002 = vsub.f32 1.0, %v6746
          %v7003 = vsub.f32 1.0, %v6747
          %v7004 = vsub.f32 1.0, %v6748
          %v7005 = vsub.f32 1.0, %v6749
          %v7006 = vsub.f32 1.0, %v6750
          %v7007 = vsub.f32 1.0, %v6751
          %v7008 = vsub.f32 1.0, %v6752
          %v7009 = vsub.f32 1.0, %v6753
          %v7010 = vsub.f32 1.0, %v6754
          %v7011 = vsub.f32 1.0, %v6755
          %v7012 = vsub.f32 1.0, %v6756
          %v7013 = vsub.f32 1.0, %v6757
          %v7014 = vsub.f32 1.0, %v6758
          %v7015 = vsub.f32 1.0, %v6759
          %v7016 = vsub.f32 1.0, %v6760
          %v7017 = vsub.f32 1.0, %v6761
          %v7018 = vsub.f32 1.0, %v6762
          %v7019 = vsub.f32 1.0, %v6763
          %v7020 = vsub.f32 1.0, %v6764
          %v7021 = vsub.f32 1.0, %v6765
          %v7022 = vsub.f32 1.0, %v6766
          %v7023 = vsub.f32 1.0, %v6767
          %v7024 = vsub.f32 1.0, %v6768
          %v7025 = vsub.f32 1.0, %v6769
          %v7026 = vsub.f32 1.0, %v6770
          %v7027 = vsub.f32 1.0, %v6771
          %v7028 = vsub.f32 1.0, %v6772
          %v7029 = vsub.f32 1.0, %v6773
          %v7030 = vsub.f32 1.0, %v6774
          %v7031 = vsub.f32 1.0, %v6775
          %v7032 = vsub.f32 1.0, %v6776
          %v7033 = vsub.f32 1.0, %v6777
          %v7034 = vsub.f32 1.0, %v6778
          %v7035 = vsub.f32 1.0, %v6779
          %v7036 = vsub.f32 1.0, %v6780
          %v7037 = vsub.f32 1.0, %v6781
          %v7038 = vsub.f32 1.0, %v6782
          %v7039 = vsub.f32 1.0, %v6783
          %v7040 = vsub.f32 1.0, %v6784
          %v7041 = vsub.f32 1.0, %v6785
          %v7042 = vsub.f32 1.0, %v6786
          %v7043 = vsub.f32 1.0, %v6787
          %v7044 = vsub.f32 1.0, %v6788
          %v7045 = vsub.f32 1.0, %v6789
          %v7046 = vsub.f32 1.0, %v6790
          %v7047 = vsub.f32 1.0, %v6791
          %v7048 = vsub.f32 1.0, %v6792
          %v7049 = vsub.f32 1.0, %v6793
          %v7050 = vsub.f32 1.0, %v6794
          %v7051 = vsub.f32 1.0, %v6795
          %v7052 = vsub.f32 1.0, %v6796
          %v7053 = vsub.f32 1.0, %v6797
          %v7054 = vsub.f32 1.0, %v6798
          %v7055 = vsub.f32 1.0, %v6799
          %v7056 = vsub.f32 1.0, %v6800
          %v7057 = vsub.f32 1.0, %v6801
          %v7058 = vsub.f32 1.0, %v6802
          %v7059 = vsub.f32 1.0, %v6803
          %v7060 = vsub.f32 1.0, %v6804
          %v7061 = vsub.f32 1.0, %v6805
          %v7062 = vsub.f32 1.0, %v6806
          %v7063 = vsub.f32 1.0, %v6807
          %v7064 = vsub.f32 1.0, %v6808
          %v7065 = vsub.f32 1.0, %v6809
          %v7066 = vsub.f32 1.0, %v6810
          %v7067 = vsub.f32 1.0, %v6811
          %v7068 = vsub.f32 1.0, %v6812
          %v7069 = vsub.f32 1.0, %v6813
          %v7070 = vsub.f32 1.0, %v6814
          %v7071 = vsub.f32 1.0, %v6815
          %v7072 = vsub.f32 1.0, %v6816
          %v7073 = vsub.f32 1.0, %v6817
          %v7074 = vsub.f32 1.0, %v6818
          %v7075 = vsub.f32 1.0, %v6819
          %v7076 = vsub.f32 1.0, %v6820
          %v7077 = vsub.f32 1.0, %v6821
          %v7078 = vsub.f32 1.0, %v6822
          %v7079 = vsub.f32 1.0, %v6823
          %v7080 = vsub.f32 1.0, %v6824
          %v7081 = vsub.f32 1.0, %v6825
          %v7082 = vsub.f32 1.0, %v6826
          %v7083 = vsub.f32 1.0, %v6827
          %v7084 = vsub.f32 1.0, %v6828
          %v7085 = vsub.f32 1.0, %v6829
          %v7086 = vsub.f32 1.0, %v6830
          %v7087 = vsub.f32 1.0, %v6831
          %v7088 = vsub.f32 1.0, %v6832
          %v7089 = vsub.f32 1.0, %v6833
          %v7090 = vsub.f32 1.0, %v6834
          %v7091 = vsub.f32 1.0, %v6835
          %v7092 = vsub.f32 1.0, %v6836
          %v7093 = vsub.f32 1.0, %v6837
          %v7094 = vsub.f32 1.0, %v6838
          %v7095 = vsub.f32 1.0, %v6839
          %v7096 = vsub.f32 1.0, %v6840
          %v7097 = vsub.f32 1.0, %v6841
          %v7098 = vsub.f32 1.0, %v6842
          %v7099 = vsub.f32 1.0, %v6843
          %v7100 = vsub.f32 1.0, %v6844
          %v7101 = vsub.f32 1.0, %v6845
          %v7102 = vsub.f32 1.0, %v6846
          %v7103 = vsub.f32 1.0, %v6847
          %v7104 = vsub.f32 1.0, %v6848
          %v7105 = vsub.f32 1.0, %v6849
          %v7106 = vsub.f32 1.0, %v6850
          %v7107 = vsub.f32 1.0, %v6851
          %v7108 = vsub.f32 1.0, %v6852
          %v7109 = vsub.f32 1.0, %v6853
          %v7110 = vsub.f32 1.0, %v6854
          %v7111 = vsub.f32 1.0, %v6855
          %v7112 = vsub.f32 1.0, %v6856
          %v7113 = vsub.f32 1.0, %v6857
          %v7114 = vsub.f32 1.0, %v6858
          %v7115 = vsub.f32 1.0, %v6859
          %v7116 = vsub.f32 1.0, %v6860
          %v7117 = vsub.f32 1.0, %v6861
          %v7118 = vsub.f32 1.0, %v6862
          %v7119 = vsub.f32 1.0, %v6863
          %v7120 = vsub.f32 1.0, %v6864
          %v7121 = vsub.f32 1.0, %v6865
          %v7122 = vsub.f32 1.0, %v6866
          %v7123 = vsub.f32 1.0, %v6867
          %v7124 = vsub.f32 1.0, %v6868
          %v7125 = vsub.f32 1.0, %v6869
          %v7126 = vsub.f32 1.0, %v6870
          %v7127 = vsub.f32 1.0, %v6871
          %v7128 = vsub.f32 1.0, %v6872
          %v7129 = vsub.f32 1.0, %v6873
          %v7130 = vsub.f32 1.0, %v6874
          %v7131 = vsub.f32 1.0, %v6875
          %v7132 = vsub.f32 1.0, %v6876
          %v7133 = vsub.f32 1.0, %v6877
          %v7134 = vsub.f32 1.0, %v6878
          %v7135 = vsub.f32 1.0, %v6879
          %v7136 = vsub.f32 1.0, %v6880
          %v7137 = vsub.f32 1.0, %v6881
          %v7138 = vsub.f32 1.0, %v6882
          %v7139 = vsub.f32 1.0, %v6883
          %v7140 = vsub.f32 1.0, %v6884
          %v7141 = vsub.f32 1.0, %v6885
          %v7142 = vsub.f32 1.0, %v6886
          %v7143 = vsub.f32 1.0, %v6887
          %v7144 = vsub.f32 1.0, %v6888
          %v7145 = vsub.f32 1.0, %v6889
          %v7146 = vsub.f32 1.0, %v6890
          %v7147 = vsub.f32 1.0, %v6891
          %v7148 = vsub.f32 1.0, %v6892
          %v7149 = vsub.f32 1.0, %v6893
          %v7150 = vsub.f32 1.0, %v6894
          %v7151 = vsub.f32 1.0, %v6895
          %v7152 = vsub.f32 1.0, %v6896
          %v7153 = vsub.f32 1.0, %v6897
          %v7154 = vsub.f32 1.0, %v6898
          %v7155 = vsub.f32 1.0, %v6899
          %v7156 = vsub.f32 1.0, %v6900
          %v7157 = vsub.f32 1.0, %v6901
          %v7158 = vsub.f32 1.0, %v6902
          %v7159 = vsub.f32 1.0, %v6903
          %v7160 = vsub.f32 1.0, %v6904
          %v7161 = vsub.f32 1.0, %v6905
          %v7162 = vsub.f32 1.0, %v6906
          %v7163 = vsub.f32 1.0, %v6907
          %v7164 = vsub.f32 1.0, %v6908
          %v7165 = vsub.f32 1.0, %v6909
          %v7166 = vsub.f32 1.0, %v6910
          %v7167 = vsub.f32 1.0, %v6911
          %v7168 = vsub.f32 1.0, %v6912
          %v7169 = vsub.f32 1.0, %v6913
          %v7170 = vsub.f32 1.0, %v6914
          %v7171 = vsub.f32 1.0, %v6915
          %v7172 = vsub.f32 1.0, %v6916
          %v7173 = vsub.f32 1.0, %v6917
          %v7174 = vsub.f32 1.0, %v6918
          %v7175 = vsub.f32 1.0, %v6919
          %v7176 = vsub.f32 1.0, %v6920
          %v7177 = vsub.f32 1.0, %v6921
          %v7178 = vsub.f32 1.0, %v6922
          %v7179 = vsub.f32 1.0, %v6923
          %v7180 = vsub.f32 1.0, %v6924
          %v7181 = vsub.f32 1.0, %v6925
          %v7182 = vsub.f32 1.0, %v6926
          %v7183 = vsub.f32 1.0, %v6927
          %v7184 = vsub.f32 1.0, %v6928
          %v7185 = vsub.f32 1.0, %v6929
          %v7186 = vsub.f32 1.0, %v6930
          %v7187 = vsub.f32 1.0, %v6931
          %v7188 = vsub.f32 1.0, %v6932
          %v7189 = vsub.f32 1.0, %v6933
          %v7190 = vsub.f32 1.0, %v6934
          %v7191 = vsub.f32 1.0, %v6935
          %v7192 = vsub.f32 1.0, %v6936
          %v7193 = vsub.f32 1.0, %v6937
          %v7194 = vsub.f32 1.0, %v6938
          %v7195 = vsub.f32 1.0, %v6939
          %v7196 = vsub.f32 1.0, %v6940
          %v7197 = vsub.f32 1.0, %v6941
          %v7198 = vsub.f32 1.0, %v6942
          %v7199 = vsub.f32 1.0, %v6943
          %v7200 = vsub.f32 1.0, %v6944
          %v7201 = vsub.f32 1.0, %v6945
          %v7202 = vsub.f32 1.0, %v6946
          %v7203 = vsub.f32 1.0, %v6947
          %v7204 = vsub.f32 1.0, %v6948
          %v7205 = vsub.f32 1.0, %v6949
          %v7206 = vsub.f32 1.0, %v6950
          %v7207 = vsub.f32 1.0, %v6951
          %v7208 = vsub.f32 1.0, %v6952
          %v7209 = vsub.f32 1.0, %v6953
          %v7210 = vsub.f32 1.0, %v6954
          %v7211 = vsub.f32 1.0, %v6955
          %v7212 = vsub.f32 1.0, %v6956
          %v7213 = vsub.f32 1.0, %v6957
          %v7214 = vsub.f32 1.0, %v6958
          %v7215 = vsub.f32 1.0, %v6959
          %v7216 = vsub.f32 1.0, %v6960
          %v7217 = vsub.f32 1.0, %v6961
          %v7218 = vsub.f32 1.0, %v6962
          %v7219 = vsub.f32 1.0, %v6963
          %v7220 = vsub.f32 1.0, %v6964
          %v7221 = vsub.f32 1.0, %v6965
          %v7222 = vsub.f32 1.0, %v6966
          %v7223 = vsub.f32 1.0, %v6967
          %v7224 = vsub.f32 1.0, %v6968
          %v7225 = vsub.f32 1.0, %v6969
          %v7226 = vsub.f32 1.0, %v6970
          %v7227 = vsub.f32 1.0, %v6971
          %v7228 = vsub.f32 1.0, %v6972
          %v7229 = vsub.f32 1.0, %v6973
          %v7230 = vsub.f32 1.0, %v6974
          %v7231 = vsub.f32 1.0, %v6975
          %v7232 = vsub.f32 1.0, %v6976
          %v7233 = vsub.f32 1.0, %v6977
          %v7234 = vsub.f32 1.0, %v6978
          %v7235 = vsub.f32 1.0, %v6979
          %v7236 = vsub.f32 1.0, %v6980
          %v7237 = vsub.f32 1.0, %v6981
          %v7238 = vsub.f32 1.0, %v6982
          %v7239 = vsub.f32 1.0, %v6983
          %v7240 = vsub.f32 1.0, %v6984
          %v7241 = vsub.f32 1.0, %v6985
          %v7242 = vsub.f32 1.0, %v6986
          %v7243 = vsub.f32 1.0, %v6987
          %v7244 = vsub.f32 1.0, %v6988
          %7245 = vst [vmem:[#allocation5] sm:$0xff] %v6989
          %7246 = vst [vmem:[#allocation5 + $0x8] sm:$0xff] %v6990
          %7247 = vst [vmem:[#allocation5 + $0x10] sm:$0xff] %v6991
          %7248 = vst [vmem:[#allocation5 + $0x18] sm:$0xff] %v6992
          %7249 = vst [vmem:[#allocation5 + $0x20] sm:$0xff] %v6993
          %7250 = vst [vmem:[#allocation5 + $0x28] sm:$0xff] %v6994
          %7251 = vst [vmem:[#allocation5 + $0x30] sm:$0xff] %v6995
          %7252 = vst [vmem:[#allocation5 + $0x38] sm:$0xff] %v6996
          %7253 = vst [vmem:[#allocation5 + $0x40] sm:$0xff] %v6997
          %7254 = vst [vmem:[#allocation5 + $0x48] sm:$0xff] %v6998
          %7255 = vst [vmem:[#allocation5 + $0x50] sm:$0xff] %v6999
          %7256 = vst [vmem:[#allocation5 + $0x58] sm:$0xff] %v7000
          %7257 = vst [vmem:[#allocation5 + $0x60] sm:$0xff] %v7001
          %7258 = vst [vmem:[#allocation5 + $0x68] sm:$0xff] %v7002
          %7259 = vst [vmem:[#allocation5 + $0x70] sm:$0xff] %v7003
          %7260 = vst [vmem:[#allocation5 + $0x78] sm:$0xff] %v7004
          %7261 = vst [vmem:[#allocation5 + $0x80] sm:$0xff] %v7005
          %7262 = vst [vmem:[#allocation5 + $0x88] sm:$0xff] %v7006
          %7263 = vst [vmem:[#allocation5 + $0x90] sm:$0xff] %v7007
          %7264 = vst [vmem:[#allocation5 + $0x98] sm:$0xff] %v7008
          %7265 = vst [vmem:[#allocation5 + $0xa0] sm:$0xff] %v7009
          %7266 = vst [vmem:[#allocation5 + $0xa8] sm:$0xff] %v7010
          %7267 = vst [vmem:[#allocation5 + $0xb0] sm:$0xff] %v7011
          %7268 = vst [vmem:[#allocation5 + $0xb8] sm:$0xff] %v7012
          %7269 = vst [vmem:[#allocation5 + $0xc0] sm:$0xff] %v7013
          %7270 = vst [vmem:[#allocation5 + $0xc8] sm:$0xff] %v7014
          %7271 = vst [vmem:[#allocation5 + $0xd0] sm:$0xff] %v7015
          %7272 = vst [vmem:[#allocation5 + $0xd8] sm:$0xff] %v7016
          %7273 = vst [vmem:[#allocation5 + $0xe0] sm:$0xff] %v7017
          %7274 = vst [vmem:[#allocation5 + $0xe8] sm:$0xff] %v7018
          %7275 = vst [vmem:[#allocation5 + $0xf0] sm:$0xff] %v7019
          %7276 = vst [vmem:[#allocation5 + $0xf8] sm:$0xff] %v7020
          %7277 = vst [vmem:[#allocation5 + $0x100] sm:$0xff] %v7021
          %7278 = vst [vmem:[#allocation5 + $0x108] sm:$0xff] %v7022
          %7279 = vst [vmem:[#allocation5 + $0x110] sm:$0xff] %v7023
          %7280 = vst [vmem:[#allocation5 + $0x118] sm:$0xff] %v7024
          %7281 = vst [vmem:[#allocation5 + $0x120] sm:$0xff] %v7025
          %7282 = vst [vmem:[#allocation5 + $0x128] sm:$0xff] %v7026
          %7283 = vst [vmem:[#allocation5 + $0x130] sm:$0xff] %v7027
          %7284 = vst [vmem:[#allocation5 + $0x138] sm:$0xff] %v7028
          %7285 = vst [vmem:[#allocation5 + $0x140] sm:$0xff] %v7029
          %7286 = vst [vmem:[#allocation5 + $0x148] sm:$0xff] %v7030
          %7287 = vst [vmem:[#allocation5 + $0x150] sm:$0xff] %v7031
          %7288 = vst [vmem:[#allocation5 + $0x158] sm:$0xff] %v7032
          %7289 = vst [vmem:[#allocation5 + $0x160] sm:$0xff] %v7033
          %7290 = vst [vmem:[#allocation5 + $0x168] sm:$0xff] %v7034
          %7291 = vst [vmem:[#allocation5 + $0x170] sm:$0xff] %v7035
          %7292 = vst [vmem:[#allocation5 + $0x178] sm:$0xff] %v7036
          %7293 = vst [vmem:[#allocation5 + $0x180] sm:$0xff] %v7037
          %7294 = vst [vmem:[#allocation5 + $0x188] sm:$0xff] %v7038
          %7295 = vst [vmem:[#allocation5 + $0x190] sm:$0xff] %v7039
          %7296 = vst [vmem:[#allocation5 + $0x198] sm:$0xff] %v7040
          %7297 = vst [vmem:[#allocation5 + $0x1a0] sm:$0xff] %v7041
          %7298 = vst [vmem:[#allocation5 + $0x1a8] sm:$0xff] %v7042
          %7299 = vst [vmem:[#allocation5 + $0x1b0] sm:$0xff] %v7043
          %7300 = vst [vmem:[#allocation5 + $0x1b8] sm:$0xff] %v7044
          %7301 = vst [vmem:[#allocation5 + $0x1c0] sm:$0xff] %v7045
          %7302 = vst [vmem:[#allocation5 + $0x1c8] sm:$0xff] %v7046
          %7303 = vst [vmem:[#allocation5 + $0x1d0] sm:$0xff] %v7047
          %7304 = vst [vmem:[#allocation5 + $0x1d8] sm:$0xff] %v7048
          %7305 = vst [vmem:[#allocation5 + $0x1e0] sm:$0xff] %v7049
          %7306 = vst [vmem:[#allocation5 + $0x1e8] sm:$0xff] %v7050
          %7307 = vst [vmem:[#allocation5 + $0x1f0] sm:$0xff] %v7051
          %7308 = vst [vmem:[#allocation5 + $0x1f8] sm:$0xff] %v7052
          %7309 = vst [vmem:[#allocation5 + $0x200] sm:$0xff] %v7053
          %7310 = vst [vmem:[#allocation5 + $0x208] sm:$0xff] %v7054
          %7311 = vst [vmem:[#allocation5 + $0x210] sm:$0xff] %v7055
          %7312 = vst [vmem:[#allocation5 + $0x218] sm:$0xff] %v7056
          %7313 = vst [vmem:[#allocation5 + $0x220] sm:$0xff] %v7057
          %7314 = vst [vmem:[#allocation5 + $0x228] sm:$0xff] %v7058
          %7315 = vst [vmem:[#allocation5 + $0x230] sm:$0xff] %v7059
          %7316 = vst [vmem:[#allocation5 + $0x238] sm:$0xff] %v7060
          %7317 = vst [vmem:[#allocation5 + $0x240] sm:$0xff] %v7061
          %7318 = vst [vmem:[#allocation5 + $0x248] sm:$0xff] %v7062
          %7319 = vst [vmem:[#allocation5 + $0x250] sm:$0xff] %v7063
          %7320 = vst [vmem:[#allocation5 + $0x258] sm:$0xff] %v7064
          %7321 = vst [vmem:[#allocation5 + $0x260] sm:$0xff] %v7065
          %7322 = vst [vmem:[#allocation5 + $0x268] sm:$0xff] %v7066
          %7323 = vst [vmem:[#allocation5 + $0x270] sm:$0xff] %v7067
          %7324 = vst [vmem:[#allocation5 + $0x278] sm:$0xff] %v7068
          %7325 = vst [vmem:[#allocation5 + $0x280] sm:$0xff] %v7069
          %7326 = vst [vmem:[#allocation5 + $0x288] sm:$0xff] %v7070
          %7327 = vst [vmem:[#allocation5 + $0x290] sm:$0xff] %v7071
          %7328 = vst [vmem:[#allocation5 + $0x298] sm:$0xff] %v7072
          %7329 = vst [vmem:[#allocation5 + $0x2a0] sm:$0xff] %v7073
          %7330 = vst [vmem:[#allocation5 + $0x2a8] sm:$0xff] %v7074
          %7331 = vst [vmem:[#allocation5 + $0x2b0] sm:$0xff] %v7075
          %7332 = vst [vmem:[#allocation5 + $0x2b8] sm:$0xff] %v7076
          %7333 = vst [vmem:[#allocation5 + $0x2c0] sm:$0xff] %v7077
          %7334 = vst [vmem:[#allocation5 + $0x2c8] sm:$0xff] %v7078
          %7335 = vst [vmem:[#allocation5 + $0x2d0] sm:$0xff] %v7079
          %7336 = vst [vmem:[#allocation5 + $0x2d8] sm:$0xff] %v7080
          %7337 = vst [vmem:[#allocation5 + $0x2e0] sm:$0xff] %v7081
          %7338 = vst [vmem:[#allocation5 + $0x2e8] sm:$0xff] %v7082
          %7339 = vst [vmem:[#allocation5 + $0x2f0] sm:$0xff] %v7083
          %7340 = vst [vmem:[#allocation5 + $0x2f8] sm:$0xff] %v7084
          %7341 = vst [vmem:[#allocation5 + $0x300] sm:$0xff] %v7085
          %7342 = vst [vmem:[#allocation5 + $0x308] sm:$0xff] %v7086
          %7343 = vst [vmem:[#allocation5 + $0x310] sm:$0xff] %v7087
          %7344 = vst [vmem:[#allocation5 + $0x318] sm:$0xff] %v7088
          %7345 = vst [vmem:[#allocation5 + $0x320] sm:$0xff] %v7089
          %7346 = vst [vmem:[#allocation5 + $0x328] sm:$0xff] %v7090
          %7347 = vst [vmem:[#allocation5 + $0x330] sm:$0xff] %v7091
          %7348 = vst [vmem:[#allocation5 + $0x338] sm:$0xff] %v7092
          %7349 = vst [vmem:[#allocation5 + $0x340] sm:$0xff] %v7093
          %7350 = vst [vmem:[#allocation5 + $0x348] sm:$0xff] %v7094
          %7351 = vst [vmem:[#allocation5 + $0x350] sm:$0xff] %v7095
          %7352 = vst [vmem:[#allocation5 + $0x358] sm:$0xff] %v7096
          %7353 = vst [vmem:[#allocation5 + $0x360] sm:$0xff] %v7097
          %7354 = vst [vmem:[#allocation5 + $0x368] sm:$0xff] %v7098
          %7355 = vst [vmem:[#allocation5 + $0x370] sm:$0xff] %v7099
          %7356 = vst [vmem:[#allocation5 + $0x378] sm:$0xff] %v7100
          %7357 = vst [vmem:[#allocation5 + $0x380] sm:$0xff] %v7101
          %7358 = vst [vmem:[#allocation5 + $0x388] sm:$0xff] %v7102
          %7359 = vst [vmem:[#allocation5 + $0x390] sm:$0xff] %v7103
          %7360 = vst [vmem:[#allocation5 + $0x398] sm:$0xff] %v7104
          %7361 = vst [vmem:[#allocation5 + $0x3a0] sm:$0xff] %v7105
          %7362 = vst [vmem:[#allocation5 + $0x3a8] sm:$0xff] %v7106
          %7363 = vst [vmem:[#allocation5 + $0x3b0] sm:$0xff] %v7107
          %7364 = vst [vmem:[#allocation5 + $0x3b8] sm:$0xff] %v7108
          %7365 = vst [vmem:[#allocation5 + $0x3c0] sm:$0xff] %v7109
          %7366 = vst [vmem:[#allocation5 + $0x3c8] sm:$0xff] %v7110
          %7367 = vst [vmem:[#allocation5 + $0x3d0] sm:$0xff] %v7111
          %7368 = vst [vmem:[#allocation5 + $0x3d8] sm:$0xff] %v7112
          %7369 = vst [vmem:[#allocation5 + $0x3e0] sm:$0xff] %v7113
          %7370 = vst [vmem:[#allocation5 + $0x3e8] sm:$0xff] %v7114
          %7371 = vst [vmem:[#allocation5 + $0x3f0] sm:$0xff] %v7115
          %7372 = vst [vmem:[#allocation5 + $0x3f8] sm:$0xff] %v7116
          %7373 = vst [vmem:[#allocation5 + $0x400] sm:$0xff] %v7117
          %7374 = vst [vmem:[#allocation5 + $0x408] sm:$0xff] %v7118
          %7375 = vst [vmem:[#allocation5 + $0x410] sm:$0xff] %v7119
          %7376 = vst [vmem:[#allocation5 + $0x418] sm:$0xff] %v7120
          %7377 = vst [vmem:[#allocation5 + $0x420] sm:$0xff] %v7121
          %7378 = vst [vmem:[#allocation5 + $0x428] sm:$0xff] %v7122
          %7379 = vst [vmem:[#allocation5 + $0x430] sm:$0xff] %v7123
          %7380 = vst [vmem:[#allocation5 + $0x438] sm:$0xff] %v7124
          %7381 = vst [vmem:[#allocation5 + $0x440] sm:$0xff] %v7125
          %7382 = vst [vmem:[#allocation5 + $0x448] sm:$0xff] %v7126
          %7383 = vst [vmem:[#allocation5 + $0x450] sm:$0xff] %v7127
          %7384 = vst [vmem:[#allocation5 + $0x458] sm:$0xff] %v7128
          %7385 = vst [vmem:[#allocation5 + $0x460] sm:$0xff] %v7129
          %7386 = vst [vmem:[#allocation5 + $0x468] sm:$0xff] %v7130
          %7387 = vst [vmem:[#allocation5 + $0x470] sm:$0xff] %v7131
          %7388 = vst [vmem:[#allocation5 + $0x478] sm:$0xff] %v7132
          %7389 = vst [vmem:[#allocation5 + $0x480] sm:$0xff] %v7133
          %7390 = vst [vmem:[#allocation5 + $0x488] sm:$0xff] %v7134
          %7391 = vst [vmem:[#allocation5 + $0x490] sm:$0xff] %v7135
          %7392 = vst [vmem:[#allocation5 + $0x498] sm:$0xff] %v7136
          %7393 = vst [vmem:[#allocation5 + $0x4a0] sm:$0xff] %v7137
          %7394 = vst [vmem:[#allocation5 + $0x4a8] sm:$0xff] %v7138
          %7395 = vst [vmem:[#allocation5 + $0x4b0] sm:$0xff] %v7139
          %7396 = vst [vmem:[#allocation5 + $0x4b8] sm:$0xff] %v7140
          %7397 = vst [vmem:[#allocation5 + $0x4c0] sm:$0xff] %v7141
          %7398 = vst [vmem:[#allocation5 + $0x4c8] sm:$0xff] %v7142
          %7399 = vst [vmem:[#allocation5 + $0x4d0] sm:$0xff] %v7143
          %7400 = vst [vmem:[#allocation5 + $0x4d8] sm:$0xff] %v7144
          %7401 = vst [vmem:[#allocation5 + $0x4e0] sm:$0xff] %v7145
          %7402 = vst [vmem:[#allocation5 + $0x4e8] sm:$0xff] %v7146
          %7403 = vst [vmem:[#allocation5 + $0x4f0] sm:$0xff] %v7147
          %7404 = vst [vmem:[#allocation5 + $0x4f8] sm:$0xff] %v7148
          %7405 = vst [vmem:[#allocation5 + $0x500] sm:$0xff] %v7149
          %7406 = vst [vmem:[#allocation5 + $0x508] sm:$0xff] %v7150
          %7407 = vst [vmem:[#allocation5 + $0x510] sm:$0xff] %v7151
          %7408 = vst [vmem:[#allocation5 + $0x518] sm:$0xff] %v7152
          %7409 = vst [vmem:[#allocation5 + $0x520] sm:$0xff] %v7153
          %7410 = vst [vmem:[#allocation5 + $0x528] sm:$0xff] %v7154
          %7411 = vst [vmem:[#allocation5 + $0x530] sm:$0xff] %v7155
          %7412 = vst [vmem:[#allocation5 + $0x538] sm:$0xff] %v7156
          %7413 = vst [vmem:[#allocation5 + $0x540] sm:$0xff] %v7157
          %7414 = vst [vmem:[#allocation5 + $0x548] sm:$0xff] %v7158
          %7415 = vst [vmem:[#allocation5 + $0x550] sm:$0xff] %v7159
          %7416 = vst [vmem:[#allocation5 + $0x558] sm:$0xff] %v7160
          %7417 = vst [vmem:[#allocation5 + $0x560] sm:$0xff] %v7161
          %7418 = vst [vmem:[#allocation5 + $0x568] sm:$0xff] %v7162
          %7419 = vst [vmem:[#allocation5 + $0x570] sm:$0xff] %v7163
          %7420 = vst [vmem:[#allocation5 + $0x578] sm:$0xff] %v7164
          %7421 = vst [vmem:[#allocation5 + $0x580] sm:$0xff] %v7165
          %7422 = vst [vmem:[#allocation5 + $0x588] sm:$0xff] %v7166
          %7423 = vst [vmem:[#allocation5 + $0x590] sm:$0xff] %v7167
          %7424 = vst [vmem:[#allocation5 + $0x598] sm:$0xff] %v7168
          %7425 = vst [vmem:[#allocation5 + $0x5a0] sm:$0xff] %v7169
          %7426 = vst [vmem:[#allocation5 + $0x5a8] sm:$0xff] %v7170
          %7427 = vst [vmem:[#allocation5 + $0x5b0] sm:$0xff] %v7171
          %7428 = vst [vmem:[#allocation5 + $0x5b8] sm:$0xff] %v7172
          %7429 = vst [vmem:[#allocation5 + $0x5c0] sm:$0xff] %v7173
          %7430 = vst [vmem:[#allocation5 + $0x5c8] sm:$0xff] %v7174
          %7431 = vst [vmem:[#allocation5 + $0x5d0] sm:$0xff] %v7175
          %7432 = vst [vmem:[#allocation5 + $0x5d8] sm:$0xff] %v7176
          %7433 = vst [vmem:[#allocation5 + $0x5e0] sm:$0xff] %v7177
          %7434 = vst [vmem:[#allocation5 + $0x5e8] sm:$0xff] %v7178
          %7435 = vst [vmem:[#allocation5 + $0x5f0] sm:$0xff] %v7179
          %7436 = vst [vmem:[#allocation5 + $0x5f8] sm:$0xff] %v7180
          %7437 = vst [vmem:[#allocation5 + $0x600] sm:$0xff] %v7181
          %7438 = vst [vmem:[#allocation5 + $0x608] sm:$0xff] %v7182
          %7439 = vst [vmem:[#allocation5 + $0x610] sm:$0xff] %v7183
          %7440 = vst [vmem:[#allocation5 + $0x618] sm:$0xff] %v7184
          %7441 = vst [vmem:[#allocation5 + $0x620] sm:$0xff] %v7185
          %7442 = vst [vmem:[#allocation5 + $0x628] sm:$0xff] %v7186
          %7443 = vst [vmem:[#allocation5 + $0x630] sm:$0xff] %v7187
          %7444 = vst [vmem:[#allocation5 + $0x638] sm:$0xff] %v7188
          %7445 = vst [vmem:[#allocation5 + $0x640] sm:$0xff] %v7189
          %7446 = vst [vmem:[#allocation5 + $0x648] sm:$0xff] %v7190
          %7447 = vst [vmem:[#allocation5 + $0x650] sm:$0xff] %v7191
          %7448 = vst [vmem:[#allocation5 + $0x658] sm:$0xff] %v7192
          %7449 = vst [vmem:[#allocation5 + $0x660] sm:$0xff] %v7193
          %7450 = vst [vmem:[#allocation5 + $0x668] sm:$0xff] %v7194
          %7451 = vst [vmem:[#allocation5 + $0x670] sm:$0xff] %v7195
          %7452 = vst [vmem:[#allocation5 + $0x678] sm:$0xff] %v7196
          %7453 = vst [vmem:[#allocation5 + $0x680] sm:$0xff] %v7197
          %7454 = vst [vmem:[#allocation5 + $0x688] sm:$0xff] %v7198
          %7455 = vst [vmem:[#allocation5 + $0x690] sm:$0xff] %v7199
          %7456 = vst [vmem:[#allocation5 + $0x698] sm:$0xff] %v7200
          %7457 = vst [vmem:[#allocation5 + $0x6a0] sm:$0xff] %v7201
          %7458 = vst [vmem:[#allocation5 + $0x6a8] sm:$0xff] %v7202
          %7459 = vst [vmem:[#allocation5 + $0x6b0] sm:$0xff] %v7203
          %7460 = vst [vmem:[#allocation5 + $0x6b8] sm:$0xff] %v7204
          %7461 = vst [vmem:[#allocation5 + $0x6c0] sm:$0xff] %v7205
          %7462 = vst [vmem:[#allocation5 + $0x6c8] sm:$0xff] %v7206
          %7463 = vst [vmem:[#allocation5 + $0x6d0] sm:$0xff] %v7207
          %7464 = vst [vmem:[#allocation5 + $0x6d8] sm:$0xff] %v7208
          %7465 = vst [vmem:[#allocation5 + $0x6e0] sm:$0xff] %v7209
          %7466 = vst [vmem:[#allocation5 + $0x6e8] sm:$0xff] %v7210
          %7467 = vst [vmem:[#allocation5 + $0x6f0] sm:$0xff] %v7211
          %7468 = vst [vmem:[#allocation5 + $0x6f8] sm:$0xff] %v7212
          %7469 = vst [vmem:[#allocation5 + $0x700] sm:$0xff] %v7213
          %7470 = vst [vmem:[#allocation5 + $0x708] sm:$0xff] %v7214
          %7471 = vst [vmem:[#allocation5 + $0x710] sm:$0xff] %v7215
          %7472 = vst [vmem:[#allocation5 + $0x718] sm:$0xff] %v7216
          %7473 = vst [vmem:[#allocation5 + $0x720] sm:$0xff] %v7217
          %7474 = vst [vmem:[#allocation5 + $0x728] sm:$0xff] %v7218
          %7475 = vst [vmem:[#allocation5 + $0x730] sm:$0xff] %v7219
          %7476 = vst [vmem:[#allocation5 + $0x738] sm:$0xff] %v7220
          %7477 = vst [vmem:[#allocation5 + $0x740] sm:$0xff] %v7221
          %7478 = vst [vmem:[#allocation5 + $0x748] sm:$0xff] %v7222
          %7479 = vst [vmem:[#allocation5 + $0x750] sm:$0xff] %v7223
          %7480 = vst [vmem:[#allocation5 + $0x758] sm:$0xff] %v7224
          %7481 = vst [vmem:[#allocation5 + $0x760] sm:$0xff] %v7225
          %7482 = vst [vmem:[#allocation5 + $0x768] sm:$0xff] %v7226
          %7483 = vst [vmem:[#allocation5 + $0x770] sm:$0xff] %v7227
          %7484 = vst [vmem:[#allocation5 + $0x778] sm:$0xff] %v7228
          %7485 = vst [vmem:[#allocation5 + $0x780] sm:$0xff] %v7229
          %7486 = vst [vmem:[#allocation5 + $0x788] sm:$0xff] %v7230
          %7487 = vst [vmem:[#allocation5 + $0x790] sm:$0xff] %v7231
          %7488 = vst [vmem:[#allocation5 + $0x798] sm:$0xff] %v7232
          %7489 = vst [vmem:[#allocation5 + $0x7a0] sm:$0xff] %v7233
          %7490 = vst [vmem:[#allocation5 + $0x7a8] sm:$0xff] %v7234
          %7491 = vst [vmem:[#allocation5 + $0x7b0] sm:$0xff] %v7235
          %7492 = vst [vmem:[#allocation5 + $0x7b8] sm:$0xff] %v7236
          %7493 = vst [vmem:[#allocation5 + $0x7c0] sm:$0xff] %v7237
          %7494 = vst [vmem:[#allocation5 + $0x7c8] sm:$0xff] %v7238
          %7495 = vst [vmem:[#allocation5 + $0x7d0] sm:$0xff] %v7239
          %7496 = vst [vmem:[#allocation5 + $0x7d8] sm:$0xff] %v7240
          %7497 = vst [vmem:[#allocation5 + $0x7e0] sm:$0xff] %v7241
          %7498 = vst [vmem:[#allocation5 + $0x7e8] sm:$0xff] %v7242
          %7499 = vst [vmem:[#allocation5 + $0x7f0] sm:$0xff] %v7243
          %7500 = vst [vmem:[#allocation5 + $0x7f8] sm:$0xff] %v7244
          loop: start=0, step=1, limit=16
          $region90: #{tpu_custom_call.1} parent=86 // loop_pre_header
            _
          $region91: #{tpu_custom_call.1} parent=86 // loop_header
            %s7502 = sphi 0, %s7506
            %p7503 = scmp.ge.s32.totalorder %s7502, 16
            %v7507 = vphi 0.0, %v7864
            %v7508 = vphi 0.0, %v7865
            %v7509 = vphi 0.0, %v7866
            %v7510 = vphi 0.0, %v7867
            %v7511 = vphi 0.0, %v7868
            %v7512 = vphi 0.0, %v7869
            %v7513 = vphi 0.0, %v7870
            %v7514 = vphi 0.0, %v7871
            %v7515 = vphi 0.0, %v7872
            %v7516 = vphi 0.0, %v7873
            %v7517 = vphi 0.0, %v7874
            %v7518 = vphi 0.0, %v7875
            %v7519 = vphi 0.0, %v7876
            %v7520 = vphi 0.0, %v7877
            %v7521 = vphi 0.0, %v7878
            %v7522 = vphi 0.0, %v7879
          $region92: #{tpu_custom_call.1} parent=86 // loop_header_branch
            %7505 = sbr.rel (%p7503) target = $region96
          $region93: #{tpu_custom_call.1} parent=86 // loop_body
            %s7523 = smul.u32 %s7502, 128
            %s7524 = scalar_lea.vmem [#allocation4], %s7523
            %v7525 = vld [vmem:[%s7524] sm:$0xff]
            %v7526 = vld [vmem:[%s7524 + $0x8] sm:$0xff]
            %v7527 = vld [vmem:[%s7524 + $0x10] sm:$0xff]
            %v7528 = vld [vmem:[%s7524 + $0x18] sm:$0xff]
            %v7529 = vld [vmem:[%s7524 + $0x20] sm:$0xff]
            %v7530 = vld [vmem:[%s7524 + $0x28] sm:$0xff]
            %v7531 = vld [vmem:[%s7524 + $0x30] sm:$0xff]
            %v7532 = vld [vmem:[%s7524 + $0x38] sm:$0xff]
            %v7533 = vld [vmem:[%s7524 + $0x40] sm:$0xff]
            %v7534 = vld [vmem:[%s7524 + $0x48] sm:$0xff]
            %v7535 = vld [vmem:[%s7524 + $0x50] sm:$0xff]
            %v7536 = vld [vmem:[%s7524 + $0x58] sm:$0xff]
            %v7537 = vld [vmem:[%s7524 + $0x60] sm:$0xff]
            %v7538 = vld [vmem:[%s7524 + $0x68] sm:$0xff]
            %v7539 = vld [vmem:[%s7524 + $0x70] sm:$0xff]
            %v7540 = vld [vmem:[%s7524 + $0x78] sm:$0xff]
            %v7541 = vadd.f32 %v7525, %v7507
            %v7542 = vadd.f32 %v7526, %v7508
            %v7543 = vadd.f32 %v7527, %v7509
            %v7544 = vadd.f32 %v7528, %v7510
            %v7545 = vadd.f32 %v7529, %v7511
            %v7546 = vadd.f32 %v7530, %v7512
            %v7547 = vadd.f32 %v7531, %v7513
            %v7548 = vadd.f32 %v7532, %v7514
            %v7549 = vadd.f32 %v7533, %v7515
            %v7550 = vadd.f32 %v7534, %v7516
            %v7551 = vadd.f32 %v7535, %v7517
            %v7552 = vadd.f32 %v7536, %v7518
            %v7553 = vadd.f32 %v7537, %v7519
            %v7554 = vadd.f32 %v7538, %v7520
            %v7555 = vadd.f32 %v7539, %v7521
            %v7556 = vadd.f32 %v7540, %v7522
            %s7557 = scalar_lea.vmem [#allocation5], %s7523
            %v7558 = vld [vmem:[%s7557] sm:$0xff]
            %v7559 = vld [vmem:[%s7557 + $0x8] sm:$0xff]
            %v7560 = vld [vmem:[%s7557 + $0x10] sm:$0xff]
            %v7561 = vld [vmem:[%s7557 + $0x18] sm:$0xff]
            %v7562 = vld [vmem:[%s7557 + $0x20] sm:$0xff]
            %v7563 = vld [vmem:[%s7557 + $0x28] sm:$0xff]
            %v7564 = vld [vmem:[%s7557 + $0x30] sm:$0xff]
            %v7565 = vld [vmem:[%s7557 + $0x38] sm:$0xff]
            %v7566 = vld [vmem:[%s7557 + $0x40] sm:$0xff]
            %v7567 = vld [vmem:[%s7557 + $0x48] sm:$0xff]
            %v7568 = vld [vmem:[%s7557 + $0x50] sm:$0xff]
            %v7569 = vld [vmem:[%s7557 + $0x58] sm:$0xff]
            %v7570 = vld [vmem:[%s7557 + $0x60] sm:$0xff]
            %v7571 = vld [vmem:[%s7557 + $0x68] sm:$0xff]
            %v7572 = vld [vmem:[%s7557 + $0x70] sm:$0xff]
            %v7573 = vld [vmem:[%s7557 + $0x78] sm:$0xff]
            %v7574 = vmul.f32 %v7558, %v7541
            %v7575 = vmul.f32 %v7559, %v7542
            %v7576 = vmul.f32 %v7560, %v7543
            %v7577 = vmul.f32 %v7561, %v7544
            %v7578 = vmul.f32 %v7562, %v7545
            %v7579 = vmul.f32 %v7563, %v7546
            %v7580 = vmul.f32 %v7564, %v7547
            %v7581 = vmul.f32 %v7565, %v7548
            %v7582 = vmul.f32 %v7566, %v7549
            %v7583 = vmul.f32 %v7567, %v7550
            %v7584 = vmul.f32 %v7568, %v7551
            %v7585 = vmul.f32 %v7569, %v7552
            %v7586 = vmul.f32 %v7570, %v7553
            %v7587 = vmul.f32 %v7571, %v7554
            %v7588 = vmul.f32 %v7572, %v7555
            %v7589 = vmul.f32 %v7573, %v7556
            %v7590 = vpack.c.bf16 %v7575, %v7574
            %v7591 = vpack.c.bf16 %v7577, %v7576
            %v7592 = vpack.c.bf16 %v7579, %v7578
            %v7593 = vpack.c.bf16 %v7581, %v7580
            %v7594 = vpack.c.bf16 %v7583, %v7582
            %v7595 = vpack.c.bf16 %v7585, %v7584
            %v7596 = vpack.c.bf16 %v7587, %v7586
            %v7597 = vpack.c.bf16 %v7589, %v7588
            %7598 = vmatprep.subr.bf16.mxu0 0
            %7599 = vmatpush1.bf16.msra.mxu0 %v1400
            %7600 = vmatprep.subr.bf16.mxu0 0
            %7601 = vmatpush1.bf16.msra.mxu0 %v1399
            %7602 = vmatprep.subr.bf16.mxu0 0
            %7603 = vmatpush1.bf16.msra.mxu0 %v1398
            %7604 = vmatprep.subr.bf16.mxu0 0
            %7605 = vmatpush1.bf16.msra.mxu0 %v1397
            %7606 = vmatprep.subr.bf16.mxu0 0
            %7607 = vmatpush1.bf16.msra.mxu0 %v1396
            %7608 = vmatprep.subr.bf16.mxu0 0
            %7609 = vmatpush1.bf16.msra.mxu0 %v1395
            %7610 = vmatprep.subr.bf16.mxu0 0
            %7611 = vmatpush1.bf16.msra.mxu0 %v1394
            %7612 = vmatprep.subr.bf16.mxu0 0
            %7613 = vmatpush1.bf16.msra.mxu0 %v1393
            %7614 = vmatprep.subr.bf16.mxu0 0
            %7615 = vmatpush2.bf16.msra.mxu0 0
            %7616 = vmatprep.subr.bf16.mxu0 0
            %7617 = vmatpush2.bf16.msra.mxu0 0
            %7618 = vmatprep.subr.bf16.mxu0 0
            %7619 = vmatpush2.bf16.msra.mxu0 0
            %7620 = vmatprep.subr.bf16.mxu0 0
            %7621 = vmatpush2.bf16.msra.mxu0 0
            %7622 = vmatprep.subr.bf16.mxu0 0
            %7623 = vmatpush2.bf16.msra.mxu0 0
            %7624 = vmatprep.subr.bf16.mxu0 0
            %7625 = vmatpush2.bf16.msra.mxu0 0
            %7626 = vmatprep.subr.bf16.mxu0 0
            %7627 = vmatpush2.bf16.msra.mxu0 0
            %7628 = vmatprep.subr.bf16.mxu0 0
            %7629 = vmatpush2.bf16.msra.mxu0 0
            %7630 = vmatprep.mubr.bf16.mxu0 0
            %7631 = vmatmul.mubr.bf16.gmra.mxu0 %v7590
            %v7632 = vpop.f32.mrf.mxu0
            %v7633 = vadd.f32 0.0, %v7632
            %v7634 = vpop.f32.mrf.mxu0
            %v7635 = vpop.f32.mrf.mxu0
            %v7636 = vadd.f32 0.0, %v7635
            %v7637 = vpop.f32.mrf.mxu0
            %7638 = vmatprep.mubr.bf16.mxu0 0
            %7639 = vmatmul.mubr.bf16.gmra.mxu0 %v7591
            %v7640 = vpop.f32.mrf.mxu0
            %v7641 = vadd.f32 0.0, %v7640
            %v7642 = vpop.f32.mrf.mxu0
            %v7643 = vpop.f32.mrf.mxu0
            %v7644 = vadd.f32 0.0, %v7643
            %v7645 = vpop.f32.mrf.mxu0
            %7646 = vmatprep.mubr.bf16.mxu0 0
            %7647 = vmatmul.mubr.bf16.gmra.mxu0 %v7592
            %v7648 = vpop.f32.mrf.mxu0
            %v7649 = vadd.f32 0.0, %v7648
            %v7650 = vpop.f32.mrf.mxu0
            %v7651 = vpop.f32.mrf.mxu0
            %v7652 = vadd.f32 0.0, %v7651
            %v7653 = vpop.f32.mrf.mxu0
            %7654 = vmatprep.mubr.bf16.mxu0 0
            %7655 = vmatmul.mubr.bf16.gmra.mxu0 %v7593
            %v7656 = vpop.f32.mrf.mxu0
            %v7657 = vadd.f32 0.0, %v7656
            %v7658 = vpop.f32.mrf.mxu0
            %v7659 = vpop.f32.mrf.mxu0
            %v7660 = vadd.f32 0.0, %v7659
            %v7661 = vpop.f32.mrf.mxu0
            %7662 = vmatprep.mubr.bf16.mxu0 0
            %7663 = vmatmul.mubr.bf16.gmra.mxu0 %v7594
            %v7664 = vpop.f32.mrf.mxu0
            %v7665 = vadd.f32 0.0, %v7664
            %v7666 = vpop.f32.mrf.mxu0
            %v7667 = vpop.f32.mrf.mxu0
            %v7668 = vadd.f32 0.0, %v7667
            %v7669 = vpop.f32.mrf.mxu0
            %7670 = vmatprep.mubr.bf16.mxu0 0
            %7671 = vmatmul.mubr.bf16.gmra.mxu0 %v7595
            %v7672 = vpop.f32.mrf.mxu0
            %v7673 = vadd.f32 0.0, %v7672
            %v7674 = vpop.f32.mrf.mxu0
            %v7675 = vpop.f32.mrf.mxu0
            %v7676 = vadd.f32 0.0, %v7675
            %v7677 = vpop.f32.mrf.mxu0
            %7678 = vmatprep.mubr.bf16.mxu0 0
            %7679 = vmatmul.mubr.bf16.gmra.mxu0 %v7596
            %v7680 = vpop.f32.mrf.mxu0
            %v7681 = vadd.f32 0.0, %v7680
            %v7682 = vpop.f32.mrf.mxu0
            %v7683 = vpop.f32.mrf.mxu0
            %v7684 = vadd.f32 0.0, %v7683
            %v7685 = vpop.f32.mrf.mxu0
            %7686 = vmatprep.mubr.bf16.mxu0 0
            %7687 = vmatmul.mubr.bf16.gmra.mxu0 %v7597
            %v7688 = vpop.f32.mrf.mxu0
            %v7689 = vadd.f32 0.0, %v7688
            %v7690 = vpop.f32.mrf.mxu0
            %v7691 = vpop.f32.mrf.mxu0
            %v7692 = vadd.f32 0.0, %v7691
            %v7693 = vpop.f32.mrf.mxu0
            %7694 = vdwg.mxu0
            %v7695 = vmul.f32 %v7633, 0.05
            %v7696 = vmul.f32 %v7636, 0.05
            %v7697 = vmul.f32 %v7641, 0.05
            %v7698 = vmul.f32 %v7644, 0.05
            %v7699 = vmul.f32 %v7649, 0.05
            %v7700 = vmul.f32 %v7652, 0.05
            %v7701 = vmul.f32 %v7657, 0.05
            %v7702 = vmul.f32 %v7660, 0.05
            %v7703 = vmul.f32 %v7665, 0.05
            %v7704 = vmul.f32 %v7668, 0.05
            %v7705 = vmul.f32 %v7673, 0.05
            %v7706 = vmul.f32 %v7676, 0.05
            %v7707 = vmul.f32 %v7681, 0.05
            %v7708 = vmul.f32 %v7684, 0.05
            %v7709 = vmul.f32 %v7689, 0.05
            %v7710 = vmul.f32 %v7692, 0.05
            %v7711 = vadd.f32 %v7541, %v7695
            %v7712 = vadd.f32 %v7542, %v7696
            %v7713 = vadd.f32 %v7543, %v7697
            %v7714 = vadd.f32 %v7544, %v7698
            %v7715 = vadd.f32 %v7545, %v7699
            %v7716 = vadd.f32 %v7546, %v7700
            %v7717 = vadd.f32 %v7547, %v7701
            %v7718 = vadd.f32 %v7548, %v7702
            %v7719 = vadd.f32 %v7549, %v7703
            %v7720 = vadd.f32 %v7550, %v7704
            %v7721 = vadd.f32 %v7551, %v7705
            %v7722 = vadd.f32 %v7552, %v7706
            %v7723 = vadd.f32 %v7553, %v7707
            %v7724 = vadd.f32 %v7554, %v7708
            %v7725 = vadd.f32 %v7555, %v7709
            %v7726 = vadd.f32 %v7556, %v7710
            %v7727 = vmul.f32 %v7558, %v7711
            %v7728 = vmul.f32 %v7559, %v7712
            %v7729 = vmul.f32 %v7560, %v7713
            %v7730 = vmul.f32 %v7561, %v7714
            %v7731 = vmul.f32 %v7562, %v7715
            %v7732 = vmul.f32 %v7563, %v7716
            %v7733 = vmul.f32 %v7564, %v7717
            %v7734 = vmul.f32 %v7565, %v7718
            %v7735 = vmul.f32 %v7566, %v7719
            %v7736 = vmul.f32 %v7567, %v7720
            %v7737 = vmul.f32 %v7568, %v7721
            %v7738 = vmul.f32 %v7569, %v7722
            %v7739 = vmul.f32 %v7570, %v7723
            %v7740 = vmul.f32 %v7571, %v7724
            %v7741 = vmul.f32 %v7572, %v7725
            %v7742 = vmul.f32 %v7573, %v7726
            %v7743 = vpack.c.bf16 %v7728, %v7727
            %v7744 = vpack.c.bf16 %v7730, %v7729
            %v7745 = vpack.c.bf16 %v7732, %v7731
            %v7746 = vpack.c.bf16 %v7734, %v7733
            %v7747 = vpack.c.bf16 %v7736, %v7735
            %v7748 = vpack.c.bf16 %v7738, %v7737
            %v7749 = vpack.c.bf16 %v7740, %v7739
            %v7750 = vpack.c.bf16 %v7742, %v7741
            %7751 = vmatprep.subr.bf16.mxu0 0
            %7752 = vmatpush1.bf16.msra.mxu0 %v1400
            %7753 = vmatprep.subr.bf16.mxu0 0
            %7754 = vmatpush1.bf16.msra.mxu0 %v1399
            %7755 = vmatprep.subr.bf16.mxu0 0
            %7756 = vmatpush1.bf16.msra.mxu0 %v1398
            %7757 = vmatprep.subr.bf16.mxu0 0
            %7758 = vmatpush1.bf16.msra.mxu0 %v1397
            %7759 = vmatprep.subr.bf16.mxu0 0
            %7760 = vmatpush1.bf16.msra.mxu0 %v1396
            %7761 = vmatprep.subr.bf16.mxu0 0
            %7762 = vmatpush1.bf16.msra.mxu0 %v1395
            %7763 = vmatprep.subr.bf16.mxu0 0
            %7764 = vmatpush1.bf16.msra.mxu0 %v1394
            %7765 = vmatprep.subr.bf16.mxu0 0
            %7766 = vmatpush1.bf16.msra.mxu0 %v1393
            %7767 = vmatprep.subr.bf16.mxu0 0
            %7768 = vmatpush2.bf16.msra.mxu0 0
            %7769 = vmatprep.subr.bf16.mxu0 0
            %7770 = vmatpush2.bf16.msra.mxu0 0
            %7771 = vmatprep.subr.bf16.mxu0 0
            %7772 = vmatpush2.bf16.msra.mxu0 0
            %7773 = vmatprep.subr.bf16.mxu0 0
            %7774 = vmatpush2.bf16.msra.mxu0 0
            %7775 = vmatprep.subr.bf16.mxu0 0
            %7776 = vmatpush2.bf16.msra.mxu0 0
            %7777 = vmatprep.subr.bf16.mxu0 0
            %7778 = vmatpush2.bf16.msra.mxu0 0
            %7779 = vmatprep.subr.bf16.mxu0 0
            %7780 = vmatpush2.bf16.msra.mxu0 0
            %7781 = vmatprep.subr.bf16.mxu0 0
            %7782 = vmatpush2.bf16.msra.mxu0 0
            %7783 = vmatprep.mubr.bf16.mxu0 0
            %7784 = vmatmul.mubr.bf16.gmra.mxu0 %v7743
            %v7785 = vpop.f32.mrf.mxu0
            %v7786 = vadd.f32 0.0, %v7785
            %v7787 = vpop.f32.mrf.mxu0
            %v7788 = vpop.f32.mrf.mxu0
            %v7789 = vadd.f32 0.0, %v7788
            %v7790 = vpop.f32.mrf.mxu0
            %7791 = vmatprep.mubr.bf16.mxu0 0
            %7792 = vmatmul.mubr.bf16.gmra.mxu0 %v7744
            %v7793 = vpop.f32.mrf.mxu0
            %v7794 = vadd.f32 0.0, %v7793
            %v7795 = vpop.f32.mrf.mxu0
            %v7796 = vpop.f32.mrf.mxu0
            %v7797 = vadd.f32 0.0, %v7796
            %v7798 = vpop.f32.mrf.mxu0
            %7799 = vmatprep.mubr.bf16.mxu0 0
            %7800 = vmatmul.mubr.bf16.gmra.mxu0 %v7745
            %v7801 = vpop.f32.mrf.mxu0
            %v7802 = vadd.f32 0.0, %v7801
            %v7803 = vpop.f32.mrf.mxu0
            %v7804 = vpop.f32.mrf.mxu0
            %v7805 = vadd.f32 0.0, %v7804
            %v7806 = vpop.f32.mrf.mxu0
            %7807 = vmatprep.mubr.bf16.mxu0 0
            %7808 = vmatmul.mubr.bf16.gmra.mxu0 %v7746
            %v7809 = vpop.f32.mrf.mxu0
            %v7810 = vadd.f32 0.0, %v7809
            %v7811 = vpop.f32.mrf.mxu0
            %v7812 = vpop.f32.mrf.mxu0
            %v7813 = vadd.f32 0.0, %v7812
            %v7814 = vpop.f32.mrf.mxu0
            %7815 = vmatprep.mubr.bf16.mxu0 0
            %7816 = vmatmul.mubr.bf16.gmra.mxu0 %v7747
            %v7817 = vpop.f32.mrf.mxu0
            %v7818 = vadd.f32 0.0, %v7817
            %v7819 = vpop.f32.mrf.mxu0
            %v7820 = vpop.f32.mrf.mxu0
            %v7821 = vadd.f32 0.0, %v7820
            %v7822 = vpop.f32.mrf.mxu0
            %7823 = vmatprep.mubr.bf16.mxu0 0
            %7824 = vmatmul.mubr.bf16.gmra.mxu0 %v7748
            %v7825 = vpop.f32.mrf.mxu0
            %v7826 = vadd.f32 0.0, %v7825
            %v7827 = vpop.f32.mrf.mxu0
            %v7828 = vpop.f32.mrf.mxu0
            %v7829 = vadd.f32 0.0, %v7828
            %v7830 = vpop.f32.mrf.mxu0
            %7831 = vmatprep.mubr.bf16.mxu0 0
            %7832 = vmatmul.mubr.bf16.gmra.mxu0 %v7749
            %v7833 = vpop.f32.mrf.mxu0
            %v7834 = vadd.f32 0.0, %v7833
            %v7835 = vpop.f32.mrf.mxu0
            %v7836 = vpop.f32.mrf.mxu0
            %v7837 = vadd.f32 0.0, %v7836
            %v7838 = vpop.f32.mrf.mxu0
            %7839 = vmatprep.mubr.bf16.mxu0 0
            %7840 = vmatmul.mubr.bf16.gmra.mxu0 %v7750
            %v7841 = vpop.f32.mrf.mxu0
            %v7842 = vadd.f32 0.0, %v7841
            %v7843 = vpop.f32.mrf.mxu0
            %v7844 = vpop.f32.mrf.mxu0
            %v7845 = vadd.f32 0.0, %v7844
            %v7846 = vpop.f32.mrf.mxu0
            %7847 = vdwg.mxu0
            %v7848 = vmul.f32 %v7786, 0.05
            %v7849 = vmul.f32 %v7789, 0.05
            %v7850 = vmul.f32 %v7794, 0.05
            %v7851 = vmul.f32 %v7797, 0.05
            %v7852 = vmul.f32 %v7802, 0.05
            %v7853 = vmul.f32 %v7805, 0.05
            %v7854 = vmul.f32 %v7810, 0.05
            %v7855 = vmul.f32 %v7813, 0.05
            %v7856 = vmul.f32 %v7818, 0.05
            %v7857 = vmul.f32 %v7821, 0.05
            %v7858 = vmul.f32 %v7826, 0.05
            %v7859 = vmul.f32 %v7829, 0.05
            %v7860 = vmul.f32 %v7834, 0.05
            %v7861 = vmul.f32 %v7837, 0.05
            %v7862 = vmul.f32 %v7842, 0.05
            %v7863 = vmul.f32 %v7845, 0.05
            %v7864 = vadd.f32 %v7541, %v7848
            %v7865 = vadd.f32 %v7542, %v7849
            %v7866 = vadd.f32 %v7543, %v7850
            %v7867 = vadd.f32 %v7544, %v7851
            %v7868 = vadd.f32 %v7545, %v7852
            %v7869 = vadd.f32 %v7546, %v7853
            %v7870 = vadd.f32 %v7547, %v7854
            %v7871 = vadd.f32 %v7548, %v7855
            %v7872 = vadd.f32 %v7549, %v7856
            %v7873 = vadd.f32 %v7550, %v7857
            %v7874 = vadd.f32 %v7551, %v7858
            %v7875 = vadd.f32 %v7552, %v7859
            %v7876 = vadd.f32 %v7553, %v7860
            %v7877 = vadd.f32 %v7554, %v7861
            %v7878 = vadd.f32 %v7555, %v7862
            %v7879 = vadd.f32 %v7556, %v7863
            %s7880 = scalar_lea.vmem [#allocation3], %s7523
            %v7881 = vld [vmem:[%s7880] sm:$0xff]
            %v7882 = vld [vmem:[%s7880 + $0x8] sm:$0xff]
            %v7883 = vld [vmem:[%s7880 + $0x10] sm:$0xff]
            %v7884 = vld [vmem:[%s7880 + $0x18] sm:$0xff]
            %v7885 = vld [vmem:[%s7880 + $0x20] sm:$0xff]
            %v7886 = vld [vmem:[%s7880 + $0x28] sm:$0xff]
            %v7887 = vld [vmem:[%s7880 + $0x30] sm:$0xff]
            %v7888 = vld [vmem:[%s7880 + $0x38] sm:$0xff]
            %v7889 = vld [vmem:[%s7880 + $0x40] sm:$0xff]
            %v7890 = vld [vmem:[%s7880 + $0x48] sm:$0xff]
            %v7891 = vld [vmem:[%s7880 + $0x50] sm:$0xff]
            %v7892 = vld [vmem:[%s7880 + $0x58] sm:$0xff]
            %v7893 = vld [vmem:[%s7880 + $0x60] sm:$0xff]
            %v7894 = vld [vmem:[%s7880 + $0x68] sm:$0xff]
            %v7895 = vld [vmem:[%s7880 + $0x70] sm:$0xff]
            %v7896 = vld [vmem:[%s7880 + $0x78] sm:$0xff]
            %v7897 = vsub.f32 %v7881, %v7864
            %v7898 = vsub.f32 %v7882, %v7865
            %v7899 = vsub.f32 %v7883, %v7866
            %v7900 = vsub.f32 %v7884, %v7867
            %v7901 = vsub.f32 %v7885, %v7868
            %v7902 = vsub.f32 %v7886, %v7869
            %v7903 = vsub.f32 %v7887, %v7870
            %v7904 = vsub.f32 %v7888, %v7871
            %v7905 = vsub.f32 %v7889, %v7872
            %v7906 = vsub.f32 %v7890, %v7873
            %v7907 = vsub.f32 %v7891, %v7874
            %v7908 = vsub.f32 %v7892, %v7875
            %v7909 = vsub.f32 %v7893, %v7876
            %v7910 = vsub.f32 %v7894, %v7877
            %v7911 = vsub.f32 %v7895, %v7878
            %v7912 = vsub.f32 %v7896, %v7879
            %7913 = vst [vmem:[%s7880] sm:$0xff] %v7897
            %7914 = vst [vmem:[%s7880 + $0x8] sm:$0xff] %v7898
            %7915 = vst [vmem:[%s7880 + $0x10] sm:$0xff] %v7899
            %7916 = vst [vmem:[%s7880 + $0x18] sm:$0xff] %v7900
            %7917 = vst [vmem:[%s7880 + $0x20] sm:$0xff] %v7901
            %7918 = vst [vmem:[%s7880 + $0x28] sm:$0xff] %v7902
            %7919 = vst [vmem:[%s7880 + $0x30] sm:$0xff] %v7903
            %7920 = vst [vmem:[%s7880 + $0x38] sm:$0xff] %v7904
            %7921 = vst [vmem:[%s7880 + $0x40] sm:$0xff] %v7905
            %7922 = vst [vmem:[%s7880 + $0x48] sm:$0xff] %v7906
            %7923 = vst [vmem:[%s7880 + $0x50] sm:$0xff] %v7907
            %7924 = vst [vmem:[%s7880 + $0x58] sm:$0xff] %v7908
            %7925 = vst [vmem:[%s7880 + $0x60] sm:$0xff] %v7909
            %7926 = vst [vmem:[%s7880 + $0x68] sm:$0xff] %v7910
            %7927 = vst [vmem:[%s7880 + $0x70] sm:$0xff] %v7911
            %7928 = vst [vmem:[%s7880 + $0x78] sm:$0xff] %v7912
          $region94: #{tpu_custom_call.1} parent=86 // loop_footer
            %s7506 = sadd.s32 1, %s7502
          $region95: #{tpu_custom_call.1} parent=86 // loop_footer_branch
            %7501 = sbr.rel target = $region91
          $region96: #{tpu_custom_call.1} parent=86 // loop_exit
            _
        $region87: #{tpu_custom_call.1} parent=73 // loop_footer
          %s3754 = sadd.s32 1, %s3750
        $region88: #{tpu_custom_call.1} parent=73 // loop_footer_branch
          %3749 = sbr.rel target = $region84
        $region89: #{tpu_custom_call.1} parent=73 // loop_exit
          _
        %v7929 = vld [vmem:[#allocation3] sm:$0xff]
        %v7930 = vld [vmem:[#allocation3 + $0x8] sm:$0xff]
        %v7931 = vld [vmem:[#allocation3 + $0x10] sm:$0xff]
        %v7932 = vld [vmem:[#allocation3 + $0x18] sm:$0xff]
        %v7933 = vld [vmem:[#allocation3 + $0x20] sm:$0xff]
        %v7934 = vld [vmem:[#allocation3 + $0x28] sm:$0xff]
        %v7935 = vld [vmem:[#allocation3 + $0x30] sm:$0xff]
        %v7936 = vld [vmem:[#allocation3 + $0x38] sm:$0xff]
        %v7937 = vld [vmem:[#allocation3 + $0x40] sm:$0xff]
        %v7938 = vld [vmem:[#allocation3 + $0x48] sm:$0xff]
        %v7939 = vld [vmem:[#allocation3 + $0x50] sm:$0xff]
        %v7940 = vld [vmem:[#allocation3 + $0x58] sm:$0xff]
        %v7941 = vld [vmem:[#allocation3 + $0x60] sm:$0xff]
        %v7942 = vld [vmem:[#allocation3 + $0x68] sm:$0xff]
        %v7943 = vld [vmem:[#allocation3 + $0x70] sm:$0xff]
        %v7944 = vld [vmem:[#allocation3 + $0x78] sm:$0xff]
        %v7945 = vld [vmem:[#allocation3 + $0x80] sm:$0xff]
        %v7946 = vld [vmem:[#allocation3 + $0x88] sm:$0xff]
        %v7947 = vld [vmem:[#allocation3 + $0x90] sm:$0xff]
        %v7948 = vld [vmem:[#allocation3 + $0x98] sm:$0xff]
        %v7949 = vld [vmem:[#allocation3 + $0xa0] sm:$0xff]
        %v7950 = vld [vmem:[#allocation3 + $0xa8] sm:$0xff]
        %v7951 = vld [vmem:[#allocation3 + $0xb0] sm:$0xff]
        %v7952 = vld [vmem:[#allocation3 + $0xb8] sm:$0xff]
        %v7953 = vld [vmem:[#allocation3 + $0xc0] sm:$0xff]
        %v7954 = vld [vmem:[#allocation3 + $0xc8] sm:$0xff]
        %v7955 = vld [vmem:[#allocation3 + $0xd0] sm:$0xff]
        %v7956 = vld [vmem:[#allocation3 + $0xd8] sm:$0xff]
        %v7957 = vld [vmem:[#allocation3 + $0xe0] sm:$0xff]
        %v7958 = vld [vmem:[#allocation3 + $0xe8] sm:$0xff]
        %v7959 = vld [vmem:[#allocation3 + $0xf0] sm:$0xff]
        %v7960 = vld [vmem:[#allocation3 + $0xf8] sm:$0xff]
        %v7961 = vld [vmem:[#allocation3 + $0x100] sm:$0xff]
        %v7962 = vld [vmem:[#allocation3 + $0x108] sm:$0xff]
        %v7963 = vld [vmem:[#allocation3 + $0x110] sm:$0xff]
        %v7964 = vld [vmem:[#allocation3 + $0x118] sm:$0xff]
        %v7965 = vld [vmem:[#allocation3 + $0x120] sm:$0xff]
        %v7966 = vld [vmem:[#allocation3 + $0x128] sm:$0xff]
        %v7967 = vld [vmem:[#allocation3 + $0x130] sm:$0xff]
        %v7968 = vld [vmem:[#allocation3 + $0x138] sm:$0xff]
        %v7969 = vld [vmem:[#allocation3 + $0x140] sm:$0xff]
        %v7970 = vld [vmem:[#allocation3 + $0x148] sm:$0xff]
        %v7971 = vld [vmem:[#allocation3 + $0x150] sm:$0xff]
        %v7972 = vld [vmem:[#allocation3 + $0x158] sm:$0xff]
        %v7973 = vld [vmem:[#allocation3 + $0x160] sm:$0xff]
        %v7974 = vld [vmem:[#allocation3 + $0x168] sm:$0xff]
        %v7975 = vld [vmem:[#allocation3 + $0x170] sm:$0xff]
        %v7976 = vld [vmem:[#allocation3 + $0x178] sm:$0xff]
        %v7977 = vld [vmem:[#allocation3 + $0x180] sm:$0xff]
        %v7978 = vld [vmem:[#allocation3 + $0x188] sm:$0xff]
        %v7979 = vld [vmem:[#allocation3 + $0x190] sm:$0xff]
        %v7980 = vld [vmem:[#allocation3 + $0x198] sm:$0xff]
        %v7981 = vld [vmem:[#allocation3 + $0x1a0] sm:$0xff]
        %v7982 = vld [vmem:[#allocation3 + $0x1a8] sm:$0xff]
        %v7983 = vld [vmem:[#allocation3 + $0x1b0] sm:$0xff]
        %v7984 = vld [vmem:[#allocation3 + $0x1b8] sm:$0xff]
        %v7985 = vld [vmem:[#allocation3 + $0x1c0] sm:$0xff]
        %v7986 = vld [vmem:[#allocation3 + $0x1c8] sm:$0xff]
        %v7987 = vld [vmem:[#allocation3 + $0x1d0] sm:$0xff]
        %v7988 = vld [vmem:[#allocation3 + $0x1d8] sm:$0xff]
        %v7989 = vld [vmem:[#allocation3 + $0x1e0] sm:$0xff]
        %v7990 = vld [vmem:[#allocation3 + $0x1e8] sm:$0xff]
        %v7991 = vld [vmem:[#allocation3 + $0x1f0] sm:$0xff]
        %v7992 = vld [vmem:[#allocation3 + $0x1f8] sm:$0xff]
        %v7993 = vld [vmem:[#allocation3 + $0x200] sm:$0xff]
        %v7994 = vld [vmem:[#allocation3 + $0x208] sm:$0xff]
        %v7995 = vld [vmem:[#allocation3 + $0x210] sm:$0xff]
        %v7996 = vld [vmem:[#allocation3 + $0x218] sm:$0xff]
        %v7997 = vld [vmem:[#allocation3 + $0x220] sm:$0xff]
        %v7998 = vld [vmem:[#allocation3 + $0x228] sm:$0xff]
        %v7999 = vld [vmem:[#allocation3 + $0x230] sm:$0xff]
        %v8000 = vld [vmem:[#allocation3 + $0x238] sm:$0xff]
        %v8001 = vld [vmem:[#allocation3 + $0x240] sm:$0xff]
        %v8002 = vld [vmem:[#allocation3 + $0x248] sm:$0xff]
        %v8003 = vld [vmem:[#allocation3 + $0x250] sm:$0xff]
        %v8004 = vld [vmem:[#allocation3 + $0x258] sm:$0xff]
        %v8005 = vld [vmem:[#allocation3 + $0x260] sm:$0xff]
        %v8006 = vld [vmem:[#allocation3 + $0x268] sm:$0xff]
        %v8007 = vld [vmem:[#allocation3 + $0x270] sm:$0xff]
        %v8008 = vld [vmem:[#allocation3 + $0x278] sm:$0xff]
        %v8009 = vld [vmem:[#allocation3 + $0x280] sm:$0xff]
        %v8010 = vld [vmem:[#allocation3 + $0x288] sm:$0xff]
        %v8011 = vld [vmem:[#allocation3 + $0x290] sm:$0xff]
        %v8012 = vld [vmem:[#allocation3 + $0x298] sm:$0xff]
        %v8013 = vld [vmem:[#allocation3 + $0x2a0] sm:$0xff]
        %v8014 = vld [vmem:[#allocation3 + $0x2a8] sm:$0xff]
        %v8015 = vld [vmem:[#allocation3 + $0x2b0] sm:$0xff]
        %v8016 = vld [vmem:[#allocation3 + $0x2b8] sm:$0xff]
        %v8017 = vld [vmem:[#allocation3 + $0x2c0] sm:$0xff]
        %v8018 = vld [vmem:[#allocation3 + $0x2c8] sm:$0xff]
        %v8019 = vld [vmem:[#allocation3 + $0x2d0] sm:$0xff]
        %v8020 = vld [vmem:[#allocation3 + $0x2d8] sm:$0xff]
        %v8021 = vld [vmem:[#allocation3 + $0x2e0] sm:$0xff]
        %v8022 = vld [vmem:[#allocation3 + $0x2e8] sm:$0xff]
        %v8023 = vld [vmem:[#allocation3 + $0x2f0] sm:$0xff]
        %v8024 = vld [vmem:[#allocation3 + $0x2f8] sm:$0xff]
        %v8025 = vld [vmem:[#allocation3 + $0x300] sm:$0xff]
        %v8026 = vld [vmem:[#allocation3 + $0x308] sm:$0xff]
        %v8027 = vld [vmem:[#allocation3 + $0x310] sm:$0xff]
        %v8028 = vld [vmem:[#allocation3 + $0x318] sm:$0xff]
        %v8029 = vld [vmem:[#allocation3 + $0x320] sm:$0xff]
        %v8030 = vld [vmem:[#allocation3 + $0x328] sm:$0xff]
        %v8031 = vld [vmem:[#allocation3 + $0x330] sm:$0xff]
        %v8032 = vld [vmem:[#allocation3 + $0x338] sm:$0xff]
        %v8033 = vld [vmem:[#allocation3 + $0x340] sm:$0xff]
        %v8034 = vld [vmem:[#allocation3 + $0x348] sm:$0xff]
        %v8035 = vld [vmem:[#allocation3 + $0x350] sm:$0xff]
        %v8036 = vld [vmem:[#allocation3 + $0x358] sm:$0xff]
        %v8037 = vld [vmem:[#allocation3 + $0x360] sm:$0xff]
        %v8038 = vld [vmem:[#allocation3 + $0x368] sm:$0xff]
        %v8039 = vld [vmem:[#allocation3 + $0x370] sm:$0xff]
        %v8040 = vld [vmem:[#allocation3 + $0x378] sm:$0xff]
        %v8041 = vld [vmem:[#allocation3 + $0x380] sm:$0xff]
        %v8042 = vld [vmem:[#allocation3 + $0x388] sm:$0xff]
        %v8043 = vld [vmem:[#allocation3 + $0x390] sm:$0xff]
        %v8044 = vld [vmem:[#allocation3 + $0x398] sm:$0xff]
        %v8045 = vld [vmem:[#allocation3 + $0x3a0] sm:$0xff]
        %v8046 = vld [vmem:[#allocation3 + $0x3a8] sm:$0xff]
        %v8047 = vld [vmem:[#allocation3 + $0x3b0] sm:$0xff]
        %v8048 = vld [vmem:[#allocation3 + $0x3b8] sm:$0xff]
        %v8049 = vld [vmem:[#allocation3 + $0x3c0] sm:$0xff]
        %v8050 = vld [vmem:[#allocation3 + $0x3c8] sm:$0xff]
        %v8051 = vld [vmem:[#allocation3 + $0x3d0] sm:$0xff]
        %v8052 = vld [vmem:[#allocation3 + $0x3d8] sm:$0xff]
        %v8053 = vld [vmem:[#allocation3 + $0x3e0] sm:$0xff]
        %v8054 = vld [vmem:[#allocation3 + $0x3e8] sm:$0xff]
        %v8055 = vld [vmem:[#allocation3 + $0x3f0] sm:$0xff]
        %v8056 = vld [vmem:[#allocation3 + $0x3f8] sm:$0xff]
        %v8057 = vld [vmem:[#allocation3 + $0x400] sm:$0xff]
        %v8058 = vld [vmem:[#allocation3 + $0x408] sm:$0xff]
        %v8059 = vld [vmem:[#allocation3 + $0x410] sm:$0xff]
        %v8060 = vld [vmem:[#allocation3 + $0x418] sm:$0xff]
        %v8061 = vld [vmem:[#allocation3 + $0x420] sm:$0xff]
        %v8062 = vld [vmem:[#allocation3 + $0x428] sm:$0xff]
        %v8063 = vld [vmem:[#allocation3 + $0x430] sm:$0xff]
        %v8064 = vld [vmem:[#allocation3 + $0x438] sm:$0xff]
        %v8065 = vld [vmem:[#allocation3 + $0x440] sm:$0xff]
        %v8066 = vld [vmem:[#allocation3 + $0x448] sm:$0xff]
        %v8067 = vld [vmem:[#allocation3 + $0x450] sm:$0xff]
        %v8068 = vld [vmem:[#allocation3 + $0x458] sm:$0xff]
        %v8069 = vld [vmem:[#allocation3 + $0x460] sm:$0xff]
        %v8070 = vld [vmem:[#allocation3 + $0x468] sm:$0xff]
        %v8071 = vld [vmem:[#allocation3 + $0x470] sm:$0xff]
        %v8072 = vld [vmem:[#allocation3 + $0x478] sm:$0xff]
        %v8073 = vld [vmem:[#allocation3 + $0x480] sm:$0xff]
        %v8074 = vld [vmem:[#allocation3 + $0x488] sm:$0xff]
        %v8075 = vld [vmem:[#allocation3 + $0x490] sm:$0xff]
        %v8076 = vld [vmem:[#allocation3 + $0x498] sm:$0xff]
        %v8077 = vld [vmem:[#allocation3 + $0x4a0] sm:$0xff]
        %v8078 = vld [vmem:[#allocation3 + $0x4a8] sm:$0xff]
        %v8079 = vld [vmem:[#allocation3 + $0x4b0] sm:$0xff]
        %v8080 = vld [vmem:[#allocation3 + $0x4b8] sm:$0xff]
        %v8081 = vld [vmem:[#allocation3 + $0x4c0] sm:$0xff]
        %v8082 = vld [vmem:[#allocation3 + $0x4c8] sm:$0xff]
        %v8083 = vld [vmem:[#allocation3 + $0x4d0] sm:$0xff]
        %v8084 = vld [vmem:[#allocation3 + $0x4d8] sm:$0xff]
        %v8085 = vld [vmem:[#allocation3 + $0x4e0] sm:$0xff]
        %v8086 = vld [vmem:[#allocation3 + $0x4e8] sm:$0xff]
        %v8087 = vld [vmem:[#allocation3 + $0x4f0] sm:$0xff]
        %v8088 = vld [vmem:[#allocation3 + $0x4f8] sm:$0xff]
        %v8089 = vld [vmem:[#allocation3 + $0x500] sm:$0xff]
        %v8090 = vld [vmem:[#allocation3 + $0x508] sm:$0xff]
        %v8091 = vld [vmem:[#allocation3 + $0x510] sm:$0xff]
        %v8092 = vld [vmem:[#allocation3 + $0x518] sm:$0xff]
        %v8093 = vld [vmem:[#allocation3 + $0x520] sm:$0xff]
        %v8094 = vld [vmem:[#allocation3 + $0x528] sm:$0xff]
        %v8095 = vld [vmem:[#allocation3 + $0x530] sm:$0xff]
        %v8096 = vld [vmem:[#allocation3 + $0x538] sm:$0xff]
        %v8097 = vld [vmem:[#allocation3 + $0x540] sm:$0xff]
        %v8098 = vld [vmem:[#allocation3 + $0x548] sm:$0xff]
        %v8099 = vld [vmem:[#allocation3 + $0x550] sm:$0xff]
        %v8100 = vld [vmem:[#allocation3 + $0x558] sm:$0xff]
        %v8101 = vld [vmem:[#allocation3 + $0x560] sm:$0xff]
        %v8102 = vld [vmem:[#allocation3 + $0x568] sm:$0xff]
        %v8103 = vld [vmem:[#allocation3 + $0x570] sm:$0xff]
        %v8104 = vld [vmem:[#allocation3 + $0x578] sm:$0xff]
        %v8105 = vld [vmem:[#allocation3 + $0x580] sm:$0xff]
        %v8106 = vld [vmem:[#allocation3 + $0x588] sm:$0xff]
        %v8107 = vld [vmem:[#allocation3 + $0x590] sm:$0xff]
        %v8108 = vld [vmem:[#allocation3 + $0x598] sm:$0xff]
        %v8109 = vld [vmem:[#allocation3 + $0x5a0] sm:$0xff]
        %v8110 = vld [vmem:[#allocation3 + $0x5a8] sm:$0xff]
        %v8111 = vld [vmem:[#allocation3 + $0x5b0] sm:$0xff]
        %v8112 = vld [vmem:[#allocation3 + $0x5b8] sm:$0xff]
        %v8113 = vld [vmem:[#allocation3 + $0x5c0] sm:$0xff]
        %v8114 = vld [vmem:[#allocation3 + $0x5c8] sm:$0xff]
        %v8115 = vld [vmem:[#allocation3 + $0x5d0] sm:$0xff]
        %v8116 = vld [vmem:[#allocation3 + $0x5d8] sm:$0xff]
        %v8117 = vld [vmem:[#allocation3 + $0x5e0] sm:$0xff]
        %v8118 = vld [vmem:[#allocation3 + $0x5e8] sm:$0xff]
        %v8119 = vld [vmem:[#allocation3 + $0x5f0] sm:$0xff]
        %v8120 = vld [vmem:[#allocation3 + $0x5f8] sm:$0xff]
        %v8121 = vld [vmem:[#allocation3 + $0x600] sm:$0xff]
        %v8122 = vld [vmem:[#allocation3 + $0x608] sm:$0xff]
        %v8123 = vld [vmem:[#allocation3 + $0x610] sm:$0xff]
        %v8124 = vld [vmem:[#allocation3 + $0x618] sm:$0xff]
        %v8125 = vld [vmem:[#allocation3 + $0x620] sm:$0xff]
        %v8126 = vld [vmem:[#allocation3 + $0x628] sm:$0xff]
        %v8127 = vld [vmem:[#allocation3 + $0x630] sm:$0xff]
        %v8128 = vld [vmem:[#allocation3 + $0x638] sm:$0xff]
        %v8129 = vld [vmem:[#allocation3 + $0x640] sm:$0xff]
        %v8130 = vld [vmem:[#allocation3 + $0x648] sm:$0xff]
        %v8131 = vld [vmem:[#allocation3 + $0x650] sm:$0xff]
        %v8132 = vld [vmem:[#allocation3 + $0x658] sm:$0xff]
        %v8133 = vld [vmem:[#allocation3 + $0x660] sm:$0xff]
        %v8134 = vld [vmem:[#allocation3 + $0x668] sm:$0xff]
        %v8135 = vld [vmem:[#allocation3 + $0x670] sm:$0xff]
        %v8136 = vld [vmem:[#allocation3 + $0x678] sm:$0xff]
        %v8137 = vld [vmem:[#allocation3 + $0x680] sm:$0xff]
        %v8138 = vld [vmem:[#allocation3 + $0x688] sm:$0xff]
        %v8139 = vld [vmem:[#allocation3 + $0x690] sm:$0xff]
        %v8140 = vld [vmem:[#allocation3 + $0x698] sm:$0xff]
        %v8141 = vld [vmem:[#allocation3 + $0x6a0] sm:$0xff]
        %v8142 = vld [vmem:[#allocation3 + $0x6a8] sm:$0xff]
        %v8143 = vld [vmem:[#allocation3 + $0x6b0] sm:$0xff]
        %v8144 = vld [vmem:[#allocation3 + $0x6b8] sm:$0xff]
        %v8145 = vld [vmem:[#allocation3 + $0x6c0] sm:$0xff]
        %v8146 = vld [vmem:[#allocation3 + $0x6c8] sm:$0xff]
        %v8147 = vld [vmem:[#allocation3 + $0x6d0] sm:$0xff]
        %v8148 = vld [vmem:[#allocation3 + $0x6d8] sm:$0xff]
        %v8149 = vld [vmem:[#allocation3 + $0x6e0] sm:$0xff]
        %v8150 = vld [vmem:[#allocation3 + $0x6e8] sm:$0xff]
        %v8151 = vld [vmem:[#allocation3 + $0x6f0] sm:$0xff]
        %v8152 = vld [vmem:[#allocation3 + $0x6f8] sm:$0xff]
        %v8153 = vld [vmem:[#allocation3 + $0x700] sm:$0xff]
        %v8154 = vld [vmem:[#allocation3 + $0x708] sm:$0xff]
        %v8155 = vld [vmem:[#allocation3 + $0x710] sm:$0xff]
        %v8156 = vld [vmem:[#allocation3 + $0x718] sm:$0xff]
        %v8157 = vld [vmem:[#allocation3 + $0x720] sm:$0xff]
        %v8158 = vld [vmem:[#allocation3 + $0x728] sm:$0xff]
        %v8159 = vld [vmem:[#allocation3 + $0x730] sm:$0xff]
        %v8160 = vld [vmem:[#allocation3 + $0x738] sm:$0xff]
        %v8161 = vld [vmem:[#allocation3 + $0x740] sm:$0xff]
        %v8162 = vld [vmem:[#allocation3 + $0x748] sm:$0xff]
        %v8163 = vld [vmem:[#allocation3 + $0x750] sm:$0xff]
        %v8164 = vld [vmem:[#allocation3 + $0x758] sm:$0xff]
        %v8165 = vld [vmem:[#allocation3 + $0x760] sm:$0xff]
        %v8166 = vld [vmem:[#allocation3 + $0x768] sm:$0xff]
        %v8167 = vld [vmem:[#allocation3 + $0x770] sm:$0xff]
        %v8168 = vld [vmem:[#allocation3 + $0x778] sm:$0xff]
        %v8169 = vld [vmem:[#allocation3 + $0x780] sm:$0xff]
        %v8170 = vld [vmem:[#allocation3 + $0x788] sm:$0xff]
        %v8171 = vld [vmem:[#allocation3 + $0x790] sm:$0xff]
        %v8172 = vld [vmem:[#allocation3 + $0x798] sm:$0xff]
        %v8173 = vld [vmem:[#allocation3 + $0x7a0] sm:$0xff]
        %v8174 = vld [vmem:[#allocation3 + $0x7a8] sm:$0xff]
        %v8175 = vld [vmem:[#allocation3 + $0x7b0] sm:$0xff]
        %v8176 = vld [vmem:[#allocation3 + $0x7b8] sm:$0xff]
        %v8177 = vld [vmem:[#allocation3 + $0x7c0] sm:$0xff]
        %v8178 = vld [vmem:[#allocation3 + $0x7c8] sm:$0xff]
        %v8179 = vld [vmem:[#allocation3 + $0x7d0] sm:$0xff]
        %v8180 = vld [vmem:[#allocation3 + $0x7d8] sm:$0xff]
        %v8181 = vld [vmem:[#allocation3 + $0x7e0] sm:$0xff]
        %v8182 = vld [vmem:[#allocation3 + $0x7e8] sm:$0xff]
        %v8183 = vld [vmem:[#allocation3 + $0x7f0] sm:$0xff]
        %v8184 = vld [vmem:[#allocation3 + $0x7f8] sm:$0xff]
        %8185 = vst [vmem:[%s1313] sm:$0xff] %v7929
        %8186 = vst [vmem:[%s1313 + $0x8] sm:$0xff] %v7930
        %8187 = vst [vmem:[%s1313 + $0x10] sm:$0xff] %v7931
        %8188 = vst [vmem:[%s1313 + $0x18] sm:$0xff] %v7932
        %8189 = vst [vmem:[%s1313 + $0x20] sm:$0xff] %v7933
        %8190 = vst [vmem:[%s1313 + $0x28] sm:$0xff] %v7934
        %8191 = vst [vmem:[%s1313 + $0x30] sm:$0xff] %v7935
        %8192 = vst [vmem:[%s1313 + $0x38] sm:$0xff] %v7936
        %8193 = vst [vmem:[%s1313 + $0x40] sm:$0xff] %v7937
        %8194 = vst [vmem:[%s1313 + $0x48] sm:$0xff] %v7938
        %8195 = vst [vmem:[%s1313 + $0x50] sm:$0xff] %v7939
        %8196 = vst [vmem:[%s1313 + $0x58] sm:$0xff] %v7940
        %8197 = vst [vmem:[%s1313 + $0x60] sm:$0xff] %v7941
        %8198 = vst [vmem:[%s1313 + $0x68] sm:$0xff] %v7942
        %8199 = vst [vmem:[%s1313 + $0x70] sm:$0xff] %v7943
        %8200 = vst [vmem:[%s1313 + $0x78] sm:$0xff] %v7944
        %8201 = vst [vmem:[%s1313 + $0x80] sm:$0xff] %v7945
        %8202 = vst [vmem:[%s1313 + $0x88] sm:$0xff] %v7946
        %8203 = vst [vmem:[%s1313 + $0x90] sm:$0xff] %v7947
        %8204 = vst [vmem:[%s1313 + $0x98] sm:$0xff] %v7948
        %8205 = vst [vmem:[%s1313 + $0xa0] sm:$0xff] %v7949
        %8206 = vst [vmem:[%s1313 + $0xa8] sm:$0xff] %v7950
        %8207 = vst [vmem:[%s1313 + $0xb0] sm:$0xff] %v7951
        %8208 = vst [vmem:[%s1313 + $0xb8] sm:$0xff] %v7952
        %8209 = vst [vmem:[%s1313 + $0xc0] sm:$0xff] %v7953
        %8210 = vst [vmem:[%s1313 + $0xc8] sm:$0xff] %v7954
        %8211 = vst [vmem:[%s1313 + $0xd0] sm:$0xff] %v7955
        %8212 = vst [vmem:[%s1313 + $0xd8] sm:$0xff] %v7956
        %8213 = vst [vmem:[%s1313 + $0xe0] sm:$0xff] %v7957
        %8214 = vst [vmem:[%s1313 + $0xe8] sm:$0xff] %v7958
        %8215 = vst [vmem:[%s1313 + $0xf0] sm:$0xff] %v7959
        %8216 = vst [vmem:[%s1313 + $0xf8] sm:$0xff] %v7960
        %8217 = vst [vmem:[%s1313 + $0x100] sm:$0xff] %v7961
        %8218 = vst [vmem:[%s1313 + $0x108] sm:$0xff] %v7962
        %8219 = vst [vmem:[%s1313 + $0x110] sm:$0xff] %v7963
        %8220 = vst [vmem:[%s1313 + $0x118] sm:$0xff] %v7964
        %8221 = vst [vmem:[%s1313 + $0x120] sm:$0xff] %v7965
        %8222 = vst [vmem:[%s1313 + $0x128] sm:$0xff] %v7966
        %8223 = vst [vmem:[%s1313 + $0x130] sm:$0xff] %v7967
        %8224 = vst [vmem:[%s1313 + $0x138] sm:$0xff] %v7968
        %8225 = vst [vmem:[%s1313 + $0x140] sm:$0xff] %v7969
        %8226 = vst [vmem:[%s1313 + $0x148] sm:$0xff] %v7970
        %8227 = vst [vmem:[%s1313 + $0x150] sm:$0xff] %v7971
        %8228 = vst [vmem:[%s1313 + $0x158] sm:$0xff] %v7972
        %8229 = vst [vmem:[%s1313 + $0x160] sm:$0xff] %v7973
        %8230 = vst [vmem:[%s1313 + $0x168] sm:$0xff] %v7974
        %8231 = vst [vmem:[%s1313 + $0x170] sm:$0xff] %v7975
        %8232 = vst [vmem:[%s1313 + $0x178] sm:$0xff] %v7976
        %8233 = vst [vmem:[%s1313 + $0x180] sm:$0xff] %v7977
        %8234 = vst [vmem:[%s1313 + $0x188] sm:$0xff] %v7978
        %8235 = vst [vmem:[%s1313 + $0x190] sm:$0xff] %v7979
        %8236 = vst [vmem:[%s1313 + $0x198] sm:$0xff] %v7980
        %8237 = vst [vmem:[%s1313 + $0x1a0] sm:$0xff] %v7981
        %8238 = vst [vmem:[%s1313 + $0x1a8] sm:$0xff] %v7982
        %8239 = vst [vmem:[%s1313 + $0x1b0] sm:$0xff] %v7983
        %8240 = vst [vmem:[%s1313 + $0x1b8] sm:$0xff] %v7984
        %8241 = vst [vmem:[%s1313 + $0x1c0] sm:$0xff] %v7985
        %8242 = vst [vmem:[%s1313 + $0x1c8] sm:$0xff] %v7986
        %8243 = vst [vmem:[%s1313 + $0x1d0] sm:$0xff] %v7987
        %8244 = vst [vmem:[%s1313 + $0x1d8] sm:$0xff] %v7988
        %8245 = vst [vmem:[%s1313 + $0x1e0] sm:$0xff] %v7989
        %8246 = vst [vmem:[%s1313 + $0x1e8] sm:$0xff] %v7990
        %8247 = vst [vmem:[%s1313 + $0x1f0] sm:$0xff] %v7991
        %8248 = vst [vmem:[%s1313 + $0x1f8] sm:$0xff] %v7992
        %8249 = vst [vmem:[%s1313 + $0x200] sm:$0xff] %v7993
        %8250 = vst [vmem:[%s1313 + $0x208] sm:$0xff] %v7994
        %8251 = vst [vmem:[%s1313 + $0x210] sm:$0xff] %v7995
        %8252 = vst [vmem:[%s1313 + $0x218] sm:$0xff] %v7996
        %8253 = vst [vmem:[%s1313 + $0x220] sm:$0xff] %v7997
        %8254 = vst [vmem:[%s1313 + $0x228] sm:$0xff] %v7998
        %8255 = vst [vmem:[%s1313 + $0x230] sm:$0xff] %v7999
        %8256 = vst [vmem:[%s1313 + $0x238] sm:$0xff] %v8000
        %8257 = vst [vmem:[%s1313 + $0x240] sm:$0xff] %v8001
        %8258 = vst [vmem:[%s1313 + $0x248] sm:$0xff] %v8002
        %8259 = vst [vmem:[%s1313 + $0x250] sm:$0xff] %v8003
        %8260 = vst [vmem:[%s1313 + $0x258] sm:$0xff] %v8004
        %8261 = vst [vmem:[%s1313 + $0x260] sm:$0xff] %v8005
        %8262 = vst [vmem:[%s1313 + $0x268] sm:$0xff] %v8006
        %8263 = vst [vmem:[%s1313 + $0x270] sm:$0xff] %v8007
        %8264 = vst [vmem:[%s1313 + $0x278] sm:$0xff] %v8008
        %8265 = vst [vmem:[%s1313 + $0x280] sm:$0xff] %v8009
        %8266 = vst [vmem:[%s1313 + $0x288] sm:$0xff] %v8010
        %8267 = vst [vmem:[%s1313 + $0x290] sm:$0xff] %v8011
        %8268 = vst [vmem:[%s1313 + $0x298] sm:$0xff] %v8012
        %8269 = vst [vmem:[%s1313 + $0x2a0] sm:$0xff] %v8013
        %8270 = vst [vmem:[%s1313 + $0x2a8] sm:$0xff] %v8014
        %8271 = vst [vmem:[%s1313 + $0x2b0] sm:$0xff] %v8015
        %8272 = vst [vmem:[%s1313 + $0x2b8] sm:$0xff] %v8016
        %8273 = vst [vmem:[%s1313 + $0x2c0] sm:$0xff] %v8017
        %8274 = vst [vmem:[%s1313 + $0x2c8] sm:$0xff] %v8018
        %8275 = vst [vmem:[%s1313 + $0x2d0] sm:$0xff] %v8019
        %8276 = vst [vmem:[%s1313 + $0x2d8] sm:$0xff] %v8020
        %8277 = vst [vmem:[%s1313 + $0x2e0] sm:$0xff] %v8021
        %8278 = vst [vmem:[%s1313 + $0x2e8] sm:$0xff] %v8022
        %8279 = vst [vmem:[%s1313 + $0x2f0] sm:$0xff] %v8023
        %8280 = vst [vmem:[%s1313 + $0x2f8] sm:$0xff] %v8024
        %8281 = vst [vmem:[%s1313 + $0x300] sm:$0xff] %v8025
        %8282 = vst [vmem:[%s1313 + $0x308] sm:$0xff] %v8026
        %8283 = vst [vmem:[%s1313 + $0x310] sm:$0xff] %v8027
        %8284 = vst [vmem:[%s1313 + $0x318] sm:$0xff] %v8028
        %8285 = vst [vmem:[%s1313 + $0x320] sm:$0xff] %v8029
        %8286 = vst [vmem:[%s1313 + $0x328] sm:$0xff] %v8030
        %8287 = vst [vmem:[%s1313 + $0x330] sm:$0xff] %v8031
        %8288 = vst [vmem:[%s1313 + $0x338] sm:$0xff] %v8032
        %8289 = vst [vmem:[%s1313 + $0x340] sm:$0xff] %v8033
        %8290 = vst [vmem:[%s1313 + $0x348] sm:$0xff] %v8034
        %8291 = vst [vmem:[%s1313 + $0x350] sm:$0xff] %v8035
        %8292 = vst [vmem:[%s1313 + $0x358] sm:$0xff] %v8036
        %8293 = vst [vmem:[%s1313 + $0x360] sm:$0xff] %v8037
        %8294 = vst [vmem:[%s1313 + $0x368] sm:$0xff] %v8038
        %8295 = vst [vmem:[%s1313 + $0x370] sm:$0xff] %v8039
        %8296 = vst [vmem:[%s1313 + $0x378] sm:$0xff] %v8040
        %8297 = vst [vmem:[%s1313 + $0x380] sm:$0xff] %v8041
        %8298 = vst [vmem:[%s1313 + $0x388] sm:$0xff] %v8042
        %8299 = vst [vmem:[%s1313 + $0x390] sm:$0xff] %v8043
        %8300 = vst [vmem:[%s1313 + $0x398] sm:$0xff] %v8044
        %8301 = vst [vmem:[%s1313 + $0x3a0] sm:$0xff] %v8045
        %8302 = vst [vmem:[%s1313 + $0x3a8] sm:$0xff] %v8046
        %8303 = vst [vmem:[%s1313 + $0x3b0] sm:$0xff] %v8047
        %8304 = vst [vmem:[%s1313 + $0x3b8] sm:$0xff] %v8048
        %8305 = vst [vmem:[%s1313 + $0x3c0] sm:$0xff] %v8049
        %8306 = vst [vmem:[%s1313 + $0x3c8] sm:$0xff] %v8050
        %8307 = vst [vmem:[%s1313 + $0x3d0] sm:$0xff] %v8051
        %8308 = vst [vmem:[%s1313 + $0x3d8] sm:$0xff] %v8052
        %8309 = vst [vmem:[%s1313 + $0x3e0] sm:$0xff] %v8053
        %8310 = vst [vmem:[%s1313 + $0x3e8] sm:$0xff] %v8054
        %8311 = vst [vmem:[%s1313 + $0x3f0] sm:$0xff] %v8055
        %8312 = vst [vmem:[%s1313 + $0x3f8] sm:$0xff] %v8056
        %8313 = vst [vmem:[%s1313 + $0x400] sm:$0xff] %v8057
        %8314 = vst [vmem:[%s1313 + $0x408] sm:$0xff] %v8058
        %8315 = vst [vmem:[%s1313 + $0x410] sm:$0xff] %v8059
        %8316 = vst [vmem:[%s1313 + $0x418] sm:$0xff] %v8060
        %8317 = vst [vmem:[%s1313 + $0x420] sm:$0xff] %v8061
        %8318 = vst [vmem:[%s1313 + $0x428] sm:$0xff] %v8062
        %8319 = vst [vmem:[%s1313 + $0x430] sm:$0xff] %v8063
        %8320 = vst [vmem:[%s1313 + $0x438] sm:$0xff] %v8064
        %8321 = vst [vmem:[%s1313 + $0x440] sm:$0xff] %v8065
        %8322 = vst [vmem:[%s1313 + $0x448] sm:$0xff] %v8066
        %8323 = vst [vmem:[%s1313 + $0x450] sm:$0xff] %v8067
        %8324 = vst [vmem:[%s1313 + $0x458] sm:$0xff] %v8068
        %8325 = vst [vmem:[%s1313 + $0x460] sm:$0xff] %v8069
        %8326 = vst [vmem:[%s1313 + $0x468] sm:$0xff] %v8070
        %8327 = vst [vmem:[%s1313 + $0x470] sm:$0xff] %v8071
        %8328 = vst [vmem:[%s1313 + $0x478] sm:$0xff] %v8072
        %8329 = vst [vmem:[%s1313 + $0x480] sm:$0xff] %v8073
        %8330 = vst [vmem:[%s1313 + $0x488] sm:$0xff] %v8074
        %8331 = vst [vmem:[%s1313 + $0x490] sm:$0xff] %v8075
        %8332 = vst [vmem:[%s1313 + $0x498] sm:$0xff] %v8076
        %8333 = vst [vmem:[%s1313 + $0x4a0] sm:$0xff] %v8077
        %8334 = vst [vmem:[%s1313 + $0x4a8] sm:$0xff] %v8078
        %8335 = vst [vmem:[%s1313 + $0x4b0] sm:$0xff] %v8079
        %8336 = vst [vmem:[%s1313 + $0x4b8] sm:$0xff] %v8080
        %8337 = vst [vmem:[%s1313 + $0x4c0] sm:$0xff] %v8081
        %8338 = vst [vmem:[%s1313 + $0x4c8] sm:$0xff] %v8082
        %8339 = vst [vmem:[%s1313 + $0x4d0] sm:$0xff] %v8083
        %8340 = vst [vmem:[%s1313 + $0x4d8] sm:$0xff] %v8084
        %8341 = vst [vmem:[%s1313 + $0x4e0] sm:$0xff] %v8085
        %8342 = vst [vmem:[%s1313 + $0x4e8] sm:$0xff] %v8086
        %8343 = vst [vmem:[%s1313 + $0x4f0] sm:$0xff] %v8087
        %8344 = vst [vmem:[%s1313 + $0x4f8] sm:$0xff] %v8088
        %8345 = vst [vmem:[%s1313 + $0x500] sm:$0xff] %v8089
        %8346 = vst [vmem:[%s1313 + $0x508] sm:$0xff] %v8090
        %8347 = vst [vmem:[%s1313 + $0x510] sm:$0xff] %v8091
        %8348 = vst [vmem:[%s1313 + $0x518] sm:$0xff] %v8092
        %8349 = vst [vmem:[%s1313 + $0x520] sm:$0xff] %v8093
        %8350 = vst [vmem:[%s1313 + $0x528] sm:$0xff] %v8094
        %8351 = vst [vmem:[%s1313 + $0x530] sm:$0xff] %v8095
        %8352 = vst [vmem:[%s1313 + $0x538] sm:$0xff] %v8096
        %8353 = vst [vmem:[%s1313 + $0x540] sm:$0xff] %v8097
        %8354 = vst [vmem:[%s1313 + $0x548] sm:$0xff] %v8098
        %8355 = vst [vmem:[%s1313 + $0x550] sm:$0xff] %v8099
        %8356 = vst [vmem:[%s1313 + $0x558] sm:$0xff] %v8100
        %8357 = vst [vmem:[%s1313 + $0x560] sm:$0xff] %v8101
        %8358 = vst [vmem:[%s1313 + $0x568] sm:$0xff] %v8102
        %8359 = vst [vmem:[%s1313 + $0x570] sm:$0xff] %v8103
        %8360 = vst [vmem:[%s1313 + $0x578] sm:$0xff] %v8104
        %8361 = vst [vmem:[%s1313 + $0x580] sm:$0xff] %v8105
        %8362 = vst [vmem:[%s1313 + $0x588] sm:$0xff] %v8106
        %8363 = vst [vmem:[%s1313 + $0x590] sm:$0xff] %v8107
        %8364 = vst [vmem:[%s1313 + $0x598] sm:$0xff] %v8108
        %8365 = vst [vmem:[%s1313 + $0x5a0] sm:$0xff] %v8109
        %8366 = vst [vmem:[%s1313 + $0x5a8] sm:$0xff] %v8110
        %8367 = vst [vmem:[%s1313 + $0x5b0] sm:$0xff] %v8111
        %8368 = vst [vmem:[%s1313 + $0x5b8] sm:$0xff] %v8112
        %8369 = vst [vmem:[%s1313 + $0x5c0] sm:$0xff] %v8113
        %8370 = vst [vmem:[%s1313 + $0x5c8] sm:$0xff] %v8114
        %8371 = vst [vmem:[%s1313 + $0x5d0] sm:$0xff] %v8115
        %8372 = vst [vmem:[%s1313 + $0x5d8] sm:$0xff] %v8116
        %8373 = vst [vmem:[%s1313 + $0x5e0] sm:$0xff] %v8117
        %8374 = vst [vmem:[%s1313 + $0x5e8] sm:$0xff] %v8118
        %8375 = vst [vmem:[%s1313 + $0x5f0] sm:$0xff] %v8119
        %8376 = vst [vmem:[%s1313 + $0x5f8] sm:$0xff] %v8120
        %8377 = vst [vmem:[%s1313 + $0x600] sm:$0xff] %v8121
        %8378 = vst [vmem:[%s1313 + $0x608] sm:$0xff] %v8122
        %8379 = vst [vmem:[%s1313 + $0x610] sm:$0xff] %v8123
        %8380 = vst [vmem:[%s1313 + $0x618] sm:$0xff] %v8124
        %8381 = vst [vmem:[%s1313 + $0x620] sm:$0xff] %v8125
        %8382 = vst [vmem:[%s1313 + $0x628] sm:$0xff] %v8126
        %8383 = vst [vmem:[%s1313 + $0x630] sm:$0xff] %v8127
        %8384 = vst [vmem:[%s1313 + $0x638] sm:$0xff] %v8128
        %8385 = vst [vmem:[%s1313 + $0x640] sm:$0xff] %v8129
        %8386 = vst [vmem:[%s1313 + $0x648] sm:$0xff] %v8130
        %8387 = vst [vmem:[%s1313 + $0x650] sm:$0xff] %v8131
        %8388 = vst [vmem:[%s1313 + $0x658] sm:$0xff] %v8132
        %8389 = vst [vmem:[%s1313 + $0x660] sm:$0xff] %v8133
        %8390 = vst [vmem:[%s1313 + $0x668] sm:$0xff] %v8134
        %8391 = vst [vmem:[%s1313 + $0x670] sm:$0xff] %v8135
        %8392 = vst [vmem:[%s1313 + $0x678] sm:$0xff] %v8136
        %8393 = vst [vmem:[%s1313 + $0x680] sm:$0xff] %v8137
        %8394 = vst [vmem:[%s1313 + $0x688] sm:$0xff] %v8138
        %8395 = vst [vmem:[%s1313 + $0x690] sm:$0xff] %v8139
        %8396 = vst [vmem:[%s1313 + $0x698] sm:$0xff] %v8140
        %8397 = vst [vmem:[%s1313 + $0x6a0] sm:$0xff] %v8141
        %8398 = vst [vmem:[%s1313 + $0x6a8] sm:$0xff] %v8142
        %8399 = vst [vmem:[%s1313 + $0x6b0] sm:$0xff] %v8143
        %8400 = vst [vmem:[%s1313 + $0x6b8] sm:$0xff] %v8144
        %8401 = vst [vmem:[%s1313 + $0x6c0] sm:$0xff] %v8145
        %8402 = vst [vmem:[%s1313 + $0x6c8] sm:$0xff] %v8146
        %8403 = vst [vmem:[%s1313 + $0x6d0] sm:$0xff] %v8147
        %8404 = vst [vmem:[%s1313 + $0x6d8] sm:$0xff] %v8148
        %8405 = vst [vmem:[%s1313 + $0x6e0] sm:$0xff] %v8149
        %8406 = vst [vmem:[%s1313 + $0x6e8] sm:$0xff] %v8150
        %8407 = vst [vmem:[%s1313 + $0x6f0] sm:$0xff] %v8151
        %8408 = vst [vmem:[%s1313 + $0x6f8] sm:$0xff] %v8152
        %8409 = vst [vmem:[%s1313 + $0x700] sm:$0xff] %v8153
        %8410 = vst [vmem:[%s1313 + $0x708] sm:$0xff] %v8154
        %8411 = vst [vmem:[%s1313 + $0x710] sm:$0xff] %v8155
        %8412 = vst [vmem:[%s1313 + $0x718] sm:$0xff] %v8156
        %8413 = vst [vmem:[%s1313 + $0x720] sm:$0xff] %v8157
        %8414 = vst [vmem:[%s1313 + $0x728] sm:$0xff] %v8158
        %8415 = vst [vmem:[%s1313 + $0x730] sm:$0xff] %v8159
        %8416 = vst [vmem:[%s1313 + $0x738] sm:$0xff] %v8160
        %8417 = vst [vmem:[%s1313 + $0x740] sm:$0xff] %v8161
        %8418 = vst [vmem:[%s1313 + $0x748] sm:$0xff] %v8162
        %8419 = vst [vmem:[%s1313 + $0x750] sm:$0xff] %v8163
        %8420 = vst [vmem:[%s1313 + $0x758] sm:$0xff] %v8164
        %8421 = vst [vmem:[%s1313 + $0x760] sm:$0xff] %v8165
        %8422 = vst [vmem:[%s1313 + $0x768] sm:$0xff] %v8166
        %8423 = vst [vmem:[%s1313 + $0x770] sm:$0xff] %v8167
        %8424 = vst [vmem:[%s1313 + $0x778] sm:$0xff] %v8168
        %8425 = vst [vmem:[%s1313 + $0x780] sm:$0xff] %v8169
        %8426 = vst [vmem:[%s1313 + $0x788] sm:$0xff] %v8170
        %8427 = vst [vmem:[%s1313 + $0x790] sm:$0xff] %v8171
        %8428 = vst [vmem:[%s1313 + $0x798] sm:$0xff] %v8172
        %8429 = vst [vmem:[%s1313 + $0x7a0] sm:$0xff] %v8173
        %8430 = vst [vmem:[%s1313 + $0x7a8] sm:$0xff] %v8174
        %8431 = vst [vmem:[%s1313 + $0x7b0] sm:$0xff] %v8175
        %8432 = vst [vmem:[%s1313 + $0x7b8] sm:$0xff] %v8176
        %8433 = vst [vmem:[%s1313 + $0x7c0] sm:$0xff] %v8177
        %8434 = vst [vmem:[%s1313 + $0x7c8] sm:$0xff] %v8178
        %8435 = vst [vmem:[%s1313 + $0x7d0] sm:$0xff] %v8179
        %8436 = vst [vmem:[%s1313 + $0x7d8] sm:$0xff] %v8180
        %8437 = vst [vmem:[%s1313 + $0x7e0] sm:$0xff] %v8181
        %8438 = vst [vmem:[%s1313 + $0x7e8] sm:$0xff] %v8182
        %8439 = vst [vmem:[%s1313 + $0x7f0] sm:$0xff] %v8183
        %8440 = vst [vmem:[%s1313 + $0x7f8] sm:$0xff] %v8184
        %s8441 = scalar_lea.vmem [#allocation3], 1920
        %v8442 = vld [vmem:[%s8441] sm:$0xff]
        %v8443 = vld [vmem:[%s8441 + $0x8] sm:$0xff]
        %v8444 = vld [vmem:[%s8441 + $0x10] sm:$0xff]
        %v8445 = vld [vmem:[%s8441 + $0x18] sm:$0xff]
        %v8446 = vld [vmem:[%s8441 + $0x20] sm:$0xff]
        %v8447 = vld [vmem:[%s8441 + $0x28] sm:$0xff]
        %v8448 = vld [vmem:[%s8441 + $0x30] sm:$0xff]
        %v8449 = vld [vmem:[%s8441 + $0x38] sm:$0xff]
        %v8450 = vld [vmem:[%s8441 + $0x40] sm:$0xff]
        %v8451 = vld [vmem:[%s8441 + $0x48] sm:$0xff]
        %v8452 = vld [vmem:[%s8441 + $0x50] sm:$0xff]
        %v8453 = vld [vmem:[%s8441 + $0x58] sm:$0xff]
        %v8454 = vld [vmem:[%s8441 + $0x60] sm:$0xff]
        %v8455 = vld [vmem:[%s8441 + $0x68] sm:$0xff]
        %v8456 = vld [vmem:[%s8441 + $0x70] sm:$0xff]
        %v8457 = vld [vmem:[%s8441 + $0x78] sm:$0xff]
        %8458 = vst [vmem:[#allocation2] sm:$0xff] %v8442
        %8459 = vst [vmem:[#allocation2 + $0x8] sm:$0xff] %v8443
        %8460 = vst [vmem:[#allocation2 + $0x10] sm:$0xff] %v8444
        %8461 = vst [vmem:[#allocation2 + $0x18] sm:$0xff] %v8445
        %8462 = vst [vmem:[#allocation2 + $0x20] sm:$0xff] %v8446
        %8463 = vst [vmem:[#allocation2 + $0x28] sm:$0xff] %v8447
        %8464 = vst [vmem:[#allocation2 + $0x30] sm:$0xff] %v8448
        %8465 = vst [vmem:[#allocation2 + $0x38] sm:$0xff] %v8449
        %8466 = vst [vmem:[#allocation2 + $0x40] sm:$0xff] %v8450
        %8467 = vst [vmem:[#allocation2 + $0x48] sm:$0xff] %v8451
        %8468 = vst [vmem:[#allocation2 + $0x50] sm:$0xff] %v8452
        %8469 = vst [vmem:[#allocation2 + $0x58] sm:$0xff] %v8453
        %8470 = vst [vmem:[#allocation2 + $0x60] sm:$0xff] %v8454
        %8471 = vst [vmem:[#allocation2 + $0x68] sm:$0xff] %v8455
        %8472 = vst [vmem:[#allocation2 + $0x70] sm:$0xff] %v8456
        %8473 = vst [vmem:[#allocation2 + $0x78] sm:$0xff] %v8457
        %s8474 = sand.u32 %s158, 1
        %s8475 = scalar_lea.sflag [#allocation8], %s8474
        %s8476 = sand.u32 %s158, 1
        %s8477 = smul.addr %s8476, 2048
        %s8478 = scalar_lea.vmem [#allocation7], %s8477
        // Predicated region
        $region97: #{tpu_custom_call.1} parent=73 // pred_check
          %p8479 = pneg %p168
        $region98: #{tpu_custom_call.1} parent=73 // pred_check_branch
          %8481 = sbr.rel (%p8479) target = $region100
        $region99: #{tpu_custom_call.1} parent=73 // pred_region
          #allocation10 [shape = 'u32[6]{0}', space=smem, size = 0x18, scoped, tag = 'DMA stride descriptor']
          %s8482 = smul.u32 16, %s24
          %s8483 = smul.u32 16, %s23
          %s8485 = ssub.s32 32768, 32768
          %8486 = vsyncadd %s8475, %s8485
          %s8487 = smul.addr %s8482, 32
          %s8488 = sadd.s32 %s8483, %s8487
          %s8489 = smul.addr %s8488, 128
          %s8490 = scalar_lea.hbm %s5, %s8489
          %s8492 = sshll.u32 1, 14
          %s8493 = sxor.u32 4294967295, %s8492
          %s8496 = sshll.u32 7, 18
          %s8497 = sxor.u32 4294967295, %s8496
          %s8498 = sand.u32 0, %s8497
          %s8500 = sor.u32 %s8498, 0
          %s8501 = sshll.u32 %s8478, 4
          %s8502 = int_to_ptr.vmem [resolvable:$true] %s8501
          %8508 = sst [smem:[#allocation10]] 2048
          %s8509 = scalar_lea.smem [#allocation10], 1
          %8510 = sst [smem:[%s8509]] 4096
          %s8511 = scalar_lea.smem [#allocation10], 2
          %8512 = sst [smem:[%s8511]] 16
          %s8513 = scalar_lea.smem [#allocation10], 3
          %8514 = sst [smem:[%s8513]] 128
          %s8515 = scalar_lea.smem [#allocation10], 4
          %8516 = sst [smem:[%s8515]] 128
          %s8517 = scalar_lea.smem [#allocation10], 5
          %8518 = sst [smem:[%s8517]] 8
          %8520 = dma.general %s8502, 32768, %s8490, %s8475, 131072, [#allocation10], %s8500, 0
        $region100: #{tpu_custom_call.1} parent=73 // pred_fallthru
          _
      $region74: #{tpu_custom_call.1} parent=5 // pred_fallthru
        _
      %p8521 = scmp.le.s32.totalorder 2, %s14
      // Predicated region
      $region101: #{tpu_custom_call.1} parent=5 // pred_check
        %p8522 = pneg %p8521
      $region102: #{tpu_custom_call.1} parent=5 // pred_check_branch
        %8524 = sbr.rel (%p8522) target = $region104
      $region103: #{tpu_custom_call.1} parent=5 // pred_region
        %s8525 = ssub.s32 %s14, 2
        // Predicated region
        $region105: #{tpu_custom_call.1} parent=103 // pred_check
          %p8526 = pneg %p174
        $region106: #{tpu_custom_call.1} parent=103 // pred_check_branch
          %8528 = sbr.rel (%p8526) target = $region108
        $region107: #{tpu_custom_call.1} parent=103 // pred_region
          %s8529 = sand.u32 %s159, 1
          %s8530 = scalar_lea.sflag [#allocation8], %s8529
          %s8531 = sand.u32 %s159, 1
          %s8532 = smul.addr %s8531, 2048
          %s8533 = scalar_lea.vmem [#allocation7], %s8532
          %8534 = dma.done %s8530, 32768
        $region108: #{tpu_custom_call.1} parent=103 // pred_fallthru
          _
      $region104: #{tpu_custom_call.1} parent=5 // pred_fallthru
        _
    $region6: #{tpu_custom_call.1} parent=1 // loop_footer
      %s18 = sadd.s32 1, %s14
    $region7: #{tpu_custom_call.1} parent=1 // loop_footer_branch
      %13 = sbr.rel target = $region3
    $region8: #{tpu_custom_call.1} parent=1 // loop_exit
      _
    %8535 = vsyncpa [#allocation8], 1
    %s8536 = scalar_lea.sflag [#allocation8], 1
    %8537 = vsyncpa %s8536, 1

</llo_original>
